<compile_context>
chip_gen: v5e
topology: v5e:2x2
jax: 0.10.0
libtpu: 0.0.40
codegen_flags: <defaults>
</compile_context>

<pallas_src>
import functools

import jax
import jax.numpy as jnp
from jax.experimental import pallas as pl
from jax.experimental.pallas import tpu as pltpu

_TARGET_TILE_ROWS = 8192          # ~rows (B*S*K positions) per grid step (double-buffered)
_VMEM_LIMIT = 48 * 1024 * 1024    # fits v7x (64 MiB physical) and v5e/v6e (128 MiB)


def _cdiv(a, b):
    return (a + b - 1) // b


def _round_up(a, b):
    return _cdiv(a, b) * b


@functools.lru_cache(maxsize=None)
def _num_tensorcores():
    """Best-effort TensorCore count: megacore split only pays on multi-TC chips."""
    try:
        info = pltpu.get_tpu_info()
        for name in ("num_cores", "core_count", "num_tensorcores",
                     "tensorcores_per_chip", "num_cores_per_chip"):
            v = getattr(info, name, None)
            if isinstance(v, int) and 1 <= v <= 8:
                return v
    except Exception:
        pass
    try:
        kind = jax.devices()[0].device_kind.lower()
        if ("v7" in kind) or ("v4" in kind) or ("v5p" in kind):
            return 2
    except Exception:
        pass
    return 1


# ------------------------- Pallas kernel (hot path) -------------------------

def _fused_mlp_stats_kernel(*refs, n_layers, with_minmax, g_tile, k):
    """Recompute the 1x1-conv chain from the narrow input tile (VMEM-resident),
    applying the already-folded BN+ReLU for layers < n_layers.  Emits:
      * per-channel [sum | sumsq] of the final (bias-free) conv output, accumulated
        across the inner ("arbitrary") grid axis,
      * optionally per-group max/min of that output (BN+ReLU+max of the last layer
        is folded exactly outside the kernel)."""
    i = 0
    x_ref = refs[i]; i += 1
    w_refs = refs[i:i + n_layers]; i += n_layers
    sc_refs = refs[i:i + n_layers - 1]; i += n_layers - 1
    sh_refs = refs[i:i + n_layers - 1]; i += n_layers - 1
    acc_ref = refs[i]; i += 1
    ymax_ref = ymin_ref = None
    if with_minmax:
        ymax_ref, ymin_ref = refs[i], refs[i + 1]

    h = x_ref[...]                                            # bf16 (t_rows, cin_pad)
    y = None
    for layer in range(n_layers):
        # 1x1 conv == matmul over channels; bf16 operands, f32 accumulation on the MXU.
        y = jnp.dot(h, w_refs[layer][...], preferred_element_type=jnp.float32)
        if layer < n_layers - 1:
            # folded BatchNorm (batch stats, bias absorbed) + ReLU, then bf16 for the MXU.
            h = jnp.maximum(y * sc_refs[layer][...] + sh_refs[layer][...], 0.0)
            h = h.astype(jnp.bfloat16)

    c = y.shape[-1]
    psum = jnp.sum(y, axis=0, keepdims=True)                  # (1, C)
    psq = jnp.sum(y * y, axis=0, keepdims=True)               # (1, C)

    @pl.when(pl.program_id(1) == 0)
    def _():
        acc_ref[...] = jnp.zeros_like(acc_ref)

    acc_ref[:, :, :c] += psum.reshape(1, 1, c)
    acc_ref[:, :, c:] += psq.reshape(1, 1, c)

    if with_minmax:
        z = y.reshape(g_tile, k, c)                           # rows are (group, sample)
        ymax_ref[...] = jnp.max(z, axis=1)
        ymin_ref[...] = jnp.min(z, axis=1)


# ------------------------- pallas_call wrapper -------------------------

def _mlp_pass(x, weights, scales, shifts, *, t_rows, p_split, n_inner,
              g_tile, k, g_padded, with_minmax):
    """One row-tiled pass: recompute layers 1..n from x, emit BN stats of layer n
    (and optionally per-group max/min of layer n's raw conv output)."""
    n_layers = len(weights)
    r_pad, cin = x.shape
    cp_out = weights[-1].shape[1]

    args = [x]
    in_specs = [pl.BlockSpec((t_rows, cin), lambda p, t: (p * n_inner + t, 0))]
    for w in weights:
        args.append(w)
        in_specs.append(pl.BlockSpec(w.shape, lambda p, t: (0, 0)))
    for s in scales:
        args.append(s)
        in_specs.append(pl.BlockSpec(s.shape, lambda p, t: (0, 0)))
    for s in shifts:
        args.append(s)
        in_specs.append(pl.BlockSpec(s.shape, lambda p, t: (0, 0)))

    acc_shape = jax.ShapeDtypeStruct((p_split, 1, 2 * cp_out), jnp.float32)
    acc_spec = pl.BlockSpec((1, 1, 2 * cp_out), lambda p, t: (p, 0, 0))   # resident over t
    if with_minmax:
        mm_shape = jax.ShapeDtypeStruct((g_padded, cp_out), jnp.float32)
        mm_spec = pl.BlockSpec((g_tile, cp_out), lambda p, t: (p * n_inner + t, 0))
        out_shape = (acc_shape, mm_shape, mm_shape)
        out_specs = (acc_spec, mm_spec, mm_spec)
    else:
        out_shape = acc_shape
        out_specs = acc_spec

    kernel = functools.partial(_fused_mlp_stats_kernel, n_layers=n_layers,
                               with_minmax=with_minmax, g_tile=g_tile, k=k)

    flops = sum(2 * r_pad * w.shape[0] * w.shape[1] for w in weights) + 8 * r_pad * cp_out
    bytes_accessed = (r_pad * cin * 2 + sum(int(w.size) * 2 for w in weights)
                      + p_split * 2 * cp_out * 4
                      + (2 * g_padded * cp_out * 4 if with_minmax else 0))

    return pl.pallas_call(
        kernel,
        grid=(p_split, n_inner),
        in_specs=in_specs,
        out_specs=out_specs,
        out_shape=out_shape,
        compiler_params=pltpu.CompilerParams(
            dimension_semantics=("parallel", "arbitrary"),
            vmem_limit_bytes=_VMEM_LIMIT),
        cost_estimate=pl.CostEstimate(flops=flops, transcendentals=0,
                                      bytes_accessed=bytes_accessed),
    )(*args)


# ------------------------- per-branch driver -------------------------

def msg_branch(grouped, params, *, nsample, eps=1e-5):
    """grouped: [B, S, K, Cin] float32 -> [B*S, Cout_last] float32 (3 Pallas passes)."""
    B, S, K, c_in = grouped.shape
    assert K == nsample
    G = B * S
    R = G * K

    cin_pad = _round_up(max(c_in, 8), 8)

    # --- tiling: rows are (group, sample), sample fastest; tiles align to groups ---
    num_cores = _num_tensorcores()
    g_tile = max(1, _TARGET_TILE_ROWS // K)
    g_tile = _round_up(min(g_tile, G), 8)
    t_rows = g_tile * K
    n_tiles_total = _cdiv(G, g_tile)
    p_split = num_cores if n_tiles_total >= num_cores else 1   # megacore only if >1 TC
    n_inner = _cdiv(n_tiles_total, p_split)
    n_tiles = p_split * n_inner
    g_padded = n_tiles * g_tile
    r_padded = g_padded * K
    n_pad_rows = r_padded - R

    # --- flatten (pure reshape), zero-pad, bf16 matmul operand; the ONLY large HBM read ---
    x = grouped.reshape(R, c_in)
    x = jnp.pad(x, ((0, n_pad_rows), (0, cin_pad - c_in))).astype(jnp.bfloat16)

    # --- per-layer padded weights / BN params.  Conv biases cancel exactly under
    #     training-mode BatchNorm (BN(x@W + b) == BN(x@W)) and are dropped. ---
    ws, gammas, betas, cps = [], [], [], []
    c_prev_pad = cin_pad
    for (w, _b, g, be) in params:
        c_out = w.shape[1]
        cp = _round_up(c_out, 128)
        ws.append(jnp.pad(w, ((0, c_prev_pad - w.shape[0]),
                              (0, cp - c_out))).astype(jnp.bfloat16))
        gammas.append(jnp.pad(g.reshape(-1), (0, cp - c_out)).astype(jnp.float32))
        betas.append(jnp.pad(be.reshape(-1), (0, cp - c_out)).astype(jnp.float32))
        cps.append(cp)
        c_prev_pad = cp
    c_out_last = params[-1][0].shape[1]
    n_layers = len(params)

    kw = dict(t_rows=t_rows, p_split=p_split, n_inner=n_inner,
              g_tile=g_tile, k=K, g_padded=g_padded)

    scales, shifts = [], []
    ymax = ymin = None
    # Constant activation value of zero-padded rows entering each layer (exact stats fix).
    h_pad = jnp.zeros((1, cin_pad), jnp.bfloat16)

    for layer in range(n_layers):
        with_minmax = (layer == n_layers - 1)
        res = _mlp_pass(x, ws[:layer + 1], scales, shifts, with_minmax=with_minmax, **kw)
        if with_minmax:
            acc, ymax, ymin = res
        else:
            acc = res

        acc = jnp.sum(acc, axis=0)[0]                         # (2*cp,)
        cp = cps[layer]
        ssum, ssq = acc[:cp], acc[cp:]

        y_pad = None
        if n_pad_rows > 0:
            y_pad = jnp.dot(h_pad, ws[layer], preferred_element_type=jnp.float32)  # (1, cp)
            if layer > 0:                                     # layer 0: padded rows give 0
                ssum = ssum - n_pad_rows * y_pad[0]
                ssq = ssq - n_pad_rows * (y_pad[0] * y_pad[0])

        mean = ssum / float(R)
        var = jnp.maximum(ssq / float(R) - mean * mean, 0.0)  # biased var (PyTorch norm.)
        scale = gammas[layer] * jax.lax.rsqrt(var + eps)
        shift = betas[layer] - mean * scale
        scales.append(scale[None, :])
        shifts.append(shift[None, :])

        if n_pad_rows > 0 and layer < n_layers - 1:
            h_pad = jnp.maximum(y_pad * scale[None, :] + shift[None, :],
                                0.0).astype(jnp.bfloat16)

    # Final BN+ReLU+max folded exactly from per-group max/min of the raw conv output:
    # relu(sc*y + sh) is monotone in y with the direction set by sign(sc).
    sc, sh = scales[-1], shifts[-1]                           # (1, cp_last)
    ymax = ymax[:G]
    ymin = ymin[:G]
    sel = jnp.where(sc >= 0.0, ymax, ymin)
    out = jnp.maximum(sel * sc + sh, 0.0)                     # (G, cp_last) f32
    return out[:, :c_out_last]                                # [B*S, c_out]


# ----------------------------- JAX glue (indexing ops) -----------------------------
# TODO(synk): FPS / ball-query / gather (torch.ops.my_ops.*) are data-dependent index
#             plumbing and stay in plain JAX rather than Pallas.

def farthest_point_sample(xyz, npoint):
    """xyz: [B, N, 3] -> idx [B, npoint] (deterministic start at index 0)."""
    B, N, _ = xyz.shape

    def body(i, state):
        dist, farthest, idxs = state
        idxs = idxs.at[:, i].set(farthest)
        centroid = xyz[jnp.arange(B), farthest]               # [B, 3]
        d = jnp.sum((xyz - centroid[:, None, :]) ** 2, -1)    # [B, N]
        dist = jnp.minimum(dist, d)
        farthest = jnp.argmax(dist, axis=-1).astype(jnp.int32)
        return dist, farthest, idxs

    dist = jnp.full((B, N), 1e10, jnp.float32)
    farthest = jnp.zeros((B,), jnp.int32)
    idxs = jnp.zeros((B, npoint), jnp.int32)
    _, _, idxs = jax.lax.fori_loop(0, npoint, body, (dist, farthest, idxs))
    return idxs


def index_points(points, idx):
    """points: [B, N, C], idx: [B, ...] -> [B, ..., C]."""
    B = points.shape[0]
    batch_idx = jnp.arange(B).reshape((B,) + (1,) * (idx.ndim - 1))
    return points[batch_idx, idx]


def query_ball_point(radius, nsample, xyz, new_xyz):
    """xyz: [B, N, 3], new_xyz: [B, S, 3] -> group_idx [B, S, nsample]."""
    B, N, _ = xyz.shape
    sqrdists = jnp.sum((new_xyz[:, :, None, :] - xyz[:, None, :, :]) ** 2, -1)   # [B,S,N]
    idx = jnp.broadcast_to(jnp.arange(N, dtype=jnp.int32), sqrdists.shape)
    masked = jnp.where(sqrdists > radius ** 2, N, idx)
    # nsample smallest masked indices (ascending) == first nsample in-radius indices.
    # TODO(synk): for very large N, tile this to avoid materializing the full [B,S,N] slab.
    group_idx = -jax.lax.top_k(-masked, nsample)[0]
    group_first = group_idx[:, :, :1]
    group_idx = jnp.where(group_idx == N,
                          jnp.broadcast_to(group_first, group_idx.shape), group_idx)
    return group_idx


# ----------------------------- Full forward -----------------------------

def set_abstraction_msg2(xyz, points, params0, params1,
                         *, npoint, radius_list, nsample_list):
    """xyz: [B, 3, N], points: [B, D, N] -> (new_xyz [B,3,S], new_points [B, D', S])."""
    xyz_t = jnp.transpose(xyz, (0, 2, 1))       # [B, N, 3]
    pts_t = jnp.transpose(points, (0, 2, 1))    # [B, N, D]
    B, N, _ = xyz_t.shape
    S = npoint

    fps_idx = farthest_point_sample(xyz_t, S)   # [B, S]
    new_xyz = index_points(xyz_t, fps_idx)      # [B, S, 3]

    feats = []
    for params, radius, nsample in ((params0, radius_list[0], nsample_list[0]),
                                    (params1, radius_list[1], nsample_list[1])):
        group_idx = query_ball_point(radius, nsample, xyz_t, new_xyz)            # [B,S,K]
        grouped_xyz = index_points(xyz_t, group_idx) - new_xyz[:, :, None, :]    # [B,S,K,3]
        grouped_pts = index_points(pts_t, group_idx)                             # [B,S,K,D]
        grouped = jnp.concatenate([grouped_pts, grouped_xyz], axis=-1)           # [B,S,K,D+3]
        out = msg_branch(grouped, params, nsample=nsample)                       # [B*S, Cout]
        feats.append(out.reshape(B, S, -1))

    new_points_concat = jnp.concatenate(feats, axis=-1)   # [B, S, C0+C1]
    return (jnp.transpose(new_xyz, (0, 2, 1)),
            jnp.transpose(new_points_concat, (0, 2, 1)))


# ----------------------------- Parameter init -----------------------------

def init_branch_params(key, in_channel, mlp):
    """Deterministic Conv2d(1x1)+BN parameter init (PyTorch-style uniform bounds)."""
    params = []
    c_in = in_channel + 3
    for c_out in mlp:
        key, k_w, k_b = jax.random.split(key, 3)
        bound = 1.0 / (c_in ** 0.5)
        w = jax.random.uniform(k_w, (c_in, c_out), jnp.float32, -bound, bound)
        b = jax.random.uniform(k_b, (1, c_out), jnp.float32, -bound, bound)
        gamma = jnp.ones((1, c_out), jnp.float32)    # BN weight
        beta = jnp.zeros((1, c_out), jnp.float32)    # BN bias
        params.append((w, b, gamma, beta))
        c_in = c_out
    return params


if __name__ == "__main__":
    key = jax.random.PRNGKey(0)
    B, N, D = 2, 64, 4                  # batch, points, feature channels
    npoint = 16
    radius_list = [0.2, 0.4]
    nsample_list = [8, 16]
    mlp_list = [[16, 16, 32], [16, 16, 32]]

    k_xyz, k_pts, k_p0, k_p1 = jax.random.split(key, 4)
    xyz = jax.random.uniform(k_xyz, (B, 3, N), jnp.float32)
    points = jax.random.normal(k_pts, (B, D, N), jnp.float32)

    params0 = init_branch_params(k_p0, D, mlp_list[0])
    params1 = init_branch_params(k_p1, D, mlp_list[1])

    fwd = jax.jit(functools.partial(set_abstraction_msg2,
                                    npoint=npoint,
                                    radius_list=radius_list,
                                    nsample_list=nsample_list))
    new_xyz, new_points = fwd(xyz, points, params0, params1)
    jax.block_until_ready((new_xyz, new_points))

    assert new_xyz.shape == (B, 3, npoint)
    assert new_points.shape == (B, mlp_list[0][-1] + mlp_list[1][-1], npoint)
    assert bool(jnp.all(jnp.isfinite(new_xyz))) and bool(jnp.all(jnp.isfinite(new_points)))
    print("KERNEL_OK")
</pallas_src>

<mosaic_0001>
module attributes {stable_mosaic.version = 11 : i64} {
  func.func @_fused_mlp_stats_kernel(%arg0: i32, %arg1: i32, %arg2: memref<256x8xbf16, #tpu.memory_space<vmem>>, %arg3: memref<8x128xbf16, #tpu.memory_space<vmem>>, %arg4: memref<1x1x256xf32, #tpu.memory_space<vmem>>) attributes {dimension_semantics = [#tpu.dimension_semantics<parallel>, #tpu.dimension_semantics<arbitrary>], iteration_bounds = array<i64: 1, 1>, scalar_prefetch = 0 : i64, scratch_operands = 0 : i64, tpu.core_type = #tpu.core_type<tc>, window_params = [{transform_indices = @transform_0, window_bounds = array<i64: 256, 8>}, {pipeline_mode = #tpu.pipeline_mode<synchronous>, transform_indices = @transform_1, window_bounds = array<i64: 8, 128>}, {transform_indices = @transform_2, window_bounds = array<i64: 1, 1, 256>}]} {
    %c0 = arith.constant 0 : index
    %c0_0 = arith.constant 0 : index
    %0 = vector.load %arg2[%c0, %c0_0] : memref<256x8xbf16, #tpu.memory_space<vmem>>, vector<256x8xbf16>
    %c0_1 = arith.constant 0 : index
    %c0_2 = arith.constant 0 : index
    %1 = vector.load %arg3[%c0_1, %c0_2] : memref<8x128xbf16, #tpu.memory_space<vmem>>, vector<8x128xbf16>
    %cst = arith.constant dense<0.000000e+00> : vector<256x128xf32>
    %2 = tpu.matmul %0, %1, %cst {dimension_numbers = #tpu.dot_dimension_numbers<[1], [0], [0], [1], [0, 0, 1, 1], [], []>} : vector<256x8xbf16>, vector<8x128xbf16>, vector<256x128xf32> -> vector<256x128xf32>
    %cst_3 = arith.constant dense<0.000000e+00> : vector<128xf32>
    %3 = vector.multi_reduction <add>, %2, %cst_3 [0] : vector<256x128xf32> to vector<128xf32>
    %4 = vector.shape_cast %3 : vector<128xf32> to vector<1x128xf32>
    %5 = arith.mulf %2, %2 : vector<256x128xf32>
    %cst_4 = arith.constant dense<0.000000e+00> : vector<128xf32>
    %6 = vector.multi_reduction <add>, %5, %cst_4 [0] : vector<256x128xf32> to vector<128xf32>
    %7 = vector.shape_cast %6 : vector<128xf32> to vector<1x128xf32>
    %c0_i32 = arith.constant 0 : i32
    %8 = arith.cmpi eq, %arg1, %c0_i32 : i32
    %9 = arith.extui %8 : i1 to i32
    %c0_i32_5 = arith.constant 0 : i32
    %10 = arith.cmpi ne, %9, %c0_i32_5 : i32
    scf.if %10 {
      %cst_17 = arith.constant 0.000000e+00 : f32
      %19 = vector.broadcast %cst_17 : f32 to vector<1x1x256xf32>
      %c0_18 = arith.constant 0 : index
      %c0_19 = arith.constant 0 : index
      %c0_20 = arith.constant 0 : index
      %20 = vector.load %arg4[%c0_18, %c0_19, %c0_20] : memref<1x1x256xf32, #tpu.memory_space<vmem>>, vector<1x1x256xf32>
      tpu.vector_store %arg4[%c0_18, %c0_19, %c0_20], %19 {strides = array<i32>} : memref<1x1x256xf32, #tpu.memory_space<vmem>>, vector<1x1x256xf32>,
    } else {
    }
    %c0_6 = arith.constant 0 : index
    %c0_7 = arith.constant 0 : index
    %c0_8 = arith.constant 0 : index
    %11 = vector.load %arg4[%c0_6, %c0_7, %c0_8] : memref<1x1x256xf32, #tpu.memory_space<vmem>>, vector<1x1x128xf32>
    %12 = vector.shape_cast %4 : vector<1x128xf32> to vector<1x1x128xf32>
    %13 = arith.addf %11, %12 : vector<1x1x128xf32>
    %c0_9 = arith.constant 0 : index
    %c0_10 = arith.constant 0 : index
    %c0_11 = arith.constant 0 : index
    %14 = vector.load %arg4[%c0_9, %c0_10, %c0_11] : memref<1x1x256xf32, #tpu.memory_space<vmem>>, vector<1x1x128xf32>
    tpu.vector_store %arg4[%c0_9, %c0_10, %c0_11], %13 {strides = array<i32>} : memref<1x1x256xf32, #tpu.memory_space<vmem>>, vector<1x1x128xf32>,
    %c0_12 = arith.constant 0 : index
    %c0_13 = arith.constant 0 : index
    %c128 = arith.constant 128 : index
    %15 = vector.load %arg4[%c0_12, %c0_13, %c128] : memref<1x1x256xf32, #tpu.memory_space<vmem>>, vector<1x1x128xf32>
    %16 = vector.shape_cast %7 : vector<1x128xf32> to vector<1x1x128xf32>
    %17 = arith.addf %15, %16 : vector<1x1x128xf32>
    %c0_14 = arith.constant 0 : index
    %c0_15 = arith.constant 0 : index
    %c128_16 = arith.constant 128 : index
    %18 = vector.load %arg4[%c0_14, %c0_15, %c128_16] : memref<1x1x256xf32, #tpu.memory_space<vmem>>, vector<1x1x128xf32>
    tpu.vector_store %arg4[%c0_14, %c0_15, %c128_16], %17 {strides = array<i32>} : memref<1x1x256xf32, #tpu.memory_space<vmem>>, vector<1x1x128xf32>,
    return
  }
  func.func @transform_0(%arg0: i32, %arg1: i32) -> (i32, i32) {
    %c1_i32 = arith.constant 1 : i32
    %0 = arith.muli %arg0, %c1_i32 : i32
    %1 = arith.addi %0, %arg1 : i32
    %c0_i32 = arith.constant 0 : i32
    %c0_i32_0 = arith.constant 0 : i32
    return %1, %c0_i32 : i32, i32
  }
  func.func @transform_1(%arg0: i32, %arg1: i32) -> (i32, i32) {
    %c0_i32 = arith.constant 0 : i32
    %c0_i32_0 = arith.constant 0 : i32
    %c0_i32_1 = arith.constant 0 : i32
    return %c0_i32, %c0_i32_0 : i32, i32
  }
  func.func @transform_2(%arg0: i32, %arg1: i32) -> (i32, i32, i32) {
    %c0_i32 = arith.constant 0 : i32
    %c0_i32_0 = arith.constant 0 : i32
    %c0_i32_1 = arith.constant 0 : i32
    return %arg0, %c0_i32, %c0_i32_0 : i32, i32, i32
  }
}

module attributes {stable_mosaic.version = 11 : i64} {
  func.func @_fused_mlp_stats_kernel(%arg0: i32, %arg1: i32, %arg2: memref<256x8xbf16, #tpu.memory_space<vmem>>, %arg3: memref<8x128xbf16, #tpu.memory_space<vmem>>, %arg4: memref<128x128xbf16, #tpu.memory_space<vmem>>, %arg5: memref<1x128xf32, #tpu.memory_space<vmem>>, %arg6: memref<1x128xf32, #tpu.memory_space<vmem>>, %arg7: memref<1x1x256xf32, #tpu.memory_space<vmem>>) attributes {dimension_semantics = [#tpu.dimension_semantics<parallel>, #tpu.dimension_semantics<arbitrary>], iteration_bounds = array<i64: 1, 1>, scalar_prefetch = 0 : i64, scratch_operands = 0 : i64, tpu.core_type = #tpu.core_type<tc>, window_params = [{transform_indices = @transform_0, window_bounds = array<i64: 256, 8>}, {pipeline_mode = #tpu.pipeline_mode<synchronous>, transform_indices = @transform_1, window_bounds = array<i64: 8, 128>}, {pipeline_mode = #tpu.pipeline_mode<synchronous>, transform_indices = @transform_2, window_bounds = array<i64: 128, 128>}, {pipeline_mode = #tpu.pipeline_mode<synchronous>, transform_indices = @transform_3, window_bounds = array<i64: 1, 128>}, {pipeline_mode = #tpu.pipeline_mode<synchronous>, transform_indices = @transform_4, window_bounds = array<i64: 1, 128>}, {transform_indices = @transform_5, window_bounds = array<i64: 1, 1, 256>}]} {
    %c0 = arith.constant 0 : index
    %c0_0 = arith.constant 0 : index
    %0 = vector.load %arg2[%c0, %c0_0] : memref<256x8xbf16, #tpu.memory_space<vmem>>, vector<256x8xbf16>
    %c0_1 = arith.constant 0 : index
    %c0_2 = arith.constant 0 : index
    %1 = vector.load %arg3[%c0_1, %c0_2] : memref<8x128xbf16, #tpu.memory_space<vmem>>, vector<8x128xbf16>
    %cst = arith.constant dense<0.000000e+00> : vector<256x128xf32>
    %2 = tpu.matmul %0, %1, %cst {dimension_numbers = #tpu.dot_dimension_numbers<[1], [0], [0], [1], [0, 0, 1, 1], [], []>} : vector<256x8xbf16>, vector<8x128xbf16>, vector<256x128xf32> -> vector<256x128xf32>
    %c0_3 = arith.constant 0 : index
    %c0_4 = arith.constant 0 : index
    %3 = vector.load %arg5[%c0_3, %c0_4] : memref<1x128xf32, #tpu.memory_space<vmem>>, vector<1x128xf32>
    %4 = vector.broadcast %3 : vector<1x128xf32> to vector<256x128xf32>
    %5 = arith.mulf %2, %4 : vector<256x128xf32>
    %c0_5 = arith.constant 0 : index
    %c0_6 = arith.constant 0 : index
    %6 = vector.load %arg6[%c0_5, %c0_6] : memref<1x128xf32, #tpu.memory_space<vmem>>, vector<1x128xf32>
    %7 = vector.broadcast %6 : vector<1x128xf32> to vector<256x128xf32>
    %8 = arith.addf %5, %7 : vector<256x128xf32>
    %cst_7 = arith.constant 0.000000e+00 : f32
    %9 = vector.broadcast %cst_7 : f32 to vector<256x128xf32>
    %10 = arith.maximumf %8, %9 : vector<256x128xf32>
    %11 = arith.truncf %10 : vector<256x128xf32> to vector<256x128xbf16>
    %c0_8 = arith.constant 0 : index
    %c0_9 = arith.constant 0 : index
    %12 = vector.load %arg4[%c0_8, %c0_9] : memref<128x128xbf16, #tpu.memory_space<vmem>>, vector<128x128xbf16>
    %cst_10 = arith.constant dense<0.000000e+00> : vector<256x128xf32>
    %13 = tpu.matmul %11, %12, %cst_10 {dimension_numbers = #tpu.dot_dimension_numbers<[1], [0], [0], [1], [0, 0, 1, 1], [], []>} : vector<256x128xbf16>, vector<128x128xbf16>, vector<256x128xf32> -> vector<256x128xf32>
    %cst_11 = arith.constant dense<0.000000e+00> : vector<128xf32>
    %14 = vector.multi_reduction <add>, %13, %cst_11 [0] : vector<256x128xf32> to vector<128xf32>
    %15 = vector.shape_cast %14 : vector<128xf32> to vector<1x128xf32>
    %16 = arith.mulf %13, %13 : vector<256x128xf32>
    %cst_12 = arith.constant dense<0.000000e+00> : vector<128xf32>
    %17 = vector.multi_reduction <add>, %16, %cst_12 [0] : vector<256x128xf32> to vector<128xf32>
    %18 = vector.shape_cast %17 : vector<128xf32> to vector<1x128xf32>
    %c0_i32 = arith.constant 0 : i32
    %19 = arith.cmpi eq, %arg1, %c0_i32 : i32
    %20 = arith.extui %19 : i1 to i32
    %c0_i32_13 = arith.constant 0 : i32
    %21 = arith.cmpi ne, %20, %c0_i32_13 : i32
    scf.if %21 {
      %cst_25 = arith.constant 0.000000e+00 : f32
      %30 = vector.broadcast %cst_25 : f32 to vector<1x1x256xf32>
      %c0_26 = arith.constant 0 : index
      %c0_27 = arith.constant 0 : index
      %c0_28 = arith.constant 0 : index
      %31 = vector.load %arg7[%c0_26, %c0_27, %c0_28] : memref<1x1x256xf32, #tpu.memory_space<vmem>>, vector<1x1x256xf32>
      tpu.vector_store %arg7[%c0_26, %c0_27, %c0_28], %30 {strides = array<i32>} : memref<1x1x256xf32, #tpu.memory_space<vmem>>, vector<1x1x256xf32>,
    } else {
    }
    %c0_14 = arith.constant 0 : index
    %c0_15 = arith.constant 0 : index
    %c0_16 = arith.constant 0 : index
    %22 = vector.load %arg7[%c0_14, %c0_15, %c0_16] : memref<1x1x256xf32, #tpu.memory_space<vmem>>, vector<1x1x128xf32>
    %23 = vector.shape_cast %15 : vector<1x128xf32> to vector<1x1x128xf32>
    %24 = arith.addf %22, %23 : vector<1x1x128xf32>
    %c0_17 = arith.constant 0 : index
    %c0_18 = arith.constant 0 : index
    %c0_19 = arith.constant 0 : index
    %25 = vector.load %arg7[%c0_17, %c0_18, %c0_19] : memref<1x1x256xf32, #tpu.memory_space<vmem>>, vector<1x1x128xf32>
    tpu.vector_store %arg7[%c0_17, %c0_18, %c0_19], %24 {strides = array<i32>} : memref<1x1x256xf32, #tpu.memory_space<vmem>>, vector<1x1x128xf32>,
    %c0_20 = arith.constant 0 : index
    %c0_21 = arith.constant 0 : index
    %c128 = arith.constant 128 : index
    %26 = vector.load %arg7[%c0_20, %c0_21, %c128] : memref<1x1x256xf32, #tpu.memory_space<vmem>>, vector<1x1x128xf32>
    %27 = vector.shape_cast %18 : vector<1x128xf32> to vector<1x1x128xf32>
    %28 = arith.addf %26, %27 : vector<1x1x128xf32>
    %c0_22 = arith.constant 0 : index
    %c0_23 = arith.constant 0 : index
    %c128_24 = arith.constant 128 : index
    %29 = vector.load %arg7[%c0_22, %c0_23, %c128_24] : memref<1x1x256xf32, #tpu.memory_space<vmem>>, vector<1x1x128xf32>
    tpu.vector_store %arg7[%c0_22, %c0_23, %c128_24], %28 {strides = array<i32>} : memref<1x1x256xf32, #tpu.memory_space<vmem>>, vector<1x1x128xf32>,
    return
  }
  func.func @transform_0(%arg0: i32, %arg1: i32) -> (i32, i32) {
    %c1_i32 = arith.constant 1 : i32
    %0 = arith.muli %arg0, %c1_i32 : i32
    %1 = arith.addi %0, %arg1 : i32
    %c0_i32 = arith.constant 0 : i32
    %c0_i32_0 = arith.constant 0 : i32
    return %1, %c0_i32 : i32, i32
  }
  func.func @transform_1(%arg0: i32, %arg1: i32) -> (i32, i32) {
    %c0_i32 = arith.constant 0 : i32
    %c0_i32_0 = arith.constant 0 : i32
    %c0_i32_1 = arith.constant 0 : i32
    return %c0_i32, %c0_i32_0 : i32, i32
  }
  func.func @transform_2(%arg0: i32, %arg1: i32) -> (i32, i32) {
    %c0_i32 = arith.constant 0 : i32
    %c0_i32_0 = arith.constant 0 : i32
    %c0_i32_1 = arith.constant 0 : i32
    return %c0_i32, %c0_i32_0 : i32, i32
  }
  func.func @transform_3(%arg0: i32, %arg1: i32) -> (i32, i32) {
    %c0_i32 = arith.constant 0 : i32
    %c0_i32_0 = arith.constant 0 : i32
    %c0_i32_1 = arith.constant 0 : i32
    return %c0_i32, %c0_i32_0 : i32, i32
  }
  func.func @transform_4(%arg0: i32, %arg1: i32) -> (i32, i32) {
    %c0_i32 = arith.constant 0 : i32
    %c0_i32_0 = arith.constant 0 : i32
    %c0_i32_1 = arith.constant 0 : i32
    return %c0_i32, %c0_i32_0 : i32, i32
  }
  func.func @transform_5(%arg0: i32, %arg1: i32) -> (i32, i32, i32) {
    %c0_i32 = arith.constant 0 : i32
    %c0_i32_0 = arith.constant 0 : i32
    %c0_i32_1 = arith.constant 0 : i32
    return %arg0, %c0_i32, %c0_i32_0 : i32, i32, i32
  }
}

module attributes {stable_mosaic.version = 11 : i64} {
  func.func @_fused_mlp_stats_kernel(%arg0: i32, %arg1: i32, %arg2: memref<256x8xbf16, #tpu.memory_space<vmem>>, %arg3: memref<8x128xbf16, #tpu.memory_space<vmem>>, %arg4: memref<128x128xbf16, #tpu.memory_space<vmem>>, %arg5: memref<128x128xbf16, #tpu.memory_space<vmem>>, %arg6: memref<1x128xf32, #tpu.memory_space<vmem>>, %arg7: memref<1x128xf32, #tpu.memory_space<vmem>>, %arg8: memref<1x128xf32, #tpu.memory_space<vmem>>, %arg9: memref<1x128xf32, #tpu.memory_space<vmem>>, %arg10: memref<1x1x256xf32, #tpu.memory_space<vmem>>, %arg11: memref<32x128xf32, #tpu.memory_space<vmem>>, %arg12: memref<32x128xf32, #tpu.memory_space<vmem>>) attributes {dimension_semantics = [#tpu.dimension_semantics<parallel>, #tpu.dimension_semantics<arbitrary>], iteration_bounds = array<i64: 1, 1>, scalar_prefetch = 0 : i64, scratch_operands = 0 : i64, tpu.core_type = #tpu.core_type<tc>, window_params = [{transform_indices = @transform_0, window_bounds = array<i64: 256, 8>}, {pipeline_mode = #tpu.pipeline_mode<synchronous>, transform_indices = @transform_1, window_bounds = array<i64: 8, 128>}, {pipeline_mode = #tpu.pipeline_mode<synchronous>, transform_indices = @transform_2, window_bounds = array<i64: 128, 128>}, {pipeline_mode = #tpu.pipeline_mode<synchronous>, transform_indices = @transform_3, window_bounds = array<i64: 128, 128>}, {pipeline_mode = #tpu.pipeline_mode<synchronous>, transform_indices = @transform_4, window_bounds = array<i64: 1, 128>}, {pipeline_mode = #tpu.pipeline_mode<synchronous>, transform_indices = @transform_5, window_bounds = array<i64: 1, 128>}, {pipeline_mode = #tpu.pipeline_mode<synchronous>, transform_indices = @transform_6, window_bounds = array<i64: 1, 128>}, {pipeline_mode = #tpu.pipeline_mode<synchronous>, transform_indices = @transform_7, window_bounds = array<i64: 1, 128>}, {transform_indices = @transform_8, window_bounds = array<i64: 1, 1, 256>}, {transform_indices = @transform_9, window_bounds = array<i64: 32, 128>}, {transform_indices = @transform_10, window_bounds = array<i64: 32, 128>}]} {
    %c0 = arith.constant 0 : index
    %c0_0 = arith.constant 0 : index
    %0 = vector.load %arg2[%c0, %c0_0] : memref<256x8xbf16, #tpu.memory_space<vmem>>, vector<256x8xbf16>
    %c0_1 = arith.constant 0 : index
    %c0_2 = arith.constant 0 : index
    %1 = vector.load %arg3[%c0_1, %c0_2] : memref<8x128xbf16, #tpu.memory_space<vmem>>, vector<8x128xbf16>
    %cst = arith.constant dense<0.000000e+00> : vector<256x128xf32>
    %2 = tpu.matmul %0, %1, %cst {dimension_numbers = #tpu.dot_dimension_numbers<[1], [0], [0], [1], [0, 0, 1, 1], [], []>} : vector<256x8xbf16>, vector<8x128xbf16>, vector<256x128xf32> -> vector<256x128xf32>
    %c0_3 = arith.constant 0 : index
    %c0_4 = arith.constant 0 : index
    %3 = vector.load %arg6[%c0_3, %c0_4] : memref<1x128xf32, #tpu.memory_space<vmem>>, vector<1x128xf32>
    %4 = vector.broadcast %3 : vector<1x128xf32> to vector<256x128xf32>
    %5 = arith.mulf %2, %4 : vector<256x128xf32>
    %c0_5 = arith.constant 0 : index
    %c0_6 = arith.constant 0 : index
    %6 = vector.load %arg8[%c0_5, %c0_6] : memref<1x128xf32, #tpu.memory_space<vmem>>, vector<1x128xf32>
    %7 = vector.broadcast %6 : vector<1x128xf32> to vector<256x128xf32>
    %8 = arith.addf %5, %7 : vector<256x128xf32>
    %cst_7 = arith.constant 0.000000e+00 : f32
    %9 = vector.broadcast %cst_7 : f32 to vector<256x128xf32>
    %10 = arith.maximumf %8, %9 : vector<256x128xf32>
    %11 = arith.truncf %10 : vector<256x128xf32> to vector<256x128xbf16>
    %c0_8 = arith.constant 0 : index
    %c0_9 = arith.constant 0 : index
    %12 = vector.load %arg4[%c0_8, %c0_9] : memref<128x128xbf16, #tpu.memory_space<vmem>>, vector<128x128xbf16>
    %cst_10 = arith.constant dense<0.000000e+00> : vector<256x128xf32>
    %13 = tpu.matmul %11, %12, %cst_10 {dimension_numbers = #tpu.dot_dimension_numbers<[1], [0], [0], [1], [0, 0, 1, 1], [], []>} : vector<256x128xbf16>, vector<128x128xbf16>, vector<256x128xf32> -> vector<256x128xf32>
    %c0_11 = arith.constant 0 : index
    %c0_12 = arith.constant 0 : index
    %14 = vector.load %arg7[%c0_11, %c0_12] : memref<1x128xf32, #tpu.memory_space<vmem>>, vector<1x128xf32>
    %15 = vector.broadcast %14 : vector<1x128xf32> to vector<256x128xf32>
    %16 = arith.mulf %13, %15 : vector<256x128xf32>
    %c0_13 = arith.constant 0 : index
    %c0_14 = arith.constant 0 : index
    %17 = vector.load %arg9[%c0_13, %c0_14] : memref<1x128xf32, #tpu.memory_space<vmem>>, vector<1x128xf32>
    %18 = vector.broadcast %17 : vector<1x128xf32> to vector<256x128xf32>
    %19 = arith.addf %16, %18 : vector<256x128xf32>
    %cst_15 = arith.constant 0.000000e+00 : f32
    %20 = vector.broadcast %cst_15 : f32 to vector<256x128xf32>
    %21 = arith.maximumf %19, %20 : vector<256x128xf32>
    %22 = arith.truncf %21 : vector<256x128xf32> to vector<256x128xbf16>
    %c0_16 = arith.constant 0 : index
    %c0_17 = arith.constant 0 : index
    %23 = vector.load %arg5[%c0_16, %c0_17] : memref<128x128xbf16, #tpu.memory_space<vmem>>, vector<128x128xbf16>
    %cst_18 = arith.constant dense<0.000000e+00> : vector<256x128xf32>
    %24 = tpu.matmul %22, %23, %cst_18 {dimension_numbers = #tpu.dot_dimension_numbers<[1], [0], [0], [1], [0, 0, 1, 1], [], []>} : vector<256x128xbf16>, vector<128x128xbf16>, vector<256x128xf32> -> vector<256x128xf32>
    %cst_19 = arith.constant dense<0.000000e+00> : vector<128xf32>
    %25 = vector.multi_reduction <add>, %24, %cst_19 [0] : vector<256x128xf32> to vector<128xf32>
    %26 = vector.shape_cast %25 : vector<128xf32> to vector<1x128xf32>
    %27 = arith.mulf %24, %24 : vector<256x128xf32>
    %cst_20 = arith.constant dense<0.000000e+00> : vector<128xf32>
    %28 = vector.multi_reduction <add>, %27, %cst_20 [0] : vector<256x128xf32> to vector<128xf32>
    %29 = vector.shape_cast %28 : vector<128xf32> to vector<1x128xf32>
    %c0_i32 = arith.constant 0 : i32
    %30 = arith.cmpi eq, %arg1, %c0_i32 : i32
    %31 = arith.extui %30 : i1 to i32
    %c0_i32_21 = arith.constant 0 : i32
    %32 = arith.cmpi ne, %31, %c0_i32_21 : i32
    scf.if %32 {
      %cst_39 = arith.constant 0.000000e+00 : f32
      %46 = vector.broadcast %cst_39 : f32 to vector<1x1x256xf32>
      %c0_40 = arith.constant 0 : index
      %c0_41 = arith.constant 0 : index
      %c0_42 = arith.constant 0 : index
      %47 = vector.load %arg10[%c0_40, %c0_41, %c0_42] : memref<1x1x256xf32, #tpu.memory_space<vmem>>, vector<1x1x256xf32>
      tpu.vector_store %arg10[%c0_40, %c0_41, %c0_42], %46 {strides = array<i32>} : memref<1x1x256xf32, #tpu.memory_space<vmem>>, vector<1x1x256xf32>,
    } else {
    }
    %c0_22 = arith.constant 0 : index
    %c0_23 = arith.constant 0 : index
    %c0_24 = arith.constant 0 : index
    %33 = vector.load %arg10[%c0_22, %c0_23, %c0_24] : memref<1x1x256xf32, #tpu.memory_space<vmem>>, vector<1x1x128xf32>
    %34 = vector.shape_cast %26 : vector<1x128xf32> to vector<1x1x128xf32>
    %35 = arith.addf %33, %34 : vector<1x1x128xf32>
    %c0_25 = arith.constant 0 : index
    %c0_26 = arith.constant 0 : index
    %c0_27 = arith.constant 0 : index
    %36 = vector.load %arg10[%c0_25, %c0_26, %c0_27] : memref<1x1x256xf32, #tpu.memory_space<vmem>>, vector<1x1x128xf32>
    tpu.vector_store %arg10[%c0_25, %c0_26, %c0_27], %35 {strides = array<i32>} : memref<1x1x256xf32, #tpu.memory_space<vmem>>, vector<1x1x128xf32>,
    %c0_28 = arith.constant 0 : index
    %c0_29 = arith.constant 0 : index
    %c128 = arith.constant 128 : index
    %37 = vector.load %arg10[%c0_28, %c0_29, %c128] : memref<1x1x256xf32, #tpu.memory_space<vmem>>, vector<1x1x128xf32>
    %38 = vector.shape_cast %29 : vector<1x128xf32> to vector<1x1x128xf32>
    %39 = arith.addf %37, %38 : vector<1x1x128xf32>
    %c0_30 = arith.constant 0 : index
    %c0_31 = arith.constant 0 : index
    %c128_32 = arith.constant 128 : index
    %40 = vector.load %arg10[%c0_30, %c0_31, %c128_32] : memref<1x1x256xf32, #tpu.memory_space<vmem>>, vector<1x1x128xf32>
    tpu.vector_store %arg10[%c0_30, %c0_31, %c128_32], %39 {strides = array<i32>} : memref<1x1x256xf32, #tpu.memory_space<vmem>>, vector<1x1x128xf32>,
    %41 = vector.shape_cast %24 : vector<256x128xf32> to vector<32x8x128xf32>
    %cst_33 = arith.constant dense<0xFF800000> : vector<32x128xf32>
    %42 = vector.multi_reduction <maximumf>, %41, %cst_33 [1] : vector<32x8x128xf32> to vector<32x128xf32>
    %c0_34 = arith.constant 0 : index
    %c0_35 = arith.constant 0 : index
    %43 = vector.load %arg11[%c0_34, %c0_35] : memref<32x128xf32, #tpu.memory_space<vmem>>, vector<32x128xf32>
    tpu.vector_store %arg11[%c0_34, %c0_35], %42 {strides = array<i32>} : memref<32x128xf32, #tpu.memory_space<vmem>>, vector<32x128xf32>,
    %cst_36 = arith.constant dense<0x7F800000> : vector<32x128xf32>
    %44 = vector.multi_reduction <minimumf>, %41, %cst_36 [1] : vector<32x8x128xf32> to vector<32x128xf32>
    %c0_37 = arith.constant 0 : index
    %c0_38 = arith.constant 0 : index
    %45 = vector.load %arg12[%c0_37, %c0_38] : memref<32x128xf32, #tpu.memory_space<vmem>>, vector<32x128xf32>
    tpu.vector_store %arg12[%c0_37, %c0_38], %44 {strides = array<i32>} : memref<32x128xf32, #tpu.memory_space<vmem>>, vector<32x128xf32>,
    return
  }
  func.func @transform_0(%arg0: i32, %arg1: i32) -> (i32, i32) {
    %c1_i32 = arith.constant 1 : i32
    %0 = arith.muli %arg0, %c1_i32 : i32
    %1 = arith.addi %0, %arg1 : i32
    %c0_i32 = arith.constant 0 : i32
    %c0_i32_0 = arith.constant 0 : i32
    return %1, %c0_i32 : i32, i32
  }
  func.func @transform_1(%arg0: i32, %arg1: i32) -> (i32, i32) {
    %c0_i32 = arith.constant 0 : i32
    %c0_i32_0 = arith.constant 0 : i32
    %c0_i32_1 = arith.constant 0 : i32
    return %c0_i32, %c0_i32_0 : i32, i32
  }
  func.func @transform_2(%arg0: i32, %arg1: i32) -> (i32, i32) {
    %c0_i32 = arith.constant 0 : i32
    %c0_i32_0 = arith.constant 0 : i32
    %c0_i32_1 = arith.constant 0 : i32
    return %c0_i32, %c0_i32_0 : i32, i32
  }
  func.func @transform_3(%arg0: i32, %arg1: i32) -> (i32, i32) {
    %c0_i32 = arith.constant 0 : i32
    %c0_i32_0 = arith.constant 0 : i32
    %c0_i32_1 = arith.constant 0 : i32
    return %c0_i32, %c0_i32_0 : i32, i32
  }
  func.func @transform_4(%arg0: i32, %arg1: i32) -> (i32, i32) {
    %c0_i32 = arith.constant 0 : i32
    %c0_i32_0 = arith.constant 0 : i32
    %c0_i32_1 = arith.constant 0 : i32
    return %c0_i32, %c0_i32_0 : i32, i32
  }
  func.func @transform_5(%arg0: i32, %arg1: i32) -> (i32, i32) {
    %c0_i32 = arith.constant 0 : i32
    %c0_i32_0 = arith.constant 0 : i32
    %c0_i32_1 = arith.constant 0 : i32
    return %c0_i32, %c0_i32_0 : i32, i32
  }
  func.func @transform_6(%arg0: i32, %arg1: i32) -> (i32, i32) {
    %c0_i32 = arith.constant 0 : i32
    %c0_i32_0 = arith.constant 0 : i32
    %c0_i32_1 = arith.constant 0 : i32
    return %c0_i32, %c0_i32_0 : i32, i32
  }
  func.func @transform_7(%arg0: i32, %arg1: i32) -> (i32, i32) {
    %c0_i32 = arith.constant 0 : i32
    %c0_i32_0 = arith.constant 0 : i32
    %c0_i32_1 = arith.constant 0 : i32
    return %c0_i32, %c0_i32_0 : i32, i32
  }
  func.func @transform_8(%arg0: i32, %arg1: i32) -> (i32, i32, i32) {
    %c0_i32 = arith.constant 0 : i32
    %c0_i32_0 = arith.constant 0 : i32
    %c0_i32_1 = arith.constant 0 : i32
    return %arg0, %c0_i32, %c0_i32_0 : i32, i32, i32
  }
  func.func @transform_9(%arg0: i32, %arg1: i32) -> (i32, i32) {
    %c1_i32 = arith.constant 1 : i32
    %0 = arith.muli %arg0, %c1_i32 : i32
    %1 = arith.addi %0, %arg1 : i32
    %c0_i32 = arith.constant 0 : i32
    %c0_i32_0 = arith.constant 0 : i32
    return %1, %c0_i32 : i32, i32
  }
  func.func @transform_10(%arg0: i32, %arg1: i32) -> (i32, i32) {
    %c1_i32 = arith.constant 1 : i32
    %0 = arith.muli %arg0, %c1_i32 : i32
    %1 = arith.addi %0, %arg1 : i32
    %c0_i32 = arith.constant 0 : i32
    %c0_i32_0 = arith.constant 0 : i32
    return %1, %c0_i32 : i32, i32
  }
}

module attributes {stable_mosaic.version = 11 : i64} {
  func.func @_fused_mlp_stats_kernel(%arg0: i32, %arg1: i32, %arg2: memref<512x8xbf16, #tpu.memory_space<vmem>>, %arg3: memref<8x128xbf16, #tpu.memory_space<vmem>>, %arg4: memref<128x128xbf16, #tpu.memory_space<vmem>>, %arg5: memref<1x128xf32, #tpu.memory_space<vmem>>, %arg6: memref<1x128xf32, #tpu.memory_space<vmem>>, %arg7: memref<1x1x256xf32, #tpu.memory_space<vmem>>) attributes {dimension_semantics = [#tpu.dimension_semantics<parallel>, #tpu.dimension_semantics<arbitrary>], iteration_bounds = array<i64: 1, 1>, scalar_prefetch = 0 : i64, scratch_operands = 0 : i64, tpu.core_type = #tpu.core_type<tc>, window_params = [{transform_indices = @transform_0, window_bounds = array<i64: 512, 8>}, {pipeline_mode = #tpu.pipeline_mode<synchronous>, transform_indices = @transform_1, window_bounds = array<i64: 8, 128>}, {pipeline_mode = #tpu.pipeline_mode<synchronous>, transform_indices = @transform_2, window_bounds = array<i64: 128, 128>}, {pipeline_mode = #tpu.pipeline_mode<synchronous>, transform_indices = @transform_3, window_bounds = array<i64: 1, 128>}, {pipeline_mode = #tpu.pipeline_mode<synchronous>, transform_indices = @transform_4, window_bounds = array<i64: 1, 128>}, {transform_indices = @transform_5, window_bounds = array<i64: 1, 1, 256>}]} {
    %c0 = arith.constant 0 : index
    %c0_0 = arith.constant 0 : index
    %0 = vector.load %arg2[%c0, %c0_0] : memref<512x8xbf16, #tpu.memory_space<vmem>>, vector<512x8xbf16>
    %c0_1 = arith.constant 0 : index
    %c0_2 = arith.constant 0 : index
    %1 = vector.load %arg3[%c0_1, %c0_2] : memref<8x128xbf16, #tpu.memory_space<vmem>>, vector<8x128xbf16>
    %cst = arith.constant dense<0.000000e+00> : vector<512x128xf32>
    %2 = tpu.matmul %0, %1, %cst {dimension_numbers = #tpu.dot_dimension_numbers<[1], [0], [0], [1], [0, 0, 1, 1], [], []>} : vector<512x8xbf16>, vector<8x128xbf16>, vector<512x128xf32> -> vector<512x128xf32>
    %c0_3 = arith.constant 0 : index
    %c0_4 = arith.constant 0 : index
    %3 = vector.load %arg5[%c0_3, %c0_4] : memref<1x128xf32, #tpu.memory_space<vmem>>, vector<1x128xf32>
    %4 = vector.broadcast %3 : vector<1x128xf32> to vector<512x128xf32>
    %5 = arith.mulf %2, %4 : vector<512x128xf32>
    %c0_5 = arith.constant 0 : index
    %c0_6 = arith.constant 0 : index
    %6 = vector.load %arg6[%c0_5, %c0_6] : memref<1x128xf32, #tpu.memory_space<vmem>>, vector<1x128xf32>
    %7 = vector.broadcast %6 : vector<1x128xf32> to vector<512x128xf32>
    %8 = arith.addf %5, %7 : vector<512x128xf32>
    %cst_7 = arith.constant 0.000000e+00 : f32
    %9 = vector.broadcast %cst_7 : f32 to vector<512x128xf32>
    %10 = arith.maximumf %8, %9 : vector<512x128xf32>
    %11 = arith.truncf %10 : vector<512x128xf32> to vector<512x128xbf16>
    %c0_8 = arith.constant 0 : index
    %c0_9 = arith.constant 0 : index
    %12 = vector.load %arg4[%c0_8, %c0_9] : memref<128x128xbf16, #tpu.memory_space<vmem>>, vector<128x128xbf16>
    %cst_10 = arith.constant dense<0.000000e+00> : vector<512x128xf32>
    %13 = tpu.matmul %11, %12, %cst_10 {dimension_numbers = #tpu.dot_dimension_numbers<[1], [0], [0], [1], [0, 0, 1, 1], [], []>} : vector<512x128xbf16>, vector<128x128xbf16>, vector<512x128xf32> -> vector<512x128xf32>
    %cst_11 = arith.constant dense<0.000000e+00> : vector<128xf32>
    %14 = vector.multi_reduction <add>, %13, %cst_11 [0] : vector<512x128xf32> to vector<128xf32>
    %15 = vector.shape_cast %14 : vector<128xf32> to vector<1x128xf32>
    %16 = arith.mulf %13, %13 : vector<512x128xf32>
    %cst_12 = arith.constant dense<0.000000e+00> : vector<128xf32>
    %17 = vector.multi_reduction <add>, %16, %cst_12 [0] : vector<512x128xf32> to vector<128xf32>
    %18 = vector.shape_cast %17 : vector<128xf32> to vector<1x128xf32>
    %c0_i32 = arith.constant 0 : i32
    %19 = arith.cmpi eq, %arg1, %c0_i32 : i32
    %20 = arith.extui %19 : i1 to i32
    %c0_i32_13 = arith.constant 0 : i32
    %21 = arith.cmpi ne, %20, %c0_i32_13 : i32
    scf.if %21 {
      %cst_25 = arith.constant 0.000000e+00 : f32
      %30 = vector.broadcast %cst_25 : f32 to vector<1x1x256xf32>
      %c0_26 = arith.constant 0 : index
      %c0_27 = arith.constant 0 : index
      %c0_28 = arith.constant 0 : index
      %31 = vector.load %arg7[%c0_26, %c0_27, %c0_28] : memref<1x1x256xf32, #tpu.memory_space<vmem>>, vector<1x1x256xf32>
      tpu.vector_store %arg7[%c0_26, %c0_27, %c0_28], %30 {strides = array<i32>} : memref<1x1x256xf32, #tpu.memory_space<vmem>>, vector<1x1x256xf32>,
    } else {
    }
    %c0_14 = arith.constant 0 : index
    %c0_15 = arith.constant 0 : index
    %c0_16 = arith.constant 0 : index
    %22 = vector.load %arg7[%c0_14, %c0_15, %c0_16] : memref<1x1x256xf32, #tpu.memory_space<vmem>>, vector<1x1x128xf32>
    %23 = vector.shape_cast %15 : vector<1x128xf32> to vector<1x1x128xf32>
    %24 = arith.addf %22, %23 : vector<1x1x128xf32>
    %c0_17 = arith.constant 0 : index
    %c0_18 = arith.constant 0 : index
    %c0_19 = arith.constant 0 : index
    %25 = vector.load %arg7[%c0_17, %c0_18, %c0_19] : memref<1x1x256xf32, #tpu.memory_space<vmem>>, vector<1x1x128xf32>
    tpu.vector_store %arg7[%c0_17, %c0_18, %c0_19], %24 {strides = array<i32>} : memref<1x1x256xf32, #tpu.memory_space<vmem>>, vector<1x1x128xf32>,
    %c0_20 = arith.constant 0 : index
    %c0_21 = arith.constant 0 : index
    %c128 = arith.constant 128 : index
    %26 = vector.load %arg7[%c0_20, %c0_21, %c128] : memref<1x1x256xf32, #tpu.memory_space<vmem>>, vector<1x1x128xf32>
    %27 = vector.shape_cast %18 : vector<1x128xf32> to vector<1x1x128xf32>
    %28 = arith.addf %26, %27 : vector<1x1x128xf32>
    %c0_22 = arith.constant 0 : index
    %c0_23 = arith.constant 0 : index
    %c128_24 = arith.constant 128 : index
    %29 = vector.load %arg7[%c0_22, %c0_23, %c128_24] : memref<1x1x256xf32, #tpu.memory_space<vmem>>, vector<1x1x128xf32>
    tpu.vector_store %arg7[%c0_22, %c0_23, %c128_24], %28 {strides = array<i32>} : memref<1x1x256xf32, #tpu.memory_space<vmem>>, vector<1x1x128xf32>,
    return
  }
  func.func @transform_0(%arg0: i32, %arg1: i32) -> (i32, i32) {
    %c1_i32 = arith.constant 1 : i32
    %0 = arith.muli %arg0, %c1_i32 : i32
    %1 = arith.addi %0, %arg1 : i32
    %c0_i32 = arith.constant 0 : i32
    %c0_i32_0 = arith.constant 0 : i32
    return %1, %c0_i32 : i32, i32
  }
  func.func @transform_1(%arg0: i32, %arg1: i32) -> (i32, i32) {
    %c0_i32 = arith.constant 0 : i32
    %c0_i32_0 = arith.constant 0 : i32
    %c0_i32_1 = arith.constant 0 : i32
    return %c0_i32, %c0_i32_0 : i32, i32
  }
  func.func @transform_2(%arg0: i32, %arg1: i32) -> (i32, i32) {
    %c0_i32 = arith.constant 0 : i32
    %c0_i32_0 = arith.constant 0 : i32
    %c0_i32_1 = arith.constant 0 : i32
    return %c0_i32, %c0_i32_0 : i32, i32
  }
  func.func @transform_3(%arg0: i32, %arg1: i32) -> (i32, i32) {
    %c0_i32 = arith.constant 0 : i32
    %c0_i32_0 = arith.constant 0 : i32
    %c0_i32_1 = arith.constant 0 : i32
    return %c0_i32, %c0_i32_0 : i32, i32
  }
  func.func @transform_4(%arg0: i32, %arg1: i32) -> (i32, i32) {
    %c0_i32 = arith.constant 0 : i32
    %c0_i32_0 = arith.constant 0 : i32
    %c0_i32_1 = arith.constant 0 : i32
    return %c0_i32, %c0_i32_0 : i32, i32
  }
  func.func @transform_5(%arg0: i32, %arg1: i32) -> (i32, i32, i32) {
    %c0_i32 = arith.constant 0 : i32
    %c0_i32_0 = arith.constant 0 : i32
    %c0_i32_1 = arith.constant 0 : i32
    return %arg0, %c0_i32, %c0_i32_0 : i32, i32, i32
  }
}

module attributes {stable_mosaic.version = 11 : i64} {
  func.func @_fused_mlp_stats_kernel(%arg0: i32, %arg1: i32, %arg2: memref<512x8xbf16, #tpu.memory_space<vmem>>, %arg3: memref<8x128xbf16, #tpu.memory_space<vmem>>, %arg4: memref<128x128xbf16, #tpu.memory_space<vmem>>, %arg5: memref<128x128xbf16, #tpu.memory_space<vmem>>, %arg6: memref<1x128xf32, #tpu.memory_space<vmem>>, %arg7: memref<1x128xf32, #tpu.memory_space<vmem>>, %arg8: memref<1x128xf32, #tpu.memory_space<vmem>>, %arg9: memref<1x128xf32, #tpu.memory_space<vmem>>, %arg10: memref<1x1x256xf32, #tpu.memory_space<vmem>>, %arg11: memref<32x128xf32, #tpu.memory_space<vmem>>, %arg12: memref<32x128xf32, #tpu.memory_space<vmem>>) attributes {dimension_semantics = [#tpu.dimension_semantics<parallel>, #tpu.dimension_semantics<arbitrary>], iteration_bounds = array<i64: 1, 1>, scalar_prefetch = 0 : i64, scratch_operands = 0 : i64, tpu.core_type = #tpu.core_type<tc>, window_params = [{transform_indices = @transform_0, window_bounds = array<i64: 512, 8>}, {pipeline_mode = #tpu.pipeline_mode<synchronous>, transform_indices = @transform_1, window_bounds = array<i64: 8, 128>}, {pipeline_mode = #tpu.pipeline_mode<synchronous>, transform_indices = @transform_2, window_bounds = array<i64: 128, 128>}, {pipeline_mode = #tpu.pipeline_mode<synchronous>, transform_indices = @transform_3, window_bounds = array<i64: 128, 128>}, {pipeline_mode = #tpu.pipeline_mode<synchronous>, transform_indices = @transform_4, window_bounds = array<i64: 1, 128>}, {pipeline_mode = #tpu.pipeline_mode<synchronous>, transform_indices = @transform_5, window_bounds = array<i64: 1, 128>}, {pipeline_mode = #tpu.pipeline_mode<synchronous>, transform_indices = @transform_6, window_bounds = array<i64: 1, 128>}, {pipeline_mode = #tpu.pipeline_mode<synchronous>, transform_indices = @transform_7, window_bounds = array<i64: 1, 128>}, {transform_indices = @transform_8, window_bounds = array<i64: 1, 1, 256>}, {transform_indices = @transform_9, window_bounds = array<i64: 32, 128>}, {transform_indices = @transform_10, window_bounds = array<i64: 32, 128>}]} {
    %c0 = arith.constant 0 : index
    %c0_0 = arith.constant 0 : index
    %0 = vector.load %arg2[%c0, %c0_0] : memref<512x8xbf16, #tpu.memory_space<vmem>>, vector<512x8xbf16>
    %c0_1 = arith.constant 0 : index
    %c0_2 = arith.constant 0 : index
    %1 = vector.load %arg3[%c0_1, %c0_2] : memref<8x128xbf16, #tpu.memory_space<vmem>>, vector<8x128xbf16>
    %cst = arith.constant dense<0.000000e+00> : vector<512x128xf32>
    %2 = tpu.matmul %0, %1, %cst {dimension_numbers = #tpu.dot_dimension_numbers<[1], [0], [0], [1], [0, 0, 1, 1], [], []>} : vector<512x8xbf16>, vector<8x128xbf16>, vector<512x128xf32> -> vector<512x128xf32>
    %c0_3 = arith.constant 0 : index
    %c0_4 = arith.constant 0 : index
    %3 = vector.load %arg6[%c0_3, %c0_4] : memref<1x128xf32, #tpu.memory_space<vmem>>, vector<1x128xf32>
    %4 = vector.broadcast %3 : vector<1x128xf32> to vector<512x128xf32>
    %5 = arith.mulf %2, %4 : vector<512x128xf32>
    %c0_5 = arith.constant 0 : index
    %c0_6 = arith.constant 0 : index
    %6 = vector.load %arg8[%c0_5, %c0_6] : memref<1x128xf32, #tpu.memory_space<vmem>>, vector<1x128xf32>
    %7 = vector.broadcast %6 : vector<1x128xf32> to vector<512x128xf32>
    %8 = arith.addf %5, %7 : vector<512x128xf32>
    %cst_7 = arith.constant 0.000000e+00 : f32
    %9 = vector.broadcast %cst_7 : f32 to vector<512x128xf32>
    %10 = arith.maximumf %8, %9 : vector<512x128xf32>
    %11 = arith.truncf %10 : vector<512x128xf32> to vector<512x128xbf16>
    %c0_8 = arith.constant 0 : index
    %c0_9 = arith.constant 0 : index
    %12 = vector.load %arg4[%c0_8, %c0_9] : memref<128x128xbf16, #tpu.memory_space<vmem>>, vector<128x128xbf16>
    %cst_10 = arith.constant dense<0.000000e+00> : vector<512x128xf32>
    %13 = tpu.matmul %11, %12, %cst_10 {dimension_numbers = #tpu.dot_dimension_numbers<[1], [0], [0], [1], [0, 0, 1, 1], [], []>} : vector<512x128xbf16>, vector<128x128xbf16>, vector<512x128xf32> -> vector<512x128xf32>
    %c0_11 = arith.constant 0 : index
    %c0_12 = arith.constant 0 : index
    %14 = vector.load %arg7[%c0_11, %c0_12] : memref<1x128xf32, #tpu.memory_space<vmem>>, vector<1x128xf32>
    %15 = vector.broadcast %14 : vector<1x128xf32> to vector<512x128xf32>
    %16 = arith.mulf %13, %15 : vector<512x128xf32>
    %c0_13 = arith.constant 0 : index
    %c0_14 = arith.constant 0 : index
    %17 = vector.load %arg9[%c0_13, %c0_14] : memref<1x128xf32, #tpu.memory_space<vmem>>, vector<1x128xf32>
    %18 = vector.broadcast %17 : vector<1x128xf32> to vector<512x128xf32>
    %19 = arith.addf %16, %18 : vector<512x128xf32>
    %cst_15 = arith.constant 0.000000e+00 : f32
    %20 = vector.broadcast %cst_15 : f32 to vector<512x128xf32>
    %21 = arith.maximumf %19, %20 : vector<512x128xf32>
    %22 = arith.truncf %21 : vector<512x128xf32> to vector<512x128xbf16>
    %c0_16 = arith.constant 0 : index
    %c0_17 = arith.constant 0 : index
    %23 = vector.load %arg5[%c0_16, %c0_17] : memref<128x128xbf16, #tpu.memory_space<vmem>>, vector<128x128xbf16>
    %cst_18 = arith.constant dense<0.000000e+00> : vector<512x128xf32>
    %24 = tpu.matmul %22, %23, %cst_18 {dimension_numbers = #tpu.dot_dimension_numbers<[1], [0], [0], [1], [0, 0, 1, 1], [], []>} : vector<512x128xbf16>, vector<128x128xbf16>, vector<512x128xf32> -> vector<512x128xf32>
    %cst_19 = arith.constant dense<0.000000e+00> : vector<128xf32>
    %25 = vector.multi_reduction <add>, %24, %cst_19 [0] : vector<512x128xf32> to vector<128xf32>
    %26 = vector.shape_cast %25 : vector<128xf32> to vector<1x128xf32>
    %27 = arith.mulf %24, %24 : vector<512x128xf32>
    %cst_20 = arith.constant dense<0.000000e+00> : vector<128xf32>
    %28 = vector.multi_reduction <add>, %27, %cst_20 [0] : vector<512x128xf32> to vector<128xf32>
    %29 = vector.shape_cast %28 : vector<128xf32> to vector<1x128xf32>
    %c0_i32 = arith.constant 0 : i32
    %30 = arith.cmpi eq, %arg1, %c0_i32 : i32
    %31 = arith.extui %30 : i1 to i32
    %c0_i32_21 = arith.constant 0 : i32
    %32 = arith.cmpi ne, %31, %c0_i32_21 : i32
    scf.if %32 {
      %cst_39 = arith.constant 0.000000e+00 : f32
      %46 = vector.broadcast %cst_39 : f32 to vector<1x1x256xf32>
      %c0_40 = arith.constant 0 : index
      %c0_41 = arith.constant 0 : index
      %c0_42 = arith.constant 0 : index
      %47 = vector.load %arg10[%c0_40, %c0_41, %c0_42] : memref<1x1x256xf32, #tpu.memory_space<vmem>>, vector<1x1x256xf32>
      tpu.vector_store %arg10[%c0_40, %c0_41, %c0_42], %46 {strides = array<i32>} : memref<1x1x256xf32, #tpu.memory_space<vmem>>, vector<1x1x256xf32>,
    } else {
    }
    %c0_22 = arith.constant 0 : index
    %c0_23 = arith.constant 0 : index
    %c0_24 = arith.constant 0 : index
    %33 = vector.load %arg10[%c0_22, %c0_23, %c0_24] : memref<1x1x256xf32, #tpu.memory_space<vmem>>, vector<1x1x128xf32>
    %34 = vector.shape_cast %26 : vector<1x128xf32> to vector<1x1x128xf32>
    %35 = arith.addf %33, %34 : vector<1x1x128xf32>
    %c0_25 = arith.constant 0 : index
    %c0_26 = arith.constant 0 : index
    %c0_27 = arith.constant 0 : index
    %36 = vector.load %arg10[%c0_25, %c0_26, %c0_27] : memref<1x1x256xf32, #tpu.memory_space<vmem>>, vector<1x1x128xf32>
    tpu.vector_store %arg10[%c0_25, %c0_26, %c0_27], %35 {strides = array<i32>} : memref<1x1x256xf32, #tpu.memory_space<vmem>>, vector<1x1x128xf32>,
    %c0_28 = arith.constant 0 : index
    %c0_29 = arith.constant 0 : index
    %c128 = arith.constant 128 : index
    %37 = vector.load %arg10[%c0_28, %c0_29, %c128] : memref<1x1x256xf32, #tpu.memory_space<vmem>>, vector<1x1x128xf32>
    %38 = vector.shape_cast %29 : vector<1x128xf32> to vector<1x1x128xf32>
    %39 = arith.addf %37, %38 : vector<1x1x128xf32>
    %c0_30 = arith.constant 0 : index
    %c0_31 = arith.constant 0 : index
    %c128_32 = arith.constant 128 : index
    %40 = vector.load %arg10[%c0_30, %c0_31, %c128_32] : memref<1x1x256xf32, #tpu.memory_space<vmem>>, vector<1x1x128xf32>
    tpu.vector_store %arg10[%c0_30, %c0_31, %c128_32], %39 {strides = array<i32>} : memref<1x1x256xf32, #tpu.memory_space<vmem>>, vector<1x1x128xf32>,
    %41 = vector.shape_cast %24 : vector<512x128xf32> to vector<32x16x128xf32>
    %cst_33 = arith.constant dense<0xFF800000> : vector<32x128xf32>
    %42 = vector.multi_reduction <maximumf>, %41, %cst_33 [1] : vector<32x16x128xf32> to vector<32x128xf32>
    %c0_34 = arith.constant 0 : index
    %c0_35 = arith.constant 0 : index
    %43 = vector.load %arg11[%c0_34, %c0_35] : memref<32x128xf32, #tpu.memory_space<vmem>>, vector<32x128xf32>
    tpu.vector_store %arg11[%c0_34, %c0_35], %42 {strides = array<i32>} : memref<32x128xf32, #tpu.memory_space<vmem>>, vector<32x128xf32>,
    %cst_36 = arith.constant dense<0x7F800000> : vector<32x128xf32>
    %44 = vector.multi_reduction <minimumf>, %41, %cst_36 [1] : vector<32x16x128xf32> to vector<32x128xf32>
    %c0_37 = arith.constant 0 : index
    %c0_38 = arith.constant 0 : index
    %45 = vector.load %arg12[%c0_37, %c0_38] : memref<32x128xf32, #tpu.memory_space<vmem>>, vector<32x128xf32>
    tpu.vector_store %arg12[%c0_37, %c0_38], %44 {strides = array<i32>} : memref<32x128xf32, #tpu.memory_space<vmem>>, vector<32x128xf32>,
    return
  }
  func.func @transform_0(%arg0: i32, %arg1: i32) -> (i32, i32) {
    %c1_i32 = arith.constant 1 : i32
    %0 = arith.muli %arg0, %c1_i32 : i32
    %1 = arith.addi %0, %arg1 : i32
    %c0_i32 = arith.constant 0 : i32
    %c0_i32_0 = arith.constant 0 : i32
    return %1, %c0_i32 : i32, i32
  }
  func.func @transform_1(%arg0: i32, %arg1: i32) -> (i32, i32) {
    %c0_i32 = arith.constant 0 : i32
    %c0_i32_0 = arith.constant 0 : i32
    %c0_i32_1 = arith.constant 0 : i32
    return %c0_i32, %c0_i32_0 : i32, i32
  }
  func.func @transform_2(%arg0: i32, %arg1: i32) -> (i32, i32) {
    %c0_i32 = arith.constant 0 : i32
    %c0_i32_0 = arith.constant 0 : i32
    %c0_i32_1 = arith.constant 0 : i32
    return %c0_i32, %c0_i32_0 : i32, i32
  }
  func.func @transform_3(%arg0: i32, %arg1: i32) -> (i32, i32) {
    %c0_i32 = arith.constant 0 : i32
    %c0_i32_0 = arith.constant 0 : i32
    %c0_i32_1 = arith.constant 0 : i32
    return %c0_i32, %c0_i32_0 : i32, i32
  }
  func.func @transform_4(%arg0: i32, %arg1: i32) -> (i32, i32) {
    %c0_i32 = arith.constant 0 : i32
    %c0_i32_0 = arith.constant 0 : i32
    %c0_i32_1 = arith.constant 0 : i32
    return %c0_i32, %c0_i32_0 : i32, i32
  }
  func.func @transform_5(%arg0: i32, %arg1: i32) -> (i32, i32) {
    %c0_i32 = arith.constant 0 : i32
    %c0_i32_0 = arith.constant 0 : i32
    %c0_i32_1 = arith.constant 0 : i32
    return %c0_i32, %c0_i32_0 : i32, i32
  }
  func.func @transform_6(%arg0: i32, %arg1: i32) -> (i32, i32) {
    %c0_i32 = arith.constant 0 : i32
    %c0_i32_0 = arith.constant 0 : i32
    %c0_i32_1 = arith.constant 0 : i32
    return %c0_i32, %c0_i32_0 : i32, i32
  }
  func.func @transform_7(%arg0: i32, %arg1: i32) -> (i32, i32) {
    %c0_i32 = arith.constant 0 : i32
    %c0_i32_0 = arith.constant 0 : i32
    %c0_i32_1 = arith.constant 0 : i32
    return %c0_i32, %c0_i32_0 : i32, i32
  }
  func.func @transform_8(%arg0: i32, %arg1: i32) -> (i32, i32, i32) {
    %c0_i32 = arith.constant 0 : i32
    %c0_i32_0 = arith.constant 0 : i32
    %c0_i32_1 = arith.constant 0 : i32
    return %arg0, %c0_i32, %c0_i32_0 : i32, i32, i32
  }
  func.func @transform_9(%arg0: i32, %arg1: i32) -> (i32, i32) {
    %c1_i32 = arith.constant 1 : i32
    %0 = arith.muli %arg0, %c1_i32 : i32
    %1 = arith.addi %0, %arg1 : i32
    %c0_i32 = arith.constant 0 : i32
    %c0_i32_0 = arith.constant 0 : i32
    return %1, %c0_i32 : i32, i32
  }
  func.func @transform_10(%arg0: i32, %arg1: i32) -> (i32, i32) {
    %c1_i32 = arith.constant 1 : i32
    %0 = arith.muli %arg0, %c1_i32 : i32
    %1 = arith.addi %0, %arg1 : i32
    %c0_i32 = arith.constant 0 : i32
    %c0_i32_0 = arith.constant 0 : i32
    return %1, %c0_i32 : i32, i32
  }
}

module attributes {stable_mosaic.version = 11 : i64} {
  func.func @_fused_mlp_stats_kernel(%arg0: i32, %arg1: i32, %arg2: memref<512x8xbf16, #tpu.memory_space<vmem>>, %arg3: memref<8x128xbf16, #tpu.memory_space<vmem>>, %arg4: memref<1x1x256xf32, #tpu.memory_space<vmem>>) attributes {dimension_semantics = [#tpu.dimension_semantics<parallel>, #tpu.dimension_semantics<arbitrary>], iteration_bounds = array<i64: 1, 1>, scalar_prefetch = 0 : i64, scratch_operands = 0 : i64, tpu.core_type = #tpu.core_type<tc>, window_params = [{transform_indices = @transform_0, window_bounds = array<i64: 512, 8>}, {pipeline_mode = #tpu.pipeline_mode<synchronous>, transform_indices = @transform_1, window_bounds = array<i64: 8, 128>}, {transform_indices = @transform_2, window_bounds = array<i64: 1, 1, 256>}]} {
    %c0 = arith.constant 0 : index
    %c0_0 = arith.constant 0 : index
    %0 = vector.load %arg2[%c0, %c0_0] : memref<512x8xbf16, #tpu.memory_space<vmem>>, vector<512x8xbf16>
    %c0_1 = arith.constant 0 : index
    %c0_2 = arith.constant 0 : index
    %1 = vector.load %arg3[%c0_1, %c0_2] : memref<8x128xbf16, #tpu.memory_space<vmem>>, vector<8x128xbf16>
    %cst = arith.constant dense<0.000000e+00> : vector<512x128xf32>
    %2 = tpu.matmul %0, %1, %cst {dimension_numbers = #tpu.dot_dimension_numbers<[1], [0], [0], [1], [0, 0, 1, 1], [], []>} : vector<512x8xbf16>, vector<8x128xbf16>, vector<512x128xf32> -> vector<512x128xf32>
    %cst_3 = arith.constant dense<0.000000e+00> : vector<128xf32>
    %3 = vector.multi_reduction <add>, %2, %cst_3 [0] : vector<512x128xf32> to vector<128xf32>
    %4 = vector.shape_cast %3 : vector<128xf32> to vector<1x128xf32>
    %5 = arith.mulf %2, %2 : vector<512x128xf32>
    %cst_4 = arith.constant dense<0.000000e+00> : vector<128xf32>
    %6 = vector.multi_reduction <add>, %5, %cst_4 [0] : vector<512x128xf32> to vector<128xf32>
    %7 = vector.shape_cast %6 : vector<128xf32> to vector<1x128xf32>
    %c0_i32 = arith.constant 0 : i32
    %8 = arith.cmpi eq, %arg1, %c0_i32 : i32
    %9 = arith.extui %8 : i1 to i32
    %c0_i32_5 = arith.constant 0 : i32
    %10 = arith.cmpi ne, %9, %c0_i32_5 : i32
    scf.if %10 {
      %cst_17 = arith.constant 0.000000e+00 : f32
      %19 = vector.broadcast %cst_17 : f32 to vector<1x1x256xf32>
      %c0_18 = arith.constant 0 : index
      %c0_19 = arith.constant 0 : index
      %c0_20 = arith.constant 0 : index
      %20 = vector.load %arg4[%c0_18, %c0_19, %c0_20] : memref<1x1x256xf32, #tpu.memory_space<vmem>>, vector<1x1x256xf32>
      tpu.vector_store %arg4[%c0_18, %c0_19, %c0_20], %19 {strides = array<i32>} : memref<1x1x256xf32, #tpu.memory_space<vmem>>, vector<1x1x256xf32>,
    } else {
    }
    %c0_6 = arith.constant 0 : index
    %c0_7 = arith.constant 0 : index
    %c0_8 = arith.constant 0 : index
    %11 = vector.load %arg4[%c0_6, %c0_7, %c0_8] : memref<1x1x256xf32, #tpu.memory_space<vmem>>, vector<1x1x128xf32>
    %12 = vector.shape_cast %4 : vector<1x128xf32> to vector<1x1x128xf32>
    %13 = arith.addf %11, %12 : vector<1x1x128xf32>
    %c0_9 = arith.constant 0 : index
    %c0_10 = arith.constant 0 : index
    %c0_11 = arith.constant 0 : index
    %14 = vector.load %arg4[%c0_9, %c0_10, %c0_11] : memref<1x1x256xf32, #tpu.memory_space<vmem>>, vector<1x1x128xf32>
    tpu.vector_store %arg4[%c0_9, %c0_10, %c0_11], %13 {strides = array<i32>} : memref<1x1x256xf32, #tpu.memory_space<vmem>>, vector<1x1x128xf32>,
    %c0_12 = arith.constant 0 : index
    %c0_13 = arith.constant 0 : index
    %c128 = arith.constant 128 : index
    %15 = vector.load %arg4[%c0_12, %c0_13, %c128] : memref<1x1x256xf32, #tpu.memory_space<vmem>>, vector<1x1x128xf32>
    %16 = vector.shape_cast %7 : vector<1x128xf32> to vector<1x1x128xf32>
    %17 = arith.addf %15, %16 : vector<1x1x128xf32>
    %c0_14 = arith.constant 0 : index
    %c0_15 = arith.constant 0 : index
    %c128_16 = arith.constant 128 : index
    %18 = vector.load %arg4[%c0_14, %c0_15, %c128_16] : memref<1x1x256xf32, #tpu.memory_space<vmem>>, vector<1x1x128xf32>
    tpu.vector_store %arg4[%c0_14, %c0_15, %c128_16], %17 {strides = array<i32>} : memref<1x1x256xf32, #tpu.memory_space<vmem>>, vector<1x1x128xf32>,
    return
  }
  func.func @transform_0(%arg0: i32, %arg1: i32) -> (i32, i32) {
    %c1_i32 = arith.constant 1 : i32
    %0 = arith.muli %arg0, %c1_i32 : i32
    %1 = arith.addi %0, %arg1 : i32
    %c0_i32 = arith.constant 0 : i32
    %c0_i32_0 = arith.constant 0 : i32
    return %1, %c0_i32 : i32, i32
  }
  func.func @transform_1(%arg0: i32, %arg1: i32) -> (i32, i32) {
    %c0_i32 = arith.constant 0 : i32
    %c0_i32_0 = arith.constant 0 : i32
    %c0_i32_1 = arith.constant 0 : i32
    return %c0_i32, %c0_i32_0 : i32, i32
  }
  func.func @transform_2(%arg0: i32, %arg1: i32) -> (i32, i32, i32) {
    %c0_i32 = arith.constant 0 : i32
    %c0_i32_0 = arith.constant 0 : i32
    %c0_i32_1 = arith.constant 0 : i32
    return %arg0, %c0_i32, %c0_i32_0 : i32, i32, i32
  }
}

</mosaic_0001>

<llo_original>
// kernel: custom-call.12
$region0: #{custom-call.12}
  %s0 = inlined_call_operand.vmem [shape: f32[2,64], index: 0, kind: output, shape index: {}]

// kernel: set_abstraction_msg2.6
$region0: #{set_abstraction_msg2.6}
  #allocation0 [shape = 'u32[]', space=smem, size = 0x4, offset = 0x4, fixed_abs, tag = 'smem constant byte address 0x4 - core index']
  #allocation1 [shape = 'u32[72,128]{1,0:T(1,128)}', space=vmem, size = 0x9000, scoped, tag = 'internal scratch']
  %s0 = inlined_call_operand.vmem [shape: bf16[256,8], index: 0, kind: input, shape index: {}]
  %s1 = inlined_call_operand.vmem [shape: bf16[8,128], index: 1, kind: input, shape index: {}]
  %s2 = inlined_call_operand.vmem [shape: f32[1,1,256], index: 2, kind: output, shape index: {}]
  %s3 = sld [smem:[#allocation0]]
  $region22: #{set_abstraction_msg2.6} parent=0
    _
  %s5 = ssub.s32 1, %s3
  %s6 = scalar_select 0, %s5, %s3
  // Predicated region
  $region2: #{set_abstraction_msg2.6} parent=0 // pred_check
    _
  $region3: #{set_abstraction_msg2.6} parent=0 // pred_check_branch
    %8 = sbr.rel (0) target = $region5
  $region4: #{set_abstraction_msg2.6} parent=0 // pred_region
    %s9 = sadd.s32 0, 0
    %s10 = smul.u32 32, %s9
    %p11 = scmp.lt.s32.totalorder %s10, 31
    %s12 = scalar_select %p11, %s10, 31
    %s13 = smul.addr %s12, 4
    %s14 = scalar_lea.vmem %s0, %s13
    %s15 = sadd.s32 0, 0
    %s16 = smul.u32 32, %s15
  $region5: #{set_abstraction_msg2.6} parent=0 // pred_fallthru
    _
  // Predicated region
  $region6: #{set_abstraction_msg2.6} parent=0 // pred_check
    _
  $region7: #{set_abstraction_msg2.6} parent=0 // pred_check_branch
    %18 = sbr.rel (0) target = $region9
  $region8: #{set_abstraction_msg2.6} parent=0 // pred_region
    _
  $region9: #{set_abstraction_msg2.6} parent=0 // pred_fallthru
    _
  %s19 = sadd.s32 0, 0
  %s20 = smul.u32 32, %s19
  %p21 = scmp.lt.s32.totalorder %s20, 31
  %s22 = scalar_select %p21, %s20, 31
  %s23 = smul.addr %s22, 4
  %s24 = scalar_lea.vmem %s0, %s23
  %s25 = sadd.s32 0, 0
  %s26 = smul.u32 32, %s25
  %p27 = scmp.lt.s32.totalorder %s26, 31
  %s28 = scalar_select %p27, %s26, 31
  %s29 = smul.addr %s28, 4
  %s30 = scalar_lea.vmem %s0, %s29
  %s31 = sadd.s32 0, 0
  %s32 = smul.u32 32, %s31
  %v34 = vld [vmem:[%s30] sm:$0xf]
  %v35 = vld [vmem:[%s30 + $0x4] sm:$0xf]
  %v36 = vld [vmem:[%s30 + $0x8] sm:$0xf]
  %v37 = vld [vmem:[%s30 + $0xc] sm:$0xf]
  %v38 = vld [vmem:[%s30 + $0x10] sm:$0xf]
  %v39 = vld [vmem:[%s30 + $0x14] sm:$0xf]
  %v40 = vld [vmem:[%s30 + $0x18] sm:$0xf]
  %v41 = vld [vmem:[%s30 + $0x1c] sm:$0xf]
  %v42 = vld [vmem:[%s30 + $0x20] sm:$0xf]
  %v43 = vld [vmem:[%s30 + $0x24] sm:$0xf]
  %v44 = vld [vmem:[%s30 + $0x28] sm:$0xf]
  %v45 = vld [vmem:[%s30 + $0x2c] sm:$0xf]
  %v46 = vld [vmem:[%s30 + $0x30] sm:$0xf]
  %v47 = vld [vmem:[%s30 + $0x34] sm:$0xf]
  %v48 = vld [vmem:[%s30 + $0x38] sm:$0xf]
  %v49 = vld [vmem:[%s30 + $0x3c] sm:$0xf]
  %v50 = vld [vmem:[%s30 + $0x40] sm:$0xf]
  %v51 = vld [vmem:[%s30 + $0x44] sm:$0xf]
  %v52 = vld [vmem:[%s30 + $0x48] sm:$0xf]
  %v53 = vld [vmem:[%s30 + $0x4c] sm:$0xf]
  %v54 = vld [vmem:[%s30 + $0x50] sm:$0xf]
  %v55 = vld [vmem:[%s30 + $0x54] sm:$0xf]
  %v56 = vld [vmem:[%s30 + $0x58] sm:$0xf]
  %v57 = vld [vmem:[%s30 + $0x5c] sm:$0xf]
  %v58 = vld [vmem:[%s30 + $0x60] sm:$0xf]
  %v59 = vld [vmem:[%s30 + $0x64] sm:$0xf]
  %v60 = vld [vmem:[%s30 + $0x68] sm:$0xf]
  %v61 = vld [vmem:[%s30 + $0x6c] sm:$0xf]
  %v62 = vld [vmem:[%s30 + $0x70] sm:$0xf]
  %v63 = vld [vmem:[%s30 + $0x74] sm:$0xf]
  %v64 = vld [vmem:[%s30 + $0x78] sm:$0xf]
  %v65 = vld [vmem:[%s30 + $0x7c] sm:$0xf]
  %v66 = vld [vmem:[%s1] sm:$0xf]
  %v99 = vunpack.c.l.b16 %v34
  %v100 = vunpack.c.l.b16 %v35
  %v101 = vunpack.c.l.b16 %v36
  %v102 = vunpack.c.l.b16 %v37
  %v103 = vunpack.c.l.b16 %v38
  %v104 = vunpack.c.l.b16 %v39
  %v105 = vunpack.c.l.b16 %v40
  %v106 = vunpack.c.l.b16 %v41
  %v107 = vunpack.c.l.b16 %v42
  %v108 = vunpack.c.l.b16 %v43
  %v109 = vunpack.c.l.b16 %v44
  %v110 = vunpack.c.l.b16 %v45
  %v111 = vunpack.c.l.b16 %v46
  %v112 = vunpack.c.l.b16 %v47
  %v113 = vunpack.c.l.b16 %v48
  %v114 = vunpack.c.l.b16 %v49
  %v115 = vunpack.c.l.b16 %v50
  %v116 = vunpack.c.l.b16 %v51
  %v117 = vunpack.c.l.b16 %v52
  %v118 = vunpack.c.l.b16 %v53
  %v119 = vunpack.c.l.b16 %v54
  %v120 = vunpack.c.l.b16 %v55
  %v121 = vunpack.c.l.b16 %v56
  %v122 = vunpack.c.l.b16 %v57
  %v123 = vunpack.c.l.b16 %v58
  %v124 = vunpack.c.l.b16 %v59
  %v125 = vunpack.c.l.b16 %v60
  %v126 = vunpack.c.l.b16 %v61
  %v127 = vunpack.c.l.b16 %v62
  %v128 = vunpack.c.l.b16 %v63
  %v129 = vunpack.c.l.b16 %v64
  %v130 = vunpack.c.l.b16 %v65
  %v131 = vpack.c.b16 %v100, %v99
  %v132 = vpack.c.b16 %v102, %v101
  %v133 = vpack.c.b16 %v104, %v103
  %v134 = vpack.c.b16 %v106, %v105
  %v135 = vpack.c.b16 %v108, %v107
  %v136 = vpack.c.b16 %v110, %v109
  %v137 = vpack.c.b16 %v112, %v111
  %v138 = vpack.c.b16 %v114, %v113
  %v139 = vpack.c.b16 %v116, %v115
  %v140 = vpack.c.b16 %v118, %v117
  %v141 = vpack.c.b16 %v120, %v119
  %v142 = vpack.c.b16 %v122, %v121
  %v143 = vpack.c.b16 %v124, %v123
  %v144 = vpack.c.b16 %v126, %v125
  %v145 = vpack.c.b16 %v128, %v127
  %v146 = vpack.c.b16 %v130, %v129
  %vm147 = vcmask 64512
  %v149 = vsel %vm147, %v131, 0
  %v152 = vsel %vm147, %v132, 0
  %v155 = vsel %vm147, %v133, 0
  %v158 = vsel %vm147, %v134, 0
  %v161 = vsel %vm147, %v135, 0
  %v164 = vsel %vm147, %v136, 0
  %v167 = vsel %vm147, %v137, 0
  %v170 = vsel %vm147, %v138, 0
  %v173 = vsel %vm147, %v139, 0
  %v176 = vsel %vm147, %v140, 0
  %v179 = vsel %vm147, %v141, 0
  %v182 = vsel %vm147, %v142, 0
  %v185 = vsel %vm147, %v143, 0
  %v188 = vsel %vm147, %v144, 0
  %v191 = vsel %vm147, %v145, 0
  %v194 = vsel %vm147, %v146, 0
  %vm196 = vcmask 1043456
  %v198 = vsel %vm196, %v66, 0
  %200 = vmatpush.bf16.msra.mxu0 0
  %201 = vmatpush.bf16.msra.mxu0 0
  %202 = vmatpush.bf16.msra.mxu0 0
  %203 = vmatpush.bf16.msra.mxu0 0
  %204 = vmatpush.bf16.msra.mxu0 0
  %205 = vmatpush.bf16.msra.mxu0 0
  %206 = vmatpush.bf16.msra.mxu0 0
  %207 = vmatpush.bf16.msra.mxu0 %v198
  %208 = vmatmul.bf16.gmra.mxu0 %v149
  %v209 = vpop.f32.mrf.mxu0
  %v210 = vadd.f32 0.0, %v209
  %v211 = vpop.f32.mrf.mxu0
  %v212 = vadd.f32 0.0, %v211
  %213 = vmatmul.bf16.gmra.mxu0 %v152
  %v214 = vpop.f32.mrf.mxu0
  %v215 = vadd.f32 0.0, %v214
  %v216 = vpop.f32.mrf.mxu0
  %v217 = vadd.f32 0.0, %v216
  %218 = vmatmul.bf16.gmra.mxu0 %v155
  %v219 = vpop.f32.mrf.mxu0
  %v220 = vadd.f32 0.0, %v219
  %v221 = vpop.f32.mrf.mxu0
  %v222 = vadd.f32 0.0, %v221
  %223 = vmatmul.bf16.gmra.mxu0 %v158
  %v224 = vpop.f32.mrf.mxu0
  %v225 = vadd.f32 0.0, %v224
  %v226 = vpop.f32.mrf.mxu0
  %v227 = vadd.f32 0.0, %v226
  %228 = vmatmul.bf16.gmra.mxu0 %v161
  %v229 = vpop.f32.mrf.mxu0
  %v230 = vadd.f32 0.0, %v229
  %v231 = vpop.f32.mrf.mxu0
  %v232 = vadd.f32 0.0, %v231
  %233 = vmatmul.bf16.gmra.mxu0 %v164
  %v234 = vpop.f32.mrf.mxu0
  %v235 = vadd.f32 0.0, %v234
  %v236 = vpop.f32.mrf.mxu0
  %v237 = vadd.f32 0.0, %v236
  %238 = vmatmul.bf16.gmra.mxu0 %v167
  %v239 = vpop.f32.mrf.mxu0
  %v240 = vadd.f32 0.0, %v239
  %v241 = vpop.f32.mrf.mxu0
  %v242 = vadd.f32 0.0, %v241
  %243 = vmatmul.bf16.gmra.mxu0 %v170
  %v244 = vpop.f32.mrf.mxu0
  %v245 = vadd.f32 0.0, %v244
  %v246 = vpop.f32.mrf.mxu0
  %v247 = vadd.f32 0.0, %v246
  %248 = vmatmul.bf16.gmra.mxu0 %v173
  %v249 = vpop.f32.mrf.mxu0
  %v250 = vadd.f32 0.0, %v249
  %v251 = vpop.f32.mrf.mxu0
  %v252 = vadd.f32 0.0, %v251
  %253 = vmatmul.bf16.gmra.mxu0 %v176
  %v254 = vpop.f32.mrf.mxu0
  %v255 = vadd.f32 0.0, %v254
  %v256 = vpop.f32.mrf.mxu0
  %v257 = vadd.f32 0.0, %v256
  %258 = vmatmul.bf16.gmra.mxu0 %v179
  %v259 = vpop.f32.mrf.mxu0
  %v260 = vadd.f32 0.0, %v259
  %v261 = vpop.f32.mrf.mxu0
  %v262 = vadd.f32 0.0, %v261
  %263 = vmatmul.bf16.gmra.mxu0 %v182
  %v264 = vpop.f32.mrf.mxu0
  %v265 = vadd.f32 0.0, %v264
  %v266 = vpop.f32.mrf.mxu0
  %v267 = vadd.f32 0.0, %v266
  %268 = vmatmul.bf16.gmra.mxu0 %v185
  %v269 = vpop.f32.mrf.mxu0
  %v270 = vadd.f32 0.0, %v269
  %v271 = vpop.f32.mrf.mxu0
  %v272 = vadd.f32 0.0, %v271
  %273 = vmatmul.bf16.gmra.mxu0 %v188
  %v274 = vpop.f32.mrf.mxu0
  %v275 = vadd.f32 0.0, %v274
  %v276 = vpop.f32.mrf.mxu0
  %v277 = vadd.f32 0.0, %v276
  %278 = vmatmul.bf16.gmra.mxu0 %v191
  %v279 = vpop.f32.mrf.mxu0
  %v280 = vadd.f32 0.0, %v279
  %v281 = vpop.f32.mrf.mxu0
  %v282 = vadd.f32 0.0, %v281
  %283 = vmatmul.bf16.gmra.mxu0 %v194
  %v284 = vpop.f32.mrf.mxu0
  %v285 = vadd.f32 0.0, %v284
  %v286 = vpop.f32.mrf.mxu0
  %v287 = vadd.f32 0.0, %v286
  %288 = vdwg.mxu0
  %v289 = vadd.f32 %v210, %v212
  %v290 = vadd.f32 %v289, %v215
  %v291 = vadd.f32 %v290, %v217
  %v292 = vadd.f32 %v291, %v220
  %v293 = vadd.f32 %v292, %v222
  %v294 = vadd.f32 %v293, %v225
  %v295 = vadd.f32 %v294, %v227
  %v296 = vadd.f32 %v295, %v230
  %v297 = vadd.f32 %v296, %v232
  %v298 = vadd.f32 %v297, %v235
  %v299 = vadd.f32 %v298, %v237
  %v300 = vadd.f32 %v299, %v240
  %v301 = vadd.f32 %v300, %v242
  %v302 = vadd.f32 %v301, %v245
  %v303 = vadd.f32 %v302, %v247
  %v304 = vadd.f32 %v303, %v250
  %v305 = vadd.f32 %v304, %v252
  %v306 = vadd.f32 %v305, %v255
  %v307 = vadd.f32 %v306, %v257
  %v308 = vadd.f32 %v307, %v260
  %v309 = vadd.f32 %v308, %v262
  %v310 = vadd.f32 %v309, %v265
  %v311 = vadd.f32 %v310, %v267
  %v312 = vadd.f32 %v311, %v270
  %v313 = vadd.f32 %v312, %v272
  %v314 = vadd.f32 %v313, %v275
  %v315 = vadd.f32 %v314, %v277
  %v316 = vadd.f32 %v315, %v280
  %v317 = vadd.f32 %v316, %v282
  %v318 = vadd.f32 %v317, %v285
  %v319 = vadd.f32 %v318, %v287
  %v320 = vrot.slane %v319, 4
  %v321 = vadd.f32 %v319, %v320
  %v322 = vrot.slane %v321, 2
  %v323 = vadd.f32 %v321, %v322
  %v324 = vrot.slane %v323, 1
  %v325 = vadd.f32 %v323, %v324
  %v326 = vmul.f32 %v210, %v210
  %v327 = vmul.f32 %v212, %v212
  %v328 = vmul.f32 %v215, %v215
  %v329 = vmul.f32 %v217, %v217
  %v330 = vmul.f32 %v220, %v220
  %v331 = vmul.f32 %v222, %v222
  %v332 = vmul.f32 %v225, %v225
  %v333 = vmul.f32 %v227, %v227
  %v334 = vmul.f32 %v230, %v230
  %v335 = vmul.f32 %v232, %v232
  %v336 = vmul.f32 %v235, %v235
  %v337 = vmul.f32 %v237, %v237
  %v338 = vmul.f32 %v240, %v240
  %v339 = vmul.f32 %v242, %v242
  %v340 = vmul.f32 %v245, %v245
  %v341 = vmul.f32 %v247, %v247
  %v342 = vmul.f32 %v250, %v250
  %v343 = vmul.f32 %v252, %v252
  %v344 = vmul.f32 %v255, %v255
  %v345 = vmul.f32 %v257, %v257
  %v346 = vmul.f32 %v260, %v260
  %v347 = vmul.f32 %v262, %v262
  %v348 = vmul.f32 %v265, %v265
  %v349 = vmul.f32 %v267, %v267
  %v350 = vmul.f32 %v270, %v270
  %v351 = vmul.f32 %v272, %v272
  %v352 = vmul.f32 %v275, %v275
  %v353 = vmul.f32 %v277, %v277
  %v354 = vmul.f32 %v280, %v280
  %v355 = vmul.f32 %v282, %v282
  %v356 = vmul.f32 %v285, %v285
  %v357 = vmul.f32 %v287, %v287
  %v358 = vadd.f32 %v326, %v327
  %v359 = vadd.f32 %v358, %v328
  %v360 = vadd.f32 %v359, %v329
  %v361 = vadd.f32 %v360, %v330
  %v362 = vadd.f32 %v361, %v331
  %v363 = vadd.f32 %v362, %v332
  %v364 = vadd.f32 %v363, %v333
  %v365 = vadd.f32 %v364, %v334
  %v366 = vadd.f32 %v365, %v335
  %v367 = vadd.f32 %v366, %v336
  %v368 = vadd.f32 %v367, %v337
  %v369 = vadd.f32 %v368, %v338
  %v370 = vadd.f32 %v369, %v339
  %v371 = vadd.f32 %v370, %v340
  %v372 = vadd.f32 %v371, %v341
  %v373 = vadd.f32 %v372, %v342
  %v374 = vadd.f32 %v373, %v343
  %v375 = vadd.f32 %v374, %v344
  %v376 = vadd.f32 %v375, %v345
  %v377 = vadd.f32 %v376, %v346
  %v378 = vadd.f32 %v377, %v347
  %v379 = vadd.f32 %v378, %v348
  %v380 = vadd.f32 %v379, %v349
  %v381 = vadd.f32 %v380, %v350
  %v382 = vadd.f32 %v381, %v351
  %v383 = vadd.f32 %v382, %v352
  %v384 = vadd.f32 %v383, %v353
  %v385 = vadd.f32 %v384, %v354
  %v386 = vadd.f32 %v385, %v355
  %v387 = vadd.f32 %v386, %v356
  %v388 = vadd.f32 %v387, %v357
  %v389 = vrot.slane %v388, 4
  %v390 = vadd.f32 %v388, %v389
  %v391 = vrot.slane %v390, 2
  %v392 = vadd.f32 %v390, %v391
  %v393 = vrot.slane %v392, 1
  %v394 = vadd.f32 %v392, %v393
  %p395 = scmp.eq.s32.totalorder 0, 0
  // Predicated region
  $region10: #{set_abstraction_msg2.6} parent=0 // pred_check
    %p396 = pneg %p395
  $region11: #{set_abstraction_msg2.6} parent=0 // pred_check_branch
    %398 = sbr.rel (%p396) target = $region13
  $region12: #{set_abstraction_msg2.6} parent=0 // pred_region
    %v399 = vlaneseq
    %vm400 = vcmp.ge.s32.totalorder %v399, 0
    %vm401 = vcmp.lt.s32.totalorder %v399, 256
    %vm402 = vmand %vm400, %vm401
    %403 = vst.msk [vmem:[%s2] sm:$0x3] %vm402, 0.0
  $region13: #{set_abstraction_msg2.6} parent=0 // pred_fallthru
    _
  %v404 = vld [vmem:[%s2] sm:$0x1]
  %v405 = vadd.f32 %v404, %v325
  %v406 = vlaneseq
  %vm407 = vcmp.ge.s32.totalorder %v406, 0
  %vm408 = vcmp.lt.s32.totalorder %v406, 128
  %vm409 = vmand %vm407, %vm408
  %410 = vst.msk [vmem:[%s2] sm:$0x1] %vm409, %v405
  %v411 = vld [vmem:[%s2 + $0x1] sm:$0x1]
  %v412 = vadd.f32 %v411, %v394
  %413 = vst.msk [vmem:[%s2 + $0x1] sm:$0x1] %vm409, %v412
  // Predicated region
  $region14: #{set_abstraction_msg2.6} parent=0 // pred_check
    _
  $region15: #{set_abstraction_msg2.6} parent=0 // pred_check_branch
    %415 = sbr.rel (0) target = $region17
  $region16: #{set_abstraction_msg2.6} parent=0 // pred_region
    _
  $region17: #{set_abstraction_msg2.6} parent=0 // pred_fallthru
    _
  // Predicated region
  $region18: #{set_abstraction_msg2.6} parent=0 // pred_check
    _
  $region19: #{set_abstraction_msg2.6} parent=0 // pred_check_branch
    %417 = sbr.rel (0) target = $region21
  $region20: #{set_abstraction_msg2.6} parent=0 // pred_region
    _
  $region21: #{set_abstraction_msg2.6} parent=0 // pred_fallthru
    _

// kernel: set_abstraction_msg2.7
$region0: #{set_abstraction_msg2.7}
  #allocation0 [shape = 'u32[]', space=smem, size = 0x4, offset = 0x4, fixed_abs, tag = 'smem constant byte address 0x4 - core index']
  #allocation1 [shape = 'u32[72,128]{1,0:T(1,128)}', space=vmem, size = 0x9000, scoped, tag = 'internal scratch']
  %s0 = inlined_call_operand.vmem [shape: bf16[256,8], index: 0, kind: input, shape index: {}]
  %s1 = inlined_call_operand.vmem [shape: bf16[8,128], index: 1, kind: input, shape index: {}]
  %s2 = inlined_call_operand.vmem [shape: bf16[128,128], index: 2, kind: input, shape index: {}]
  %s3 = inlined_call_operand.vmem [shape: f32[1,128], index: 3, kind: input, shape index: {}]
  %s4 = inlined_call_operand.vmem [shape: f32[1,128], index: 4, kind: input, shape index: {}]
  %s5 = inlined_call_operand.vmem [shape: f32[1,1,256], index: 5, kind: output, shape index: {}]
  %s6 = sld [smem:[#allocation0]]
  $region34: #{set_abstraction_msg2.7} parent=0
    _
  %s8 = ssub.s32 1, %s6
  %s9 = scalar_select 0, %s8, %s6
  // Predicated region
  $region2: #{set_abstraction_msg2.7} parent=0 // pred_check
    _
  $region3: #{set_abstraction_msg2.7} parent=0 // pred_check_branch
    %11 = sbr.rel (0) target = $region5
  $region4: #{set_abstraction_msg2.7} parent=0 // pred_region
    %s12 = sadd.s32 0, 0
    %s13 = smul.u32 32, %s12
    %p14 = scmp.lt.s32.totalorder %s13, 31
    %s15 = scalar_select %p14, %s13, 31
    %s16 = smul.addr %s15, 4
    %s17 = scalar_lea.vmem %s0, %s16
    %s18 = sadd.s32 0, 0
    %s19 = smul.u32 32, %s18
  $region5: #{set_abstraction_msg2.7} parent=0 // pred_fallthru
    _
  // Predicated region
  $region6: #{set_abstraction_msg2.7} parent=0 // pred_check
    _
  $region7: #{set_abstraction_msg2.7} parent=0 // pred_check_branch
    %21 = sbr.rel (0) target = $region9
  $region8: #{set_abstraction_msg2.7} parent=0 // pred_region
    _
  $region9: #{set_abstraction_msg2.7} parent=0 // pred_fallthru
    _
  // Predicated region
  $region10: #{set_abstraction_msg2.7} parent=0 // pred_check
    _
  $region11: #{set_abstraction_msg2.7} parent=0 // pred_check_branch
    %23 = sbr.rel (0) target = $region13
  $region12: #{set_abstraction_msg2.7} parent=0 // pred_region
    _
  $region13: #{set_abstraction_msg2.7} parent=0 // pred_fallthru
    _
  // Predicated region
  $region14: #{set_abstraction_msg2.7} parent=0 // pred_check
    _
  $region15: #{set_abstraction_msg2.7} parent=0 // pred_check_branch
    %25 = sbr.rel (0) target = $region17
  $region16: #{set_abstraction_msg2.7} parent=0 // pred_region
    _
  $region17: #{set_abstraction_msg2.7} parent=0 // pred_fallthru
    _
  // Predicated region
  $region18: #{set_abstraction_msg2.7} parent=0 // pred_check
    _
  $region19: #{set_abstraction_msg2.7} parent=0 // pred_check_branch
    %27 = sbr.rel (0) target = $region21
  $region20: #{set_abstraction_msg2.7} parent=0 // pred_region
    _
  $region21: #{set_abstraction_msg2.7} parent=0 // pred_fallthru
    _
  %s28 = sadd.s32 0, 0
  %s29 = smul.u32 32, %s28
  %p30 = scmp.lt.s32.totalorder %s29, 31
  %s31 = scalar_select %p30, %s29, 31
  %s32 = smul.addr %s31, 4
  %s33 = scalar_lea.vmem %s0, %s32
  %s34 = sadd.s32 0, 0
  %s35 = smul.u32 32, %s34
  %p36 = scmp.lt.s32.totalorder %s35, 31
  %s37 = scalar_select %p36, %s35, 31
  %s38 = smul.addr %s37, 4
  %s39 = scalar_lea.vmem %s0, %s38
  %s40 = sadd.s32 0, 0
  %s41 = smul.u32 32, %s40
  %v43 = vld [vmem:[%s39] sm:$0xf]
  %v44 = vld [vmem:[%s39 + $0x4] sm:$0xf]
  %v45 = vld [vmem:[%s39 + $0x8] sm:$0xf]
  %v46 = vld [vmem:[%s39 + $0xc] sm:$0xf]
  %v47 = vld [vmem:[%s39 + $0x10] sm:$0xf]
  %v48 = vld [vmem:[%s39 + $0x14] sm:$0xf]
  %v49 = vld [vmem:[%s39 + $0x18] sm:$0xf]
  %v50 = vld [vmem:[%s39 + $0x1c] sm:$0xf]
  %v51 = vld [vmem:[%s39 + $0x20] sm:$0xf]
  %v52 = vld [vmem:[%s39 + $0x24] sm:$0xf]
  %v53 = vld [vmem:[%s39 + $0x28] sm:$0xf]
  %v54 = vld [vmem:[%s39 + $0x2c] sm:$0xf]
  %v55 = vld [vmem:[%s39 + $0x30] sm:$0xf]
  %v56 = vld [vmem:[%s39 + $0x34] sm:$0xf]
  %v57 = vld [vmem:[%s39 + $0x38] sm:$0xf]
  %v58 = vld [vmem:[%s39 + $0x3c] sm:$0xf]
  %v59 = vld [vmem:[%s39 + $0x40] sm:$0xf]
  %v60 = vld [vmem:[%s39 + $0x44] sm:$0xf]
  %v61 = vld [vmem:[%s39 + $0x48] sm:$0xf]
  %v62 = vld [vmem:[%s39 + $0x4c] sm:$0xf]
  %v63 = vld [vmem:[%s39 + $0x50] sm:$0xf]
  %v64 = vld [vmem:[%s39 + $0x54] sm:$0xf]
  %v65 = vld [vmem:[%s39 + $0x58] sm:$0xf]
  %v66 = vld [vmem:[%s39 + $0x5c] sm:$0xf]
  %v67 = vld [vmem:[%s39 + $0x60] sm:$0xf]
  %v68 = vld [vmem:[%s39 + $0x64] sm:$0xf]
  %v69 = vld [vmem:[%s39 + $0x68] sm:$0xf]
  %v70 = vld [vmem:[%s39 + $0x6c] sm:$0xf]
  %v71 = vld [vmem:[%s39 + $0x70] sm:$0xf]
  %v72 = vld [vmem:[%s39 + $0x74] sm:$0xf]
  %v73 = vld [vmem:[%s39 + $0x78] sm:$0xf]
  %v74 = vld [vmem:[%s39 + $0x7c] sm:$0xf]
  %v75 = vld [vmem:[%s1] sm:$0xf]
  %v108 = vunpack.c.l.b16 %v43
  %v109 = vunpack.c.l.b16 %v44
  %v110 = vunpack.c.l.b16 %v45
  %v111 = vunpack.c.l.b16 %v46
  %v112 = vunpack.c.l.b16 %v47
  %v113 = vunpack.c.l.b16 %v48
  %v114 = vunpack.c.l.b16 %v49
  %v115 = vunpack.c.l.b16 %v50
  %v116 = vunpack.c.l.b16 %v51
  %v117 = vunpack.c.l.b16 %v52
  %v118 = vunpack.c.l.b16 %v53
  %v119 = vunpack.c.l.b16 %v54
  %v120 = vunpack.c.l.b16 %v55
  %v121 = vunpack.c.l.b16 %v56
  %v122 = vunpack.c.l.b16 %v57
  %v123 = vunpack.c.l.b16 %v58
  %v124 = vunpack.c.l.b16 %v59
  %v125 = vunpack.c.l.b16 %v60
  %v126 = vunpack.c.l.b16 %v61
  %v127 = vunpack.c.l.b16 %v62
  %v128 = vunpack.c.l.b16 %v63
  %v129 = vunpack.c.l.b16 %v64
  %v130 = vunpack.c.l.b16 %v65
  %v131 = vunpack.c.l.b16 %v66
  %v132 = vunpack.c.l.b16 %v67
  %v133 = vunpack.c.l.b16 %v68
  %v134 = vunpack.c.l.b16 %v69
  %v135 = vunpack.c.l.b16 %v70
  %v136 = vunpack.c.l.b16 %v71
  %v137 = vunpack.c.l.b16 %v72
  %v138 = vunpack.c.l.b16 %v73
  %v139 = vunpack.c.l.b16 %v74
  %v140 = vpack.c.b16 %v109, %v108
  %v141 = vpack.c.b16 %v111, %v110
  %v142 = vpack.c.b16 %v113, %v112
  %v143 = vpack.c.b16 %v115, %v114
  %v144 = vpack.c.b16 %v117, %v116
  %v145 = vpack.c.b16 %v119, %v118
  %v146 = vpack.c.b16 %v121, %v120
  %v147 = vpack.c.b16 %v123, %v122
  %v148 = vpack.c.b16 %v125, %v124
  %v149 = vpack.c.b16 %v127, %v126
  %v150 = vpack.c.b16 %v129, %v128
  %v151 = vpack.c.b16 %v131, %v130
  %v152 = vpack.c.b16 %v133, %v132
  %v153 = vpack.c.b16 %v135, %v134
  %v154 = vpack.c.b16 %v137, %v136
  %v155 = vpack.c.b16 %v139, %v138
  %vm156 = vcmask 64512
  %v158 = vsel %vm156, %v140, 0
  %v161 = vsel %vm156, %v141, 0
  %v164 = vsel %vm156, %v142, 0
  %v167 = vsel %vm156, %v143, 0
  %v170 = vsel %vm156, %v144, 0
  %v173 = vsel %vm156, %v145, 0
  %v176 = vsel %vm156, %v146, 0
  %v179 = vsel %vm156, %v147, 0
  %v182 = vsel %vm156, %v148, 0
  %v185 = vsel %vm156, %v149, 0
  %v188 = vsel %vm156, %v150, 0
  %v191 = vsel %vm156, %v151, 0
  %v194 = vsel %vm156, %v152, 0
  %v197 = vsel %vm156, %v153, 0
  %v200 = vsel %vm156, %v154, 0
  %v203 = vsel %vm156, %v155, 0
  %vm205 = vcmask 1043456
  %v207 = vsel %vm205, %v75, 0
  %209 = vmatpush.bf16.msra.mxu0 0
  %210 = vmatpush.bf16.msra.mxu0 0
  %211 = vmatpush.bf16.msra.mxu0 0
  %212 = vmatpush.bf16.msra.mxu0 0
  %213 = vmatpush.bf16.msra.mxu0 0
  %214 = vmatpush.bf16.msra.mxu0 0
  %215 = vmatpush.bf16.msra.mxu0 0
  %216 = vmatpush.bf16.msra.mxu0 %v207
  %217 = vmatmul.bf16.gmra.mxu0 %v158
  %v218 = vpop.f32.mrf.mxu0
  %v219 = vadd.f32 0.0, %v218
  %v220 = vpop.f32.mrf.mxu0
  %v221 = vadd.f32 0.0, %v220
  %222 = vmatmul.bf16.gmra.mxu0 %v161
  %v223 = vpop.f32.mrf.mxu0
  %v224 = vadd.f32 0.0, %v223
  %v225 = vpop.f32.mrf.mxu0
  %v226 = vadd.f32 0.0, %v225
  %227 = vmatmul.bf16.gmra.mxu0 %v164
  %v228 = vpop.f32.mrf.mxu0
  %v229 = vadd.f32 0.0, %v228
  %v230 = vpop.f32.mrf.mxu0
  %v231 = vadd.f32 0.0, %v230
  %232 = vmatmul.bf16.gmra.mxu0 %v167
  %v233 = vpop.f32.mrf.mxu0
  %v234 = vadd.f32 0.0, %v233
  %v235 = vpop.f32.mrf.mxu0
  %v236 = vadd.f32 0.0, %v235
  %237 = vmatmul.bf16.gmra.mxu0 %v170
  %v238 = vpop.f32.mrf.mxu0
  %v239 = vadd.f32 0.0, %v238
  %v240 = vpop.f32.mrf.mxu0
  %v241 = vadd.f32 0.0, %v240
  %242 = vmatmul.bf16.gmra.mxu0 %v173
  %v243 = vpop.f32.mrf.mxu0
  %v244 = vadd.f32 0.0, %v243
  %v245 = vpop.f32.mrf.mxu0
  %v246 = vadd.f32 0.0, %v245
  %247 = vmatmul.bf16.gmra.mxu0 %v176
  %v248 = vpop.f32.mrf.mxu0
  %v249 = vadd.f32 0.0, %v248
  %v250 = vpop.f32.mrf.mxu0
  %v251 = vadd.f32 0.0, %v250
  %252 = vmatmul.bf16.gmra.mxu0 %v179
  %v253 = vpop.f32.mrf.mxu0
  %v254 = vadd.f32 0.0, %v253
  %v255 = vpop.f32.mrf.mxu0
  %v256 = vadd.f32 0.0, %v255
  %257 = vmatmul.bf16.gmra.mxu0 %v182
  %v258 = vpop.f32.mrf.mxu0
  %v259 = vadd.f32 0.0, %v258
  %v260 = vpop.f32.mrf.mxu0
  %v261 = vadd.f32 0.0, %v260
  %262 = vmatmul.bf16.gmra.mxu0 %v185
  %v263 = vpop.f32.mrf.mxu0
  %v264 = vadd.f32 0.0, %v263
  %v265 = vpop.f32.mrf.mxu0
  %v266 = vadd.f32 0.0, %v265
  %267 = vmatmul.bf16.gmra.mxu0 %v188
  %v268 = vpop.f32.mrf.mxu0
  %v269 = vadd.f32 0.0, %v268
  %v270 = vpop.f32.mrf.mxu0
  %v271 = vadd.f32 0.0, %v270
  %272 = vmatmul.bf16.gmra.mxu0 %v191
  %v273 = vpop.f32.mrf.mxu0
  %v274 = vadd.f32 0.0, %v273
  %v275 = vpop.f32.mrf.mxu0
  %v276 = vadd.f32 0.0, %v275
  %277 = vmatmul.bf16.gmra.mxu0 %v194
  %v278 = vpop.f32.mrf.mxu0
  %v279 = vadd.f32 0.0, %v278
  %v280 = vpop.f32.mrf.mxu0
  %v281 = vadd.f32 0.0, %v280
  %282 = vmatmul.bf16.gmra.mxu0 %v197
  %v283 = vpop.f32.mrf.mxu0
  %v284 = vadd.f32 0.0, %v283
  %v285 = vpop.f32.mrf.mxu0
  %v286 = vadd.f32 0.0, %v285
  %287 = vmatmul.bf16.gmra.mxu0 %v200
  %v288 = vpop.f32.mrf.mxu0
  %v289 = vadd.f32 0.0, %v288
  %v290 = vpop.f32.mrf.mxu0
  %v291 = vadd.f32 0.0, %v290
  %292 = vmatmul.bf16.gmra.mxu0 %v203
  %v293 = vpop.f32.mrf.mxu0
  %v294 = vadd.f32 0.0, %v293
  %v295 = vpop.f32.mrf.mxu0
  %v296 = vadd.f32 0.0, %v295
  %297 = vdwg.mxu0
  %v298 = vld [vmem:[%s3] sm:$0x1]
  %v300 = vperm.slane %v298, 0
  %v302 = vmul.f32 %v219, %v300
  %v303 = vmul.f32 %v221, %v300
  %v304 = vmul.f32 %v224, %v300
  %v305 = vmul.f32 %v226, %v300
  %v306 = vmul.f32 %v229, %v300
  %v307 = vmul.f32 %v231, %v300
  %v308 = vmul.f32 %v234, %v300
  %v309 = vmul.f32 %v236, %v300
  %v310 = vmul.f32 %v239, %v300
  %v311 = vmul.f32 %v241, %v300
  %v312 = vmul.f32 %v244, %v300
  %v313 = vmul.f32 %v246, %v300
  %v314 = vmul.f32 %v249, %v300
  %v315 = vmul.f32 %v251, %v300
  %v316 = vmul.f32 %v254, %v300
  %v317 = vmul.f32 %v256, %v300
  %v318 = vmul.f32 %v259, %v300
  %v319 = vmul.f32 %v261, %v300
  %v320 = vmul.f32 %v264, %v300
  %v321 = vmul.f32 %v266, %v300
  %v322 = vmul.f32 %v269, %v300
  %v323 = vmul.f32 %v271, %v300
  %v324 = vmul.f32 %v274, %v300
  %v325 = vmul.f32 %v276, %v300
  %v326 = vmul.f32 %v279, %v300
  %v327 = vmul.f32 %v281, %v300
  %v328 = vmul.f32 %v284, %v300
  %v329 = vmul.f32 %v286, %v300
  %v330 = vmul.f32 %v289, %v300
  %v331 = vmul.f32 %v291, %v300
  %v332 = vmul.f32 %v294, %v300
  %v333 = vmul.f32 %v296, %v300
  %v334 = vld [vmem:[%s4] sm:$0x1]
  %v336 = vperm.slane %v334, 0
  %v338 = vadd.f32 %v302, %v336
  %v339 = vadd.f32 %v303, %v336
  %v340 = vadd.f32 %v304, %v336
  %v341 = vadd.f32 %v305, %v336
  %v342 = vadd.f32 %v306, %v336
  %v343 = vadd.f32 %v307, %v336
  %v344 = vadd.f32 %v308, %v336
  %v345 = vadd.f32 %v309, %v336
  %v346 = vadd.f32 %v310, %v336
  %v347 = vadd.f32 %v311, %v336
  %v348 = vadd.f32 %v312, %v336
  %v349 = vadd.f32 %v313, %v336
  %v350 = vadd.f32 %v314, %v336
  %v351 = vadd.f32 %v315, %v336
  %v352 = vadd.f32 %v316, %v336
  %v353 = vadd.f32 %v317, %v336
  %v354 = vadd.f32 %v318, %v336
  %v355 = vadd.f32 %v319, %v336
  %v356 = vadd.f32 %v320, %v336
  %v357 = vadd.f32 %v321, %v336
  %v358 = vadd.f32 %v322, %v336
  %v359 = vadd.f32 %v323, %v336
  %v360 = vadd.f32 %v324, %v336
  %v361 = vadd.f32 %v325, %v336
  %v362 = vadd.f32 %v326, %v336
  %v363 = vadd.f32 %v327, %v336
  %v364 = vadd.f32 %v328, %v336
  %v365 = vadd.f32 %v329, %v336
  %v366 = vadd.f32 %v330, %v336
  %v367 = vadd.f32 %v331, %v336
  %v368 = vadd.f32 %v332, %v336
  %v369 = vadd.f32 %v333, %v336
  %v370 = vmax.f32 %v338, 0.0
  %v371 = vmax.f32 %v339, 0.0
  %v372 = vmax.f32 %v340, 0.0
  %v373 = vmax.f32 %v341, 0.0
  %v374 = vmax.f32 %v342, 0.0
  %v375 = vmax.f32 %v343, 0.0
  %v376 = vmax.f32 %v344, 0.0
  %v377 = vmax.f32 %v345, 0.0
  %v378 = vmax.f32 %v346, 0.0
  %v379 = vmax.f32 %v347, 0.0
  %v380 = vmax.f32 %v348, 0.0
  %v381 = vmax.f32 %v349, 0.0
  %v382 = vmax.f32 %v350, 0.0
  %v383 = vmax.f32 %v351, 0.0
  %v384 = vmax.f32 %v352, 0.0
  %v385 = vmax.f32 %v353, 0.0
  %v386 = vmax.f32 %v354, 0.0
  %v387 = vmax.f32 %v355, 0.0
  %v388 = vmax.f32 %v356, 0.0
  %v389 = vmax.f32 %v357, 0.0
  %v390 = vmax.f32 %v358, 0.0
  %v391 = vmax.f32 %v359, 0.0
  %v392 = vmax.f32 %v360, 0.0
  %v393 = vmax.f32 %v361, 0.0
  %v394 = vmax.f32 %v362, 0.0
  %v395 = vmax.f32 %v363, 0.0
  %v396 = vmax.f32 %v364, 0.0
  %v397 = vmax.f32 %v365, 0.0
  %v398 = vmax.f32 %v366, 0.0
  %v399 = vmax.f32 %v367, 0.0
  %v400 = vmax.f32 %v368, 0.0
  %v401 = vmax.f32 %v369, 0.0
  %v402 = vpack.c.bf16 %v371, %v370
  %v403 = vpack.c.bf16 %v373, %v372
  %v404 = vpack.c.bf16 %v375, %v374
  %v405 = vpack.c.bf16 %v377, %v376
  %v406 = vpack.c.bf16 %v379, %v378
  %v407 = vpack.c.bf16 %v381, %v380
  %v408 = vpack.c.bf16 %v383, %v382
  %v409 = vpack.c.bf16 %v385, %v384
  %v410 = vpack.c.bf16 %v387, %v386
  %v411 = vpack.c.bf16 %v389, %v388
  %v412 = vpack.c.bf16 %v391, %v390
  %v413 = vpack.c.bf16 %v393, %v392
  %v414 = vpack.c.bf16 %v395, %v394
  %v415 = vpack.c.bf16 %v397, %v396
  %v416 = vpack.c.bf16 %v399, %v398
  %v417 = vpack.c.bf16 %v401, %v400
  %v418 = vld [vmem:[%s2] sm:$0xf]
  %v419 = vld [vmem:[%s2 + $0x4] sm:$0xf]
  %v420 = vld [vmem:[%s2 + $0x8] sm:$0xf]
  %v421 = vld [vmem:[%s2 + $0xc] sm:$0xf]
  %v422 = vld [vmem:[%s2 + $0x10] sm:$0xf]
  %v423 = vld [vmem:[%s2 + $0x14] sm:$0xf]
  %v424 = vld [vmem:[%s2 + $0x18] sm:$0xf]
  %v425 = vld [vmem:[%s2 + $0x1c] sm:$0xf]
  %v426 = vld [vmem:[%s2 + $0x20] sm:$0xf]
  %v427 = vld [vmem:[%s2 + $0x24] sm:$0xf]
  %v428 = vld [vmem:[%s2 + $0x28] sm:$0xf]
  %v429 = vld [vmem:[%s2 + $0x2c] sm:$0xf]
  %v430 = vld [vmem:[%s2 + $0x30] sm:$0xf]
  %v431 = vld [vmem:[%s2 + $0x34] sm:$0xf]
  %v432 = vld [vmem:[%s2 + $0x38] sm:$0xf]
  %v433 = vld [vmem:[%s2 + $0x3c] sm:$0xf]
  %v450 = vunpack.c.l.b16 %v418
  %v451 = vunpack.c.l.b16 %v419
  %v452 = vunpack.c.l.b16 %v420
  %v453 = vunpack.c.l.b16 %v421
  %v454 = vunpack.c.l.b16 %v422
  %v455 = vunpack.c.l.b16 %v423
  %v456 = vunpack.c.l.b16 %v424
  %v457 = vunpack.c.l.b16 %v425
  %v458 = vunpack.c.l.b16 %v426
  %v459 = vunpack.c.l.b16 %v427
  %v460 = vunpack.c.l.b16 %v428
  %v461 = vunpack.c.l.b16 %v429
  %v462 = vunpack.c.l.b16 %v430
  %v463 = vunpack.c.l.b16 %v431
  %v464 = vunpack.c.l.b16 %v432
  %v465 = vunpack.c.l.b16 %v433
  %v466 = vpack.c.b16 %v451, %v450
  %v467 = vpack.c.b16 %v453, %v452
  %v468 = vpack.c.b16 %v455, %v454
  %v469 = vpack.c.b16 %v457, %v456
  %v470 = vpack.c.b16 %v459, %v458
  %v471 = vpack.c.b16 %v461, %v460
  %v472 = vpack.c.b16 %v463, %v462
  %v473 = vpack.c.b16 %v465, %v464
  %482 = vmatpush.bf16.msra.mxu0 %v473
  %483 = vmatpush.bf16.msra.mxu0 %v472
  %484 = vmatpush.bf16.msra.mxu0 %v471
  %485 = vmatpush.bf16.msra.mxu0 %v470
  %486 = vmatpush.bf16.msra.mxu0 %v469
  %487 = vmatpush.bf16.msra.mxu0 %v468
  %488 = vmatpush.bf16.msra.mxu0 %v467
  %489 = vmatpush.bf16.msra.mxu0 %v466
  %490 = vmatmul.bf16.gmra.mxu0 %v402
  %v491 = vpop.f32.mrf.mxu0
  %v492 = vadd.f32 0.0, %v491
  %v493 = vpop.f32.mrf.mxu0
  %v494 = vadd.f32 0.0, %v493
  %495 = vmatmul.bf16.gmra.mxu0 %v403
  %v496 = vpop.f32.mrf.mxu0
  %v497 = vadd.f32 0.0, %v496
  %v498 = vpop.f32.mrf.mxu0
  %v499 = vadd.f32 0.0, %v498
  %500 = vmatmul.bf16.gmra.mxu0 %v404
  %v501 = vpop.f32.mrf.mxu0
  %v502 = vadd.f32 0.0, %v501
  %v503 = vpop.f32.mrf.mxu0
  %v504 = vadd.f32 0.0, %v503
  %505 = vmatmul.bf16.gmra.mxu0 %v405
  %v506 = vpop.f32.mrf.mxu0
  %v507 = vadd.f32 0.0, %v506
  %v508 = vpop.f32.mrf.mxu0
  %v509 = vadd.f32 0.0, %v508
  %510 = vmatmul.bf16.gmra.mxu0 %v406
  %v511 = vpop.f32.mrf.mxu0
  %v512 = vadd.f32 0.0, %v511
  %v513 = vpop.f32.mrf.mxu0
  %v514 = vadd.f32 0.0, %v513
  %515 = vmatmul.bf16.gmra.mxu0 %v407
  %v516 = vpop.f32.mrf.mxu0
  %v517 = vadd.f32 0.0, %v516
  %v518 = vpop.f32.mrf.mxu0
  %v519 = vadd.f32 0.0, %v518
  %520 = vmatmul.bf16.gmra.mxu0 %v408
  %v521 = vpop.f32.mrf.mxu0
  %v522 = vadd.f32 0.0, %v521
  %v523 = vpop.f32.mrf.mxu0
  %v524 = vadd.f32 0.0, %v523
  %525 = vmatmul.bf16.gmra.mxu0 %v409
  %v526 = vpop.f32.mrf.mxu0
  %v527 = vadd.f32 0.0, %v526
  %v528 = vpop.f32.mrf.mxu0
  %v529 = vadd.f32 0.0, %v528
  %530 = vmatmul.bf16.gmra.mxu0 %v410
  %v531 = vpop.f32.mrf.mxu0
  %v532 = vadd.f32 0.0, %v531
  %v533 = vpop.f32.mrf.mxu0
  %v534 = vadd.f32 0.0, %v533
  %535 = vmatmul.bf16.gmra.mxu0 %v411
  %v536 = vpop.f32.mrf.mxu0
  %v537 = vadd.f32 0.0, %v536
  %v538 = vpop.f32.mrf.mxu0
  %v539 = vadd.f32 0.0, %v538
  %540 = vmatmul.bf16.gmra.mxu0 %v412
  %v541 = vpop.f32.mrf.mxu0
  %v542 = vadd.f32 0.0, %v541
  %v543 = vpop.f32.mrf.mxu0
  %v544 = vadd.f32 0.0, %v543
  %545 = vmatmul.bf16.gmra.mxu0 %v413
  %v546 = vpop.f32.mrf.mxu0
  %v547 = vadd.f32 0.0, %v546
  %v548 = vpop.f32.mrf.mxu0
  %v549 = vadd.f32 0.0, %v548
  %550 = vmatmul.bf16.gmra.mxu0 %v414
  %v551 = vpop.f32.mrf.mxu0
  %v552 = vadd.f32 0.0, %v551
  %v553 = vpop.f32.mrf.mxu0
  %v554 = vadd.f32 0.0, %v553
  %555 = vmatmul.bf16.gmra.mxu0 %v415
  %v556 = vpop.f32.mrf.mxu0
  %v557 = vadd.f32 0.0, %v556
  %v558 = vpop.f32.mrf.mxu0
  %v559 = vadd.f32 0.0, %v558
  %560 = vmatmul.bf16.gmra.mxu0 %v416
  %v561 = vpop.f32.mrf.mxu0
  %v562 = vadd.f32 0.0, %v561
  %v563 = vpop.f32.mrf.mxu0
  %v564 = vadd.f32 0.0, %v563
  %565 = vmatmul.bf16.gmra.mxu0 %v417
  %v566 = vpop.f32.mrf.mxu0
  %v567 = vadd.f32 0.0, %v566
  %v568 = vpop.f32.mrf.mxu0
  %v569 = vadd.f32 0.0, %v568
  %570 = vdwg.mxu0
  %v571 = vadd.f32 %v492, %v494
  %v572 = vadd.f32 %v571, %v497
  %v573 = vadd.f32 %v572, %v499
  %v574 = vadd.f32 %v573, %v502
  %v575 = vadd.f32 %v574, %v504
  %v576 = vadd.f32 %v575, %v507
  %v577 = vadd.f32 %v576, %v509
  %v578 = vadd.f32 %v577, %v512
  %v579 = vadd.f32 %v578, %v514
  %v580 = vadd.f32 %v579, %v517
  %v581 = vadd.f32 %v580, %v519
  %v582 = vadd.f32 %v581, %v522
  %v583 = vadd.f32 %v582, %v524
  %v584 = vadd.f32 %v583, %v527
  %v585 = vadd.f32 %v584, %v529
  %v586 = vadd.f32 %v585, %v532
  %v587 = vadd.f32 %v586, %v534
  %v588 = vadd.f32 %v587, %v537
  %v589 = vadd.f32 %v588, %v539
  %v590 = vadd.f32 %v589, %v542
  %v591 = vadd.f32 %v590, %v544
  %v592 = vadd.f32 %v591, %v547
  %v593 = vadd.f32 %v592, %v549
  %v594 = vadd.f32 %v593, %v552
  %v595 = vadd.f32 %v594, %v554
  %v596 = vadd.f32 %v595, %v557
  %v597 = vadd.f32 %v596, %v559
  %v598 = vadd.f32 %v597, %v562
  %v599 = vadd.f32 %v598, %v564
  %v600 = vadd.f32 %v599, %v567
  %v601 = vadd.f32 %v600, %v569
  %v602 = vrot.slane %v601, 4
  %v603 = vadd.f32 %v601, %v602
  %v604 = vrot.slane %v603, 2
  %v605 = vadd.f32 %v603, %v604
  %v606 = vrot.slane %v605, 1
  %v607 = vadd.f32 %v605, %v606
  %v608 = vmul.f32 %v492, %v492
  %v609 = vmul.f32 %v494, %v494
  %v610 = vmul.f32 %v497, %v497
  %v611 = vmul.f32 %v499, %v499
  %v612 = vmul.f32 %v502, %v502
  %v613 = vmul.f32 %v504, %v504
  %v614 = vmul.f32 %v507, %v507
  %v615 = vmul.f32 %v509, %v509
  %v616 = vmul.f32 %v512, %v512
  %v617 = vmul.f32 %v514, %v514
  %v618 = vmul.f32 %v517, %v517
  %v619 = vmul.f32 %v519, %v519
  %v620 = vmul.f32 %v522, %v522
  %v621 = vmul.f32 %v524, %v524
  %v622 = vmul.f32 %v527, %v527
  %v623 = vmul.f32 %v529, %v529
  %v624 = vmul.f32 %v532, %v532
  %v625 = vmul.f32 %v534, %v534
  %v626 = vmul.f32 %v537, %v537
  %v627 = vmul.f32 %v539, %v539
  %v628 = vmul.f32 %v542, %v542
  %v629 = vmul.f32 %v544, %v544
  %v630 = vmul.f32 %v547, %v547
  %v631 = vmul.f32 %v549, %v549
  %v632 = vmul.f32 %v552, %v552
  %v633 = vmul.f32 %v554, %v554
  %v634 = vmul.f32 %v557, %v557
  %v635 = vmul.f32 %v559, %v559
  %v636 = vmul.f32 %v562, %v562
  %v637 = vmul.f32 %v564, %v564
  %v638 = vmul.f32 %v567, %v567
  %v639 = vmul.f32 %v569, %v569
  %v640 = vadd.f32 %v608, %v609
  %v641 = vadd.f32 %v640, %v610
  %v642 = vadd.f32 %v641, %v611
  %v643 = vadd.f32 %v642, %v612
  %v644 = vadd.f32 %v643, %v613
  %v645 = vadd.f32 %v644, %v614
  %v646 = vadd.f32 %v645, %v615
  %v647 = vadd.f32 %v646, %v616
  %v648 = vadd.f32 %v647, %v617
  %v649 = vadd.f32 %v648, %v618
  %v650 = vadd.f32 %v649, %v619
  %v651 = vadd.f32 %v650, %v620
  %v652 = vadd.f32 %v651, %v621
  %v653 = vadd.f32 %v652, %v622
  %v654 = vadd.f32 %v653, %v623
  %v655 = vadd.f32 %v654, %v624
  %v656 = vadd.f32 %v655, %v625
  %v657 = vadd.f32 %v656, %v626
  %v658 = vadd.f32 %v657, %v627
  %v659 = vadd.f32 %v658, %v628
  %v660 = vadd.f32 %v659, %v629
  %v661 = vadd.f32 %v660, %v630
  %v662 = vadd.f32 %v661, %v631
  %v663 = vadd.f32 %v662, %v632
  %v664 = vadd.f32 %v663, %v633
  %v665 = vadd.f32 %v664, %v634
  %v666 = vadd.f32 %v665, %v635
  %v667 = vadd.f32 %v666, %v636
  %v668 = vadd.f32 %v667, %v637
  %v669 = vadd.f32 %v668, %v638
  %v670 = vadd.f32 %v669, %v639
  %v671 = vrot.slane %v670, 4
  %v672 = vadd.f32 %v670, %v671
  %v673 = vrot.slane %v672, 2
  %v674 = vadd.f32 %v672, %v673
  %v675 = vrot.slane %v674, 1
  %v676 = vadd.f32 %v674, %v675
  %p677 = scmp.eq.s32.totalorder 0, 0
  // Predicated region
  $region22: #{set_abstraction_msg2.7} parent=0 // pred_check
    %p678 = pneg %p677
  $region23: #{set_abstraction_msg2.7} parent=0 // pred_check_branch
    %680 = sbr.rel (%p678) target = $region25
  $region24: #{set_abstraction_msg2.7} parent=0 // pred_region
    %v681 = vlaneseq
    %vm682 = vcmp.ge.s32.totalorder %v681, 0
    %vm683 = vcmp.lt.s32.totalorder %v681, 256
    %vm684 = vmand %vm682, %vm683
    %685 = vst.msk [vmem:[%s5] sm:$0x3] %vm684, 0.0
  $region25: #{set_abstraction_msg2.7} parent=0 // pred_fallthru
    _
  %v686 = vld [vmem:[%s5] sm:$0x1]
  %v687 = vadd.f32 %v686, %v607
  %v688 = vlaneseq
  %vm689 = vcmp.ge.s32.totalorder %v688, 0
  %vm690 = vcmp.lt.s32.totalorder %v688, 128
  %vm691 = vmand %vm689, %vm690
  %692 = vst.msk [vmem:[%s5] sm:$0x1] %vm691, %v687
  %v693 = vld [vmem:[%s5 + $0x1] sm:$0x1]
  %v694 = vadd.f32 %v693, %v676
  %695 = vst.msk [vmem:[%s5 + $0x1] sm:$0x1] %vm691, %v694
  // Predicated region
  $region26: #{set_abstraction_msg2.7} parent=0 // pred_check
    _
  $region27: #{set_abstraction_msg2.7} parent=0 // pred_check_branch
    %697 = sbr.rel (0) target = $region29
  $region28: #{set_abstraction_msg2.7} parent=0 // pred_region
    _
  $region29: #{set_abstraction_msg2.7} parent=0 // pred_fallthru
    _
  // Predicated region
  $region30: #{set_abstraction_msg2.7} parent=0 // pred_check
    _
  $region31: #{set_abstraction_msg2.7} parent=0 // pred_check_branch
    %699 = sbr.rel (0) target = $region33
  $region32: #{set_abstraction_msg2.7} parent=0 // pred_region
    _
  $region33: #{set_abstraction_msg2.7} parent=0 // pred_fallthru
    _

// kernel: set_abstraction_msg2.8
$region0: #{set_abstraction_msg2.8}
  #allocation0 [shape = 'u32[]', space=smem, size = 0x4, offset = 0x4, fixed_abs, tag = 'smem constant byte address 0x4 - core index']
  #allocation1 [shape = 'u32[72,128]{1,0:T(1,128)}', space=vmem, size = 0x9000, scoped, tag = 'internal scratch']
  %s0 = inlined_call_operand.vmem [shape: bf16[256,8], index: 0, kind: input, shape index: {}]
  %s1 = inlined_call_operand.vmem [shape: bf16[8,128], index: 1, kind: input, shape index: {}]
  %s2 = inlined_call_operand.vmem [shape: bf16[128,128], index: 2, kind: input, shape index: {}]
  %s3 = inlined_call_operand.vmem [shape: bf16[128,128], index: 3, kind: input, shape index: {}]
  %s4 = inlined_call_operand.vmem [shape: f32[1,128], index: 4, kind: input, shape index: {}]
  %s5 = inlined_call_operand.vmem [shape: f32[1,128], index: 5, kind: input, shape index: {}]
  %s6 = inlined_call_operand.vmem [shape: f32[1,128], index: 6, kind: input, shape index: {}]
  %s7 = inlined_call_operand.vmem [shape: f32[1,128], index: 7, kind: input, shape index: {}]
  %s8 = inlined_call_operand.vmem [shape: f32[1,1,256], index: 8, kind: output, shape index: {0}]
  %s9 = inlined_call_operand.vmem [shape: f32[32,128], index: 9, kind: output, shape index: {1}]
  %s10 = inlined_call_operand.vmem [shape: f32[32,128], index: 10, kind: output, shape index: {2}]
  %11 = xla_tuple %s8, %s9, %s10
  %s12 = sld [smem:[#allocation0]]
  $region62: #{set_abstraction_msg2.8} parent=0
    _
  %s14 = ssub.s32 1, %s12
  %s15 = scalar_select 0, %s14, %s12
  // Predicated region
  $region2: #{set_abstraction_msg2.8} parent=0 // pred_check
    _
  $region3: #{set_abstraction_msg2.8} parent=0 // pred_check_branch
    %17 = sbr.rel (0) target = $region5
  $region4: #{set_abstraction_msg2.8} parent=0 // pred_region
    %s18 = sadd.s32 0, 0
    %s19 = smul.u32 32, %s18
    %p20 = scmp.lt.s32.totalorder %s19, 31
    %s21 = scalar_select %p20, %s19, 31
    %s22 = smul.addr %s21, 4
    %s23 = scalar_lea.vmem %s0, %s22
    %s24 = sadd.s32 0, 0
    %s25 = smul.u32 32, %s24
  $region5: #{set_abstraction_msg2.8} parent=0 // pred_fallthru
    _
  // Predicated region
  $region6: #{set_abstraction_msg2.8} parent=0 // pred_check
    _
  $region7: #{set_abstraction_msg2.8} parent=0 // pred_check_branch
    %27 = sbr.rel (0) target = $region9
  $region8: #{set_abstraction_msg2.8} parent=0 // pred_region
    _
  $region9: #{set_abstraction_msg2.8} parent=0 // pred_fallthru
    _
  // Predicated region
  $region10: #{set_abstraction_msg2.8} parent=0 // pred_check
    _
  $region11: #{set_abstraction_msg2.8} parent=0 // pred_check_branch
    %29 = sbr.rel (0) target = $region13
  $region12: #{set_abstraction_msg2.8} parent=0 // pred_region
    _
  $region13: #{set_abstraction_msg2.8} parent=0 // pred_fallthru
    _
  // Predicated region
  $region14: #{set_abstraction_msg2.8} parent=0 // pred_check
    _
  $region15: #{set_abstraction_msg2.8} parent=0 // pred_check_branch
    %31 = sbr.rel (0) target = $region17
  $region16: #{set_abstraction_msg2.8} parent=0 // pred_region
    _
  $region17: #{set_abstraction_msg2.8} parent=0 // pred_fallthru
    _
  // Predicated region
  $region18: #{set_abstraction_msg2.8} parent=0 // pred_check
    _
  $region19: #{set_abstraction_msg2.8} parent=0 // pred_check_branch
    %33 = sbr.rel (0) target = $region21
  $region20: #{set_abstraction_msg2.8} parent=0 // pred_region
    _
  $region21: #{set_abstraction_msg2.8} parent=0 // pred_fallthru
    _
  // Predicated region
  $region22: #{set_abstraction_msg2.8} parent=0 // pred_check
    _
  $region23: #{set_abstraction_msg2.8} parent=0 // pred_check_branch
    %35 = sbr.rel (0) target = $region25
  $region24: #{set_abstraction_msg2.8} parent=0 // pred_region
    _
  $region25: #{set_abstraction_msg2.8} parent=0 // pred_fallthru
    _
  // Predicated region
  $region26: #{set_abstraction_msg2.8} parent=0 // pred_check
    _
  $region27: #{set_abstraction_msg2.8} parent=0 // pred_check_branch
    %37 = sbr.rel (0) target = $region29
  $region28: #{set_abstraction_msg2.8} parent=0 // pred_region
    _
  $region29: #{set_abstraction_msg2.8} parent=0 // pred_fallthru
    _
  // Predicated region
  $region30: #{set_abstraction_msg2.8} parent=0 // pred_check
    _
  $region31: #{set_abstraction_msg2.8} parent=0 // pred_check_branch
    %39 = sbr.rel (0) target = $region33
  $region32: #{set_abstraction_msg2.8} parent=0 // pred_region
    _
  $region33: #{set_abstraction_msg2.8} parent=0 // pred_fallthru
    _
  %s40 = sadd.s32 0, 0
  %s41 = smul.u32 32, %s40
  %p42 = scmp.lt.s32.totalorder %s41, 31
  %s43 = scalar_select %p42, %s41, 31
  %s44 = smul.addr %s43, 4
  %s45 = scalar_lea.vmem %s0, %s44
  %s46 = sadd.s32 0, 0
  %s47 = smul.u32 4, %s46
  %p48 = scmp.lt.s32.totalorder %s47, 3
  %s49 = scalar_select %p48, %s47, 3
  %s50 = smul.addr %s49, 8
  %s51 = scalar_lea.vmem %s9, %s50
  %s52 = sadd.s32 0, 0
  %s53 = smul.u32 4, %s52
  %p54 = scmp.lt.s32.totalorder %s53, 3
  %s55 = scalar_select %p54, %s53, 3
  %s56 = smul.addr %s55, 8
  %s57 = scalar_lea.vmem %s10, %s56
  %s58 = sadd.s32 0, 0
  %s59 = smul.u32 32, %s58
  %p60 = scmp.lt.s32.totalorder %s59, 31
  %s61 = scalar_select %p60, %s59, 31
  %s62 = smul.addr %s61, 4
  %s63 = scalar_lea.vmem %s0, %s62
  %s64 = sadd.s32 0, 0
  %s65 = smul.u32 32, %s64
  %s66 = sadd.s32 0, 0
  %s67 = smul.u32 4, %s66
  %p68 = scmp.lt.s32.totalorder %s67, 3
  %s69 = scalar_select %p68, %s67, 3
  %s70 = smul.addr %s69, 8
  %s71 = scalar_lea.vmem %s9, %s70
  %s72 = sadd.s32 0, 0
  %s73 = smul.u32 4, %s72
  %s74 = sadd.s32 0, 0
  %s75 = smul.u32 4, %s74
  %p76 = scmp.lt.s32.totalorder %s75, 3
  %s77 = scalar_select %p76, %s75, 3
  %s78 = smul.addr %s77, 8
  %s79 = scalar_lea.vmem %s10, %s78
  %s80 = sadd.s32 0, 0
  %s81 = smul.u32 4, %s80
  %v83 = vld [vmem:[%s63] sm:$0xf]
  %v84 = vld [vmem:[%s63 + $0x4] sm:$0xf]
  %v85 = vld [vmem:[%s63 + $0x8] sm:$0xf]
  %v86 = vld [vmem:[%s63 + $0xc] sm:$0xf]
  %v87 = vld [vmem:[%s63 + $0x10] sm:$0xf]
  %v88 = vld [vmem:[%s63 + $0x14] sm:$0xf]
  %v89 = vld [vmem:[%s63 + $0x18] sm:$0xf]
  %v90 = vld [vmem:[%s63 + $0x1c] sm:$0xf]
  %v91 = vld [vmem:[%s63 + $0x20] sm:$0xf]
  %v92 = vld [vmem:[%s63 + $0x24] sm:$0xf]
  %v93 = vld [vmem:[%s63 + $0x28] sm:$0xf]
  %v94 = vld [vmem:[%s63 + $0x2c] sm:$0xf]
  %v95 = vld [vmem:[%s63 + $0x30] sm:$0xf]
  %v96 = vld [vmem:[%s63 + $0x34] sm:$0xf]
  %v97 = vld [vmem:[%s63 + $0x38] sm:$0xf]
  %v98 = vld [vmem:[%s63 + $0x3c] sm:$0xf]
  %v99 = vld [vmem:[%s63 + $0x40] sm:$0xf]
  %v100 = vld [vmem:[%s63 + $0x44] sm:$0xf]
  %v101 = vld [vmem:[%s63 + $0x48] sm:$0xf]
  %v102 = vld [vmem:[%s63 + $0x4c] sm:$0xf]
  %v103 = vld [vmem:[%s63 + $0x50] sm:$0xf]
  %v104 = vld [vmem:[%s63 + $0x54] sm:$0xf]
  %v105 = vld [vmem:[%s63 + $0x58] sm:$0xf]
  %v106 = vld [vmem:[%s63 + $0x5c] sm:$0xf]
  %v107 = vld [vmem:[%s63 + $0x60] sm:$0xf]
  %v108 = vld [vmem:[%s63 + $0x64] sm:$0xf]
  %v109 = vld [vmem:[%s63 + $0x68] sm:$0xf]
  %v110 = vld [vmem:[%s63 + $0x6c] sm:$0xf]
  %v111 = vld [vmem:[%s63 + $0x70] sm:$0xf]
  %v112 = vld [vmem:[%s63 + $0x74] sm:$0xf]
  %v113 = vld [vmem:[%s63 + $0x78] sm:$0xf]
  %v114 = vld [vmem:[%s63 + $0x7c] sm:$0xf]
  %v115 = vld [vmem:[%s1] sm:$0xf]
  %v148 = vunpack.c.l.b16 %v83
  %v149 = vunpack.c.l.b16 %v84
  %v150 = vunpack.c.l.b16 %v85
  %v151 = vunpack.c.l.b16 %v86
  %v152 = vunpack.c.l.b16 %v87
  %v153 = vunpack.c.l.b16 %v88
  %v154 = vunpack.c.l.b16 %v89
  %v155 = vunpack.c.l.b16 %v90
  %v156 = vunpack.c.l.b16 %v91
  %v157 = vunpack.c.l.b16 %v92
  %v158 = vunpack.c.l.b16 %v93
  %v159 = vunpack.c.l.b16 %v94
  %v160 = vunpack.c.l.b16 %v95
  %v161 = vunpack.c.l.b16 %v96
  %v162 = vunpack.c.l.b16 %v97
  %v163 = vunpack.c.l.b16 %v98
  %v164 = vunpack.c.l.b16 %v99
  %v165 = vunpack.c.l.b16 %v100
  %v166 = vunpack.c.l.b16 %v101
  %v167 = vunpack.c.l.b16 %v102
  %v168 = vunpack.c.l.b16 %v103
  %v169 = vunpack.c.l.b16 %v104
  %v170 = vunpack.c.l.b16 %v105
  %v171 = vunpack.c.l.b16 %v106
  %v172 = vunpack.c.l.b16 %v107
  %v173 = vunpack.c.l.b16 %v108
  %v174 = vunpack.c.l.b16 %v109
  %v175 = vunpack.c.l.b16 %v110
  %v176 = vunpack.c.l.b16 %v111
  %v177 = vunpack.c.l.b16 %v112
  %v178 = vunpack.c.l.b16 %v113
  %v179 = vunpack.c.l.b16 %v114
  %v180 = vpack.c.b16 %v149, %v148
  %v181 = vpack.c.b16 %v151, %v150
  %v182 = vpack.c.b16 %v153, %v152
  %v183 = vpack.c.b16 %v155, %v154
  %v184 = vpack.c.b16 %v157, %v156
  %v185 = vpack.c.b16 %v159, %v158
  %v186 = vpack.c.b16 %v161, %v160
  %v187 = vpack.c.b16 %v163, %v162
  %v188 = vpack.c.b16 %v165, %v164
  %v189 = vpack.c.b16 %v167, %v166
  %v190 = vpack.c.b16 %v169, %v168
  %v191 = vpack.c.b16 %v171, %v170
  %v192 = vpack.c.b16 %v173, %v172
  %v193 = vpack.c.b16 %v175, %v174
  %v194 = vpack.c.b16 %v177, %v176
  %v195 = vpack.c.b16 %v179, %v178
  %vm196 = vcmask 64512
  %v198 = vsel %vm196, %v180, 0
  %v201 = vsel %vm196, %v181, 0
  %v204 = vsel %vm196, %v182, 0
  %v207 = vsel %vm196, %v183, 0
  %v210 = vsel %vm196, %v184, 0
  %v213 = vsel %vm196, %v185, 0
  %v216 = vsel %vm196, %v186, 0
  %v219 = vsel %vm196, %v187, 0
  %v222 = vsel %vm196, %v188, 0
  %v225 = vsel %vm196, %v189, 0
  %v228 = vsel %vm196, %v190, 0
  %v231 = vsel %vm196, %v191, 0
  %v234 = vsel %vm196, %v192, 0
  %v237 = vsel %vm196, %v193, 0
  %v240 = vsel %vm196, %v194, 0
  %v243 = vsel %vm196, %v195, 0
  %vm245 = vcmask 1043456
  %v247 = vsel %vm245, %v115, 0
  %249 = vmatpush.bf16.msra.mxu0 0
  %250 = vmatpush.bf16.msra.mxu0 0
  %251 = vmatpush.bf16.msra.mxu0 0
  %252 = vmatpush.bf16.msra.mxu0 0
  %253 = vmatpush.bf16.msra.mxu0 0
  %254 = vmatpush.bf16.msra.mxu0 0
  %255 = vmatpush.bf16.msra.mxu0 0
  %256 = vmatpush.bf16.msra.mxu0 %v247
  %257 = vmatmul.bf16.gmra.mxu0 %v198
  %v258 = vpop.f32.mrf.mxu0
  %v259 = vadd.f32 0.0, %v258
  %v260 = vpop.f32.mrf.mxu0
  %v261 = vadd.f32 0.0, %v260
  %262 = vmatmul.bf16.gmra.mxu0 %v201
  %v263 = vpop.f32.mrf.mxu0
  %v264 = vadd.f32 0.0, %v263
  %v265 = vpop.f32.mrf.mxu0
  %v266 = vadd.f32 0.0, %v265
  %267 = vmatmul.bf16.gmra.mxu0 %v204
  %v268 = vpop.f32.mrf.mxu0
  %v269 = vadd.f32 0.0, %v268
  %v270 = vpop.f32.mrf.mxu0
  %v271 = vadd.f32 0.0, %v270
  %272 = vmatmul.bf16.gmra.mxu0 %v207
  %v273 = vpop.f32.mrf.mxu0
  %v274 = vadd.f32 0.0, %v273
  %v275 = vpop.f32.mrf.mxu0
  %v276 = vadd.f32 0.0, %v275
  %277 = vmatmul.bf16.gmra.mxu0 %v210
  %v278 = vpop.f32.mrf.mxu0
  %v279 = vadd.f32 0.0, %v278
  %v280 = vpop.f32.mrf.mxu0
  %v281 = vadd.f32 0.0, %v280
  %282 = vmatmul.bf16.gmra.mxu0 %v213
  %v283 = vpop.f32.mrf.mxu0
  %v284 = vadd.f32 0.0, %v283
  %v285 = vpop.f32.mrf.mxu0
  %v286 = vadd.f32 0.0, %v285
  %287 = vmatmul.bf16.gmra.mxu0 %v216
  %v288 = vpop.f32.mrf.mxu0
  %v289 = vadd.f32 0.0, %v288
  %v290 = vpop.f32.mrf.mxu0
  %v291 = vadd.f32 0.0, %v290
  %292 = vmatmul.bf16.gmra.mxu0 %v219
  %v293 = vpop.f32.mrf.mxu0
  %v294 = vadd.f32 0.0, %v293
  %v295 = vpop.f32.mrf.mxu0
  %v296 = vadd.f32 0.0, %v295
  %297 = vmatmul.bf16.gmra.mxu0 %v222
  %v298 = vpop.f32.mrf.mxu0
  %v299 = vadd.f32 0.0, %v298
  %v300 = vpop.f32.mrf.mxu0
  %v301 = vadd.f32 0.0, %v300
  %302 = vmatmul.bf16.gmra.mxu0 %v225
  %v303 = vpop.f32.mrf.mxu0
  %v304 = vadd.f32 0.0, %v303
  %v305 = vpop.f32.mrf.mxu0
  %v306 = vadd.f32 0.0, %v305
  %307 = vmatmul.bf16.gmra.mxu0 %v228
  %v308 = vpop.f32.mrf.mxu0
  %v309 = vadd.f32 0.0, %v308
  %v310 = vpop.f32.mrf.mxu0
  %v311 = vadd.f32 0.0, %v310
  %312 = vmatmul.bf16.gmra.mxu0 %v231
  %v313 = vpop.f32.mrf.mxu0
  %v314 = vadd.f32 0.0, %v313
  %v315 = vpop.f32.mrf.mxu0
  %v316 = vadd.f32 0.0, %v315
  %317 = vmatmul.bf16.gmra.mxu0 %v234
  %v318 = vpop.f32.mrf.mxu0
  %v319 = vadd.f32 0.0, %v318
  %v320 = vpop.f32.mrf.mxu0
  %v321 = vadd.f32 0.0, %v320
  %322 = vmatmul.bf16.gmra.mxu0 %v237
  %v323 = vpop.f32.mrf.mxu0
  %v324 = vadd.f32 0.0, %v323
  %v325 = vpop.f32.mrf.mxu0
  %v326 = vadd.f32 0.0, %v325
  %327 = vmatmul.bf16.gmra.mxu0 %v240
  %v328 = vpop.f32.mrf.mxu0
  %v329 = vadd.f32 0.0, %v328
  %v330 = vpop.f32.mrf.mxu0
  %v331 = vadd.f32 0.0, %v330
  %332 = vmatmul.bf16.gmra.mxu0 %v243
  %v333 = vpop.f32.mrf.mxu0
  %v334 = vadd.f32 0.0, %v333
  %v335 = vpop.f32.mrf.mxu0
  %v336 = vadd.f32 0.0, %v335
  %337 = vdwg.mxu0
  %v338 = vld [vmem:[%s4] sm:$0x1]
  %v340 = vperm.slane %v338, 0
  %v342 = vmul.f32 %v259, %v340
  %v343 = vmul.f32 %v261, %v340
  %v344 = vmul.f32 %v264, %v340
  %v345 = vmul.f32 %v266, %v340
  %v346 = vmul.f32 %v269, %v340
  %v347 = vmul.f32 %v271, %v340
  %v348 = vmul.f32 %v274, %v340
  %v349 = vmul.f32 %v276, %v340
  %v350 = vmul.f32 %v279, %v340
  %v351 = vmul.f32 %v281, %v340
  %v352 = vmul.f32 %v284, %v340
  %v353 = vmul.f32 %v286, %v340
  %v354 = vmul.f32 %v289, %v340
  %v355 = vmul.f32 %v291, %v340
  %v356 = vmul.f32 %v294, %v340
  %v357 = vmul.f32 %v296, %v340
  %v358 = vmul.f32 %v299, %v340
  %v359 = vmul.f32 %v301, %v340
  %v360 = vmul.f32 %v304, %v340
  %v361 = vmul.f32 %v306, %v340
  %v362 = vmul.f32 %v309, %v340
  %v363 = vmul.f32 %v311, %v340
  %v364 = vmul.f32 %v314, %v340
  %v365 = vmul.f32 %v316, %v340
  %v366 = vmul.f32 %v319, %v340
  %v367 = vmul.f32 %v321, %v340
  %v368 = vmul.f32 %v324, %v340
  %v369 = vmul.f32 %v326, %v340
  %v370 = vmul.f32 %v329, %v340
  %v371 = vmul.f32 %v331, %v340
  %v372 = vmul.f32 %v334, %v340
  %v373 = vmul.f32 %v336, %v340
  %v374 = vld [vmem:[%s6] sm:$0x1]
  %v376 = vperm.slane %v374, 0
  %v378 = vadd.f32 %v342, %v376
  %v379 = vadd.f32 %v343, %v376
  %v380 = vadd.f32 %v344, %v376
  %v381 = vadd.f32 %v345, %v376
  %v382 = vadd.f32 %v346, %v376
  %v383 = vadd.f32 %v347, %v376
  %v384 = vadd.f32 %v348, %v376
  %v385 = vadd.f32 %v349, %v376
  %v386 = vadd.f32 %v350, %v376
  %v387 = vadd.f32 %v351, %v376
  %v388 = vadd.f32 %v352, %v376
  %v389 = vadd.f32 %v353, %v376
  %v390 = vadd.f32 %v354, %v376
  %v391 = vadd.f32 %v355, %v376
  %v392 = vadd.f32 %v356, %v376
  %v393 = vadd.f32 %v357, %v376
  %v394 = vadd.f32 %v358, %v376
  %v395 = vadd.f32 %v359, %v376
  %v396 = vadd.f32 %v360, %v376
  %v397 = vadd.f32 %v361, %v376
  %v398 = vadd.f32 %v362, %v376
  %v399 = vadd.f32 %v363, %v376
  %v400 = vadd.f32 %v364, %v376
  %v401 = vadd.f32 %v365, %v376
  %v402 = vadd.f32 %v366, %v376
  %v403 = vadd.f32 %v367, %v376
  %v404 = vadd.f32 %v368, %v376
  %v405 = vadd.f32 %v369, %v376
  %v406 = vadd.f32 %v370, %v376
  %v407 = vadd.f32 %v371, %v376
  %v408 = vadd.f32 %v372, %v376
  %v409 = vadd.f32 %v373, %v376
  %v410 = vmax.f32 %v378, 0.0
  %v411 = vmax.f32 %v379, 0.0
  %v412 = vmax.f32 %v380, 0.0
  %v413 = vmax.f32 %v381, 0.0
  %v414 = vmax.f32 %v382, 0.0
  %v415 = vmax.f32 %v383, 0.0
  %v416 = vmax.f32 %v384, 0.0
  %v417 = vmax.f32 %v385, 0.0
  %v418 = vmax.f32 %v386, 0.0
  %v419 = vmax.f32 %v387, 0.0
  %v420 = vmax.f32 %v388, 0.0
  %v421 = vmax.f32 %v389, 0.0
  %v422 = vmax.f32 %v390, 0.0
  %v423 = vmax.f32 %v391, 0.0
  %v424 = vmax.f32 %v392, 0.0
  %v425 = vmax.f32 %v393, 0.0
  %v426 = vmax.f32 %v394, 0.0
  %v427 = vmax.f32 %v395, 0.0
  %v428 = vmax.f32 %v396, 0.0
  %v429 = vmax.f32 %v397, 0.0
  %v430 = vmax.f32 %v398, 0.0
  %v431 = vmax.f32 %v399, 0.0
  %v432 = vmax.f32 %v400, 0.0
  %v433 = vmax.f32 %v401, 0.0
  %v434 = vmax.f32 %v402, 0.0
  %v435 = vmax.f32 %v403, 0.0
  %v436 = vmax.f32 %v404, 0.0
  %v437 = vmax.f32 %v405, 0.0
  %v438 = vmax.f32 %v406, 0.0
  %v439 = vmax.f32 %v407, 0.0
  %v440 = vmax.f32 %v408, 0.0
  %v441 = vmax.f32 %v409, 0.0
  %v442 = vpack.c.bf16 %v411, %v410
  %v443 = vpack.c.bf16 %v413, %v412
  %v444 = vpack.c.bf16 %v415, %v414
  %v445 = vpack.c.bf16 %v417, %v416
  %v446 = vpack.c.bf16 %v419, %v418
  %v447 = vpack.c.bf16 %v421, %v420
  %v448 = vpack.c.bf16 %v423, %v422
  %v449 = vpack.c.bf16 %v425, %v424
  %v450 = vpack.c.bf16 %v427, %v426
  %v451 = vpack.c.bf16 %v429, %v428
  %v452 = vpack.c.bf16 %v431, %v430
  %v453 = vpack.c.bf16 %v433, %v432
  %v454 = vpack.c.bf16 %v435, %v434
  %v455 = vpack.c.bf16 %v437, %v436
  %v456 = vpack.c.bf16 %v439, %v438
  %v457 = vpack.c.bf16 %v441, %v440
  %v458 = vld [vmem:[%s2] sm:$0xf]
  %v459 = vld [vmem:[%s2 + $0x4] sm:$0xf]
  %v460 = vld [vmem:[%s2 + $0x8] sm:$0xf]
  %v461 = vld [vmem:[%s2 + $0xc] sm:$0xf]
  %v462 = vld [vmem:[%s2 + $0x10] sm:$0xf]
  %v463 = vld [vmem:[%s2 + $0x14] sm:$0xf]
  %v464 = vld [vmem:[%s2 + $0x18] sm:$0xf]
  %v465 = vld [vmem:[%s2 + $0x1c] sm:$0xf]
  %v466 = vld [vmem:[%s2 + $0x20] sm:$0xf]
  %v467 = vld [vmem:[%s2 + $0x24] sm:$0xf]
  %v468 = vld [vmem:[%s2 + $0x28] sm:$0xf]
  %v469 = vld [vmem:[%s2 + $0x2c] sm:$0xf]
  %v470 = vld [vmem:[%s2 + $0x30] sm:$0xf]
  %v471 = vld [vmem:[%s2 + $0x34] sm:$0xf]
  %v472 = vld [vmem:[%s2 + $0x38] sm:$0xf]
  %v473 = vld [vmem:[%s2 + $0x3c] sm:$0xf]
  %v490 = vunpack.c.l.b16 %v458
  %v491 = vunpack.c.l.b16 %v459
  %v492 = vunpack.c.l.b16 %v460
  %v493 = vunpack.c.l.b16 %v461
  %v494 = vunpack.c.l.b16 %v462
  %v495 = vunpack.c.l.b16 %v463
  %v496 = vunpack.c.l.b16 %v464
  %v497 = vunpack.c.l.b16 %v465
  %v498 = vunpack.c.l.b16 %v466
  %v499 = vunpack.c.l.b16 %v467
  %v500 = vunpack.c.l.b16 %v468
  %v501 = vunpack.c.l.b16 %v469
  %v502 = vunpack.c.l.b16 %v470
  %v503 = vunpack.c.l.b16 %v471
  %v504 = vunpack.c.l.b16 %v472
  %v505 = vunpack.c.l.b16 %v473
  %v506 = vpack.c.b16 %v491, %v490
  %v507 = vpack.c.b16 %v493, %v492
  %v508 = vpack.c.b16 %v495, %v494
  %v509 = vpack.c.b16 %v497, %v496
  %v510 = vpack.c.b16 %v499, %v498
  %v511 = vpack.c.b16 %v501, %v500
  %v512 = vpack.c.b16 %v503, %v502
  %v513 = vpack.c.b16 %v505, %v504
  %522 = vmatpush.bf16.msra.mxu0 %v513
  %523 = vmatpush.bf16.msra.mxu0 %v512
  %524 = vmatpush.bf16.msra.mxu0 %v511
  %525 = vmatpush.bf16.msra.mxu0 %v510
  %526 = vmatpush.bf16.msra.mxu0 %v509
  %527 = vmatpush.bf16.msra.mxu0 %v508
  %528 = vmatpush.bf16.msra.mxu0 %v507
  %529 = vmatpush.bf16.msra.mxu0 %v506
  %530 = vmatmul.bf16.gmra.mxu0 %v442
  %v531 = vpop.f32.mrf.mxu0
  %v532 = vadd.f32 0.0, %v531
  %v533 = vpop.f32.mrf.mxu0
  %v534 = vadd.f32 0.0, %v533
  %535 = vmatmul.bf16.gmra.mxu0 %v443
  %v536 = vpop.f32.mrf.mxu0
  %v537 = vadd.f32 0.0, %v536
  %v538 = vpop.f32.mrf.mxu0
  %v539 = vadd.f32 0.0, %v538
  %540 = vmatmul.bf16.gmra.mxu0 %v444
  %v541 = vpop.f32.mrf.mxu0
  %v542 = vadd.f32 0.0, %v541
  %v543 = vpop.f32.mrf.mxu0
  %v544 = vadd.f32 0.0, %v543
  %545 = vmatmul.bf16.gmra.mxu0 %v445
  %v546 = vpop.f32.mrf.mxu0
  %v547 = vadd.f32 0.0, %v546
  %v548 = vpop.f32.mrf.mxu0
  %v549 = vadd.f32 0.0, %v548
  %550 = vmatmul.bf16.gmra.mxu0 %v446
  %v551 = vpop.f32.mrf.mxu0
  %v552 = vadd.f32 0.0, %v551
  %v553 = vpop.f32.mrf.mxu0
  %v554 = vadd.f32 0.0, %v553
  %555 = vmatmul.bf16.gmra.mxu0 %v447
  %v556 = vpop.f32.mrf.mxu0
  %v557 = vadd.f32 0.0, %v556
  %v558 = vpop.f32.mrf.mxu0
  %v559 = vadd.f32 0.0, %v558
  %560 = vmatmul.bf16.gmra.mxu0 %v448
  %v561 = vpop.f32.mrf.mxu0
  %v562 = vadd.f32 0.0, %v561
  %v563 = vpop.f32.mrf.mxu0
  %v564 = vadd.f32 0.0, %v563
  %565 = vmatmul.bf16.gmra.mxu0 %v449
  %v566 = vpop.f32.mrf.mxu0
  %v567 = vadd.f32 0.0, %v566
  %v568 = vpop.f32.mrf.mxu0
  %v569 = vadd.f32 0.0, %v568
  %570 = vmatmul.bf16.gmra.mxu0 %v450
  %v571 = vpop.f32.mrf.mxu0
  %v572 = vadd.f32 0.0, %v571
  %v573 = vpop.f32.mrf.mxu0
  %v574 = vadd.f32 0.0, %v573
  %575 = vmatmul.bf16.gmra.mxu0 %v451
  %v576 = vpop.f32.mrf.mxu0
  %v577 = vadd.f32 0.0, %v576
  %v578 = vpop.f32.mrf.mxu0
  %v579 = vadd.f32 0.0, %v578
  %580 = vmatmul.bf16.gmra.mxu0 %v452
  %v581 = vpop.f32.mrf.mxu0
  %v582 = vadd.f32 0.0, %v581
  %v583 = vpop.f32.mrf.mxu0
  %v584 = vadd.f32 0.0, %v583
  %585 = vmatmul.bf16.gmra.mxu0 %v453
  %v586 = vpop.f32.mrf.mxu0
  %v587 = vadd.f32 0.0, %v586
  %v588 = vpop.f32.mrf.mxu0
  %v589 = vadd.f32 0.0, %v588
  %590 = vmatmul.bf16.gmra.mxu0 %v454
  %v591 = vpop.f32.mrf.mxu0
  %v592 = vadd.f32 0.0, %v591
  %v593 = vpop.f32.mrf.mxu0
  %v594 = vadd.f32 0.0, %v593
  %595 = vmatmul.bf16.gmra.mxu0 %v455
  %v596 = vpop.f32.mrf.mxu0
  %v597 = vadd.f32 0.0, %v596
  %v598 = vpop.f32.mrf.mxu0
  %v599 = vadd.f32 0.0, %v598
  %600 = vmatmul.bf16.gmra.mxu0 %v456
  %v601 = vpop.f32.mrf.mxu0
  %v602 = vadd.f32 0.0, %v601
  %v603 = vpop.f32.mrf.mxu0
  %v604 = vadd.f32 0.0, %v603
  %605 = vmatmul.bf16.gmra.mxu0 %v457
  %v606 = vpop.f32.mrf.mxu0
  %v607 = vadd.f32 0.0, %v606
  %v608 = vpop.f32.mrf.mxu0
  %v609 = vadd.f32 0.0, %v608
  %610 = vdwg.mxu0
  %v611 = vld [vmem:[%s5] sm:$0x1]
  %v613 = vperm.slane %v611, 0
  %v615 = vmul.f32 %v532, %v613
  %v616 = vmul.f32 %v534, %v613
  %v617 = vmul.f32 %v537, %v613
  %v618 = vmul.f32 %v539, %v613
  %v619 = vmul.f32 %v542, %v613
  %v620 = vmul.f32 %v544, %v613
  %v621 = vmul.f32 %v547, %v613
  %v622 = vmul.f32 %v549, %v613
  %v623 = vmul.f32 %v552, %v613
  %v624 = vmul.f32 %v554, %v613
  %v625 = vmul.f32 %v557, %v613
  %v626 = vmul.f32 %v559, %v613
  %v627 = vmul.f32 %v562, %v613
  %v628 = vmul.f32 %v564, %v613
  %v629 = vmul.f32 %v567, %v613
  %v630 = vmul.f32 %v569, %v613
  %v631 = vmul.f32 %v572, %v613
  %v632 = vmul.f32 %v574, %v613
  %v633 = vmul.f32 %v577, %v613
  %v634 = vmul.f32 %v579, %v613
  %v635 = vmul.f32 %v582, %v613
  %v636 = vmul.f32 %v584, %v613
  %v637 = vmul.f32 %v587, %v613
  %v638 = vmul.f32 %v589, %v613
  %v639 = vmul.f32 %v592, %v613
  %v640 = vmul.f32 %v594, %v613
  %v641 = vmul.f32 %v597, %v613
  %v642 = vmul.f32 %v599, %v613
  %v643 = vmul.f32 %v602, %v613
  %v644 = vmul.f32 %v604, %v613
  %v645 = vmul.f32 %v607, %v613
  %v646 = vmul.f32 %v609, %v613
  %v647 = vld [vmem:[%s7] sm:$0x1]
  %v649 = vperm.slane %v647, 0
  %v651 = vadd.f32 %v615, %v649
  %v652 = vadd.f32 %v616, %v649
  %v653 = vadd.f32 %v617, %v649
  %v654 = vadd.f32 %v618, %v649
  %v655 = vadd.f32 %v619, %v649
  %v656 = vadd.f32 %v620, %v649
  %v657 = vadd.f32 %v621, %v649
  %v658 = vadd.f32 %v622, %v649
  %v659 = vadd.f32 %v623, %v649
  %v660 = vadd.f32 %v624, %v649
  %v661 = vadd.f32 %v625, %v649
  %v662 = vadd.f32 %v626, %v649
  %v663 = vadd.f32 %v627, %v649
  %v664 = vadd.f32 %v628, %v649
  %v665 = vadd.f32 %v629, %v649
  %v666 = vadd.f32 %v630, %v649
  %v667 = vadd.f32 %v631, %v649
  %v668 = vadd.f32 %v632, %v649
  %v669 = vadd.f32 %v633, %v649
  %v670 = vadd.f32 %v634, %v649
  %v671 = vadd.f32 %v635, %v649
  %v672 = vadd.f32 %v636, %v649
  %v673 = vadd.f32 %v637, %v649
  %v674 = vadd.f32 %v638, %v649
  %v675 = vadd.f32 %v639, %v649
  %v676 = vadd.f32 %v640, %v649
  %v677 = vadd.f32 %v641, %v649
  %v678 = vadd.f32 %v642, %v649
  %v679 = vadd.f32 %v643, %v649
  %v680 = vadd.f32 %v644, %v649
  %v681 = vadd.f32 %v645, %v649
  %v682 = vadd.f32 %v646, %v649
  %v683 = vmax.f32 %v651, 0.0
  %v684 = vmax.f32 %v652, 0.0
  %v685 = vmax.f32 %v653, 0.0
  %v686 = vmax.f32 %v654, 0.0
  %v687 = vmax.f32 %v655, 0.0
  %v688 = vmax.f32 %v656, 0.0
  %v689 = vmax.f32 %v657, 0.0
  %v690 = vmax.f32 %v658, 0.0
  %v691 = vmax.f32 %v659, 0.0
  %v692 = vmax.f32 %v660, 0.0
  %v693 = vmax.f32 %v661, 0.0
  %v694 = vmax.f32 %v662, 0.0
  %v695 = vmax.f32 %v663, 0.0
  %v696 = vmax.f32 %v664, 0.0
  %v697 = vmax.f32 %v665, 0.0
  %v698 = vmax.f32 %v666, 0.0
  %v699 = vmax.f32 %v667, 0.0
  %v700 = vmax.f32 %v668, 0.0
  %v701 = vmax.f32 %v669, 0.0
  %v702 = vmax.f32 %v670, 0.0
  %v703 = vmax.f32 %v671, 0.0
  %v704 = vmax.f32 %v672, 0.0
  %v705 = vmax.f32 %v673, 0.0
  %v706 = vmax.f32 %v674, 0.0
  %v707 = vmax.f32 %v675, 0.0
  %v708 = vmax.f32 %v676, 0.0
  %v709 = vmax.f32 %v677, 0.0
  %v710 = vmax.f32 %v678, 0.0
  %v711 = vmax.f32 %v679, 0.0
  %v712 = vmax.f32 %v680, 0.0
  %v713 = vmax.f32 %v681, 0.0
  %v714 = vmax.f32 %v682, 0.0
  %v715 = vpack.c.bf16 %v684, %v683
  %v716 = vpack.c.bf16 %v686, %v685
  %v717 = vpack.c.bf16 %v688, %v687
  %v718 = vpack.c.bf16 %v690, %v689
  %v719 = vpack.c.bf16 %v692, %v691
  %v720 = vpack.c.bf16 %v694, %v693
  %v721 = vpack.c.bf16 %v696, %v695
  %v722 = vpack.c.bf16 %v698, %v697
  %v723 = vpack.c.bf16 %v700, %v699
  %v724 = vpack.c.bf16 %v702, %v701
  %v725 = vpack.c.bf16 %v704, %v703
  %v726 = vpack.c.bf16 %v706, %v705
  %v727 = vpack.c.bf16 %v708, %v707
  %v728 = vpack.c.bf16 %v710, %v709
  %v729 = vpack.c.bf16 %v712, %v711
  %v730 = vpack.c.bf16 %v714, %v713
  %v731 = vld [vmem:[%s3] sm:$0xf]
  %v732 = vld [vmem:[%s3 + $0x4] sm:$0xf]
  %v733 = vld [vmem:[%s3 + $0x8] sm:$0xf]
  %v734 = vld [vmem:[%s3 + $0xc] sm:$0xf]
  %v735 = vld [vmem:[%s3 + $0x10] sm:$0xf]
  %v736 = vld [vmem:[%s3 + $0x14] sm:$0xf]
  %v737 = vld [vmem:[%s3 + $0x18] sm:$0xf]
  %v738 = vld [vmem:[%s3 + $0x1c] sm:$0xf]
  %v739 = vld [vmem:[%s3 + $0x20] sm:$0xf]
  %v740 = vld [vmem:[%s3 + $0x24] sm:$0xf]
  %v741 = vld [vmem:[%s3 + $0x28] sm:$0xf]
  %v742 = vld [vmem:[%s3 + $0x2c] sm:$0xf]
  %v743 = vld [vmem:[%s3 + $0x30] sm:$0xf]
  %v744 = vld [vmem:[%s3 + $0x34] sm:$0xf]
  %v745 = vld [vmem:[%s3 + $0x38] sm:$0xf]
  %v746 = vld [vmem:[%s3 + $0x3c] sm:$0xf]
  %v763 = vunpack.c.l.b16 %v731
  %v764 = vunpack.c.l.b16 %v732
  %v765 = vunpack.c.l.b16 %v733
  %v766 = vunpack.c.l.b16 %v734
  %v767 = vunpack.c.l.b16 %v735
  %v768 = vunpack.c.l.b16 %v736
  %v769 = vunpack.c.l.b16 %v737
  %v770 = vunpack.c.l.b16 %v738
  %v771 = vunpack.c.l.b16 %v739
  %v772 = vunpack.c.l.b16 %v740
  %v773 = vunpack.c.l.b16 %v741
  %v774 = vunpack.c.l.b16 %v742
  %v775 = vunpack.c.l.b16 %v743
  %v776 = vunpack.c.l.b16 %v744
  %v777 = vunpack.c.l.b16 %v745
  %v778 = vunpack.c.l.b16 %v746
  %v779 = vpack.c.b16 %v764, %v763
  %v780 = vpack.c.b16 %v766, %v765
  %v781 = vpack.c.b16 %v768, %v767
  %v782 = vpack.c.b16 %v770, %v769
  %v783 = vpack.c.b16 %v772, %v771
  %v784 = vpack.c.b16 %v774, %v773
  %v785 = vpack.c.b16 %v776, %v775
  %v786 = vpack.c.b16 %v778, %v777
  %795 = vmatpush.bf16.msra.mxu0 %v786
  %796 = vmatpush.bf16.msra.mxu0 %v785
  %797 = vmatpush.bf16.msra.mxu0 %v784
  %798 = vmatpush.bf16.msra.mxu0 %v783
  %799 = vmatpush.bf16.msra.mxu0 %v782
  %800 = vmatpush.bf16.msra.mxu0 %v781
  %801 = vmatpush.bf16.msra.mxu0 %v780
  %802 = vmatpush.bf16.msra.mxu0 %v779
  %803 = vmatmul.bf16.gmra.mxu0 %v715
  %v804 = vpop.f32.mrf.mxu0
  %v805 = vadd.f32 0.0, %v804
  %v806 = vpop.f32.mrf.mxu0
  %v807 = vadd.f32 0.0, %v806
  %808 = vmatmul.bf16.gmra.mxu0 %v716
  %v809 = vpop.f32.mrf.mxu0
  %v810 = vadd.f32 0.0, %v809
  %v811 = vpop.f32.mrf.mxu0
  %v812 = vadd.f32 0.0, %v811
  %813 = vmatmul.bf16.gmra.mxu0 %v717
  %v814 = vpop.f32.mrf.mxu0
  %v815 = vadd.f32 0.0, %v814
  %v816 = vpop.f32.mrf.mxu0
  %v817 = vadd.f32 0.0, %v816
  %818 = vmatmul.bf16.gmra.mxu0 %v718
  %v819 = vpop.f32.mrf.mxu0
  %v820 = vadd.f32 0.0, %v819
  %v821 = vpop.f32.mrf.mxu0
  %v822 = vadd.f32 0.0, %v821
  %823 = vmatmul.bf16.gmra.mxu0 %v719
  %v824 = vpop.f32.mrf.mxu0
  %v825 = vadd.f32 0.0, %v824
  %v826 = vpop.f32.mrf.mxu0
  %v827 = vadd.f32 0.0, %v826
  %828 = vmatmul.bf16.gmra.mxu0 %v720
  %v829 = vpop.f32.mrf.mxu0
  %v830 = vadd.f32 0.0, %v829
  %v831 = vpop.f32.mrf.mxu0
  %v832 = vadd.f32 0.0, %v831
  %833 = vmatmul.bf16.gmra.mxu0 %v721
  %v834 = vpop.f32.mrf.mxu0
  %v835 = vadd.f32 0.0, %v834
  %v836 = vpop.f32.mrf.mxu0
  %v837 = vadd.f32 0.0, %v836
  %838 = vmatmul.bf16.gmra.mxu0 %v722
  %v839 = vpop.f32.mrf.mxu0
  %v840 = vadd.f32 0.0, %v839
  %v841 = vpop.f32.mrf.mxu0
  %v842 = vadd.f32 0.0, %v841
  %843 = vmatmul.bf16.gmra.mxu0 %v723
  %v844 = vpop.f32.mrf.mxu0
  %v845 = vadd.f32 0.0, %v844
  %v846 = vpop.f32.mrf.mxu0
  %v847 = vadd.f32 0.0, %v846
  %848 = vmatmul.bf16.gmra.mxu0 %v724
  %v849 = vpop.f32.mrf.mxu0
  %v850 = vadd.f32 0.0, %v849
  %v851 = vpop.f32.mrf.mxu0
  %v852 = vadd.f32 0.0, %v851
  %853 = vmatmul.bf16.gmra.mxu0 %v725
  %v854 = vpop.f32.mrf.mxu0
  %v855 = vadd.f32 0.0, %v854
  %v856 = vpop.f32.mrf.mxu0
  %v857 = vadd.f32 0.0, %v856
  %858 = vmatmul.bf16.gmra.mxu0 %v726
  %v859 = vpop.f32.mrf.mxu0
  %v860 = vadd.f32 0.0, %v859
  %v861 = vpop.f32.mrf.mxu0
  %v862 = vadd.f32 0.0, %v861
  %863 = vmatmul.bf16.gmra.mxu0 %v727
  %v864 = vpop.f32.mrf.mxu0
  %v865 = vadd.f32 0.0, %v864
  %v866 = vpop.f32.mrf.mxu0
  %v867 = vadd.f32 0.0, %v866
  %868 = vmatmul.bf16.gmra.mxu0 %v728
  %v869 = vpop.f32.mrf.mxu0
  %v870 = vadd.f32 0.0, %v869
  %v871 = vpop.f32.mrf.mxu0
  %v872 = vadd.f32 0.0, %v871
  %873 = vmatmul.bf16.gmra.mxu0 %v729
  %v874 = vpop.f32.mrf.mxu0
  %v875 = vadd.f32 0.0, %v874
  %v876 = vpop.f32.mrf.mxu0
  %v877 = vadd.f32 0.0, %v876
  %878 = vmatmul.bf16.gmra.mxu0 %v730
  %v879 = vpop.f32.mrf.mxu0
  %v880 = vadd.f32 0.0, %v879
  %v881 = vpop.f32.mrf.mxu0
  %v882 = vadd.f32 0.0, %v881
  %883 = vdwg.mxu0
  %v884 = vadd.f32 %v805, %v807
  %v885 = vadd.f32 %v884, %v810
  %v886 = vadd.f32 %v885, %v812
  %v887 = vadd.f32 %v886, %v815
  %v888 = vadd.f32 %v887, %v817
  %v889 = vadd.f32 %v888, %v820
  %v890 = vadd.f32 %v889, %v822
  %v891 = vadd.f32 %v890, %v825
  %v892 = vadd.f32 %v891, %v827
  %v893 = vadd.f32 %v892, %v830
  %v894 = vadd.f32 %v893, %v832
  %v895 = vadd.f32 %v894, %v835
  %v896 = vadd.f32 %v895, %v837
  %v897 = vadd.f32 %v896, %v840
  %v898 = vadd.f32 %v897, %v842
  %v899 = vadd.f32 %v898, %v845
  %v900 = vadd.f32 %v899, %v847
  %v901 = vadd.f32 %v900, %v850
  %v902 = vadd.f32 %v901, %v852
  %v903 = vadd.f32 %v902, %v855
  %v904 = vadd.f32 %v903, %v857
  %v905 = vadd.f32 %v904, %v860
  %v906 = vadd.f32 %v905, %v862
  %v907 = vadd.f32 %v906, %v865
  %v908 = vadd.f32 %v907, %v867
  %v909 = vadd.f32 %v908, %v870
  %v910 = vadd.f32 %v909, %v872
  %v911 = vadd.f32 %v910, %v875
  %v912 = vadd.f32 %v911, %v877
  %v913 = vadd.f32 %v912, %v880
  %v914 = vadd.f32 %v913, %v882
  %v915 = vrot.slane %v914, 4
  %v916 = vadd.f32 %v914, %v915
  %v917 = vrot.slane %v916, 2
  %v918 = vadd.f32 %v916, %v917
  %v919 = vrot.slane %v918, 1
  %v920 = vadd.f32 %v918, %v919
  %v921 = vmul.f32 %v805, %v805
  %v922 = vmul.f32 %v807, %v807
  %v923 = vmul.f32 %v810, %v810
  %v924 = vmul.f32 %v812, %v812
  %v925 = vmul.f32 %v815, %v815
  %v926 = vmul.f32 %v817, %v817
  %v927 = vmul.f32 %v820, %v820
  %v928 = vmul.f32 %v822, %v822
  %v929 = vmul.f32 %v825, %v825
  %v930 = vmul.f32 %v827, %v827
  %v931 = vmul.f32 %v830, %v830
  %v932 = vmul.f32 %v832, %v832
  %v933 = vmul.f32 %v835, %v835
  %v934 = vmul.f32 %v837, %v837
  %v935 = vmul.f32 %v840, %v840
  %v936 = vmul.f32 %v842, %v842
  %v937 = vmul.f32 %v845, %v845
  %v938 = vmul.f32 %v847, %v847
  %v939 = vmul.f32 %v850, %v850
  %v940 = vmul.f32 %v852, %v852
  %v941 = vmul.f32 %v855, %v855
  %v942 = vmul.f32 %v857, %v857
  %v943 = vmul.f32 %v860, %v860
  %v944 = vmul.f32 %v862, %v862
  %v945 = vmul.f32 %v865, %v865
  %v946 = vmul.f32 %v867, %v867
  %v947 = vmul.f32 %v870, %v870
  %v948 = vmul.f32 %v872, %v872
  %v949 = vmul.f32 %v875, %v875
  %v950 = vmul.f32 %v877, %v877
  %v951 = vmul.f32 %v880, %v880
  %v952 = vmul.f32 %v882, %v882
  %v953 = vadd.f32 %v921, %v922
  %v954 = vadd.f32 %v953, %v923
  %v955 = vadd.f32 %v954, %v924
  %v956 = vadd.f32 %v955, %v925
  %v957 = vadd.f32 %v956, %v926
  %v958 = vadd.f32 %v957, %v927
  %v959 = vadd.f32 %v958, %v928
  %v960 = vadd.f32 %v959, %v929
  %v961 = vadd.f32 %v960, %v930
  %v962 = vadd.f32 %v961, %v931
  %v963 = vadd.f32 %v962, %v932
  %v964 = vadd.f32 %v963, %v933
  %v965 = vadd.f32 %v964, %v934
  %v966 = vadd.f32 %v965, %v935
  %v967 = vadd.f32 %v966, %v936
  %v968 = vadd.f32 %v967, %v937
  %v969 = vadd.f32 %v968, %v938
  %v970 = vadd.f32 %v969, %v939
  %v971 = vadd.f32 %v970, %v940
  %v972 = vadd.f32 %v971, %v941
  %v973 = vadd.f32 %v972, %v942
  %v974 = vadd.f32 %v973, %v943
  %v975 = vadd.f32 %v974, %v944
  %v976 = vadd.f32 %v975, %v945
  %v977 = vadd.f32 %v976, %v946
  %v978 = vadd.f32 %v977, %v947
  %v979 = vadd.f32 %v978, %v948
  %v980 = vadd.f32 %v979, %v949
  %v981 = vadd.f32 %v980, %v950
  %v982 = vadd.f32 %v981, %v951
  %v983 = vadd.f32 %v982, %v952
  %v984 = vrot.slane %v983, 4
  %v985 = vadd.f32 %v983, %v984
  %v986 = vrot.slane %v985, 2
  %v987 = vadd.f32 %v985, %v986
  %v988 = vrot.slane %v987, 1
  %v989 = vadd.f32 %v987, %v988
  %p990 = scmp.eq.s32.totalorder 0, 0
  // Predicated region
  $region34: #{set_abstraction_msg2.8} parent=0 // pred_check
    %p991 = pneg %p990
  $region35: #{set_abstraction_msg2.8} parent=0 // pred_check_branch
    %993 = sbr.rel (%p991) target = $region37
  $region36: #{set_abstraction_msg2.8} parent=0 // pred_region
    %v994 = vlaneseq
    %vm995 = vcmp.ge.s32.totalorder %v994, 0
    %vm996 = vcmp.lt.s32.totalorder %v994, 256
    %vm997 = vmand %vm995, %vm996
    %998 = vst.msk [vmem:[%s8] sm:$0x3] %vm997, 0.0
  $region37: #{set_abstraction_msg2.8} parent=0 // pred_fallthru
    _
  %v999 = vld [vmem:[%s8] sm:$0x1]
  %v1000 = vadd.f32 %v999, %v920
  %v1001 = vlaneseq
  %vm1002 = vcmp.ge.s32.totalorder %v1001, 0
  %vm1003 = vcmp.lt.s32.totalorder %v1001, 128
  %vm1004 = vmand %vm1002, %vm1003
  %1005 = vst.msk [vmem:[%s8] sm:$0x1] %vm1004, %v1000
  %v1006 = vld [vmem:[%s8 + $0x1] sm:$0x1]
  %v1007 = vadd.f32 %v1006, %v989
  %1008 = vst.msk [vmem:[%s8 + $0x1] sm:$0x1] %vm1004, %v1007
  %v1009 = vrot.slane %v805, 4
  %v1010 = vmax.f32 %v805, %v1009
  %v1011 = vrot.slane %v1010, 2
  %v1012 = vmax.f32 %v1010, %v1011
  %v1013 = vrot.slane %v1012, 1
  %v1014 = vmax.f32 %v1012, %v1013
  %v1015 = vrot.slane %v807, 4
  %v1016 = vmax.f32 %v807, %v1015
  %v1017 = vrot.slane %v1016, 2
  %v1018 = vmax.f32 %v1016, %v1017
  %v1019 = vrot.slane %v1018, 1
  %v1020 = vmax.f32 %v1018, %v1019
  %v1021 = vrot.slane %v810, 4
  %v1022 = vmax.f32 %v810, %v1021
  %v1023 = vrot.slane %v1022, 2
  %v1024 = vmax.f32 %v1022, %v1023
  %v1025 = vrot.slane %v1024, 1
  %v1026 = vmax.f32 %v1024, %v1025
  %v1027 = vrot.slane %v812, 4
  %v1028 = vmax.f32 %v812, %v1027
  %v1029 = vrot.slane %v1028, 2
  %v1030 = vmax.f32 %v1028, %v1029
  %v1031 = vrot.slane %v1030, 1
  %v1032 = vmax.f32 %v1030, %v1031
  %v1033 = vrot.slane %v815, 4
  %v1034 = vmax.f32 %v815, %v1033
  %v1035 = vrot.slane %v1034, 2
  %v1036 = vmax.f32 %v1034, %v1035
  %v1037 = vrot.slane %v1036, 1
  %v1038 = vmax.f32 %v1036, %v1037
  %v1039 = vrot.slane %v817, 4
  %v1040 = vmax.f32 %v817, %v1039
  %v1041 = vrot.slane %v1040, 2
  %v1042 = vmax.f32 %v1040, %v1041
  %v1043 = vrot.slane %v1042, 1
  %v1044 = vmax.f32 %v1042, %v1043
  %v1045 = vrot.slane %v820, 4
  %v1046 = vmax.f32 %v820, %v1045
  %v1047 = vrot.slane %v1046, 2
  %v1048 = vmax.f32 %v1046, %v1047
  %v1049 = vrot.slane %v1048, 1
  %v1050 = vmax.f32 %v1048, %v1049
  %v1051 = vrot.slane %v822, 4
  %v1052 = vmax.f32 %v822, %v1051
  %v1053 = vrot.slane %v1052, 2
  %v1054 = vmax.f32 %v1052, %v1053
  %v1055 = vrot.slane %v1054, 1
  %v1056 = vmax.f32 %v1054, %v1055
  %v1057 = vrot.slane %v825, 4
  %v1058 = vmax.f32 %v825, %v1057
  %v1059 = vrot.slane %v1058, 2
  %v1060 = vmax.f32 %v1058, %v1059
  %v1061 = vrot.slane %v1060, 1
  %v1062 = vmax.f32 %v1060, %v1061
  %v1063 = vrot.slane %v827, 4
  %v1064 = vmax.f32 %v827, %v1063
  %v1065 = vrot.slane %v1064, 2
  %v1066 = vmax.f32 %v1064, %v1065
  %v1067 = vrot.slane %v1066, 1
  %v1068 = vmax.f32 %v1066, %v1067
  %v1069 = vrot.slane %v830, 4
  %v1070 = vmax.f32 %v830, %v1069
  %v1071 = vrot.slane %v1070, 2
  %v1072 = vmax.f32 %v1070, %v1071
  %v1073 = vrot.slane %v1072, 1
  %v1074 = vmax.f32 %v1072, %v1073
  %v1075 = vrot.slane %v832, 4
  %v1076 = vmax.f32 %v832, %v1075
  %v1077 = vrot.slane %v1076, 2
  %v1078 = vmax.f32 %v1076, %v1077
  %v1079 = vrot.slane %v1078, 1
  %v1080 = vmax.f32 %v1078, %v1079
  %v1081 = vrot.slane %v835, 4
  %v1082 = vmax.f32 %v835, %v1081
  %v1083 = vrot.slane %v1082, 2
  %v1084 = vmax.f32 %v1082, %v1083
  %v1085 = vrot.slane %v1084, 1
  %v1086 = vmax.f32 %v1084, %v1085
  %v1087 = vrot.slane %v837, 4
  %v1088 = vmax.f32 %v837, %v1087
  %v1089 = vrot.slane %v1088, 2
  %v1090 = vmax.f32 %v1088, %v1089
  %v1091 = vrot.slane %v1090, 1
  %v1092 = vmax.f32 %v1090, %v1091
  %v1093 = vrot.slane %v840, 4
  %v1094 = vmax.f32 %v840, %v1093
  %v1095 = vrot.slane %v1094, 2
  %v1096 = vmax.f32 %v1094, %v1095
  %v1097 = vrot.slane %v1096, 1
  %v1098 = vmax.f32 %v1096, %v1097
  %v1099 = vrot.slane %v842, 4
  %v1100 = vmax.f32 %v842, %v1099
  %v1101 = vrot.slane %v1100, 2
  %v1102 = vmax.f32 %v1100, %v1101
  %v1103 = vrot.slane %v1102, 1
  %v1104 = vmax.f32 %v1102, %v1103
  %v1105 = vrot.slane %v845, 4
  %v1106 = vmax.f32 %v845, %v1105
  %v1107 = vrot.slane %v1106, 2
  %v1108 = vmax.f32 %v1106, %v1107
  %v1109 = vrot.slane %v1108, 1
  %v1110 = vmax.f32 %v1108, %v1109
  %v1111 = vrot.slane %v847, 4
  %v1112 = vmax.f32 %v847, %v1111
  %v1113 = vrot.slane %v1112, 2
  %v1114 = vmax.f32 %v1112, %v1113
  %v1115 = vrot.slane %v1114, 1
  %v1116 = vmax.f32 %v1114, %v1115
  %v1117 = vrot.slane %v850, 4
  %v1118 = vmax.f32 %v850, %v1117
  %v1119 = vrot.slane %v1118, 2
  %v1120 = vmax.f32 %v1118, %v1119
  %v1121 = vrot.slane %v1120, 1
  %v1122 = vmax.f32 %v1120, %v1121
  %v1123 = vrot.slane %v852, 4
  %v1124 = vmax.f32 %v852, %v1123
  %v1125 = vrot.slane %v1124, 2
  %v1126 = vmax.f32 %v1124, %v1125
  %v1127 = vrot.slane %v1126, 1
  %v1128 = vmax.f32 %v1126, %v1127
  %v1129 = vrot.slane %v855, 4
  %v1130 = vmax.f32 %v855, %v1129
  %v1131 = vrot.slane %v1130, 2
  %v1132 = vmax.f32 %v1130, %v1131
  %v1133 = vrot.slane %v1132, 1
  %v1134 = vmax.f32 %v1132, %v1133
  %v1135 = vrot.slane %v857, 4
  %v1136 = vmax.f32 %v857, %v1135
  %v1137 = vrot.slane %v1136, 2
  %v1138 = vmax.f32 %v1136, %v1137
  %v1139 = vrot.slane %v1138, 1
  %v1140 = vmax.f32 %v1138, %v1139
  %v1141 = vrot.slane %v860, 4
  %v1142 = vmax.f32 %v860, %v1141
  %v1143 = vrot.slane %v1142, 2
  %v1144 = vmax.f32 %v1142, %v1143
  %v1145 = vrot.slane %v1144, 1
  %v1146 = vmax.f32 %v1144, %v1145
  %v1147 = vrot.slane %v862, 4
  %v1148 = vmax.f32 %v862, %v1147
  %v1149 = vrot.slane %v1148, 2
  %v1150 = vmax.f32 %v1148, %v1149
  %v1151 = vrot.slane %v1150, 1
  %v1152 = vmax.f32 %v1150, %v1151
  %v1153 = vrot.slane %v865, 4
  %v1154 = vmax.f32 %v865, %v1153
  %v1155 = vrot.slane %v1154, 2
  %v1156 = vmax.f32 %v1154, %v1155
  %v1157 = vrot.slane %v1156, 1
  %v1158 = vmax.f32 %v1156, %v1157
  %v1159 = vrot.slane %v867, 4
  %v1160 = vmax.f32 %v867, %v1159
  %v1161 = vrot.slane %v1160, 2
  %v1162 = vmax.f32 %v1160, %v1161
  %v1163 = vrot.slane %v1162, 1
  %v1164 = vmax.f32 %v1162, %v1163
  %v1165 = vrot.slane %v870, 4
  %v1166 = vmax.f32 %v870, %v1165
  %v1167 = vrot.slane %v1166, 2
  %v1168 = vmax.f32 %v1166, %v1167
  %v1169 = vrot.slane %v1168, 1
  %v1170 = vmax.f32 %v1168, %v1169
  %v1171 = vrot.slane %v872, 4
  %v1172 = vmax.f32 %v872, %v1171
  %v1173 = vrot.slane %v1172, 2
  %v1174 = vmax.f32 %v1172, %v1173
  %v1175 = vrot.slane %v1174, 1
  %v1176 = vmax.f32 %v1174, %v1175
  %v1177 = vrot.slane %v875, 4
  %v1178 = vmax.f32 %v875, %v1177
  %v1179 = vrot.slane %v1178, 2
  %v1180 = vmax.f32 %v1178, %v1179
  %v1181 = vrot.slane %v1180, 1
  %v1182 = vmax.f32 %v1180, %v1181
  %v1183 = vrot.slane %v877, 4
  %v1184 = vmax.f32 %v877, %v1183
  %v1185 = vrot.slane %v1184, 2
  %v1186 = vmax.f32 %v1184, %v1185
  %v1187 = vrot.slane %v1186, 1
  %v1188 = vmax.f32 %v1186, %v1187
  %v1189 = vrot.slane %v880, 4
  %v1190 = vmax.f32 %v880, %v1189
  %v1191 = vrot.slane %v1190, 2
  %v1192 = vmax.f32 %v1190, %v1191
  %v1193 = vrot.slane %v1192, 1
  %v1194 = vmax.f32 %v1192, %v1193
  %v1195 = vrot.slane %v882, 4
  %v1196 = vmax.f32 %v882, %v1195
  %v1197 = vrot.slane %v1196, 2
  %v1198 = vmax.f32 %v1196, %v1197
  %v1199 = vrot.slane %v1198, 1
  %v1200 = vmax.f32 %v1198, %v1199
  %vm1233 = vcmask 1041409
  %v1234 = vsel %vm1233, %v1020, %v1014
  %vm1235 = vcmask 1042434
  %v1236 = vsel %vm1235, %v1026, %v1234
  %vm1237 = vcmask 1043459
  %v1238 = vsel %vm1237, %v1032, %v1236
  %vm1239 = vcmask 1044484
  %v1240 = vsel %vm1239, %v1038, %v1238
  %vm1241 = vcmask 1045509
  %v1242 = vsel %vm1241, %v1044, %v1240
  %vm1243 = vcmask 1046534
  %v1244 = vsel %vm1243, %v1050, %v1242
  %vm1245 = vcmask 1047559
  %v1246 = vsel %vm1245, %v1056, %v1244
  %v1247 = vsel %vm1233, %v1068, %v1062
  %v1248 = vsel %vm1235, %v1074, %v1247
  %v1249 = vsel %vm1237, %v1080, %v1248
  %v1250 = vsel %vm1239, %v1086, %v1249
  %v1251 = vsel %vm1241, %v1092, %v1250
  %v1252 = vsel %vm1243, %v1098, %v1251
  %v1253 = vsel %vm1245, %v1104, %v1252
  %v1254 = vsel %vm1233, %v1116, %v1110
  %v1255 = vsel %vm1235, %v1122, %v1254
  %v1256 = vsel %vm1237, %v1128, %v1255
  %v1257 = vsel %vm1239, %v1134, %v1256
  %v1258 = vsel %vm1241, %v1140, %v1257
  %v1259 = vsel %vm1243, %v1146, %v1258
  %v1260 = vsel %vm1245, %v1152, %v1259
  %v1261 = vsel %vm1233, %v1164, %v1158
  %v1262 = vsel %vm1235, %v1170, %v1261
  %v1263 = vsel %vm1237, %v1176, %v1262
  %v1264 = vsel %vm1239, %v1182, %v1263
  %v1265 = vsel %vm1241, %v1188, %v1264
  %v1266 = vsel %vm1243, %v1194, %v1265
  %v1267 = vsel %vm1245, %v1200, %v1266
  %1272 = vst [vmem:[%s71] sm:$0xff] %v1246
  %1273 = vst [vmem:[%s71 + $0x8] sm:$0xff] %v1253
  %1274 = vst [vmem:[%s71 + $0x10] sm:$0xff] %v1260
  %1275 = vst [vmem:[%s71 + $0x18] sm:$0xff] %v1267
  %v1276 = vrot.slane %v805, 4
  %v1277 = vmin.f32 %v805, %v1276
  %v1278 = vrot.slane %v1277, 2
  %v1279 = vmin.f32 %v1277, %v1278
  %v1280 = vrot.slane %v1279, 1
  %v1281 = vmin.f32 %v1279, %v1280
  %v1282 = vrot.slane %v807, 4
  %v1283 = vmin.f32 %v807, %v1282
  %v1284 = vrot.slane %v1283, 2
  %v1285 = vmin.f32 %v1283, %v1284
  %v1286 = vrot.slane %v1285, 1
  %v1287 = vmin.f32 %v1285, %v1286
  %v1288 = vrot.slane %v810, 4
  %v1289 = vmin.f32 %v810, %v1288
  %v1290 = vrot.slane %v1289, 2
  %v1291 = vmin.f32 %v1289, %v1290
  %v1292 = vrot.slane %v1291, 1
  %v1293 = vmin.f32 %v1291, %v1292
  %v1294 = vrot.slane %v812, 4
  %v1295 = vmin.f32 %v812, %v1294
  %v1296 = vrot.slane %v1295, 2
  %v1297 = vmin.f32 %v1295, %v1296
  %v1298 = vrot.slane %v1297, 1
  %v1299 = vmin.f32 %v1297, %v1298
  %v1300 = vrot.slane %v815, 4
  %v1301 = vmin.f32 %v815, %v1300
  %v1302 = vrot.slane %v1301, 2
  %v1303 = vmin.f32 %v1301, %v1302
  %v1304 = vrot.slane %v1303, 1
  %v1305 = vmin.f32 %v1303, %v1304
  %v1306 = vrot.slane %v817, 4
  %v1307 = vmin.f32 %v817, %v1306
  %v1308 = vrot.slane %v1307, 2
  %v1309 = vmin.f32 %v1307, %v1308
  %v1310 = vrot.slane %v1309, 1
  %v1311 = vmin.f32 %v1309, %v1310
  %v1312 = vrot.slane %v820, 4
  %v1313 = vmin.f32 %v820, %v1312
  %v1314 = vrot.slane %v1313, 2
  %v1315 = vmin.f32 %v1313, %v1314
  %v1316 = vrot.slane %v1315, 1
  %v1317 = vmin.f32 %v1315, %v1316
  %v1318 = vrot.slane %v822, 4
  %v1319 = vmin.f32 %v822, %v1318
  %v1320 = vrot.slane %v1319, 2
  %v1321 = vmin.f32 %v1319, %v1320
  %v1322 = vrot.slane %v1321, 1
  %v1323 = vmin.f32 %v1321, %v1322
  %v1324 = vrot.slane %v825, 4
  %v1325 = vmin.f32 %v825, %v1324
  %v1326 = vrot.slane %v1325, 2
  %v1327 = vmin.f32 %v1325, %v1326
  %v1328 = vrot.slane %v1327, 1
  %v1329 = vmin.f32 %v1327, %v1328
  %v1330 = vrot.slane %v827, 4
  %v1331 = vmin.f32 %v827, %v1330
  %v1332 = vrot.slane %v1331, 2
  %v1333 = vmin.f32 %v1331, %v1332
  %v1334 = vrot.slane %v1333, 1
  %v1335 = vmin.f32 %v1333, %v1334
  %v1336 = vrot.slane %v830, 4
  %v1337 = vmin.f32 %v830, %v1336
  %v1338 = vrot.slane %v1337, 2
  %v1339 = vmin.f32 %v1337, %v1338
  %v1340 = vrot.slane %v1339, 1
  %v1341 = vmin.f32 %v1339, %v1340
  %v1342 = vrot.slane %v832, 4
  %v1343 = vmin.f32 %v832, %v1342
  %v1344 = vrot.slane %v1343, 2
  %v1345 = vmin.f32 %v1343, %v1344
  %v1346 = vrot.slane %v1345, 1
  %v1347 = vmin.f32 %v1345, %v1346
  %v1348 = vrot.slane %v835, 4
  %v1349 = vmin.f32 %v835, %v1348
  %v1350 = vrot.slane %v1349, 2
  %v1351 = vmin.f32 %v1349, %v1350
  %v1352 = vrot.slane %v1351, 1
  %v1353 = vmin.f32 %v1351, %v1352
  %v1354 = vrot.slane %v837, 4
  %v1355 = vmin.f32 %v837, %v1354
  %v1356 = vrot.slane %v1355, 2
  %v1357 = vmin.f32 %v1355, %v1356
  %v1358 = vrot.slane %v1357, 1
  %v1359 = vmin.f32 %v1357, %v1358
  %v1360 = vrot.slane %v840, 4
  %v1361 = vmin.f32 %v840, %v1360
  %v1362 = vrot.slane %v1361, 2
  %v1363 = vmin.f32 %v1361, %v1362
  %v1364 = vrot.slane %v1363, 1
  %v1365 = vmin.f32 %v1363, %v1364
  %v1366 = vrot.slane %v842, 4
  %v1367 = vmin.f32 %v842, %v1366
  %v1368 = vrot.slane %v1367, 2
  %v1369 = vmin.f32 %v1367, %v1368
  %v1370 = vrot.slane %v1369, 1
  %v1371 = vmin.f32 %v1369, %v1370
  %v1372 = vrot.slane %v845, 4
  %v1373 = vmin.f32 %v845, %v1372
  %v1374 = vrot.slane %v1373, 2
  %v1375 = vmin.f32 %v1373, %v1374
  %v1376 = vrot.slane %v1375, 1
  %v1377 = vmin.f32 %v1375, %v1376
  %v1378 = vrot.slane %v847, 4
  %v1379 = vmin.f32 %v847, %v1378
  %v1380 = vrot.slane %v1379, 2
  %v1381 = vmin.f32 %v1379, %v1380
  %v1382 = vrot.slane %v1381, 1
  %v1383 = vmin.f32 %v1381, %v1382
  %v1384 = vrot.slane %v850, 4
  %v1385 = vmin.f32 %v850, %v1384
  %v1386 = vrot.slane %v1385, 2
  %v1387 = vmin.f32 %v1385, %v1386
  %v1388 = vrot.slane %v1387, 1
  %v1389 = vmin.f32 %v1387, %v1388
  %v1390 = vrot.slane %v852, 4
  %v1391 = vmin.f32 %v852, %v1390
  %v1392 = vrot.slane %v1391, 2
  %v1393 = vmin.f32 %v1391, %v1392
  %v1394 = vrot.slane %v1393, 1
  %v1395 = vmin.f32 %v1393, %v1394
  %v1396 = vrot.slane %v855, 4
  %v1397 = vmin.f32 %v855, %v1396
  %v1398 = vrot.slane %v1397, 2
  %v1399 = vmin.f32 %v1397, %v1398
  %v1400 = vrot.slane %v1399, 1
  %v1401 = vmin.f32 %v1399, %v1400
  %v1402 = vrot.slane %v857, 4
  %v1403 = vmin.f32 %v857, %v1402
  %v1404 = vrot.slane %v1403, 2
  %v1405 = vmin.f32 %v1403, %v1404
  %v1406 = vrot.slane %v1405, 1
  %v1407 = vmin.f32 %v1405, %v1406
  %v1408 = vrot.slane %v860, 4
  %v1409 = vmin.f32 %v860, %v1408
  %v1410 = vrot.slane %v1409, 2
  %v1411 = vmin.f32 %v1409, %v1410
  %v1412 = vrot.slane %v1411, 1
  %v1413 = vmin.f32 %v1411, %v1412
  %v1414 = vrot.slane %v862, 4
  %v1415 = vmin.f32 %v862, %v1414
  %v1416 = vrot.slane %v1415, 2
  %v1417 = vmin.f32 %v1415, %v1416
  %v1418 = vrot.slane %v1417, 1
  %v1419 = vmin.f32 %v1417, %v1418
  %v1420 = vrot.slane %v865, 4
  %v1421 = vmin.f32 %v865, %v1420
  %v1422 = vrot.slane %v1421, 2
  %v1423 = vmin.f32 %v1421, %v1422
  %v1424 = vrot.slane %v1423, 1
  %v1425 = vmin.f32 %v1423, %v1424
  %v1426 = vrot.slane %v867, 4
  %v1427 = vmin.f32 %v867, %v1426
  %v1428 = vrot.slane %v1427, 2
  %v1429 = vmin.f32 %v1427, %v1428
  %v1430 = vrot.slane %v1429, 1
  %v1431 = vmin.f32 %v1429, %v1430
  %v1432 = vrot.slane %v870, 4
  %v1433 = vmin.f32 %v870, %v1432
  %v1434 = vrot.slane %v1433, 2
  %v1435 = vmin.f32 %v1433, %v1434
  %v1436 = vrot.slane %v1435, 1
  %v1437 = vmin.f32 %v1435, %v1436
  %v1438 = vrot.slane %v872, 4
  %v1439 = vmin.f32 %v872, %v1438
  %v1440 = vrot.slane %v1439, 2
  %v1441 = vmin.f32 %v1439, %v1440
  %v1442 = vrot.slane %v1441, 1
  %v1443 = vmin.f32 %v1441, %v1442
  %v1444 = vrot.slane %v875, 4
  %v1445 = vmin.f32 %v875, %v1444
  %v1446 = vrot.slane %v1445, 2
  %v1447 = vmin.f32 %v1445, %v1446
  %v1448 = vrot.slane %v1447, 1
  %v1449 = vmin.f32 %v1447, %v1448
  %v1450 = vrot.slane %v877, 4
  %v1451 = vmin.f32 %v877, %v1450
  %v1452 = vrot.slane %v1451, 2
  %v1453 = vmin.f32 %v1451, %v1452
  %v1454 = vrot.slane %v1453, 1
  %v1455 = vmin.f32 %v1453, %v1454
  %v1456 = vrot.slane %v880, 4
  %v1457 = vmin.f32 %v880, %v1456
  %v1458 = vrot.slane %v1457, 2
  %v1459 = vmin.f32 %v1457, %v1458
  %v1460 = vrot.slane %v1459, 1
  %v1461 = vmin.f32 %v1459, %v1460
  %v1462 = vrot.slane %v882, 4
  %v1463 = vmin.f32 %v882, %v1462
  %v1464 = vrot.slane %v1463, 2
  %v1465 = vmin.f32 %v1463, %v1464
  %v1466 = vrot.slane %v1465, 1
  %v1467 = vmin.f32 %v1465, %v1466
  %v1500 = vsel %vm1233, %v1287, %v1281
  %v1501 = vsel %vm1235, %v1293, %v1500
  %v1502 = vsel %vm1237, %v1299, %v1501
  %v1503 = vsel %vm1239, %v1305, %v1502
  %v1504 = vsel %vm1241, %v1311, %v1503
  %v1505 = vsel %vm1243, %v1317, %v1504
  %v1506 = vsel %vm1245, %v1323, %v1505
  %v1507 = vsel %vm1233, %v1335, %v1329
  %v1508 = vsel %vm1235, %v1341, %v1507
  %v1509 = vsel %vm1237, %v1347, %v1508
  %v1510 = vsel %vm1239, %v1353, %v1509
  %v1511 = vsel %vm1241, %v1359, %v1510
  %v1512 = vsel %vm1243, %v1365, %v1511
  %v1513 = vsel %vm1245, %v1371, %v1512
  %v1514 = vsel %vm1233, %v1383, %v1377
  %v1515 = vsel %vm1235, %v1389, %v1514
  %v1516 = vsel %vm1237, %v1395, %v1515
  %v1517 = vsel %vm1239, %v1401, %v1516
  %v1518 = vsel %vm1241, %v1407, %v1517
  %v1519 = vsel %vm1243, %v1413, %v1518
  %v1520 = vsel %vm1245, %v1419, %v1519
  %v1521 = vsel %vm1233, %v1431, %v1425
  %v1522 = vsel %vm1235, %v1437, %v1521
  %v1523 = vsel %vm1237, %v1443, %v1522
  %v1524 = vsel %vm1239, %v1449, %v1523
  %v1525 = vsel %vm1241, %v1455, %v1524
  %v1526 = vsel %vm1243, %v1461, %v1525
  %v1527 = vsel %vm1245, %v1467, %v1526
  %1532 = vst [vmem:[%s79] sm:$0xff] %v1506
  %1533 = vst [vmem:[%s79 + $0x8] sm:$0xff] %v1513
  %1534 = vst [vmem:[%s79 + $0x10] sm:$0xff] %v1520
  %1535 = vst [vmem:[%s79 + $0x18] sm:$0xff] %v1527
  %s1536 = sadd.s32 0, 0
  %s1537 = smul.u32 4, %s1536
  %p1538 = scmp.lt.s32.totalorder %s1537, 3
  %s1539 = scalar_select %p1538, %s1537, 3
  %s1540 = smul.addr %s1539, 8
  %s1541 = scalar_lea.vmem %s9, %s1540
  %s1542 = sadd.s32 0, 0
  %s1543 = smul.u32 4, %s1542
  %p1544 = scmp.lt.s32.totalorder %s1543, 3
  %s1545 = scalar_select %p1544, %s1543, 3
  %s1546 = smul.addr %s1545, 8
  %s1547 = scalar_lea.vmem %s10, %s1546
  // Predicated region
  $region38: #{set_abstraction_msg2.8} parent=0 // pred_check
    _
  $region39: #{set_abstraction_msg2.8} parent=0 // pred_check_branch
    %1549 = sbr.rel (0) target = $region41
  $region40: #{set_abstraction_msg2.8} parent=0 // pred_region
    _
  $region41: #{set_abstraction_msg2.8} parent=0 // pred_fallthru
    _
  // Predicated region
  $region42: #{set_abstraction_msg2.8} parent=0 // pred_check
    _
  $region43: #{set_abstraction_msg2.8} parent=0 // pred_check_branch
    %1551 = sbr.rel (0) target = $region45
  $region44: #{set_abstraction_msg2.8} parent=0 // pred_region
    %s1552 = sadd.s32 0, 0
    %s1553 = smul.u32 4, %s1552
  $region45: #{set_abstraction_msg2.8} parent=0 // pred_fallthru
    _
  // Predicated region
  $region46: #{set_abstraction_msg2.8} parent=0 // pred_check
    _
  $region47: #{set_abstraction_msg2.8} parent=0 // pred_check_branch
    %1555 = sbr.rel (0) target = $region49
  $region48: #{set_abstraction_msg2.8} parent=0 // pred_region
    %s1556 = sadd.s32 0, 0
    %s1557 = smul.u32 4, %s1556
  $region49: #{set_abstraction_msg2.8} parent=0 // pred_fallthru
    _
  // Predicated region
  $region50: #{set_abstraction_msg2.8} parent=0 // pred_check
    _
  $region51: #{set_abstraction_msg2.8} parent=0 // pred_check_branch
    %1559 = sbr.rel (0) target = $region53
  $region52: #{set_abstraction_msg2.8} parent=0 // pred_region
    _
  $region53: #{set_abstraction_msg2.8} parent=0 // pred_fallthru
    _
  // Predicated region
  $region54: #{set_abstraction_msg2.8} parent=0 // pred_check
    _
  $region55: #{set_abstraction_msg2.8} parent=0 // pred_check_branch
    %1561 = sbr.rel (0) target = $region57
  $region56: #{set_abstraction_msg2.8} parent=0 // pred_region
    %s1562 = sadd.s32 0, 0
    %s1563 = smul.u32 4, %s1562
    %p1564 = scmp.lt.s32.totalorder %s1563, 3
    %s1565 = scalar_select %p1564, %s1563, 3
    %s1566 = smul.addr %s1565, 8
    %s1567 = scalar_lea.vmem %s9, %s1566
  $region57: #{set_abstraction_msg2.8} parent=0 // pred_fallthru
    _
  // Predicated region
  $region58: #{set_abstraction_msg2.8} parent=0 // pred_check
    _
  $region59: #{set_abstraction_msg2.8} parent=0 // pred_check_branch
    %1569 = sbr.rel (0) target = $region61
  $region60: #{set_abstraction_msg2.8} parent=0 // pred_region
    %s1570 = sadd.s32 0, 0
    %s1571 = smul.u32 4, %s1570
    %p1572 = scmp.lt.s32.totalorder %s1571, 3
    %s1573 = scalar_select %p1572, %s1571, 3
    %s1574 = smul.addr %s1573, 8
    %s1575 = scalar_lea.vmem %s10, %s1574
  $region61: #{set_abstraction_msg2.8} parent=0 // pred_fallthru
    _

// kernel: set_abstraction_msg2.9
$region0: #{set_abstraction_msg2.9}
  #allocation0 [shape = 'u32[]', space=smem, size = 0x4, offset = 0x4, fixed_abs, tag = 'smem constant byte address 0x4 - core index']
  #allocation1 [shape = 'u32[72,128]{1,0:T(1,128)}', space=vmem, size = 0x9000, scoped, tag = 'internal scratch']
  %s0 = inlined_call_operand.vmem [shape: bf16[512,8], index: 0, kind: input, shape index: {}]
  %s1 = inlined_call_operand.vmem [shape: bf16[8,128], index: 1, kind: input, shape index: {}]
  %s2 = inlined_call_operand.vmem [shape: f32[1,1,256], index: 2, kind: output, shape index: {}]
  %s3 = sld [smem:[#allocation0]]
  $region22: #{set_abstraction_msg2.9} parent=0
    _
  %s5 = ssub.s32 1, %s3
  %s6 = scalar_select 0, %s5, %s3
  // Predicated region
  $region2: #{set_abstraction_msg2.9} parent=0 // pred_check
    _
  $region3: #{set_abstraction_msg2.9} parent=0 // pred_check_branch
    %8 = sbr.rel (0) target = $region5
  $region4: #{set_abstraction_msg2.9} parent=0 // pred_region
    %s9 = sadd.s32 0, 0
    %s10 = smul.u32 64, %s9
    %p11 = scmp.lt.s32.totalorder %s10, 63
    %s12 = scalar_select %p11, %s10, 63
    %s13 = smul.addr %s12, 4
    %s14 = scalar_lea.vmem %s0, %s13
    %s15 = sadd.s32 0, 0
    %s16 = smul.u32 64, %s15
  $region5: #{set_abstraction_msg2.9} parent=0 // pred_fallthru
    _
  // Predicated region
  $region6: #{set_abstraction_msg2.9} parent=0 // pred_check
    _
  $region7: #{set_abstraction_msg2.9} parent=0 // pred_check_branch
    %18 = sbr.rel (0) target = $region9
  $region8: #{set_abstraction_msg2.9} parent=0 // pred_region
    _
  $region9: #{set_abstraction_msg2.9} parent=0 // pred_fallthru
    _
  %s19 = sadd.s32 0, 0
  %s20 = smul.u32 64, %s19
  %p21 = scmp.lt.s32.totalorder %s20, 63
  %s22 = scalar_select %p21, %s20, 63
  %s23 = smul.addr %s22, 4
  %s24 = scalar_lea.vmem %s0, %s23
  %s25 = sadd.s32 0, 0
  %s26 = smul.u32 64, %s25
  %p27 = scmp.lt.s32.totalorder %s26, 63
  %s28 = scalar_select %p27, %s26, 63
  %s29 = smul.addr %s28, 4
  %s30 = scalar_lea.vmem %s0, %s29
  %s31 = sadd.s32 0, 0
  %s32 = smul.u32 64, %s31
  %v34 = vld [vmem:[%s30] sm:$0xf]
  %v35 = vld [vmem:[%s30 + $0x4] sm:$0xf]
  %v36 = vld [vmem:[%s30 + $0x8] sm:$0xf]
  %v37 = vld [vmem:[%s30 + $0xc] sm:$0xf]
  %v38 = vld [vmem:[%s30 + $0x10] sm:$0xf]
  %v39 = vld [vmem:[%s30 + $0x14] sm:$0xf]
  %v40 = vld [vmem:[%s30 + $0x18] sm:$0xf]
  %v41 = vld [vmem:[%s30 + $0x1c] sm:$0xf]
  %v42 = vld [vmem:[%s30 + $0x20] sm:$0xf]
  %v43 = vld [vmem:[%s30 + $0x24] sm:$0xf]
  %v44 = vld [vmem:[%s30 + $0x28] sm:$0xf]
  %v45 = vld [vmem:[%s30 + $0x2c] sm:$0xf]
  %v46 = vld [vmem:[%s30 + $0x30] sm:$0xf]
  %v47 = vld [vmem:[%s30 + $0x34] sm:$0xf]
  %v48 = vld [vmem:[%s30 + $0x38] sm:$0xf]
  %v49 = vld [vmem:[%s30 + $0x3c] sm:$0xf]
  %v50 = vld [vmem:[%s30 + $0x40] sm:$0xf]
  %v51 = vld [vmem:[%s30 + $0x44] sm:$0xf]
  %v52 = vld [vmem:[%s30 + $0x48] sm:$0xf]
  %v53 = vld [vmem:[%s30 + $0x4c] sm:$0xf]
  %v54 = vld [vmem:[%s30 + $0x50] sm:$0xf]
  %v55 = vld [vmem:[%s30 + $0x54] sm:$0xf]
  %v56 = vld [vmem:[%s30 + $0x58] sm:$0xf]
  %v57 = vld [vmem:[%s30 + $0x5c] sm:$0xf]
  %v58 = vld [vmem:[%s30 + $0x60] sm:$0xf]
  %v59 = vld [vmem:[%s30 + $0x64] sm:$0xf]
  %v60 = vld [vmem:[%s30 + $0x68] sm:$0xf]
  %v61 = vld [vmem:[%s30 + $0x6c] sm:$0xf]
  %v62 = vld [vmem:[%s30 + $0x70] sm:$0xf]
  %v63 = vld [vmem:[%s30 + $0x74] sm:$0xf]
  %v64 = vld [vmem:[%s30 + $0x78] sm:$0xf]
  %v65 = vld [vmem:[%s30 + $0x7c] sm:$0xf]
  %v66 = vld [vmem:[%s30 + $0x80] sm:$0xf]
  %v67 = vld [vmem:[%s30 + $0x84] sm:$0xf]
  %v68 = vld [vmem:[%s30 + $0x88] sm:$0xf]
  %v69 = vld [vmem:[%s30 + $0x8c] sm:$0xf]
  %v70 = vld [vmem:[%s30 + $0x90] sm:$0xf]
  %v71 = vld [vmem:[%s30 + $0x94] sm:$0xf]
  %v72 = vld [vmem:[%s30 + $0x98] sm:$0xf]
  %v73 = vld [vmem:[%s30 + $0x9c] sm:$0xf]
  %v74 = vld [vmem:[%s30 + $0xa0] sm:$0xf]
  %v75 = vld [vmem:[%s30 + $0xa4] sm:$0xf]
  %v76 = vld [vmem:[%s30 + $0xa8] sm:$0xf]
  %v77 = vld [vmem:[%s30 + $0xac] sm:$0xf]
  %v78 = vld [vmem:[%s30 + $0xb0] sm:$0xf]
  %v79 = vld [vmem:[%s30 + $0xb4] sm:$0xf]
  %v80 = vld [vmem:[%s30 + $0xb8] sm:$0xf]
  %v81 = vld [vmem:[%s30 + $0xbc] sm:$0xf]
  %v82 = vld [vmem:[%s30 + $0xc0] sm:$0xf]
  %v83 = vld [vmem:[%s30 + $0xc4] sm:$0xf]
  %v84 = vld [vmem:[%s30 + $0xc8] sm:$0xf]
  %v85 = vld [vmem:[%s30 + $0xcc] sm:$0xf]
  %v86 = vld [vmem:[%s30 + $0xd0] sm:$0xf]
  %v87 = vld [vmem:[%s30 + $0xd4] sm:$0xf]
  %v88 = vld [vmem:[%s30 + $0xd8] sm:$0xf]
  %v89 = vld [vmem:[%s30 + $0xdc] sm:$0xf]
  %v90 = vld [vmem:[%s30 + $0xe0] sm:$0xf]
  %v91 = vld [vmem:[%s30 + $0xe4] sm:$0xf]
  %v92 = vld [vmem:[%s30 + $0xe8] sm:$0xf]
  %v93 = vld [vmem:[%s30 + $0xec] sm:$0xf]
  %v94 = vld [vmem:[%s30 + $0xf0] sm:$0xf]
  %v95 = vld [vmem:[%s30 + $0xf4] sm:$0xf]
  %v96 = vld [vmem:[%s30 + $0xf8] sm:$0xf]
  %v97 = vld [vmem:[%s30 + $0xfc] sm:$0xf]
  %v98 = vld [vmem:[%s1] sm:$0xf]
  %v163 = vunpack.c.l.b16 %v34
  %v164 = vunpack.c.l.b16 %v35
  %v165 = vunpack.c.l.b16 %v36
  %v166 = vunpack.c.l.b16 %v37
  %v167 = vunpack.c.l.b16 %v38
  %v168 = vunpack.c.l.b16 %v39
  %v169 = vunpack.c.l.b16 %v40
  %v170 = vunpack.c.l.b16 %v41
  %v171 = vunpack.c.l.b16 %v42
  %v172 = vunpack.c.l.b16 %v43
  %v173 = vunpack.c.l.b16 %v44
  %v174 = vunpack.c.l.b16 %v45
  %v175 = vunpack.c.l.b16 %v46
  %v176 = vunpack.c.l.b16 %v47
  %v177 = vunpack.c.l.b16 %v48
  %v178 = vunpack.c.l.b16 %v49
  %v179 = vunpack.c.l.b16 %v50
  %v180 = vunpack.c.l.b16 %v51
  %v181 = vunpack.c.l.b16 %v52
  %v182 = vunpack.c.l.b16 %v53
  %v183 = vunpack.c.l.b16 %v54
  %v184 = vunpack.c.l.b16 %v55
  %v185 = vunpack.c.l.b16 %v56
  %v186 = vunpack.c.l.b16 %v57
  %v187 = vunpack.c.l.b16 %v58
  %v188 = vunpack.c.l.b16 %v59
  %v189 = vunpack.c.l.b16 %v60
  %v190 = vunpack.c.l.b16 %v61
  %v191 = vunpack.c.l.b16 %v62
  %v192 = vunpack.c.l.b16 %v63
  %v193 = vunpack.c.l.b16 %v64
  %v194 = vunpack.c.l.b16 %v65
  %v195 = vunpack.c.l.b16 %v66
  %v196 = vunpack.c.l.b16 %v67
  %v197 = vunpack.c.l.b16 %v68
  %v198 = vunpack.c.l.b16 %v69
  %v199 = vunpack.c.l.b16 %v70
  %v200 = vunpack.c.l.b16 %v71
  %v201 = vunpack.c.l.b16 %v72
  %v202 = vunpack.c.l.b16 %v73
  %v203 = vunpack.c.l.b16 %v74
  %v204 = vunpack.c.l.b16 %v75
  %v205 = vunpack.c.l.b16 %v76
  %v206 = vunpack.c.l.b16 %v77
  %v207 = vunpack.c.l.b16 %v78
  %v208 = vunpack.c.l.b16 %v79
  %v209 = vunpack.c.l.b16 %v80
  %v210 = vunpack.c.l.b16 %v81
  %v211 = vunpack.c.l.b16 %v82
  %v212 = vunpack.c.l.b16 %v83
  %v213 = vunpack.c.l.b16 %v84
  %v214 = vunpack.c.l.b16 %v85
  %v215 = vunpack.c.l.b16 %v86
  %v216 = vunpack.c.l.b16 %v87
  %v217 = vunpack.c.l.b16 %v88
  %v218 = vunpack.c.l.b16 %v89
  %v219 = vunpack.c.l.b16 %v90
  %v220 = vunpack.c.l.b16 %v91
  %v221 = vunpack.c.l.b16 %v92
  %v222 = vunpack.c.l.b16 %v93
  %v223 = vunpack.c.l.b16 %v94
  %v224 = vunpack.c.l.b16 %v95
  %v225 = vunpack.c.l.b16 %v96
  %v226 = vunpack.c.l.b16 %v97
  %v227 = vpack.c.b16 %v164, %v163
  %v228 = vpack.c.b16 %v166, %v165
  %v229 = vpack.c.b16 %v168, %v167
  %v230 = vpack.c.b16 %v170, %v169
  %v231 = vpack.c.b16 %v172, %v171
  %v232 = vpack.c.b16 %v174, %v173
  %v233 = vpack.c.b16 %v176, %v175
  %v234 = vpack.c.b16 %v178, %v177
  %v235 = vpack.c.b16 %v180, %v179
  %v236 = vpack.c.b16 %v182, %v181
  %v237 = vpack.c.b16 %v184, %v183
  %v238 = vpack.c.b16 %v186, %v185
  %v239 = vpack.c.b16 %v188, %v187
  %v240 = vpack.c.b16 %v190, %v189
  %v241 = vpack.c.b16 %v192, %v191
  %v242 = vpack.c.b16 %v194, %v193
  %v243 = vpack.c.b16 %v196, %v195
  %v244 = vpack.c.b16 %v198, %v197
  %v245 = vpack.c.b16 %v200, %v199
  %v246 = vpack.c.b16 %v202, %v201
  %v247 = vpack.c.b16 %v204, %v203
  %v248 = vpack.c.b16 %v206, %v205
  %v249 = vpack.c.b16 %v208, %v207
  %v250 = vpack.c.b16 %v210, %v209
  %v251 = vpack.c.b16 %v212, %v211
  %v252 = vpack.c.b16 %v214, %v213
  %v253 = vpack.c.b16 %v216, %v215
  %v254 = vpack.c.b16 %v218, %v217
  %v255 = vpack.c.b16 %v220, %v219
  %v256 = vpack.c.b16 %v222, %v221
  %v257 = vpack.c.b16 %v224, %v223
  %v258 = vpack.c.b16 %v226, %v225
  %vm259 = vcmask 64512
  %v261 = vsel %vm259, %v227, 0
  %v264 = vsel %vm259, %v228, 0
  %v267 = vsel %vm259, %v229, 0
  %v270 = vsel %vm259, %v230, 0
  %v273 = vsel %vm259, %v231, 0
  %v276 = vsel %vm259, %v232, 0
  %v279 = vsel %vm259, %v233, 0
  %v282 = vsel %vm259, %v234, 0
  %v285 = vsel %vm259, %v235, 0
  %v288 = vsel %vm259, %v236, 0
  %v291 = vsel %vm259, %v237, 0
  %v294 = vsel %vm259, %v238, 0
  %v297 = vsel %vm259, %v239, 0
  %v300 = vsel %vm259, %v240, 0
  %v303 = vsel %vm259, %v241, 0
  %v306 = vsel %vm259, %v242, 0
  %v309 = vsel %vm259, %v243, 0
  %v312 = vsel %vm259, %v244, 0
  %v315 = vsel %vm259, %v245, 0
  %v318 = vsel %vm259, %v246, 0
  %v321 = vsel %vm259, %v247, 0
  %v324 = vsel %vm259, %v248, 0
  %v327 = vsel %vm259, %v249, 0
  %v330 = vsel %vm259, %v250, 0
  %v333 = vsel %vm259, %v251, 0
  %v336 = vsel %vm259, %v252, 0
  %v339 = vsel %vm259, %v253, 0
  %v342 = vsel %vm259, %v254, 0
  %v345 = vsel %vm259, %v255, 0
  %v348 = vsel %vm259, %v256, 0
  %v351 = vsel %vm259, %v257, 0
  %v354 = vsel %vm259, %v258, 0
  %vm356 = vcmask 1043456
  %v358 = vsel %vm356, %v98, 0
  %360 = vmatpush.bf16.msra.mxu0 0
  %361 = vmatpush.bf16.msra.mxu0 0
  %362 = vmatpush.bf16.msra.mxu0 0
  %363 = vmatpush.bf16.msra.mxu0 0
  %364 = vmatpush.bf16.msra.mxu0 0
  %365 = vmatpush.bf16.msra.mxu0 0
  %366 = vmatpush.bf16.msra.mxu0 0
  %367 = vmatpush.bf16.msra.mxu0 %v358
  %368 = vmatmul.bf16.gmra.mxu0 %v261
  %v369 = vpop.f32.mrf.mxu0
  %v370 = vadd.f32 0.0, %v369
  %v371 = vpop.f32.mrf.mxu0
  %v372 = vadd.f32 0.0, %v371
  %373 = vmatmul.bf16.gmra.mxu0 %v264
  %v374 = vpop.f32.mrf.mxu0
  %v375 = vadd.f32 0.0, %v374
  %v376 = vpop.f32.mrf.mxu0
  %v377 = vadd.f32 0.0, %v376
  %378 = vmatmul.bf16.gmra.mxu0 %v267
  %v379 = vpop.f32.mrf.mxu0
  %v380 = vadd.f32 0.0, %v379
  %v381 = vpop.f32.mrf.mxu0
  %v382 = vadd.f32 0.0, %v381
  %383 = vmatmul.bf16.gmra.mxu0 %v270
  %v384 = vpop.f32.mrf.mxu0
  %v385 = vadd.f32 0.0, %v384
  %v386 = vpop.f32.mrf.mxu0
  %v387 = vadd.f32 0.0, %v386
  %388 = vmatmul.bf16.gmra.mxu0 %v273
  %v389 = vpop.f32.mrf.mxu0
  %v390 = vadd.f32 0.0, %v389
  %v391 = vpop.f32.mrf.mxu0
  %v392 = vadd.f32 0.0, %v391
  %393 = vmatmul.bf16.gmra.mxu0 %v276
  %v394 = vpop.f32.mrf.mxu0
  %v395 = vadd.f32 0.0, %v394
  %v396 = vpop.f32.mrf.mxu0
  %v397 = vadd.f32 0.0, %v396
  %398 = vmatmul.bf16.gmra.mxu0 %v279
  %v399 = vpop.f32.mrf.mxu0
  %v400 = vadd.f32 0.0, %v399
  %v401 = vpop.f32.mrf.mxu0
  %v402 = vadd.f32 0.0, %v401
  %403 = vmatmul.bf16.gmra.mxu0 %v282
  %v404 = vpop.f32.mrf.mxu0
  %v405 = vadd.f32 0.0, %v404
  %v406 = vpop.f32.mrf.mxu0
  %v407 = vadd.f32 0.0, %v406
  %408 = vmatmul.bf16.gmra.mxu0 %v285
  %v409 = vpop.f32.mrf.mxu0
  %v410 = vadd.f32 0.0, %v409
  %v411 = vpop.f32.mrf.mxu0
  %v412 = vadd.f32 0.0, %v411
  %413 = vmatmul.bf16.gmra.mxu0 %v288
  %v414 = vpop.f32.mrf.mxu0
  %v415 = vadd.f32 0.0, %v414
  %v416 = vpop.f32.mrf.mxu0
  %v417 = vadd.f32 0.0, %v416
  %418 = vmatmul.bf16.gmra.mxu0 %v291
  %v419 = vpop.f32.mrf.mxu0
  %v420 = vadd.f32 0.0, %v419
  %v421 = vpop.f32.mrf.mxu0
  %v422 = vadd.f32 0.0, %v421
  %423 = vmatmul.bf16.gmra.mxu0 %v294
  %v424 = vpop.f32.mrf.mxu0
  %v425 = vadd.f32 0.0, %v424
  %v426 = vpop.f32.mrf.mxu0
  %v427 = vadd.f32 0.0, %v426
  %428 = vmatmul.bf16.gmra.mxu0 %v297
  %v429 = vpop.f32.mrf.mxu0
  %v430 = vadd.f32 0.0, %v429
  %v431 = vpop.f32.mrf.mxu0
  %v432 = vadd.f32 0.0, %v431
  %433 = vmatmul.bf16.gmra.mxu0 %v300
  %v434 = vpop.f32.mrf.mxu0
  %v435 = vadd.f32 0.0, %v434
  %v436 = vpop.f32.mrf.mxu0
  %v437 = vadd.f32 0.0, %v436
  %438 = vmatmul.bf16.gmra.mxu0 %v303
  %v439 = vpop.f32.mrf.mxu0
  %v440 = vadd.f32 0.0, %v439
  %v441 = vpop.f32.mrf.mxu0
  %v442 = vadd.f32 0.0, %v441
  %443 = vmatmul.bf16.gmra.mxu0 %v306
  %v444 = vpop.f32.mrf.mxu0
  %v445 = vadd.f32 0.0, %v444
  %v446 = vpop.f32.mrf.mxu0
  %v447 = vadd.f32 0.0, %v446
  %448 = vmatmul.bf16.gmra.mxu0 %v309
  %v449 = vpop.f32.mrf.mxu0
  %v450 = vadd.f32 0.0, %v449
  %v451 = vpop.f32.mrf.mxu0
  %v452 = vadd.f32 0.0, %v451
  %453 = vmatmul.bf16.gmra.mxu0 %v312
  %v454 = vpop.f32.mrf.mxu0
  %v455 = vadd.f32 0.0, %v454
  %v456 = vpop.f32.mrf.mxu0
  %v457 = vadd.f32 0.0, %v456
  %458 = vmatmul.bf16.gmra.mxu0 %v315
  %v459 = vpop.f32.mrf.mxu0
  %v460 = vadd.f32 0.0, %v459
  %v461 = vpop.f32.mrf.mxu0
  %v462 = vadd.f32 0.0, %v461
  %463 = vmatmul.bf16.gmra.mxu0 %v318
  %v464 = vpop.f32.mrf.mxu0
  %v465 = vadd.f32 0.0, %v464
  %v466 = vpop.f32.mrf.mxu0
  %v467 = vadd.f32 0.0, %v466
  %468 = vmatmul.bf16.gmra.mxu0 %v321
  %v469 = vpop.f32.mrf.mxu0
  %v470 = vadd.f32 0.0, %v469
  %v471 = vpop.f32.mrf.mxu0
  %v472 = vadd.f32 0.0, %v471
  %473 = vmatmul.bf16.gmra.mxu0 %v324
  %v474 = vpop.f32.mrf.mxu0
  %v475 = vadd.f32 0.0, %v474
  %v476 = vpop.f32.mrf.mxu0
  %v477 = vadd.f32 0.0, %v476
  %478 = vmatmul.bf16.gmra.mxu0 %v327
  %v479 = vpop.f32.mrf.mxu0
  %v480 = vadd.f32 0.0, %v479
  %v481 = vpop.f32.mrf.mxu0
  %v482 = vadd.f32 0.0, %v481
  %483 = vmatmul.bf16.gmra.mxu0 %v330
  %v484 = vpop.f32.mrf.mxu0
  %v485 = vadd.f32 0.0, %v484
  %v486 = vpop.f32.mrf.mxu0
  %v487 = vadd.f32 0.0, %v486
  %488 = vmatmul.bf16.gmra.mxu0 %v333
  %v489 = vpop.f32.mrf.mxu0
  %v490 = vadd.f32 0.0, %v489
  %v491 = vpop.f32.mrf.mxu0
  %v492 = vadd.f32 0.0, %v491
  %493 = vmatmul.bf16.gmra.mxu0 %v336
  %v494 = vpop.f32.mrf.mxu0
  %v495 = vadd.f32 0.0, %v494
  %v496 = vpop.f32.mrf.mxu0
  %v497 = vadd.f32 0.0, %v496
  %498 = vmatmul.bf16.gmra.mxu0 %v339
  %v499 = vpop.f32.mrf.mxu0
  %v500 = vadd.f32 0.0, %v499
  %v501 = vpop.f32.mrf.mxu0
  %v502 = vadd.f32 0.0, %v501
  %503 = vmatmul.bf16.gmra.mxu0 %v342
  %v504 = vpop.f32.mrf.mxu0
  %v505 = vadd.f32 0.0, %v504
  %v506 = vpop.f32.mrf.mxu0
  %v507 = vadd.f32 0.0, %v506
  %508 = vmatmul.bf16.gmra.mxu0 %v345
  %v509 = vpop.f32.mrf.mxu0
  %v510 = vadd.f32 0.0, %v509
  %v511 = vpop.f32.mrf.mxu0
  %v512 = vadd.f32 0.0, %v511
  %513 = vmatmul.bf16.gmra.mxu0 %v348
  %v514 = vpop.f32.mrf.mxu0
  %v515 = vadd.f32 0.0, %v514
  %v516 = vpop.f32.mrf.mxu0
  %v517 = vadd.f32 0.0, %v516
  %518 = vmatmul.bf16.gmra.mxu0 %v351
  %v519 = vpop.f32.mrf.mxu0
  %v520 = vadd.f32 0.0, %v519
  %v521 = vpop.f32.mrf.mxu0
  %v522 = vadd.f32 0.0, %v521
  %523 = vmatmul.bf16.gmra.mxu0 %v354
  %v524 = vpop.f32.mrf.mxu0
  %v525 = vadd.f32 0.0, %v524
  %v526 = vpop.f32.mrf.mxu0
  %v527 = vadd.f32 0.0, %v526
  %528 = vdwg.mxu0
  %v529 = vadd.f32 %v370, %v372
  %v530 = vadd.f32 %v529, %v375
  %v531 = vadd.f32 %v530, %v377
  %v532 = vadd.f32 %v531, %v380
  %v533 = vadd.f32 %v532, %v382
  %v534 = vadd.f32 %v533, %v385
  %v535 = vadd.f32 %v534, %v387
  %v536 = vadd.f32 %v535, %v390
  %v537 = vadd.f32 %v536, %v392
  %v538 = vadd.f32 %v537, %v395
  %v539 = vadd.f32 %v538, %v397
  %v540 = vadd.f32 %v539, %v400
  %v541 = vadd.f32 %v540, %v402
  %v542 = vadd.f32 %v541, %v405
  %v543 = vadd.f32 %v542, %v407
  %v544 = vadd.f32 %v543, %v410
  %v545 = vadd.f32 %v544, %v412
  %v546 = vadd.f32 %v545, %v415
  %v547 = vadd.f32 %v546, %v417
  %v548 = vadd.f32 %v547, %v420
  %v549 = vadd.f32 %v548, %v422
  %v550 = vadd.f32 %v549, %v425
  %v551 = vadd.f32 %v550, %v427
  %v552 = vadd.f32 %v551, %v430
  %v553 = vadd.f32 %v552, %v432
  %v554 = vadd.f32 %v553, %v435
  %v555 = vadd.f32 %v554, %v437
  %v556 = vadd.f32 %v555, %v440
  %v557 = vadd.f32 %v556, %v442
  %v558 = vadd.f32 %v557, %v445
  %v559 = vadd.f32 %v558, %v447
  %v560 = vadd.f32 %v559, %v450
  %v561 = vadd.f32 %v560, %v452
  %v562 = vadd.f32 %v561, %v455
  %v563 = vadd.f32 %v562, %v457
  %v564 = vadd.f32 %v563, %v460
  %v565 = vadd.f32 %v564, %v462
  %v566 = vadd.f32 %v565, %v465
  %v567 = vadd.f32 %v566, %v467
  %v568 = vadd.f32 %v567, %v470
  %v569 = vadd.f32 %v568, %v472
  %v570 = vadd.f32 %v569, %v475
  %v571 = vadd.f32 %v570, %v477
  %v572 = vadd.f32 %v571, %v480
  %v573 = vadd.f32 %v572, %v482
  %v574 = vadd.f32 %v573, %v485
  %v575 = vadd.f32 %v574, %v487
  %v576 = vadd.f32 %v575, %v490
  %v577 = vadd.f32 %v576, %v492
  %v578 = vadd.f32 %v577, %v495
  %v579 = vadd.f32 %v578, %v497
  %v580 = vadd.f32 %v579, %v500
  %v581 = vadd.f32 %v580, %v502
  %v582 = vadd.f32 %v581, %v505
  %v583 = vadd.f32 %v582, %v507
  %v584 = vadd.f32 %v583, %v510
  %v585 = vadd.f32 %v584, %v512
  %v586 = vadd.f32 %v585, %v515
  %v587 = vadd.f32 %v586, %v517
  %v588 = vadd.f32 %v587, %v520
  %v589 = vadd.f32 %v588, %v522
  %v590 = vadd.f32 %v589, %v525
  %v591 = vadd.f32 %v590, %v527
  %v592 = vrot.slane %v591, 4
  %v593 = vadd.f32 %v591, %v592
  %v594 = vrot.slane %v593, 2
  %v595 = vadd.f32 %v593, %v594
  %v596 = vrot.slane %v595, 1
  %v597 = vadd.f32 %v595, %v596
  %v598 = vmul.f32 %v370, %v370
  %v599 = vmul.f32 %v372, %v372
  %v600 = vmul.f32 %v375, %v375
  %v601 = vmul.f32 %v377, %v377
  %v602 = vmul.f32 %v380, %v380
  %v603 = vmul.f32 %v382, %v382
  %v604 = vmul.f32 %v385, %v385
  %v605 = vmul.f32 %v387, %v387
  %v606 = vmul.f32 %v390, %v390
  %v607 = vmul.f32 %v392, %v392
  %v608 = vmul.f32 %v395, %v395
  %v609 = vmul.f32 %v397, %v397
  %v610 = vmul.f32 %v400, %v400
  %v611 = vmul.f32 %v402, %v402
  %v612 = vmul.f32 %v405, %v405
  %v613 = vmul.f32 %v407, %v407
  %v614 = vmul.f32 %v410, %v410
  %v615 = vmul.f32 %v412, %v412
  %v616 = vmul.f32 %v415, %v415
  %v617 = vmul.f32 %v417, %v417
  %v618 = vmul.f32 %v420, %v420
  %v619 = vmul.f32 %v422, %v422
  %v620 = vmul.f32 %v425, %v425
  %v621 = vmul.f32 %v427, %v427
  %v622 = vmul.f32 %v430, %v430
  %v623 = vmul.f32 %v432, %v432
  %v624 = vmul.f32 %v435, %v435
  %v625 = vmul.f32 %v437, %v437
  %v626 = vmul.f32 %v440, %v440
  %v627 = vmul.f32 %v442, %v442
  %v628 = vmul.f32 %v445, %v445
  %v629 = vmul.f32 %v447, %v447
  %v630 = vmul.f32 %v450, %v450
  %v631 = vmul.f32 %v452, %v452
  %v632 = vmul.f32 %v455, %v455
  %v633 = vmul.f32 %v457, %v457
  %v634 = vmul.f32 %v460, %v460
  %v635 = vmul.f32 %v462, %v462
  %v636 = vmul.f32 %v465, %v465
  %v637 = vmul.f32 %v467, %v467
  %v638 = vmul.f32 %v470, %v470
  %v639 = vmul.f32 %v472, %v472
  %v640 = vmul.f32 %v475, %v475
  %v641 = vmul.f32 %v477, %v477
  %v642 = vmul.f32 %v480, %v480
  %v643 = vmul.f32 %v482, %v482
  %v644 = vmul.f32 %v485, %v485
  %v645 = vmul.f32 %v487, %v487
  %v646 = vmul.f32 %v490, %v490
  %v647 = vmul.f32 %v492, %v492
  %v648 = vmul.f32 %v495, %v495
  %v649 = vmul.f32 %v497, %v497
  %v650 = vmul.f32 %v500, %v500
  %v651 = vmul.f32 %v502, %v502
  %v652 = vmul.f32 %v505, %v505
  %v653 = vmul.f32 %v507, %v507
  %v654 = vmul.f32 %v510, %v510
  %v655 = vmul.f32 %v512, %v512
  %v656 = vmul.f32 %v515, %v515
  %v657 = vmul.f32 %v517, %v517
  %v658 = vmul.f32 %v520, %v520
  %v659 = vmul.f32 %v522, %v522
  %v660 = vmul.f32 %v525, %v525
  %v661 = vmul.f32 %v527, %v527
  %v662 = vadd.f32 %v598, %v599
  %v663 = vadd.f32 %v662, %v600
  %v664 = vadd.f32 %v663, %v601
  %v665 = vadd.f32 %v664, %v602
  %v666 = vadd.f32 %v665, %v603
  %v667 = vadd.f32 %v666, %v604
  %v668 = vadd.f32 %v667, %v605
  %v669 = vadd.f32 %v668, %v606
  %v670 = vadd.f32 %v669, %v607
  %v671 = vadd.f32 %v670, %v608
  %v672 = vadd.f32 %v671, %v609
  %v673 = vadd.f32 %v672, %v610
  %v674 = vadd.f32 %v673, %v611
  %v675 = vadd.f32 %v674, %v612
  %v676 = vadd.f32 %v675, %v613
  %v677 = vadd.f32 %v676, %v614
  %v678 = vadd.f32 %v677, %v615
  %v679 = vadd.f32 %v678, %v616
  %v680 = vadd.f32 %v679, %v617
  %v681 = vadd.f32 %v680, %v618
  %v682 = vadd.f32 %v681, %v619
  %v683 = vadd.f32 %v682, %v620
  %v684 = vadd.f32 %v683, %v621
  %v685 = vadd.f32 %v684, %v622
  %v686 = vadd.f32 %v685, %v623
  %v687 = vadd.f32 %v686, %v624
  %v688 = vadd.f32 %v687, %v625
  %v689 = vadd.f32 %v688, %v626
  %v690 = vadd.f32 %v689, %v627
  %v691 = vadd.f32 %v690, %v628
  %v692 = vadd.f32 %v691, %v629
  %v693 = vadd.f32 %v692, %v630
  %v694 = vadd.f32 %v693, %v631
  %v695 = vadd.f32 %v694, %v632
  %v696 = vadd.f32 %v695, %v633
  %v697 = vadd.f32 %v696, %v634
  %v698 = vadd.f32 %v697, %v635
  %v699 = vadd.f32 %v698, %v636
  %v700 = vadd.f32 %v699, %v637
  %v701 = vadd.f32 %v700, %v638
  %v702 = vadd.f32 %v701, %v639
  %v703 = vadd.f32 %v702, %v640
  %v704 = vadd.f32 %v703, %v641
  %v705 = vadd.f32 %v704, %v642
  %v706 = vadd.f32 %v705, %v643
  %v707 = vadd.f32 %v706, %v644
  %v708 = vadd.f32 %v707, %v645
  %v709 = vadd.f32 %v708, %v646
  %v710 = vadd.f32 %v709, %v647
  %v711 = vadd.f32 %v710, %v648
  %v712 = vadd.f32 %v711, %v649
  %v713 = vadd.f32 %v712, %v650
  %v714 = vadd.f32 %v713, %v651
  %v715 = vadd.f32 %v714, %v652
  %v716 = vadd.f32 %v715, %v653
  %v717 = vadd.f32 %v716, %v654
  %v718 = vadd.f32 %v717, %v655
  %v719 = vadd.f32 %v718, %v656
  %v720 = vadd.f32 %v719, %v657
  %v721 = vadd.f32 %v720, %v658
  %v722 = vadd.f32 %v721, %v659
  %v723 = vadd.f32 %v722, %v660
  %v724 = vadd.f32 %v723, %v661
  %v725 = vrot.slane %v724, 4
  %v726 = vadd.f32 %v724, %v725
  %v727 = vrot.slane %v726, 2
  %v728 = vadd.f32 %v726, %v727
  %v729 = vrot.slane %v728, 1
  %v730 = vadd.f32 %v728, %v729
  %p731 = scmp.eq.s32.totalorder 0, 0
  // Predicated region
  $region10: #{set_abstraction_msg2.9} parent=0 // pred_check
    %p732 = pneg %p731
  $region11: #{set_abstraction_msg2.9} parent=0 // pred_check_branch
    %734 = sbr.rel (%p732) target = $region13
  $region12: #{set_abstraction_msg2.9} parent=0 // pred_region
    %v735 = vlaneseq
    %vm736 = vcmp.ge.s32.totalorder %v735, 0
    %vm737 = vcmp.lt.s32.totalorder %v735, 256
    %vm738 = vmand %vm736, %vm737
    %739 = vst.msk [vmem:[%s2] sm:$0x3] %vm738, 0.0
  $region13: #{set_abstraction_msg2.9} parent=0 // pred_fallthru
    _
  %v740 = vld [vmem:[%s2] sm:$0x1]
  %v741 = vadd.f32 %v740, %v597
  %v742 = vlaneseq
  %vm743 = vcmp.ge.s32.totalorder %v742, 0
  %vm744 = vcmp.lt.s32.totalorder %v742, 128
  %vm745 = vmand %vm743, %vm744
  %746 = vst.msk [vmem:[%s2] sm:$0x1] %vm745, %v741
  %v747 = vld [vmem:[%s2 + $0x1] sm:$0x1]
  %v748 = vadd.f32 %v747, %v730
  %749 = vst.msk [vmem:[%s2 + $0x1] sm:$0x1] %vm745, %v748
  // Predicated region
  $region14: #{set_abstraction_msg2.9} parent=0 // pred_check
    _
  $region15: #{set_abstraction_msg2.9} parent=0 // pred_check_branch
    %751 = sbr.rel (0) target = $region17
  $region16: #{set_abstraction_msg2.9} parent=0 // pred_region
    _
  $region17: #{set_abstraction_msg2.9} parent=0 // pred_fallthru
    _
  // Predicated region
  $region18: #{set_abstraction_msg2.9} parent=0 // pred_check
    _
  $region19: #{set_abstraction_msg2.9} parent=0 // pred_check_branch
    %753 = sbr.rel (0) target = $region21
  $region20: #{set_abstraction_msg2.9} parent=0 // pred_region
    _
  $region21: #{set_abstraction_msg2.9} parent=0 // pred_fallthru
    _

// kernel: set_abstraction_msg2.10
$region0: #{set_abstraction_msg2.10}
  #allocation0 [shape = 'u32[]', space=smem, size = 0x4, offset = 0x4, fixed_abs, tag = 'smem constant byte address 0x4 - core index']
  #allocation1 [shape = 'u32[72,128]{1,0:T(1,128)}', space=vmem, size = 0x9000, scoped, tag = 'internal scratch']
  %s0 = inlined_call_operand.vmem [shape: bf16[512,8], index: 0, kind: input, shape index: {}]
  %s1 = inlined_call_operand.vmem [shape: bf16[8,128], index: 1, kind: input, shape index: {}]
  %s2 = inlined_call_operand.vmem [shape: bf16[128,128], index: 2, kind: input, shape index: {}]
  %s3 = inlined_call_operand.vmem [shape: f32[1,128], index: 3, kind: input, shape index: {}]
  %s4 = inlined_call_operand.vmem [shape: f32[1,128], index: 4, kind: input, shape index: {}]
  %s5 = inlined_call_operand.vmem [shape: f32[1,1,256], index: 5, kind: output, shape index: {}]
  %s6 = sld [smem:[#allocation0]]
  $region34: #{set_abstraction_msg2.10} parent=0
    _
  %s8 = ssub.s32 1, %s6
  %s9 = scalar_select 0, %s8, %s6
  // Predicated region
  $region2: #{set_abstraction_msg2.10} parent=0 // pred_check
    _
  $region3: #{set_abstraction_msg2.10} parent=0 // pred_check_branch
    %11 = sbr.rel (0) target = $region5
  $region4: #{set_abstraction_msg2.10} parent=0 // pred_region
    %s12 = sadd.s32 0, 0
    %s13 = smul.u32 64, %s12
    %p14 = scmp.lt.s32.totalorder %s13, 63
    %s15 = scalar_select %p14, %s13, 63
    %s16 = smul.addr %s15, 4
    %s17 = scalar_lea.vmem %s0, %s16
    %s18 = sadd.s32 0, 0
    %s19 = smul.u32 64, %s18
  $region5: #{set_abstraction_msg2.10} parent=0 // pred_fallthru
    _
  // Predicated region
  $region6: #{set_abstraction_msg2.10} parent=0 // pred_check
    _
  $region7: #{set_abstraction_msg2.10} parent=0 // pred_check_branch
    %21 = sbr.rel (0) target = $region9
  $region8: #{set_abstraction_msg2.10} parent=0 // pred_region
    _
  $region9: #{set_abstraction_msg2.10} parent=0 // pred_fallthru
    _
  // Predicated region
  $region10: #{set_abstraction_msg2.10} parent=0 // pred_check
    _
  $region11: #{set_abstraction_msg2.10} parent=0 // pred_check_branch
    %23 = sbr.rel (0) target = $region13
  $region12: #{set_abstraction_msg2.10} parent=0 // pred_region
    _
  $region13: #{set_abstraction_msg2.10} parent=0 // pred_fallthru
    _
  // Predicated region
  $region14: #{set_abstraction_msg2.10} parent=0 // pred_check
    _
  $region15: #{set_abstraction_msg2.10} parent=0 // pred_check_branch
    %25 = sbr.rel (0) target = $region17
  $region16: #{set_abstraction_msg2.10} parent=0 // pred_region
    _
  $region17: #{set_abstraction_msg2.10} parent=0 // pred_fallthru
    _
  // Predicated region
  $region18: #{set_abstraction_msg2.10} parent=0 // pred_check
    _
  $region19: #{set_abstraction_msg2.10} parent=0 // pred_check_branch
    %27 = sbr.rel (0) target = $region21
  $region20: #{set_abstraction_msg2.10} parent=0 // pred_region
    _
  $region21: #{set_abstraction_msg2.10} parent=0 // pred_fallthru
    _
  %s28 = sadd.s32 0, 0
  %s29 = smul.u32 64, %s28
  %p30 = scmp.lt.s32.totalorder %s29, 63
  %s31 = scalar_select %p30, %s29, 63
  %s32 = smul.addr %s31, 4
  %s33 = scalar_lea.vmem %s0, %s32
  %s34 = sadd.s32 0, 0
  %s35 = smul.u32 64, %s34
  %p36 = scmp.lt.s32.totalorder %s35, 63
  %s37 = scalar_select %p36, %s35, 63
  %s38 = smul.addr %s37, 4
  %s39 = scalar_lea.vmem %s0, %s38
  %s40 = sadd.s32 0, 0
  %s41 = smul.u32 64, %s40
  %v43 = vld [vmem:[%s39] sm:$0xf]
  %v44 = vld [vmem:[%s39 + $0x4] sm:$0xf]
  %v45 = vld [vmem:[%s39 + $0x8] sm:$0xf]
  %v46 = vld [vmem:[%s39 + $0xc] sm:$0xf]
  %v47 = vld [vmem:[%s39 + $0x10] sm:$0xf]
  %v48 = vld [vmem:[%s39 + $0x14] sm:$0xf]
  %v49 = vld [vmem:[%s39 + $0x18] sm:$0xf]
  %v50 = vld [vmem:[%s39 + $0x1c] sm:$0xf]
  %v51 = vld [vmem:[%s39 + $0x20] sm:$0xf]
  %v52 = vld [vmem:[%s39 + $0x24] sm:$0xf]
  %v53 = vld [vmem:[%s39 + $0x28] sm:$0xf]
  %v54 = vld [vmem:[%s39 + $0x2c] sm:$0xf]
  %v55 = vld [vmem:[%s39 + $0x30] sm:$0xf]
  %v56 = vld [vmem:[%s39 + $0x34] sm:$0xf]
  %v57 = vld [vmem:[%s39 + $0x38] sm:$0xf]
  %v58 = vld [vmem:[%s39 + $0x3c] sm:$0xf]
  %v59 = vld [vmem:[%s39 + $0x40] sm:$0xf]
  %v60 = vld [vmem:[%s39 + $0x44] sm:$0xf]
  %v61 = vld [vmem:[%s39 + $0x48] sm:$0xf]
  %v62 = vld [vmem:[%s39 + $0x4c] sm:$0xf]
  %v63 = vld [vmem:[%s39 + $0x50] sm:$0xf]
  %v64 = vld [vmem:[%s39 + $0x54] sm:$0xf]
  %v65 = vld [vmem:[%s39 + $0x58] sm:$0xf]
  %v66 = vld [vmem:[%s39 + $0x5c] sm:$0xf]
  %v67 = vld [vmem:[%s39 + $0x60] sm:$0xf]
  %v68 = vld [vmem:[%s39 + $0x64] sm:$0xf]
  %v69 = vld [vmem:[%s39 + $0x68] sm:$0xf]
  %v70 = vld [vmem:[%s39 + $0x6c] sm:$0xf]
  %v71 = vld [vmem:[%s39 + $0x70] sm:$0xf]
  %v72 = vld [vmem:[%s39 + $0x74] sm:$0xf]
  %v73 = vld [vmem:[%s39 + $0x78] sm:$0xf]
  %v74 = vld [vmem:[%s39 + $0x7c] sm:$0xf]
  %v75 = vld [vmem:[%s39 + $0x80] sm:$0xf]
  %v76 = vld [vmem:[%s39 + $0x84] sm:$0xf]
  %v77 = vld [vmem:[%s39 + $0x88] sm:$0xf]
  %v78 = vld [vmem:[%s39 + $0x8c] sm:$0xf]
  %v79 = vld [vmem:[%s39 + $0x90] sm:$0xf]
  %v80 = vld [vmem:[%s39 + $0x94] sm:$0xf]
  %v81 = vld [vmem:[%s39 + $0x98] sm:$0xf]
  %v82 = vld [vmem:[%s39 + $0x9c] sm:$0xf]
  %v83 = vld [vmem:[%s39 + $0xa0] sm:$0xf]
  %v84 = vld [vmem:[%s39 + $0xa4] sm:$0xf]
  %v85 = vld [vmem:[%s39 + $0xa8] sm:$0xf]
  %v86 = vld [vmem:[%s39 + $0xac] sm:$0xf]
  %v87 = vld [vmem:[%s39 + $0xb0] sm:$0xf]
  %v88 = vld [vmem:[%s39 + $0xb4] sm:$0xf]
  %v89 = vld [vmem:[%s39 + $0xb8] sm:$0xf]
  %v90 = vld [vmem:[%s39 + $0xbc] sm:$0xf]
  %v91 = vld [vmem:[%s39 + $0xc0] sm:$0xf]
  %v92 = vld [vmem:[%s39 + $0xc4] sm:$0xf]
  %v93 = vld [vmem:[%s39 + $0xc8] sm:$0xf]
  %v94 = vld [vmem:[%s39 + $0xcc] sm:$0xf]
  %v95 = vld [vmem:[%s39 + $0xd0] sm:$0xf]
  %v96 = vld [vmem:[%s39 + $0xd4] sm:$0xf]
  %v97 = vld [vmem:[%s39 + $0xd8] sm:$0xf]
  %v98 = vld [vmem:[%s39 + $0xdc] sm:$0xf]
  %v99 = vld [vmem:[%s39 + $0xe0] sm:$0xf]
  %v100 = vld [vmem:[%s39 + $0xe4] sm:$0xf]
  %v101 = vld [vmem:[%s39 + $0xe8] sm:$0xf]
  %v102 = vld [vmem:[%s39 + $0xec] sm:$0xf]
  %v103 = vld [vmem:[%s39 + $0xf0] sm:$0xf]
  %v104 = vld [vmem:[%s39 + $0xf4] sm:$0xf]
  %v105 = vld [vmem:[%s39 + $0xf8] sm:$0xf]
  %v106 = vld [vmem:[%s39 + $0xfc] sm:$0xf]
  %v107 = vld [vmem:[%s1] sm:$0xf]
  %v172 = vunpack.c.l.b16 %v43
  %v173 = vunpack.c.l.b16 %v44
  %v174 = vunpack.c.l.b16 %v45
  %v175 = vunpack.c.l.b16 %v46
  %v176 = vunpack.c.l.b16 %v47
  %v177 = vunpack.c.l.b16 %v48
  %v178 = vunpack.c.l.b16 %v49
  %v179 = vunpack.c.l.b16 %v50
  %v180 = vunpack.c.l.b16 %v51
  %v181 = vunpack.c.l.b16 %v52
  %v182 = vunpack.c.l.b16 %v53
  %v183 = vunpack.c.l.b16 %v54
  %v184 = vunpack.c.l.b16 %v55
  %v185 = vunpack.c.l.b16 %v56
  %v186 = vunpack.c.l.b16 %v57
  %v187 = vunpack.c.l.b16 %v58
  %v188 = vunpack.c.l.b16 %v59
  %v189 = vunpack.c.l.b16 %v60
  %v190 = vunpack.c.l.b16 %v61
  %v191 = vunpack.c.l.b16 %v62
  %v192 = vunpack.c.l.b16 %v63
  %v193 = vunpack.c.l.b16 %v64
  %v194 = vunpack.c.l.b16 %v65
  %v195 = vunpack.c.l.b16 %v66
  %v196 = vunpack.c.l.b16 %v67
  %v197 = vunpack.c.l.b16 %v68
  %v198 = vunpack.c.l.b16 %v69
  %v199 = vunpack.c.l.b16 %v70
  %v200 = vunpack.c.l.b16 %v71
  %v201 = vunpack.c.l.b16 %v72
  %v202 = vunpack.c.l.b16 %v73
  %v203 = vunpack.c.l.b16 %v74
  %v204 = vunpack.c.l.b16 %v75
  %v205 = vunpack.c.l.b16 %v76
  %v206 = vunpack.c.l.b16 %v77
  %v207 = vunpack.c.l.b16 %v78
  %v208 = vunpack.c.l.b16 %v79
  %v209 = vunpack.c.l.b16 %v80
  %v210 = vunpack.c.l.b16 %v81
  %v211 = vunpack.c.l.b16 %v82
  %v212 = vunpack.c.l.b16 %v83
  %v213 = vunpack.c.l.b16 %v84
  %v214 = vunpack.c.l.b16 %v85
  %v215 = vunpack.c.l.b16 %v86
  %v216 = vunpack.c.l.b16 %v87
  %v217 = vunpack.c.l.b16 %v88
  %v218 = vunpack.c.l.b16 %v89
  %v219 = vunpack.c.l.b16 %v90
  %v220 = vunpack.c.l.b16 %v91
  %v221 = vunpack.c.l.b16 %v92
  %v222 = vunpack.c.l.b16 %v93
  %v223 = vunpack.c.l.b16 %v94
  %v224 = vunpack.c.l.b16 %v95
  %v225 = vunpack.c.l.b16 %v96
  %v226 = vunpack.c.l.b16 %v97
  %v227 = vunpack.c.l.b16 %v98
  %v228 = vunpack.c.l.b16 %v99
  %v229 = vunpack.c.l.b16 %v100
  %v230 = vunpack.c.l.b16 %v101
  %v231 = vunpack.c.l.b16 %v102
  %v232 = vunpack.c.l.b16 %v103
  %v233 = vunpack.c.l.b16 %v104
  %v234 = vunpack.c.l.b16 %v105
  %v235 = vunpack.c.l.b16 %v106
  %v236 = vpack.c.b16 %v173, %v172
  %v237 = vpack.c.b16 %v175, %v174
  %v238 = vpack.c.b16 %v177, %v176
  %v239 = vpack.c.b16 %v179, %v178
  %v240 = vpack.c.b16 %v181, %v180
  %v241 = vpack.c.b16 %v183, %v182
  %v242 = vpack.c.b16 %v185, %v184
  %v243 = vpack.c.b16 %v187, %v186
  %v244 = vpack.c.b16 %v189, %v188
  %v245 = vpack.c.b16 %v191, %v190
  %v246 = vpack.c.b16 %v193, %v192
  %v247 = vpack.c.b16 %v195, %v194
  %v248 = vpack.c.b16 %v197, %v196
  %v249 = vpack.c.b16 %v199, %v198
  %v250 = vpack.c.b16 %v201, %v200
  %v251 = vpack.c.b16 %v203, %v202
  %v252 = vpack.c.b16 %v205, %v204
  %v253 = vpack.c.b16 %v207, %v206
  %v254 = vpack.c.b16 %v209, %v208
  %v255 = vpack.c.b16 %v211, %v210
  %v256 = vpack.c.b16 %v213, %v212
  %v257 = vpack.c.b16 %v215, %v214
  %v258 = vpack.c.b16 %v217, %v216
  %v259 = vpack.c.b16 %v219, %v218
  %v260 = vpack.c.b16 %v221, %v220
  %v261 = vpack.c.b16 %v223, %v222
  %v262 = vpack.c.b16 %v225, %v224
  %v263 = vpack.c.b16 %v227, %v226
  %v264 = vpack.c.b16 %v229, %v228
  %v265 = vpack.c.b16 %v231, %v230
  %v266 = vpack.c.b16 %v233, %v232
  %v267 = vpack.c.b16 %v235, %v234
  %vm268 = vcmask 64512
  %v270 = vsel %vm268, %v236, 0
  %v273 = vsel %vm268, %v237, 0
  %v276 = vsel %vm268, %v238, 0
  %v279 = vsel %vm268, %v239, 0
  %v282 = vsel %vm268, %v240, 0
  %v285 = vsel %vm268, %v241, 0
  %v288 = vsel %vm268, %v242, 0
  %v291 = vsel %vm268, %v243, 0
  %v294 = vsel %vm268, %v244, 0
  %v297 = vsel %vm268, %v245, 0
  %v300 = vsel %vm268, %v246, 0
  %v303 = vsel %vm268, %v247, 0
  %v306 = vsel %vm268, %v248, 0
  %v309 = vsel %vm268, %v249, 0
  %v312 = vsel %vm268, %v250, 0
  %v315 = vsel %vm268, %v251, 0
  %v318 = vsel %vm268, %v252, 0
  %v321 = vsel %vm268, %v253, 0
  %v324 = vsel %vm268, %v254, 0
  %v327 = vsel %vm268, %v255, 0
  %v330 = vsel %vm268, %v256, 0
  %v333 = vsel %vm268, %v257, 0
  %v336 = vsel %vm268, %v258, 0
  %v339 = vsel %vm268, %v259, 0
  %v342 = vsel %vm268, %v260, 0
  %v345 = vsel %vm268, %v261, 0
  %v348 = vsel %vm268, %v262, 0
  %v351 = vsel %vm268, %v263, 0
  %v354 = vsel %vm268, %v264, 0
  %v357 = vsel %vm268, %v265, 0
  %v360 = vsel %vm268, %v266, 0
  %v363 = vsel %vm268, %v267, 0
  %vm365 = vcmask 1043456
  %v367 = vsel %vm365, %v107, 0
  %369 = vmatpush.bf16.msra.mxu0 0
  %370 = vmatpush.bf16.msra.mxu0 0
  %371 = vmatpush.bf16.msra.mxu0 0
  %372 = vmatpush.bf16.msra.mxu0 0
  %373 = vmatpush.bf16.msra.mxu0 0
  %374 = vmatpush.bf16.msra.mxu0 0
  %375 = vmatpush.bf16.msra.mxu0 0
  %376 = vmatpush.bf16.msra.mxu0 %v367
  %377 = vmatmul.bf16.gmra.mxu0 %v270
  %v378 = vpop.f32.mrf.mxu0
  %v379 = vadd.f32 0.0, %v378
  %v380 = vpop.f32.mrf.mxu0
  %v381 = vadd.f32 0.0, %v380
  %382 = vmatmul.bf16.gmra.mxu0 %v273
  %v383 = vpop.f32.mrf.mxu0
  %v384 = vadd.f32 0.0, %v383
  %v385 = vpop.f32.mrf.mxu0
  %v386 = vadd.f32 0.0, %v385
  %387 = vmatmul.bf16.gmra.mxu0 %v276
  %v388 = vpop.f32.mrf.mxu0
  %v389 = vadd.f32 0.0, %v388
  %v390 = vpop.f32.mrf.mxu0
  %v391 = vadd.f32 0.0, %v390
  %392 = vmatmul.bf16.gmra.mxu0 %v279
  %v393 = vpop.f32.mrf.mxu0
  %v394 = vadd.f32 0.0, %v393
  %v395 = vpop.f32.mrf.mxu0
  %v396 = vadd.f32 0.0, %v395
  %397 = vmatmul.bf16.gmra.mxu0 %v282
  %v398 = vpop.f32.mrf.mxu0
  %v399 = vadd.f32 0.0, %v398
  %v400 = vpop.f32.mrf.mxu0
  %v401 = vadd.f32 0.0, %v400
  %402 = vmatmul.bf16.gmra.mxu0 %v285
  %v403 = vpop.f32.mrf.mxu0
  %v404 = vadd.f32 0.0, %v403
  %v405 = vpop.f32.mrf.mxu0
  %v406 = vadd.f32 0.0, %v405
  %407 = vmatmul.bf16.gmra.mxu0 %v288
  %v408 = vpop.f32.mrf.mxu0
  %v409 = vadd.f32 0.0, %v408
  %v410 = vpop.f32.mrf.mxu0
  %v411 = vadd.f32 0.0, %v410
  %412 = vmatmul.bf16.gmra.mxu0 %v291
  %v413 = vpop.f32.mrf.mxu0
  %v414 = vadd.f32 0.0, %v413
  %v415 = vpop.f32.mrf.mxu0
  %v416 = vadd.f32 0.0, %v415
  %417 = vmatmul.bf16.gmra.mxu0 %v294
  %v418 = vpop.f32.mrf.mxu0
  %v419 = vadd.f32 0.0, %v418
  %v420 = vpop.f32.mrf.mxu0
  %v421 = vadd.f32 0.0, %v420
  %422 = vmatmul.bf16.gmra.mxu0 %v297
  %v423 = vpop.f32.mrf.mxu0
  %v424 = vadd.f32 0.0, %v423
  %v425 = vpop.f32.mrf.mxu0
  %v426 = vadd.f32 0.0, %v425
  %427 = vmatmul.bf16.gmra.mxu0 %v300
  %v428 = vpop.f32.mrf.mxu0
  %v429 = vadd.f32 0.0, %v428
  %v430 = vpop.f32.mrf.mxu0
  %v431 = vadd.f32 0.0, %v430
  %432 = vmatmul.bf16.gmra.mxu0 %v303
  %v433 = vpop.f32.mrf.mxu0
  %v434 = vadd.f32 0.0, %v433
  %v435 = vpop.f32.mrf.mxu0
  %v436 = vadd.f32 0.0, %v435
  %437 = vmatmul.bf16.gmra.mxu0 %v306
  %v438 = vpop.f32.mrf.mxu0
  %v439 = vadd.f32 0.0, %v438
  %v440 = vpop.f32.mrf.mxu0
  %v441 = vadd.f32 0.0, %v440
  %442 = vmatmul.bf16.gmra.mxu0 %v309
  %v443 = vpop.f32.mrf.mxu0
  %v444 = vadd.f32 0.0, %v443
  %v445 = vpop.f32.mrf.mxu0
  %v446 = vadd.f32 0.0, %v445
  %447 = vmatmul.bf16.gmra.mxu0 %v312
  %v448 = vpop.f32.mrf.mxu0
  %v449 = vadd.f32 0.0, %v448
  %v450 = vpop.f32.mrf.mxu0
  %v451 = vadd.f32 0.0, %v450
  %452 = vmatmul.bf16.gmra.mxu0 %v315
  %v453 = vpop.f32.mrf.mxu0
  %v454 = vadd.f32 0.0, %v453
  %v455 = vpop.f32.mrf.mxu0
  %v456 = vadd.f32 0.0, %v455
  %457 = vmatmul.bf16.gmra.mxu0 %v318
  %v458 = vpop.f32.mrf.mxu0
  %v459 = vadd.f32 0.0, %v458
  %v460 = vpop.f32.mrf.mxu0
  %v461 = vadd.f32 0.0, %v460
  %462 = vmatmul.bf16.gmra.mxu0 %v321
  %v463 = vpop.f32.mrf.mxu0
  %v464 = vadd.f32 0.0, %v463
  %v465 = vpop.f32.mrf.mxu0
  %v466 = vadd.f32 0.0, %v465
  %467 = vmatmul.bf16.gmra.mxu0 %v324
  %v468 = vpop.f32.mrf.mxu0
  %v469 = vadd.f32 0.0, %v468
  %v470 = vpop.f32.mrf.mxu0
  %v471 = vadd.f32 0.0, %v470
  %472 = vmatmul.bf16.gmra.mxu0 %v327
  %v473 = vpop.f32.mrf.mxu0
  %v474 = vadd.f32 0.0, %v473
  %v475 = vpop.f32.mrf.mxu0
  %v476 = vadd.f32 0.0, %v475
  %477 = vmatmul.bf16.gmra.mxu0 %v330
  %v478 = vpop.f32.mrf.mxu0
  %v479 = vadd.f32 0.0, %v478
  %v480 = vpop.f32.mrf.mxu0
  %v481 = vadd.f32 0.0, %v480
  %482 = vmatmul.bf16.gmra.mxu0 %v333
  %v483 = vpop.f32.mrf.mxu0
  %v484 = vadd.f32 0.0, %v483
  %v485 = vpop.f32.mrf.mxu0
  %v486 = vadd.f32 0.0, %v485
  %487 = vmatmul.bf16.gmra.mxu0 %v336
  %v488 = vpop.f32.mrf.mxu0
  %v489 = vadd.f32 0.0, %v488
  %v490 = vpop.f32.mrf.mxu0
  %v491 = vadd.f32 0.0, %v490
  %492 = vmatmul.bf16.gmra.mxu0 %v339
  %v493 = vpop.f32.mrf.mxu0
  %v494 = vadd.f32 0.0, %v493
  %v495 = vpop.f32.mrf.mxu0
  %v496 = vadd.f32 0.0, %v495
  %497 = vmatmul.bf16.gmra.mxu0 %v342
  %v498 = vpop.f32.mrf.mxu0
  %v499 = vadd.f32 0.0, %v498
  %v500 = vpop.f32.mrf.mxu0
  %v501 = vadd.f32 0.0, %v500
  %502 = vmatmul.bf16.gmra.mxu0 %v345
  %v503 = vpop.f32.mrf.mxu0
  %v504 = vadd.f32 0.0, %v503
  %v505 = vpop.f32.mrf.mxu0
  %v506 = vadd.f32 0.0, %v505
  %507 = vmatmul.bf16.gmra.mxu0 %v348
  %v508 = vpop.f32.mrf.mxu0
  %v509 = vadd.f32 0.0, %v508
  %v510 = vpop.f32.mrf.mxu0
  %v511 = vadd.f32 0.0, %v510
  %512 = vmatmul.bf16.gmra.mxu0 %v351
  %v513 = vpop.f32.mrf.mxu0
  %v514 = vadd.f32 0.0, %v513
  %v515 = vpop.f32.mrf.mxu0
  %v516 = vadd.f32 0.0, %v515
  %517 = vmatmul.bf16.gmra.mxu0 %v354
  %v518 = vpop.f32.mrf.mxu0
  %v519 = vadd.f32 0.0, %v518
  %v520 = vpop.f32.mrf.mxu0
  %v521 = vadd.f32 0.0, %v520
  %522 = vmatmul.bf16.gmra.mxu0 %v357
  %v523 = vpop.f32.mrf.mxu0
  %v524 = vadd.f32 0.0, %v523
  %v525 = vpop.f32.mrf.mxu0
  %v526 = vadd.f32 0.0, %v525
  %527 = vmatmul.bf16.gmra.mxu0 %v360
  %v528 = vpop.f32.mrf.mxu0
  %v529 = vadd.f32 0.0, %v528
  %v530 = vpop.f32.mrf.mxu0
  %v531 = vadd.f32 0.0, %v530
  %532 = vmatmul.bf16.gmra.mxu0 %v363
  %v533 = vpop.f32.mrf.mxu0
  %v534 = vadd.f32 0.0, %v533
  %v535 = vpop.f32.mrf.mxu0
  %v536 = vadd.f32 0.0, %v535
  %537 = vdwg.mxu0
  %v538 = vld [vmem:[%s3] sm:$0x1]
  %v540 = vperm.slane %v538, 0
  %v542 = vmul.f32 %v379, %v540
  %v543 = vmul.f32 %v381, %v540
  %v544 = vmul.f32 %v384, %v540
  %v545 = vmul.f32 %v386, %v540
  %v546 = vmul.f32 %v389, %v540
  %v547 = vmul.f32 %v391, %v540
  %v548 = vmul.f32 %v394, %v540
  %v549 = vmul.f32 %v396, %v540
  %v550 = vmul.f32 %v399, %v540
  %v551 = vmul.f32 %v401, %v540
  %v552 = vmul.f32 %v404, %v540
  %v553 = vmul.f32 %v406, %v540
  %v554 = vmul.f32 %v409, %v540
  %v555 = vmul.f32 %v411, %v540
  %v556 = vmul.f32 %v414, %v540
  %v557 = vmul.f32 %v416, %v540
  %v558 = vmul.f32 %v419, %v540
  %v559 = vmul.f32 %v421, %v540
  %v560 = vmul.f32 %v424, %v540
  %v561 = vmul.f32 %v426, %v540
  %v562 = vmul.f32 %v429, %v540
  %v563 = vmul.f32 %v431, %v540
  %v564 = vmul.f32 %v434, %v540
  %v565 = vmul.f32 %v436, %v540
  %v566 = vmul.f32 %v439, %v540
  %v567 = vmul.f32 %v441, %v540
  %v568 = vmul.f32 %v444, %v540
  %v569 = vmul.f32 %v446, %v540
  %v570 = vmul.f32 %v449, %v540
  %v571 = vmul.f32 %v451, %v540
  %v572 = vmul.f32 %v454, %v540
  %v573 = vmul.f32 %v456, %v540
  %v574 = vmul.f32 %v459, %v540
  %v575 = vmul.f32 %v461, %v540
  %v576 = vmul.f32 %v464, %v540
  %v577 = vmul.f32 %v466, %v540
  %v578 = vmul.f32 %v469, %v540
  %v579 = vmul.f32 %v471, %v540
  %v580 = vmul.f32 %v474, %v540
  %v581 = vmul.f32 %v476, %v540
  %v582 = vmul.f32 %v479, %v540
  %v583 = vmul.f32 %v481, %v540
  %v584 = vmul.f32 %v484, %v540
  %v585 = vmul.f32 %v486, %v540
  %v586 = vmul.f32 %v489, %v540
  %v587 = vmul.f32 %v491, %v540
  %v588 = vmul.f32 %v494, %v540
  %v589 = vmul.f32 %v496, %v540
  %v590 = vmul.f32 %v499, %v540
  %v591 = vmul.f32 %v501, %v540
  %v592 = vmul.f32 %v504, %v540
  %v593 = vmul.f32 %v506, %v540
  %v594 = vmul.f32 %v509, %v540
  %v595 = vmul.f32 %v511, %v540
  %v596 = vmul.f32 %v514, %v540
  %v597 = vmul.f32 %v516, %v540
  %v598 = vmul.f32 %v519, %v540
  %v599 = vmul.f32 %v521, %v540
  %v600 = vmul.f32 %v524, %v540
  %v601 = vmul.f32 %v526, %v540
  %v602 = vmul.f32 %v529, %v540
  %v603 = vmul.f32 %v531, %v540
  %v604 = vmul.f32 %v534, %v540
  %v605 = vmul.f32 %v536, %v540
  %v606 = vld [vmem:[%s4] sm:$0x1]
  %v608 = vperm.slane %v606, 0
  %v610 = vadd.f32 %v542, %v608
  %v611 = vadd.f32 %v543, %v608
  %v612 = vadd.f32 %v544, %v608
  %v613 = vadd.f32 %v545, %v608
  %v614 = vadd.f32 %v546, %v608
  %v615 = vadd.f32 %v547, %v608
  %v616 = vadd.f32 %v548, %v608
  %v617 = vadd.f32 %v549, %v608
  %v618 = vadd.f32 %v550, %v608
  %v619 = vadd.f32 %v551, %v608
  %v620 = vadd.f32 %v552, %v608
  %v621 = vadd.f32 %v553, %v608
  %v622 = vadd.f32 %v554, %v608
  %v623 = vadd.f32 %v555, %v608
  %v624 = vadd.f32 %v556, %v608
  %v625 = vadd.f32 %v557, %v608
  %v626 = vadd.f32 %v558, %v608
  %v627 = vadd.f32 %v559, %v608
  %v628 = vadd.f32 %v560, %v608
  %v629 = vadd.f32 %v561, %v608
  %v630 = vadd.f32 %v562, %v608
  %v631 = vadd.f32 %v563, %v608
  %v632 = vadd.f32 %v564, %v608
  %v633 = vadd.f32 %v565, %v608
  %v634 = vadd.f32 %v566, %v608
  %v635 = vadd.f32 %v567, %v608
  %v636 = vadd.f32 %v568, %v608
  %v637 = vadd.f32 %v569, %v608
  %v638 = vadd.f32 %v570, %v608
  %v639 = vadd.f32 %v571, %v608
  %v640 = vadd.f32 %v572, %v608
  %v641 = vadd.f32 %v573, %v608
  %v642 = vadd.f32 %v574, %v608
  %v643 = vadd.f32 %v575, %v608
  %v644 = vadd.f32 %v576, %v608
  %v645 = vadd.f32 %v577, %v608
  %v646 = vadd.f32 %v578, %v608
  %v647 = vadd.f32 %v579, %v608
  %v648 = vadd.f32 %v580, %v608
  %v649 = vadd.f32 %v581, %v608
  %v650 = vadd.f32 %v582, %v608
  %v651 = vadd.f32 %v583, %v608
  %v652 = vadd.f32 %v584, %v608
  %v653 = vadd.f32 %v585, %v608
  %v654 = vadd.f32 %v586, %v608
  %v655 = vadd.f32 %v587, %v608
  %v656 = vadd.f32 %v588, %v608
  %v657 = vadd.f32 %v589, %v608
  %v658 = vadd.f32 %v590, %v608
  %v659 = vadd.f32 %v591, %v608
  %v660 = vadd.f32 %v592, %v608
  %v661 = vadd.f32 %v593, %v608
  %v662 = vadd.f32 %v594, %v608
  %v663 = vadd.f32 %v595, %v608
  %v664 = vadd.f32 %v596, %v608
  %v665 = vadd.f32 %v597, %v608
  %v666 = vadd.f32 %v598, %v608
  %v667 = vadd.f32 %v599, %v608
  %v668 = vadd.f32 %v600, %v608
  %v669 = vadd.f32 %v601, %v608
  %v670 = vadd.f32 %v602, %v608
  %v671 = vadd.f32 %v603, %v608
  %v672 = vadd.f32 %v604, %v608
  %v673 = vadd.f32 %v605, %v608
  %v674 = vmax.f32 %v610, 0.0
  %v675 = vmax.f32 %v611, 0.0
  %v676 = vmax.f32 %v612, 0.0
  %v677 = vmax.f32 %v613, 0.0
  %v678 = vmax.f32 %v614, 0.0
  %v679 = vmax.f32 %v615, 0.0
  %v680 = vmax.f32 %v616, 0.0
  %v681 = vmax.f32 %v617, 0.0
  %v682 = vmax.f32 %v618, 0.0
  %v683 = vmax.f32 %v619, 0.0
  %v684 = vmax.f32 %v620, 0.0
  %v685 = vmax.f32 %v621, 0.0
  %v686 = vmax.f32 %v622, 0.0
  %v687 = vmax.f32 %v623, 0.0
  %v688 = vmax.f32 %v624, 0.0
  %v689 = vmax.f32 %v625, 0.0
  %v690 = vmax.f32 %v626, 0.0
  %v691 = vmax.f32 %v627, 0.0
  %v692 = vmax.f32 %v628, 0.0
  %v693 = vmax.f32 %v629, 0.0
  %v694 = vmax.f32 %v630, 0.0
  %v695 = vmax.f32 %v631, 0.0
  %v696 = vmax.f32 %v632, 0.0
  %v697 = vmax.f32 %v633, 0.0
  %v698 = vmax.f32 %v634, 0.0
  %v699 = vmax.f32 %v635, 0.0
  %v700 = vmax.f32 %v636, 0.0
  %v701 = vmax.f32 %v637, 0.0
  %v702 = vmax.f32 %v638, 0.0
  %v703 = vmax.f32 %v639, 0.0
  %v704 = vmax.f32 %v640, 0.0
  %v705 = vmax.f32 %v641, 0.0
  %v706 = vmax.f32 %v642, 0.0
  %v707 = vmax.f32 %v643, 0.0
  %v708 = vmax.f32 %v644, 0.0
  %v709 = vmax.f32 %v645, 0.0
  %v710 = vmax.f32 %v646, 0.0
  %v711 = vmax.f32 %v647, 0.0
  %v712 = vmax.f32 %v648, 0.0
  %v713 = vmax.f32 %v649, 0.0
  %v714 = vmax.f32 %v650, 0.0
  %v715 = vmax.f32 %v651, 0.0
  %v716 = vmax.f32 %v652, 0.0
  %v717 = vmax.f32 %v653, 0.0
  %v718 = vmax.f32 %v654, 0.0
  %v719 = vmax.f32 %v655, 0.0
  %v720 = vmax.f32 %v656, 0.0
  %v721 = vmax.f32 %v657, 0.0
  %v722 = vmax.f32 %v658, 0.0
  %v723 = vmax.f32 %v659, 0.0
  %v724 = vmax.f32 %v660, 0.0
  %v725 = vmax.f32 %v661, 0.0
  %v726 = vmax.f32 %v662, 0.0
  %v727 = vmax.f32 %v663, 0.0
  %v728 = vmax.f32 %v664, 0.0
  %v729 = vmax.f32 %v665, 0.0
  %v730 = vmax.f32 %v666, 0.0
  %v731 = vmax.f32 %v667, 0.0
  %v732 = vmax.f32 %v668, 0.0
  %v733 = vmax.f32 %v669, 0.0
  %v734 = vmax.f32 %v670, 0.0
  %v735 = vmax.f32 %v671, 0.0
  %v736 = vmax.f32 %v672, 0.0
  %v737 = vmax.f32 %v673, 0.0
  %v738 = vpack.c.bf16 %v675, %v674
  %v739 = vpack.c.bf16 %v677, %v676
  %v740 = vpack.c.bf16 %v679, %v678
  %v741 = vpack.c.bf16 %v681, %v680
  %v742 = vpack.c.bf16 %v683, %v682
  %v743 = vpack.c.bf16 %v685, %v684
  %v744 = vpack.c.bf16 %v687, %v686
  %v745 = vpack.c.bf16 %v689, %v688
  %v746 = vpack.c.bf16 %v691, %v690
  %v747 = vpack.c.bf16 %v693, %v692
  %v748 = vpack.c.bf16 %v695, %v694
  %v749 = vpack.c.bf16 %v697, %v696
  %v750 = vpack.c.bf16 %v699, %v698
  %v751 = vpack.c.bf16 %v701, %v700
  %v752 = vpack.c.bf16 %v703, %v702
  %v753 = vpack.c.bf16 %v705, %v704
  %v754 = vpack.c.bf16 %v707, %v706
  %v755 = vpack.c.bf16 %v709, %v708
  %v756 = vpack.c.bf16 %v711, %v710
  %v757 = vpack.c.bf16 %v713, %v712
  %v758 = vpack.c.bf16 %v715, %v714
  %v759 = vpack.c.bf16 %v717, %v716
  %v760 = vpack.c.bf16 %v719, %v718
  %v761 = vpack.c.bf16 %v721, %v720
  %v762 = vpack.c.bf16 %v723, %v722
  %v763 = vpack.c.bf16 %v725, %v724
  %v764 = vpack.c.bf16 %v727, %v726
  %v765 = vpack.c.bf16 %v729, %v728
  %v766 = vpack.c.bf16 %v731, %v730
  %v767 = vpack.c.bf16 %v733, %v732
  %v768 = vpack.c.bf16 %v735, %v734
  %v769 = vpack.c.bf16 %v737, %v736
  %v770 = vld [vmem:[%s2] sm:$0xf]
  %v771 = vld [vmem:[%s2 + $0x4] sm:$0xf]
  %v772 = vld [vmem:[%s2 + $0x8] sm:$0xf]
  %v773 = vld [vmem:[%s2 + $0xc] sm:$0xf]
  %v774 = vld [vmem:[%s2 + $0x10] sm:$0xf]
  %v775 = vld [vmem:[%s2 + $0x14] sm:$0xf]
  %v776 = vld [vmem:[%s2 + $0x18] sm:$0xf]
  %v777 = vld [vmem:[%s2 + $0x1c] sm:$0xf]
  %v778 = vld [vmem:[%s2 + $0x20] sm:$0xf]
  %v779 = vld [vmem:[%s2 + $0x24] sm:$0xf]
  %v780 = vld [vmem:[%s2 + $0x28] sm:$0xf]
  %v781 = vld [vmem:[%s2 + $0x2c] sm:$0xf]
  %v782 = vld [vmem:[%s2 + $0x30] sm:$0xf]
  %v783 = vld [vmem:[%s2 + $0x34] sm:$0xf]
  %v784 = vld [vmem:[%s2 + $0x38] sm:$0xf]
  %v785 = vld [vmem:[%s2 + $0x3c] sm:$0xf]
  %v802 = vunpack.c.l.b16 %v770
  %v803 = vunpack.c.l.b16 %v771
  %v804 = vunpack.c.l.b16 %v772
  %v805 = vunpack.c.l.b16 %v773
  %v806 = vunpack.c.l.b16 %v774
  %v807 = vunpack.c.l.b16 %v775
  %v808 = vunpack.c.l.b16 %v776
  %v809 = vunpack.c.l.b16 %v777
  %v810 = vunpack.c.l.b16 %v778
  %v811 = vunpack.c.l.b16 %v779
  %v812 = vunpack.c.l.b16 %v780
  %v813 = vunpack.c.l.b16 %v781
  %v814 = vunpack.c.l.b16 %v782
  %v815 = vunpack.c.l.b16 %v783
  %v816 = vunpack.c.l.b16 %v784
  %v817 = vunpack.c.l.b16 %v785
  %v818 = vpack.c.b16 %v803, %v802
  %v819 = vpack.c.b16 %v805, %v804
  %v820 = vpack.c.b16 %v807, %v806
  %v821 = vpack.c.b16 %v809, %v808
  %v822 = vpack.c.b16 %v811, %v810
  %v823 = vpack.c.b16 %v813, %v812
  %v824 = vpack.c.b16 %v815, %v814
  %v825 = vpack.c.b16 %v817, %v816
  %834 = vmatpush.bf16.msra.mxu0 %v825
  %835 = vmatpush.bf16.msra.mxu0 %v824
  %836 = vmatpush.bf16.msra.mxu0 %v823
  %837 = vmatpush.bf16.msra.mxu0 %v822
  %838 = vmatpush.bf16.msra.mxu0 %v821
  %839 = vmatpush.bf16.msra.mxu0 %v820
  %840 = vmatpush.bf16.msra.mxu0 %v819
  %841 = vmatpush.bf16.msra.mxu0 %v818
  %842 = vmatmul.bf16.gmra.mxu0 %v738
  %v843 = vpop.f32.mrf.mxu0
  %v844 = vadd.f32 0.0, %v843
  %v845 = vpop.f32.mrf.mxu0
  %v846 = vadd.f32 0.0, %v845
  %847 = vmatmul.bf16.gmra.mxu0 %v739
  %v848 = vpop.f32.mrf.mxu0
  %v849 = vadd.f32 0.0, %v848
  %v850 = vpop.f32.mrf.mxu0
  %v851 = vadd.f32 0.0, %v850
  %852 = vmatmul.bf16.gmra.mxu0 %v740
  %v853 = vpop.f32.mrf.mxu0
  %v854 = vadd.f32 0.0, %v853
  %v855 = vpop.f32.mrf.mxu0
  %v856 = vadd.f32 0.0, %v855
  %857 = vmatmul.bf16.gmra.mxu0 %v741
  %v858 = vpop.f32.mrf.mxu0
  %v859 = vadd.f32 0.0, %v858
  %v860 = vpop.f32.mrf.mxu0
  %v861 = vadd.f32 0.0, %v860
  %862 = vmatmul.bf16.gmra.mxu0 %v742
  %v863 = vpop.f32.mrf.mxu0
  %v864 = vadd.f32 0.0, %v863
  %v865 = vpop.f32.mrf.mxu0
  %v866 = vadd.f32 0.0, %v865
  %867 = vmatmul.bf16.gmra.mxu0 %v743
  %v868 = vpop.f32.mrf.mxu0
  %v869 = vadd.f32 0.0, %v868
  %v870 = vpop.f32.mrf.mxu0
  %v871 = vadd.f32 0.0, %v870
  %872 = vmatmul.bf16.gmra.mxu0 %v744
  %v873 = vpop.f32.mrf.mxu0
  %v874 = vadd.f32 0.0, %v873
  %v875 = vpop.f32.mrf.mxu0
  %v876 = vadd.f32 0.0, %v875
  %877 = vmatmul.bf16.gmra.mxu0 %v745
  %v878 = vpop.f32.mrf.mxu0
  %v879 = vadd.f32 0.0, %v878
  %v880 = vpop.f32.mrf.mxu0
  %v881 = vadd.f32 0.0, %v880
  %882 = vmatmul.bf16.gmra.mxu0 %v746
  %v883 = vpop.f32.mrf.mxu0
  %v884 = vadd.f32 0.0, %v883
  %v885 = vpop.f32.mrf.mxu0
  %v886 = vadd.f32 0.0, %v885
  %887 = vmatmul.bf16.gmra.mxu0 %v747
  %v888 = vpop.f32.mrf.mxu0
  %v889 = vadd.f32 0.0, %v888
  %v890 = vpop.f32.mrf.mxu0
  %v891 = vadd.f32 0.0, %v890
  %892 = vmatmul.bf16.gmra.mxu0 %v748
  %v893 = vpop.f32.mrf.mxu0
  %v894 = vadd.f32 0.0, %v893
  %v895 = vpop.f32.mrf.mxu0
  %v896 = vadd.f32 0.0, %v895
  %897 = vmatmul.bf16.gmra.mxu0 %v749
  %v898 = vpop.f32.mrf.mxu0
  %v899 = vadd.f32 0.0, %v898
  %v900 = vpop.f32.mrf.mxu0
  %v901 = vadd.f32 0.0, %v900
  %902 = vmatmul.bf16.gmra.mxu0 %v750
  %v903 = vpop.f32.mrf.mxu0
  %v904 = vadd.f32 0.0, %v903
  %v905 = vpop.f32.mrf.mxu0
  %v906 = vadd.f32 0.0, %v905
  %907 = vmatmul.bf16.gmra.mxu0 %v751
  %v908 = vpop.f32.mrf.mxu0
  %v909 = vadd.f32 0.0, %v908
  %v910 = vpop.f32.mrf.mxu0
  %v911 = vadd.f32 0.0, %v910
  %912 = vmatmul.bf16.gmra.mxu0 %v752
  %v913 = vpop.f32.mrf.mxu0
  %v914 = vadd.f32 0.0, %v913
  %v915 = vpop.f32.mrf.mxu0
  %v916 = vadd.f32 0.0, %v915
  %917 = vmatmul.bf16.gmra.mxu0 %v753
  %v918 = vpop.f32.mrf.mxu0
  %v919 = vadd.f32 0.0, %v918
  %v920 = vpop.f32.mrf.mxu0
  %v921 = vadd.f32 0.0, %v920
  %922 = vmatmul.bf16.gmra.mxu0 %v754
  %v923 = vpop.f32.mrf.mxu0
  %v924 = vadd.f32 0.0, %v923
  %v925 = vpop.f32.mrf.mxu0
  %v926 = vadd.f32 0.0, %v925
  %927 = vmatmul.bf16.gmra.mxu0 %v755
  %v928 = vpop.f32.mrf.mxu0
  %v929 = vadd.f32 0.0, %v928
  %v930 = vpop.f32.mrf.mxu0
  %v931 = vadd.f32 0.0, %v930
  %932 = vmatmul.bf16.gmra.mxu0 %v756
  %v933 = vpop.f32.mrf.mxu0
  %v934 = vadd.f32 0.0, %v933
  %v935 = vpop.f32.mrf.mxu0
  %v936 = vadd.f32 0.0, %v935
  %937 = vmatmul.bf16.gmra.mxu0 %v757
  %v938 = vpop.f32.mrf.mxu0
  %v939 = vadd.f32 0.0, %v938
  %v940 = vpop.f32.mrf.mxu0
  %v941 = vadd.f32 0.0, %v940
  %942 = vmatmul.bf16.gmra.mxu0 %v758
  %v943 = vpop.f32.mrf.mxu0
  %v944 = vadd.f32 0.0, %v943
  %v945 = vpop.f32.mrf.mxu0
  %v946 = vadd.f32 0.0, %v945
  %947 = vmatmul.bf16.gmra.mxu0 %v759
  %v948 = vpop.f32.mrf.mxu0
  %v949 = vadd.f32 0.0, %v948
  %v950 = vpop.f32.mrf.mxu0
  %v951 = vadd.f32 0.0, %v950
  %952 = vmatmul.bf16.gmra.mxu0 %v760
  %v953 = vpop.f32.mrf.mxu0
  %v954 = vadd.f32 0.0, %v953
  %v955 = vpop.f32.mrf.mxu0
  %v956 = vadd.f32 0.0, %v955
  %957 = vmatmul.bf16.gmra.mxu0 %v761
  %v958 = vpop.f32.mrf.mxu0
  %v959 = vadd.f32 0.0, %v958
  %v960 = vpop.f32.mrf.mxu0
  %v961 = vadd.f32 0.0, %v960
  %962 = vmatmul.bf16.gmra.mxu0 %v762
  %v963 = vpop.f32.mrf.mxu0
  %v964 = vadd.f32 0.0, %v963
  %v965 = vpop.f32.mrf.mxu0
  %v966 = vadd.f32 0.0, %v965
  %967 = vmatmul.bf16.gmra.mxu0 %v763
  %v968 = vpop.f32.mrf.mxu0
  %v969 = vadd.f32 0.0, %v968
  %v970 = vpop.f32.mrf.mxu0
  %v971 = vadd.f32 0.0, %v970
  %972 = vmatmul.bf16.gmra.mxu0 %v764
  %v973 = vpop.f32.mrf.mxu0
  %v974 = vadd.f32 0.0, %v973
  %v975 = vpop.f32.mrf.mxu0
  %v976 = vadd.f32 0.0, %v975
  %977 = vmatmul.bf16.gmra.mxu0 %v765
  %v978 = vpop.f32.mrf.mxu0
  %v979 = vadd.f32 0.0, %v978
  %v980 = vpop.f32.mrf.mxu0
  %v981 = vadd.f32 0.0, %v980
  %982 = vmatmul.bf16.gmra.mxu0 %v766
  %v983 = vpop.f32.mrf.mxu0
  %v984 = vadd.f32 0.0, %v983
  %v985 = vpop.f32.mrf.mxu0
  %v986 = vadd.f32 0.0, %v985
  %987 = vmatmul.bf16.gmra.mxu0 %v767
  %v988 = vpop.f32.mrf.mxu0
  %v989 = vadd.f32 0.0, %v988
  %v990 = vpop.f32.mrf.mxu0
  %v991 = vadd.f32 0.0, %v990
  %992 = vmatmul.bf16.gmra.mxu0 %v768
  %v993 = vpop.f32.mrf.mxu0
  %v994 = vadd.f32 0.0, %v993
  %v995 = vpop.f32.mrf.mxu0
  %v996 = vadd.f32 0.0, %v995
  %997 = vmatmul.bf16.gmra.mxu0 %v769
  %v998 = vpop.f32.mrf.mxu0
  %v999 = vadd.f32 0.0, %v998
  %v1000 = vpop.f32.mrf.mxu0
  %v1001 = vadd.f32 0.0, %v1000
  %1002 = vdwg.mxu0
  %v1003 = vadd.f32 %v844, %v846
  %v1004 = vadd.f32 %v1003, %v849
  %v1005 = vadd.f32 %v1004, %v851
  %v1006 = vadd.f32 %v1005, %v854
  %v1007 = vadd.f32 %v1006, %v856
  %v1008 = vadd.f32 %v1007, %v859
  %v1009 = vadd.f32 %v1008, %v861
  %v1010 = vadd.f32 %v1009, %v864
  %v1011 = vadd.f32 %v1010, %v866
  %v1012 = vadd.f32 %v1011, %v869
  %v1013 = vadd.f32 %v1012, %v871
  %v1014 = vadd.f32 %v1013, %v874
  %v1015 = vadd.f32 %v1014, %v876
  %v1016 = vadd.f32 %v1015, %v879
  %v1017 = vadd.f32 %v1016, %v881
  %v1018 = vadd.f32 %v1017, %v884
  %v1019 = vadd.f32 %v1018, %v886
  %v1020 = vadd.f32 %v1019, %v889
  %v1021 = vadd.f32 %v1020, %v891
  %v1022 = vadd.f32 %v1021, %v894
  %v1023 = vadd.f32 %v1022, %v896
  %v1024 = vadd.f32 %v1023, %v899
  %v1025 = vadd.f32 %v1024, %v901
  %v1026 = vadd.f32 %v1025, %v904
  %v1027 = vadd.f32 %v1026, %v906
  %v1028 = vadd.f32 %v1027, %v909
  %v1029 = vadd.f32 %v1028, %v911
  %v1030 = vadd.f32 %v1029, %v914
  %v1031 = vadd.f32 %v1030, %v916
  %v1032 = vadd.f32 %v1031, %v919
  %v1033 = vadd.f32 %v1032, %v921
  %v1034 = vadd.f32 %v1033, %v924
  %v1035 = vadd.f32 %v1034, %v926
  %v1036 = vadd.f32 %v1035, %v929
  %v1037 = vadd.f32 %v1036, %v931
  %v1038 = vadd.f32 %v1037, %v934
  %v1039 = vadd.f32 %v1038, %v936
  %v1040 = vadd.f32 %v1039, %v939
  %v1041 = vadd.f32 %v1040, %v941
  %v1042 = vadd.f32 %v1041, %v944
  %v1043 = vadd.f32 %v1042, %v946
  %v1044 = vadd.f32 %v1043, %v949
  %v1045 = vadd.f32 %v1044, %v951
  %v1046 = vadd.f32 %v1045, %v954
  %v1047 = vadd.f32 %v1046, %v956
  %v1048 = vadd.f32 %v1047, %v959
  %v1049 = vadd.f32 %v1048, %v961
  %v1050 = vadd.f32 %v1049, %v964
  %v1051 = vadd.f32 %v1050, %v966
  %v1052 = vadd.f32 %v1051, %v969
  %v1053 = vadd.f32 %v1052, %v971
  %v1054 = vadd.f32 %v1053, %v974
  %v1055 = vadd.f32 %v1054, %v976
  %v1056 = vadd.f32 %v1055, %v979
  %v1057 = vadd.f32 %v1056, %v981
  %v1058 = vadd.f32 %v1057, %v984
  %v1059 = vadd.f32 %v1058, %v986
  %v1060 = vadd.f32 %v1059, %v989
  %v1061 = vadd.f32 %v1060, %v991
  %v1062 = vadd.f32 %v1061, %v994
  %v1063 = vadd.f32 %v1062, %v996
  %v1064 = vadd.f32 %v1063, %v999
  %v1065 = vadd.f32 %v1064, %v1001
  %v1066 = vrot.slane %v1065, 4
  %v1067 = vadd.f32 %v1065, %v1066
  %v1068 = vrot.slane %v1067, 2
  %v1069 = vadd.f32 %v1067, %v1068
  %v1070 = vrot.slane %v1069, 1
  %v1071 = vadd.f32 %v1069, %v1070
  %v1072 = vmul.f32 %v844, %v844
  %v1073 = vmul.f32 %v846, %v846
  %v1074 = vmul.f32 %v849, %v849
  %v1075 = vmul.f32 %v851, %v851
  %v1076 = vmul.f32 %v854, %v854
  %v1077 = vmul.f32 %v856, %v856
  %v1078 = vmul.f32 %v859, %v859
  %v1079 = vmul.f32 %v861, %v861
  %v1080 = vmul.f32 %v864, %v864
  %v1081 = vmul.f32 %v866, %v866
  %v1082 = vmul.f32 %v869, %v869
  %v1083 = vmul.f32 %v871, %v871
  %v1084 = vmul.f32 %v874, %v874
  %v1085 = vmul.f32 %v876, %v876
  %v1086 = vmul.f32 %v879, %v879
  %v1087 = vmul.f32 %v881, %v881
  %v1088 = vmul.f32 %v884, %v884
  %v1089 = vmul.f32 %v886, %v886
  %v1090 = vmul.f32 %v889, %v889
  %v1091 = vmul.f32 %v891, %v891
  %v1092 = vmul.f32 %v894, %v894
  %v1093 = vmul.f32 %v896, %v896
  %v1094 = vmul.f32 %v899, %v899
  %v1095 = vmul.f32 %v901, %v901
  %v1096 = vmul.f32 %v904, %v904
  %v1097 = vmul.f32 %v906, %v906
  %v1098 = vmul.f32 %v909, %v909
  %v1099 = vmul.f32 %v911, %v911
  %v1100 = vmul.f32 %v914, %v914
  %v1101 = vmul.f32 %v916, %v916
  %v1102 = vmul.f32 %v919, %v919
  %v1103 = vmul.f32 %v921, %v921
  %v1104 = vmul.f32 %v924, %v924
  %v1105 = vmul.f32 %v926, %v926
  %v1106 = vmul.f32 %v929, %v929
  %v1107 = vmul.f32 %v931, %v931
  %v1108 = vmul.f32 %v934, %v934
  %v1109 = vmul.f32 %v936, %v936
  %v1110 = vmul.f32 %v939, %v939
  %v1111 = vmul.f32 %v941, %v941
  %v1112 = vmul.f32 %v944, %v944
  %v1113 = vmul.f32 %v946, %v946
  %v1114 = vmul.f32 %v949, %v949
  %v1115 = vmul.f32 %v951, %v951
  %v1116 = vmul.f32 %v954, %v954
  %v1117 = vmul.f32 %v956, %v956
  %v1118 = vmul.f32 %v959, %v959
  %v1119 = vmul.f32 %v961, %v961
  %v1120 = vmul.f32 %v964, %v964
  %v1121 = vmul.f32 %v966, %v966
  %v1122 = vmul.f32 %v969, %v969
  %v1123 = vmul.f32 %v971, %v971
  %v1124 = vmul.f32 %v974, %v974
  %v1125 = vmul.f32 %v976, %v976
  %v1126 = vmul.f32 %v979, %v979
  %v1127 = vmul.f32 %v981, %v981
  %v1128 = vmul.f32 %v984, %v984
  %v1129 = vmul.f32 %v986, %v986
  %v1130 = vmul.f32 %v989, %v989
  %v1131 = vmul.f32 %v991, %v991
  %v1132 = vmul.f32 %v994, %v994
  %v1133 = vmul.f32 %v996, %v996
  %v1134 = vmul.f32 %v999, %v999
  %v1135 = vmul.f32 %v1001, %v1001
  %v1136 = vadd.f32 %v1072, %v1073
  %v1137 = vadd.f32 %v1136, %v1074
  %v1138 = vadd.f32 %v1137, %v1075
  %v1139 = vadd.f32 %v1138, %v1076
  %v1140 = vadd.f32 %v1139, %v1077
  %v1141 = vadd.f32 %v1140, %v1078
  %v1142 = vadd.f32 %v1141, %v1079
  %v1143 = vadd.f32 %v1142, %v1080
  %v1144 = vadd.f32 %v1143, %v1081
  %v1145 = vadd.f32 %v1144, %v1082
  %v1146 = vadd.f32 %v1145, %v1083
  %v1147 = vadd.f32 %v1146, %v1084
  %v1148 = vadd.f32 %v1147, %v1085
  %v1149 = vadd.f32 %v1148, %v1086
  %v1150 = vadd.f32 %v1149, %v1087
  %v1151 = vadd.f32 %v1150, %v1088
  %v1152 = vadd.f32 %v1151, %v1089
  %v1153 = vadd.f32 %v1152, %v1090
  %v1154 = vadd.f32 %v1153, %v1091
  %v1155 = vadd.f32 %v1154, %v1092
  %v1156 = vadd.f32 %v1155, %v1093
  %v1157 = vadd.f32 %v1156, %v1094
  %v1158 = vadd.f32 %v1157, %v1095
  %v1159 = vadd.f32 %v1158, %v1096
  %v1160 = vadd.f32 %v1159, %v1097
  %v1161 = vadd.f32 %v1160, %v1098
  %v1162 = vadd.f32 %v1161, %v1099
  %v1163 = vadd.f32 %v1162, %v1100
  %v1164 = vadd.f32 %v1163, %v1101
  %v1165 = vadd.f32 %v1164, %v1102
  %v1166 = vadd.f32 %v1165, %v1103
  %v1167 = vadd.f32 %v1166, %v1104
  %v1168 = vadd.f32 %v1167, %v1105
  %v1169 = vadd.f32 %v1168, %v1106
  %v1170 = vadd.f32 %v1169, %v1107
  %v1171 = vadd.f32 %v1170, %v1108
  %v1172 = vadd.f32 %v1171, %v1109
  %v1173 = vadd.f32 %v1172, %v1110
  %v1174 = vadd.f32 %v1173, %v1111
  %v1175 = vadd.f32 %v1174, %v1112
  %v1176 = vadd.f32 %v1175, %v1113
  %v1177 = vadd.f32 %v1176, %v1114
  %v1178 = vadd.f32 %v1177, %v1115
  %v1179 = vadd.f32 %v1178, %v1116
  %v1180 = vadd.f32 %v1179, %v1117
  %v1181 = vadd.f32 %v1180, %v1118
  %v1182 = vadd.f32 %v1181, %v1119
  %v1183 = vadd.f32 %v1182, %v1120
  %v1184 = vadd.f32 %v1183, %v1121
  %v1185 = vadd.f32 %v1184, %v1122
  %v1186 = vadd.f32 %v1185, %v1123
  %v1187 = vadd.f32 %v1186, %v1124
  %v1188 = vadd.f32 %v1187, %v1125
  %v1189 = vadd.f32 %v1188, %v1126
  %v1190 = vadd.f32 %v1189, %v1127
  %v1191 = vadd.f32 %v1190, %v1128
  %v1192 = vadd.f32 %v1191, %v1129
  %v1193 = vadd.f32 %v1192, %v1130
  %v1194 = vadd.f32 %v1193, %v1131
  %v1195 = vadd.f32 %v1194, %v1132
  %v1196 = vadd.f32 %v1195, %v1133
  %v1197 = vadd.f32 %v1196, %v1134
  %v1198 = vadd.f32 %v1197, %v1135
  %v1199 = vrot.slane %v1198, 4
  %v1200 = vadd.f32 %v1198, %v1199
  %v1201 = vrot.slane %v1200, 2
  %v1202 = vadd.f32 %v1200, %v1201
  %v1203 = vrot.slane %v1202, 1
  %v1204 = vadd.f32 %v1202, %v1203
  %p1205 = scmp.eq.s32.totalorder 0, 0
  // Predicated region
  $region22: #{set_abstraction_msg2.10} parent=0 // pred_check
    %p1206 = pneg %p1205
  $region23: #{set_abstraction_msg2.10} parent=0 // pred_check_branch
    %1208 = sbr.rel (%p1206) target = $region25
  $region24: #{set_abstraction_msg2.10} parent=0 // pred_region
    %v1209 = vlaneseq
    %vm1210 = vcmp.ge.s32.totalorder %v1209, 0
    %vm1211 = vcmp.lt.s32.totalorder %v1209, 256
    %vm1212 = vmand %vm1210, %vm1211
    %1213 = vst.msk [vmem:[%s5] sm:$0x3] %vm1212, 0.0
  $region25: #{set_abstraction_msg2.10} parent=0 // pred_fallthru
    _
  %v1214 = vld [vmem:[%s5] sm:$0x1]
  %v1215 = vadd.f32 %v1214, %v1071
  %v1216 = vlaneseq
  %vm1217 = vcmp.ge.s32.totalorder %v1216, 0
  %vm1218 = vcmp.lt.s32.totalorder %v1216, 128
  %vm1219 = vmand %vm1217, %vm1218
  %1220 = vst.msk [vmem:[%s5] sm:$0x1] %vm1219, %v1215
  %v1221 = vld [vmem:[%s5 + $0x1] sm:$0x1]
  %v1222 = vadd.f32 %v1221, %v1204
  %1223 = vst.msk [vmem:[%s5 + $0x1] sm:$0x1] %vm1219, %v1222
  // Predicated region
  $region26: #{set_abstraction_msg2.10} parent=0 // pred_check
    _
  $region27: #{set_abstraction_msg2.10} parent=0 // pred_check_branch
    %1225 = sbr.rel (0) target = $region29
  $region28: #{set_abstraction_msg2.10} parent=0 // pred_region
    _
  $region29: #{set_abstraction_msg2.10} parent=0 // pred_fallthru
    _
  // Predicated region
  $region30: #{set_abstraction_msg2.10} parent=0 // pred_check
    _
  $region31: #{set_abstraction_msg2.10} parent=0 // pred_check_branch
    %1227 = sbr.rel (0) target = $region33
  $region32: #{set_abstraction_msg2.10} parent=0 // pred_region
    _
  $region33: #{set_abstraction_msg2.10} parent=0 // pred_fallthru
    _

// kernel: set_abstraction_msg2.11
$region0: #{set_abstraction_msg2.11}
  #allocation0 [shape = 'u32[]', space=smem, size = 0x4, offset = 0x4, fixed_abs, tag = 'smem constant byte address 0x4 - core index']
  #allocation1 [shape = 'u32[72,128]{1,0:T(1,128)}', space=vmem, size = 0x9000, scoped, tag = 'internal scratch']
  %s0 = inlined_call_operand.vmem [shape: bf16[512,8], index: 0, kind: input, shape index: {}]
  %s1 = inlined_call_operand.vmem [shape: bf16[8,128], index: 1, kind: input, shape index: {}]
  %s2 = inlined_call_operand.vmem [shape: bf16[128,128], index: 2, kind: input, shape index: {}]
  %s3 = inlined_call_operand.vmem [shape: bf16[128,128], index: 3, kind: input, shape index: {}]
  %s4 = inlined_call_operand.vmem [shape: f32[1,128], index: 4, kind: input, shape index: {}]
  %s5 = inlined_call_operand.vmem [shape: f32[1,128], index: 5, kind: input, shape index: {}]
  %s6 = inlined_call_operand.vmem [shape: f32[1,128], index: 6, kind: input, shape index: {}]
  %s7 = inlined_call_operand.vmem [shape: f32[1,128], index: 7, kind: input, shape index: {}]
  %s8 = inlined_call_operand.vmem [shape: f32[1,1,256], index: 8, kind: output, shape index: {0}]
  %s9 = inlined_call_operand.vmem [shape: f32[32,128], index: 9, kind: output, shape index: {1}]
  %s10 = inlined_call_operand.vmem [shape: f32[32,128], index: 10, kind: output, shape index: {2}]
  %11 = xla_tuple %s8, %s9, %s10
  %s12 = sld [smem:[#allocation0]]
  $region62: #{set_abstraction_msg2.11} parent=0
    _
  %s14 = ssub.s32 1, %s12
  %s15 = scalar_select 0, %s14, %s12
  // Predicated region
  $region2: #{set_abstraction_msg2.11} parent=0 // pred_check
    _
  $region3: #{set_abstraction_msg2.11} parent=0 // pred_check_branch
    %17 = sbr.rel (0) target = $region5
  $region4: #{set_abstraction_msg2.11} parent=0 // pred_region
    %s18 = sadd.s32 0, 0
    %s19 = smul.u32 64, %s18
    %p20 = scmp.lt.s32.totalorder %s19, 63
    %s21 = scalar_select %p20, %s19, 63
    %s22 = smul.addr %s21, 4
    %s23 = scalar_lea.vmem %s0, %s22
    %s24 = sadd.s32 0, 0
    %s25 = smul.u32 64, %s24
  $region5: #{set_abstraction_msg2.11} parent=0 // pred_fallthru
    _
  // Predicated region
  $region6: #{set_abstraction_msg2.11} parent=0 // pred_check
    _
  $region7: #{set_abstraction_msg2.11} parent=0 // pred_check_branch
    %27 = sbr.rel (0) target = $region9
  $region8: #{set_abstraction_msg2.11} parent=0 // pred_region
    _
  $region9: #{set_abstraction_msg2.11} parent=0 // pred_fallthru
    _
  // Predicated region
  $region10: #{set_abstraction_msg2.11} parent=0 // pred_check
    _
  $region11: #{set_abstraction_msg2.11} parent=0 // pred_check_branch
    %29 = sbr.rel (0) target = $region13
  $region12: #{set_abstraction_msg2.11} parent=0 // pred_region
    _
  $region13: #{set_abstraction_msg2.11} parent=0 // pred_fallthru
    _
  // Predicated region
  $region14: #{set_abstraction_msg2.11} parent=0 // pred_check
    _
  $region15: #{set_abstraction_msg2.11} parent=0 // pred_check_branch
    %31 = sbr.rel (0) target = $region17
  $region16: #{set_abstraction_msg2.11} parent=0 // pred_region
    _
  $region17: #{set_abstraction_msg2.11} parent=0 // pred_fallthru
    _
  // Predicated region
  $region18: #{set_abstraction_msg2.11} parent=0 // pred_check
    _
  $region19: #{set_abstraction_msg2.11} parent=0 // pred_check_branch
    %33 = sbr.rel (0) target = $region21
  $region20: #{set_abstraction_msg2.11} parent=0 // pred_region
    _
  $region21: #{set_abstraction_msg2.11} parent=0 // pred_fallthru
    _
  // Predicated region
  $region22: #{set_abstraction_msg2.11} parent=0 // pred_check
    _
  $region23: #{set_abstraction_msg2.11} parent=0 // pred_check_branch
    %35 = sbr.rel (0) target = $region25
  $region24: #{set_abstraction_msg2.11} parent=0 // pred_region
    _
  $region25: #{set_abstraction_msg2.11} parent=0 // pred_fallthru
    _
  // Predicated region
  $region26: #{set_abstraction_msg2.11} parent=0 // pred_check
    _
  $region27: #{set_abstraction_msg2.11} parent=0 // pred_check_branch
    %37 = sbr.rel (0) target = $region29
  $region28: #{set_abstraction_msg2.11} parent=0 // pred_region
    _
  $region29: #{set_abstraction_msg2.11} parent=0 // pred_fallthru
    _
  // Predicated region
  $region30: #{set_abstraction_msg2.11} parent=0 // pred_check
    _
  $region31: #{set_abstraction_msg2.11} parent=0 // pred_check_branch
    %39 = sbr.rel (0) target = $region33
  $region32: #{set_abstraction_msg2.11} parent=0 // pred_region
    _
  $region33: #{set_abstraction_msg2.11} parent=0 // pred_fallthru
    _
  %s40 = sadd.s32 0, 0
  %s41 = smul.u32 64, %s40
  %p42 = scmp.lt.s32.totalorder %s41, 63
  %s43 = scalar_select %p42, %s41, 63
  %s44 = smul.addr %s43, 4
  %s45 = scalar_lea.vmem %s0, %s44
  %s46 = sadd.s32 0, 0
  %s47 = smul.u32 4, %s46
  %p48 = scmp.lt.s32.totalorder %s47, 3
  %s49 = scalar_select %p48, %s47, 3
  %s50 = smul.addr %s49, 8
  %s51 = scalar_lea.vmem %s9, %s50
  %s52 = sadd.s32 0, 0
  %s53 = smul.u32 4, %s52
  %p54 = scmp.lt.s32.totalorder %s53, 3
  %s55 = scalar_select %p54, %s53, 3
  %s56 = smul.addr %s55, 8
  %s57 = scalar_lea.vmem %s10, %s56
  %s58 = sadd.s32 0, 0
  %s59 = smul.u32 64, %s58
  %p60 = scmp.lt.s32.totalorder %s59, 63
  %s61 = scalar_select %p60, %s59, 63
  %s62 = smul.addr %s61, 4
  %s63 = scalar_lea.vmem %s0, %s62
  %s64 = sadd.s32 0, 0
  %s65 = smul.u32 64, %s64
  %s66 = sadd.s32 0, 0
  %s67 = smul.u32 4, %s66
  %p68 = scmp.lt.s32.totalorder %s67, 3
  %s69 = scalar_select %p68, %s67, 3
  %s70 = smul.addr %s69, 8
  %s71 = scalar_lea.vmem %s9, %s70
  %s72 = sadd.s32 0, 0
  %s73 = smul.u32 4, %s72
  %s74 = sadd.s32 0, 0
  %s75 = smul.u32 4, %s74
  %p76 = scmp.lt.s32.totalorder %s75, 3
  %s77 = scalar_select %p76, %s75, 3
  %s78 = smul.addr %s77, 8
  %s79 = scalar_lea.vmem %s10, %s78
  %s80 = sadd.s32 0, 0
  %s81 = smul.u32 4, %s80
  %v83 = vld [vmem:[%s63] sm:$0xf]
  %v84 = vld [vmem:[%s63 + $0x4] sm:$0xf]
  %v85 = vld [vmem:[%s63 + $0x8] sm:$0xf]
  %v86 = vld [vmem:[%s63 + $0xc] sm:$0xf]
  %v87 = vld [vmem:[%s63 + $0x10] sm:$0xf]
  %v88 = vld [vmem:[%s63 + $0x14] sm:$0xf]
  %v89 = vld [vmem:[%s63 + $0x18] sm:$0xf]
  %v90 = vld [vmem:[%s63 + $0x1c] sm:$0xf]
  %v91 = vld [vmem:[%s63 + $0x20] sm:$0xf]
  %v92 = vld [vmem:[%s63 + $0x24] sm:$0xf]
  %v93 = vld [vmem:[%s63 + $0x28] sm:$0xf]
  %v94 = vld [vmem:[%s63 + $0x2c] sm:$0xf]
  %v95 = vld [vmem:[%s63 + $0x30] sm:$0xf]
  %v96 = vld [vmem:[%s63 + $0x34] sm:$0xf]
  %v97 = vld [vmem:[%s63 + $0x38] sm:$0xf]
  %v98 = vld [vmem:[%s63 + $0x3c] sm:$0xf]
  %v99 = vld [vmem:[%s63 + $0x40] sm:$0xf]
  %v100 = vld [vmem:[%s63 + $0x44] sm:$0xf]
  %v101 = vld [vmem:[%s63 + $0x48] sm:$0xf]
  %v102 = vld [vmem:[%s63 + $0x4c] sm:$0xf]
  %v103 = vld [vmem:[%s63 + $0x50] sm:$0xf]
  %v104 = vld [vmem:[%s63 + $0x54] sm:$0xf]
  %v105 = vld [vmem:[%s63 + $0x58] sm:$0xf]
  %v106 = vld [vmem:[%s63 + $0x5c] sm:$0xf]
  %v107 = vld [vmem:[%s63 + $0x60] sm:$0xf]
  %v108 = vld [vmem:[%s63 + $0x64] sm:$0xf]
  %v109 = vld [vmem:[%s63 + $0x68] sm:$0xf]
  %v110 = vld [vmem:[%s63 + $0x6c] sm:$0xf]
  %v111 = vld [vmem:[%s63 + $0x70] sm:$0xf]
  %v112 = vld [vmem:[%s63 + $0x74] sm:$0xf]
  %v113 = vld [vmem:[%s63 + $0x78] sm:$0xf]
  %v114 = vld [vmem:[%s63 + $0x7c] sm:$0xf]
  %v115 = vld [vmem:[%s63 + $0x80] sm:$0xf]
  %v116 = vld [vmem:[%s63 + $0x84] sm:$0xf]
  %v117 = vld [vmem:[%s63 + $0x88] sm:$0xf]
  %v118 = vld [vmem:[%s63 + $0x8c] sm:$0xf]
  %v119 = vld [vmem:[%s63 + $0x90] sm:$0xf]
  %v120 = vld [vmem:[%s63 + $0x94] sm:$0xf]
  %v121 = vld [vmem:[%s63 + $0x98] sm:$0xf]
  %v122 = vld [vmem:[%s63 + $0x9c] sm:$0xf]
  %v123 = vld [vmem:[%s63 + $0xa0] sm:$0xf]
  %v124 = vld [vmem:[%s63 + $0xa4] sm:$0xf]
  %v125 = vld [vmem:[%s63 + $0xa8] sm:$0xf]
  %v126 = vld [vmem:[%s63 + $0xac] sm:$0xf]
  %v127 = vld [vmem:[%s63 + $0xb0] sm:$0xf]
  %v128 = vld [vmem:[%s63 + $0xb4] sm:$0xf]
  %v129 = vld [vmem:[%s63 + $0xb8] sm:$0xf]
  %v130 = vld [vmem:[%s63 + $0xbc] sm:$0xf]
  %v131 = vld [vmem:[%s63 + $0xc0] sm:$0xf]
  %v132 = vld [vmem:[%s63 + $0xc4] sm:$0xf]
  %v133 = vld [vmem:[%s63 + $0xc8] sm:$0xf]
  %v134 = vld [vmem:[%s63 + $0xcc] sm:$0xf]
  %v135 = vld [vmem:[%s63 + $0xd0] sm:$0xf]
  %v136 = vld [vmem:[%s63 + $0xd4] sm:$0xf]
  %v137 = vld [vmem:[%s63 + $0xd8] sm:$0xf]
  %v138 = vld [vmem:[%s63 + $0xdc] sm:$0xf]
  %v139 = vld [vmem:[%s63 + $0xe0] sm:$0xf]
  %v140 = vld [vmem:[%s63 + $0xe4] sm:$0xf]
  %v141 = vld [vmem:[%s63 + $0xe8] sm:$0xf]
  %v142 = vld [vmem:[%s63 + $0xec] sm:$0xf]
  %v143 = vld [vmem:[%s63 + $0xf0] sm:$0xf]
  %v144 = vld [vmem:[%s63 + $0xf4] sm:$0xf]
  %v145 = vld [vmem:[%s63 + $0xf8] sm:$0xf]
  %v146 = vld [vmem:[%s63 + $0xfc] sm:$0xf]
  %v147 = vld [vmem:[%s1] sm:$0xf]
  %v212 = vunpack.c.l.b16 %v83
  %v213 = vunpack.c.l.b16 %v84
  %v214 = vunpack.c.l.b16 %v85
  %v215 = vunpack.c.l.b16 %v86
  %v216 = vunpack.c.l.b16 %v87
  %v217 = vunpack.c.l.b16 %v88
  %v218 = vunpack.c.l.b16 %v89
  %v219 = vunpack.c.l.b16 %v90
  %v220 = vunpack.c.l.b16 %v91
  %v221 = vunpack.c.l.b16 %v92
  %v222 = vunpack.c.l.b16 %v93
  %v223 = vunpack.c.l.b16 %v94
  %v224 = vunpack.c.l.b16 %v95
  %v225 = vunpack.c.l.b16 %v96
  %v226 = vunpack.c.l.b16 %v97
  %v227 = vunpack.c.l.b16 %v98
  %v228 = vunpack.c.l.b16 %v99
  %v229 = vunpack.c.l.b16 %v100
  %v230 = vunpack.c.l.b16 %v101
  %v231 = vunpack.c.l.b16 %v102
  %v232 = vunpack.c.l.b16 %v103
  %v233 = vunpack.c.l.b16 %v104
  %v234 = vunpack.c.l.b16 %v105
  %v235 = vunpack.c.l.b16 %v106
  %v236 = vunpack.c.l.b16 %v107
  %v237 = vunpack.c.l.b16 %v108
  %v238 = vunpack.c.l.b16 %v109
  %v239 = vunpack.c.l.b16 %v110
  %v240 = vunpack.c.l.b16 %v111
  %v241 = vunpack.c.l.b16 %v112
  %v242 = vunpack.c.l.b16 %v113
  %v243 = vunpack.c.l.b16 %v114
  %v244 = vunpack.c.l.b16 %v115
  %v245 = vunpack.c.l.b16 %v116
  %v246 = vunpack.c.l.b16 %v117
  %v247 = vunpack.c.l.b16 %v118
  %v248 = vunpack.c.l.b16 %v119
  %v249 = vunpack.c.l.b16 %v120
  %v250 = vunpack.c.l.b16 %v121
  %v251 = vunpack.c.l.b16 %v122
  %v252 = vunpack.c.l.b16 %v123
  %v253 = vunpack.c.l.b16 %v124
  %v254 = vunpack.c.l.b16 %v125
  %v255 = vunpack.c.l.b16 %v126
  %v256 = vunpack.c.l.b16 %v127
  %v257 = vunpack.c.l.b16 %v128
  %v258 = vunpack.c.l.b16 %v129
  %v259 = vunpack.c.l.b16 %v130
  %v260 = vunpack.c.l.b16 %v131
  %v261 = vunpack.c.l.b16 %v132
  %v262 = vunpack.c.l.b16 %v133
  %v263 = vunpack.c.l.b16 %v134
  %v264 = vunpack.c.l.b16 %v135
  %v265 = vunpack.c.l.b16 %v136
  %v266 = vunpack.c.l.b16 %v137
  %v267 = vunpack.c.l.b16 %v138
  %v268 = vunpack.c.l.b16 %v139
  %v269 = vunpack.c.l.b16 %v140
  %v270 = vunpack.c.l.b16 %v141
  %v271 = vunpack.c.l.b16 %v142
  %v272 = vunpack.c.l.b16 %v143
  %v273 = vunpack.c.l.b16 %v144
  %v274 = vunpack.c.l.b16 %v145
  %v275 = vunpack.c.l.b16 %v146
  %v276 = vpack.c.b16 %v213, %v212
  %v277 = vpack.c.b16 %v215, %v214
  %v278 = vpack.c.b16 %v217, %v216
  %v279 = vpack.c.b16 %v219, %v218
  %v280 = vpack.c.b16 %v221, %v220
  %v281 = vpack.c.b16 %v223, %v222
  %v282 = vpack.c.b16 %v225, %v224
  %v283 = vpack.c.b16 %v227, %v226
  %v284 = vpack.c.b16 %v229, %v228
  %v285 = vpack.c.b16 %v231, %v230
  %v286 = vpack.c.b16 %v233, %v232
  %v287 = vpack.c.b16 %v235, %v234
  %v288 = vpack.c.b16 %v237, %v236
  %v289 = vpack.c.b16 %v239, %v238
  %v290 = vpack.c.b16 %v241, %v240
  %v291 = vpack.c.b16 %v243, %v242
  %v292 = vpack.c.b16 %v245, %v244
  %v293 = vpack.c.b16 %v247, %v246
  %v294 = vpack.c.b16 %v249, %v248
  %v295 = vpack.c.b16 %v251, %v250
  %v296 = vpack.c.b16 %v253, %v252
  %v297 = vpack.c.b16 %v255, %v254
  %v298 = vpack.c.b16 %v257, %v256
  %v299 = vpack.c.b16 %v259, %v258
  %v300 = vpack.c.b16 %v261, %v260
  %v301 = vpack.c.b16 %v263, %v262
  %v302 = vpack.c.b16 %v265, %v264
  %v303 = vpack.c.b16 %v267, %v266
  %v304 = vpack.c.b16 %v269, %v268
  %v305 = vpack.c.b16 %v271, %v270
  %v306 = vpack.c.b16 %v273, %v272
  %v307 = vpack.c.b16 %v275, %v274
  %vm308 = vcmask 64512
  %v310 = vsel %vm308, %v276, 0
  %v313 = vsel %vm308, %v277, 0
  %v316 = vsel %vm308, %v278, 0
  %v319 = vsel %vm308, %v279, 0
  %v322 = vsel %vm308, %v280, 0
  %v325 = vsel %vm308, %v281, 0
  %v328 = vsel %vm308, %v282, 0
  %v331 = vsel %vm308, %v283, 0
  %v334 = vsel %vm308, %v284, 0
  %v337 = vsel %vm308, %v285, 0
  %v340 = vsel %vm308, %v286, 0
  %v343 = vsel %vm308, %v287, 0
  %v346 = vsel %vm308, %v288, 0
  %v349 = vsel %vm308, %v289, 0
  %v352 = vsel %vm308, %v290, 0
  %v355 = vsel %vm308, %v291, 0
  %v358 = vsel %vm308, %v292, 0
  %v361 = vsel %vm308, %v293, 0
  %v364 = vsel %vm308, %v294, 0
  %v367 = vsel %vm308, %v295, 0
  %v370 = vsel %vm308, %v296, 0
  %v373 = vsel %vm308, %v297, 0
  %v376 = vsel %vm308, %v298, 0
  %v379 = vsel %vm308, %v299, 0
  %v382 = vsel %vm308, %v300, 0
  %v385 = vsel %vm308, %v301, 0
  %v388 = vsel %vm308, %v302, 0
  %v391 = vsel %vm308, %v303, 0
  %v394 = vsel %vm308, %v304, 0
  %v397 = vsel %vm308, %v305, 0
  %v400 = vsel %vm308, %v306, 0
  %v403 = vsel %vm308, %v307, 0
  %vm405 = vcmask 1043456
  %v407 = vsel %vm405, %v147, 0
  %409 = vmatpush.bf16.msra.mxu0 0
  %410 = vmatpush.bf16.msra.mxu0 0
  %411 = vmatpush.bf16.msra.mxu0 0
  %412 = vmatpush.bf16.msra.mxu0 0
  %413 = vmatpush.bf16.msra.mxu0 0
  %414 = vmatpush.bf16.msra.mxu0 0
  %415 = vmatpush.bf16.msra.mxu0 0
  %416 = vmatpush.bf16.msra.mxu0 %v407
  %417 = vmatmul.bf16.gmra.mxu0 %v310
  %v418 = vpop.f32.mrf.mxu0
  %v419 = vadd.f32 0.0, %v418
  %v420 = vpop.f32.mrf.mxu0
  %v421 = vadd.f32 0.0, %v420
  %422 = vmatmul.bf16.gmra.mxu0 %v313
  %v423 = vpop.f32.mrf.mxu0
  %v424 = vadd.f32 0.0, %v423
  %v425 = vpop.f32.mrf.mxu0
  %v426 = vadd.f32 0.0, %v425
  %427 = vmatmul.bf16.gmra.mxu0 %v316
  %v428 = vpop.f32.mrf.mxu0
  %v429 = vadd.f32 0.0, %v428
  %v430 = vpop.f32.mrf.mxu0
  %v431 = vadd.f32 0.0, %v430
  %432 = vmatmul.bf16.gmra.mxu0 %v319
  %v433 = vpop.f32.mrf.mxu0
  %v434 = vadd.f32 0.0, %v433
  %v435 = vpop.f32.mrf.mxu0
  %v436 = vadd.f32 0.0, %v435
  %437 = vmatmul.bf16.gmra.mxu0 %v322
  %v438 = vpop.f32.mrf.mxu0
  %v439 = vadd.f32 0.0, %v438
  %v440 = vpop.f32.mrf.mxu0
  %v441 = vadd.f32 0.0, %v440
  %442 = vmatmul.bf16.gmra.mxu0 %v325
  %v443 = vpop.f32.mrf.mxu0
  %v444 = vadd.f32 0.0, %v443
  %v445 = vpop.f32.mrf.mxu0
  %v446 = vadd.f32 0.0, %v445
  %447 = vmatmul.bf16.gmra.mxu0 %v328
  %v448 = vpop.f32.mrf.mxu0
  %v449 = vadd.f32 0.0, %v448
  %v450 = vpop.f32.mrf.mxu0
  %v451 = vadd.f32 0.0, %v450
  %452 = vmatmul.bf16.gmra.mxu0 %v331
  %v453 = vpop.f32.mrf.mxu0
  %v454 = vadd.f32 0.0, %v453
  %v455 = vpop.f32.mrf.mxu0
  %v456 = vadd.f32 0.0, %v455
  %457 = vmatmul.bf16.gmra.mxu0 %v334
  %v458 = vpop.f32.mrf.mxu0
  %v459 = vadd.f32 0.0, %v458
  %v460 = vpop.f32.mrf.mxu0
  %v461 = vadd.f32 0.0, %v460
  %462 = vmatmul.bf16.gmra.mxu0 %v337
  %v463 = vpop.f32.mrf.mxu0
  %v464 = vadd.f32 0.0, %v463
  %v465 = vpop.f32.mrf.mxu0
  %v466 = vadd.f32 0.0, %v465
  %467 = vmatmul.bf16.gmra.mxu0 %v340
  %v468 = vpop.f32.mrf.mxu0
  %v469 = vadd.f32 0.0, %v468
  %v470 = vpop.f32.mrf.mxu0
  %v471 = vadd.f32 0.0, %v470
  %472 = vmatmul.bf16.gmra.mxu0 %v343
  %v473 = vpop.f32.mrf.mxu0
  %v474 = vadd.f32 0.0, %v473
  %v475 = vpop.f32.mrf.mxu0
  %v476 = vadd.f32 0.0, %v475
  %477 = vmatmul.bf16.gmra.mxu0 %v346
  %v478 = vpop.f32.mrf.mxu0
  %v479 = vadd.f32 0.0, %v478
  %v480 = vpop.f32.mrf.mxu0
  %v481 = vadd.f32 0.0, %v480
  %482 = vmatmul.bf16.gmra.mxu0 %v349
  %v483 = vpop.f32.mrf.mxu0
  %v484 = vadd.f32 0.0, %v483
  %v485 = vpop.f32.mrf.mxu0
  %v486 = vadd.f32 0.0, %v485
  %487 = vmatmul.bf16.gmra.mxu0 %v352
  %v488 = vpop.f32.mrf.mxu0
  %v489 = vadd.f32 0.0, %v488
  %v490 = vpop.f32.mrf.mxu0
  %v491 = vadd.f32 0.0, %v490
  %492 = vmatmul.bf16.gmra.mxu0 %v355
  %v493 = vpop.f32.mrf.mxu0
  %v494 = vadd.f32 0.0, %v493
  %v495 = vpop.f32.mrf.mxu0
  %v496 = vadd.f32 0.0, %v495
  %497 = vmatmul.bf16.gmra.mxu0 %v358
  %v498 = vpop.f32.mrf.mxu0
  %v499 = vadd.f32 0.0, %v498
  %v500 = vpop.f32.mrf.mxu0
  %v501 = vadd.f32 0.0, %v500
  %502 = vmatmul.bf16.gmra.mxu0 %v361
  %v503 = vpop.f32.mrf.mxu0
  %v504 = vadd.f32 0.0, %v503
  %v505 = vpop.f32.mrf.mxu0
  %v506 = vadd.f32 0.0, %v505
  %507 = vmatmul.bf16.gmra.mxu0 %v364
  %v508 = vpop.f32.mrf.mxu0
  %v509 = vadd.f32 0.0, %v508
  %v510 = vpop.f32.mrf.mxu0
  %v511 = vadd.f32 0.0, %v510
  %512 = vmatmul.bf16.gmra.mxu0 %v367
  %v513 = vpop.f32.mrf.mxu0
  %v514 = vadd.f32 0.0, %v513
  %v515 = vpop.f32.mrf.mxu0
  %v516 = vadd.f32 0.0, %v515
  %517 = vmatmul.bf16.gmra.mxu0 %v370
  %v518 = vpop.f32.mrf.mxu0
  %v519 = vadd.f32 0.0, %v518
  %v520 = vpop.f32.mrf.mxu0
  %v521 = vadd.f32 0.0, %v520
  %522 = vmatmul.bf16.gmra.mxu0 %v373
  %v523 = vpop.f32.mrf.mxu0
  %v524 = vadd.f32 0.0, %v523
  %v525 = vpop.f32.mrf.mxu0
  %v526 = vadd.f32 0.0, %v525
  %527 = vmatmul.bf16.gmra.mxu0 %v376
  %v528 = vpop.f32.mrf.mxu0
  %v529 = vadd.f32 0.0, %v528
  %v530 = vpop.f32.mrf.mxu0
  %v531 = vadd.f32 0.0, %v530
  %532 = vmatmul.bf16.gmra.mxu0 %v379
  %v533 = vpop.f32.mrf.mxu0
  %v534 = vadd.f32 0.0, %v533
  %v535 = vpop.f32.mrf.mxu0
  %v536 = vadd.f32 0.0, %v535
  %537 = vmatmul.bf16.gmra.mxu0 %v382
  %v538 = vpop.f32.mrf.mxu0
  %v539 = vadd.f32 0.0, %v538
  %v540 = vpop.f32.mrf.mxu0
  %v541 = vadd.f32 0.0, %v540
  %542 = vmatmul.bf16.gmra.mxu0 %v385
  %v543 = vpop.f32.mrf.mxu0
  %v544 = vadd.f32 0.0, %v543
  %v545 = vpop.f32.mrf.mxu0
  %v546 = vadd.f32 0.0, %v545
  %547 = vmatmul.bf16.gmra.mxu0 %v388
  %v548 = vpop.f32.mrf.mxu0
  %v549 = vadd.f32 0.0, %v548
  %v550 = vpop.f32.mrf.mxu0
  %v551 = vadd.f32 0.0, %v550
  %552 = vmatmul.bf16.gmra.mxu0 %v391
  %v553 = vpop.f32.mrf.mxu0
  %v554 = vadd.f32 0.0, %v553
  %v555 = vpop.f32.mrf.mxu0
  %v556 = vadd.f32 0.0, %v555
  %557 = vmatmul.bf16.gmra.mxu0 %v394
  %v558 = vpop.f32.mrf.mxu0
  %v559 = vadd.f32 0.0, %v558
  %v560 = vpop.f32.mrf.mxu0
  %v561 = vadd.f32 0.0, %v560
  %562 = vmatmul.bf16.gmra.mxu0 %v397
  %v563 = vpop.f32.mrf.mxu0
  %v564 = vadd.f32 0.0, %v563
  %v565 = vpop.f32.mrf.mxu0
  %v566 = vadd.f32 0.0, %v565
  %567 = vmatmul.bf16.gmra.mxu0 %v400
  %v568 = vpop.f32.mrf.mxu0
  %v569 = vadd.f32 0.0, %v568
  %v570 = vpop.f32.mrf.mxu0
  %v571 = vadd.f32 0.0, %v570
  %572 = vmatmul.bf16.gmra.mxu0 %v403
  %v573 = vpop.f32.mrf.mxu0
  %v574 = vadd.f32 0.0, %v573
  %v575 = vpop.f32.mrf.mxu0
  %v576 = vadd.f32 0.0, %v575
  %577 = vdwg.mxu0
  %v578 = vld [vmem:[%s4] sm:$0x1]
  %v580 = vperm.slane %v578, 0
  %v582 = vmul.f32 %v419, %v580
  %v583 = vmul.f32 %v421, %v580
  %v584 = vmul.f32 %v424, %v580
  %v585 = vmul.f32 %v426, %v580
  %v586 = vmul.f32 %v429, %v580
  %v587 = vmul.f32 %v431, %v580
  %v588 = vmul.f32 %v434, %v580
  %v589 = vmul.f32 %v436, %v580
  %v590 = vmul.f32 %v439, %v580
  %v591 = vmul.f32 %v441, %v580
  %v592 = vmul.f32 %v444, %v580
  %v593 = vmul.f32 %v446, %v580
  %v594 = vmul.f32 %v449, %v580
  %v595 = vmul.f32 %v451, %v580
  %v596 = vmul.f32 %v454, %v580
  %v597 = vmul.f32 %v456, %v580
  %v598 = vmul.f32 %v459, %v580
  %v599 = vmul.f32 %v461, %v580
  %v600 = vmul.f32 %v464, %v580
  %v601 = vmul.f32 %v466, %v580
  %v602 = vmul.f32 %v469, %v580
  %v603 = vmul.f32 %v471, %v580
  %v604 = vmul.f32 %v474, %v580
  %v605 = vmul.f32 %v476, %v580
  %v606 = vmul.f32 %v479, %v580
  %v607 = vmul.f32 %v481, %v580
  %v608 = vmul.f32 %v484, %v580
  %v609 = vmul.f32 %v486, %v580
  %v610 = vmul.f32 %v489, %v580
  %v611 = vmul.f32 %v491, %v580
  %v612 = vmul.f32 %v494, %v580
  %v613 = vmul.f32 %v496, %v580
  %v614 = vmul.f32 %v499, %v580
  %v615 = vmul.f32 %v501, %v580
  %v616 = vmul.f32 %v504, %v580
  %v617 = vmul.f32 %v506, %v580
  %v618 = vmul.f32 %v509, %v580
  %v619 = vmul.f32 %v511, %v580
  %v620 = vmul.f32 %v514, %v580
  %v621 = vmul.f32 %v516, %v580
  %v622 = vmul.f32 %v519, %v580
  %v623 = vmul.f32 %v521, %v580
  %v624 = vmul.f32 %v524, %v580
  %v625 = vmul.f32 %v526, %v580
  %v626 = vmul.f32 %v529, %v580
  %v627 = vmul.f32 %v531, %v580
  %v628 = vmul.f32 %v534, %v580
  %v629 = vmul.f32 %v536, %v580
  %v630 = vmul.f32 %v539, %v580
  %v631 = vmul.f32 %v541, %v580
  %v632 = vmul.f32 %v544, %v580
  %v633 = vmul.f32 %v546, %v580
  %v634 = vmul.f32 %v549, %v580
  %v635 = vmul.f32 %v551, %v580
  %v636 = vmul.f32 %v554, %v580
  %v637 = vmul.f32 %v556, %v580
  %v638 = vmul.f32 %v559, %v580
  %v639 = vmul.f32 %v561, %v580
  %v640 = vmul.f32 %v564, %v580
  %v641 = vmul.f32 %v566, %v580
  %v642 = vmul.f32 %v569, %v580
  %v643 = vmul.f32 %v571, %v580
  %v644 = vmul.f32 %v574, %v580
  %v645 = vmul.f32 %v576, %v580
  %v646 = vld [vmem:[%s6] sm:$0x1]
  %v648 = vperm.slane %v646, 0
  %v650 = vadd.f32 %v582, %v648
  %v651 = vadd.f32 %v583, %v648
  %v652 = vadd.f32 %v584, %v648
  %v653 = vadd.f32 %v585, %v648
  %v654 = vadd.f32 %v586, %v648
  %v655 = vadd.f32 %v587, %v648
  %v656 = vadd.f32 %v588, %v648
  %v657 = vadd.f32 %v589, %v648
  %v658 = vadd.f32 %v590, %v648
  %v659 = vadd.f32 %v591, %v648
  %v660 = vadd.f32 %v592, %v648
  %v661 = vadd.f32 %v593, %v648
  %v662 = vadd.f32 %v594, %v648
  %v663 = vadd.f32 %v595, %v648
  %v664 = vadd.f32 %v596, %v648
  %v665 = vadd.f32 %v597, %v648
  %v666 = vadd.f32 %v598, %v648
  %v667 = vadd.f32 %v599, %v648
  %v668 = vadd.f32 %v600, %v648
  %v669 = vadd.f32 %v601, %v648
  %v670 = vadd.f32 %v602, %v648
  %v671 = vadd.f32 %v603, %v648
  %v672 = vadd.f32 %v604, %v648
  %v673 = vadd.f32 %v605, %v648
  %v674 = vadd.f32 %v606, %v648
  %v675 = vadd.f32 %v607, %v648
  %v676 = vadd.f32 %v608, %v648
  %v677 = vadd.f32 %v609, %v648
  %v678 = vadd.f32 %v610, %v648
  %v679 = vadd.f32 %v611, %v648
  %v680 = vadd.f32 %v612, %v648
  %v681 = vadd.f32 %v613, %v648
  %v682 = vadd.f32 %v614, %v648
  %v683 = vadd.f32 %v615, %v648
  %v684 = vadd.f32 %v616, %v648
  %v685 = vadd.f32 %v617, %v648
  %v686 = vadd.f32 %v618, %v648
  %v687 = vadd.f32 %v619, %v648
  %v688 = vadd.f32 %v620, %v648
  %v689 = vadd.f32 %v621, %v648
  %v690 = vadd.f32 %v622, %v648
  %v691 = vadd.f32 %v623, %v648
  %v692 = vadd.f32 %v624, %v648
  %v693 = vadd.f32 %v625, %v648
  %v694 = vadd.f32 %v626, %v648
  %v695 = vadd.f32 %v627, %v648
  %v696 = vadd.f32 %v628, %v648
  %v697 = vadd.f32 %v629, %v648
  %v698 = vadd.f32 %v630, %v648
  %v699 = vadd.f32 %v631, %v648
  %v700 = vadd.f32 %v632, %v648
  %v701 = vadd.f32 %v633, %v648
  %v702 = vadd.f32 %v634, %v648
  %v703 = vadd.f32 %v635, %v648
  %v704 = vadd.f32 %v636, %v648
  %v705 = vadd.f32 %v637, %v648
  %v706 = vadd.f32 %v638, %v648
  %v707 = vadd.f32 %v639, %v648
  %v708 = vadd.f32 %v640, %v648
  %v709 = vadd.f32 %v641, %v648
  %v710 = vadd.f32 %v642, %v648
  %v711 = vadd.f32 %v643, %v648
  %v712 = vadd.f32 %v644, %v648
  %v713 = vadd.f32 %v645, %v648
  %v714 = vmax.f32 %v650, 0.0
  %v715 = vmax.f32 %v651, 0.0
  %v716 = vmax.f32 %v652, 0.0
  %v717 = vmax.f32 %v653, 0.0
  %v718 = vmax.f32 %v654, 0.0
  %v719 = vmax.f32 %v655, 0.0
  %v720 = vmax.f32 %v656, 0.0
  %v721 = vmax.f32 %v657, 0.0
  %v722 = vmax.f32 %v658, 0.0
  %v723 = vmax.f32 %v659, 0.0
  %v724 = vmax.f32 %v660, 0.0
  %v725 = vmax.f32 %v661, 0.0
  %v726 = vmax.f32 %v662, 0.0
  %v727 = vmax.f32 %v663, 0.0
  %v728 = vmax.f32 %v664, 0.0
  %v729 = vmax.f32 %v665, 0.0
  %v730 = vmax.f32 %v666, 0.0
  %v731 = vmax.f32 %v667, 0.0
  %v732 = vmax.f32 %v668, 0.0
  %v733 = vmax.f32 %v669, 0.0
  %v734 = vmax.f32 %v670, 0.0
  %v735 = vmax.f32 %v671, 0.0
  %v736 = vmax.f32 %v672, 0.0
  %v737 = vmax.f32 %v673, 0.0
  %v738 = vmax.f32 %v674, 0.0
  %v739 = vmax.f32 %v675, 0.0
  %v740 = vmax.f32 %v676, 0.0
  %v741 = vmax.f32 %v677, 0.0
  %v742 = vmax.f32 %v678, 0.0
  %v743 = vmax.f32 %v679, 0.0
  %v744 = vmax.f32 %v680, 0.0
  %v745 = vmax.f32 %v681, 0.0
  %v746 = vmax.f32 %v682, 0.0
  %v747 = vmax.f32 %v683, 0.0
  %v748 = vmax.f32 %v684, 0.0
  %v749 = vmax.f32 %v685, 0.0
  %v750 = vmax.f32 %v686, 0.0
  %v751 = vmax.f32 %v687, 0.0
  %v752 = vmax.f32 %v688, 0.0
  %v753 = vmax.f32 %v689, 0.0
  %v754 = vmax.f32 %v690, 0.0
  %v755 = vmax.f32 %v691, 0.0
  %v756 = vmax.f32 %v692, 0.0
  %v757 = vmax.f32 %v693, 0.0
  %v758 = vmax.f32 %v694, 0.0
  %v759 = vmax.f32 %v695, 0.0
  %v760 = vmax.f32 %v696, 0.0
  %v761 = vmax.f32 %v697, 0.0
  %v762 = vmax.f32 %v698, 0.0
  %v763 = vmax.f32 %v699, 0.0
  %v764 = vmax.f32 %v700, 0.0
  %v765 = vmax.f32 %v701, 0.0
  %v766 = vmax.f32 %v702, 0.0
  %v767 = vmax.f32 %v703, 0.0
  %v768 = vmax.f32 %v704, 0.0
  %v769 = vmax.f32 %v705, 0.0
  %v770 = vmax.f32 %v706, 0.0
  %v771 = vmax.f32 %v707, 0.0
  %v772 = vmax.f32 %v708, 0.0
  %v773 = vmax.f32 %v709, 0.0
  %v774 = vmax.f32 %v710, 0.0
  %v775 = vmax.f32 %v711, 0.0
  %v776 = vmax.f32 %v712, 0.0
  %v777 = vmax.f32 %v713, 0.0
  %v778 = vpack.c.bf16 %v715, %v714
  %v779 = vpack.c.bf16 %v717, %v716
  %v780 = vpack.c.bf16 %v719, %v718
  %v781 = vpack.c.bf16 %v721, %v720
  %v782 = vpack.c.bf16 %v723, %v722
  %v783 = vpack.c.bf16 %v725, %v724
  %v784 = vpack.c.bf16 %v727, %v726
  %v785 = vpack.c.bf16 %v729, %v728
  %v786 = vpack.c.bf16 %v731, %v730
  %v787 = vpack.c.bf16 %v733, %v732
  %v788 = vpack.c.bf16 %v735, %v734
  %v789 = vpack.c.bf16 %v737, %v736
  %v790 = vpack.c.bf16 %v739, %v738
  %v791 = vpack.c.bf16 %v741, %v740
  %v792 = vpack.c.bf16 %v743, %v742
  %v793 = vpack.c.bf16 %v745, %v744
  %v794 = vpack.c.bf16 %v747, %v746
  %v795 = vpack.c.bf16 %v749, %v748
  %v796 = vpack.c.bf16 %v751, %v750
  %v797 = vpack.c.bf16 %v753, %v752
  %v798 = vpack.c.bf16 %v755, %v754
  %v799 = vpack.c.bf16 %v757, %v756
  %v800 = vpack.c.bf16 %v759, %v758
  %v801 = vpack.c.bf16 %v761, %v760
  %v802 = vpack.c.bf16 %v763, %v762
  %v803 = vpack.c.bf16 %v765, %v764
  %v804 = vpack.c.bf16 %v767, %v766
  %v805 = vpack.c.bf16 %v769, %v768
  %v806 = vpack.c.bf16 %v771, %v770
  %v807 = vpack.c.bf16 %v773, %v772
  %v808 = vpack.c.bf16 %v775, %v774
  %v809 = vpack.c.bf16 %v777, %v776
  %v810 = vld [vmem:[%s2] sm:$0xf]
  %v811 = vld [vmem:[%s2 + $0x4] sm:$0xf]
  %v812 = vld [vmem:[%s2 + $0x8] sm:$0xf]
  %v813 = vld [vmem:[%s2 + $0xc] sm:$0xf]
  %v814 = vld [vmem:[%s2 + $0x10] sm:$0xf]
  %v815 = vld [vmem:[%s2 + $0x14] sm:$0xf]
  %v816 = vld [vmem:[%s2 + $0x18] sm:$0xf]
  %v817 = vld [vmem:[%s2 + $0x1c] sm:$0xf]
  %v818 = vld [vmem:[%s2 + $0x20] sm:$0xf]
  %v819 = vld [vmem:[%s2 + $0x24] sm:$0xf]
  %v820 = vld [vmem:[%s2 + $0x28] sm:$0xf]
  %v821 = vld [vmem:[%s2 + $0x2c] sm:$0xf]
  %v822 = vld [vmem:[%s2 + $0x30] sm:$0xf]
  %v823 = vld [vmem:[%s2 + $0x34] sm:$0xf]
  %v824 = vld [vmem:[%s2 + $0x38] sm:$0xf]
  %v825 = vld [vmem:[%s2 + $0x3c] sm:$0xf]
  %v842 = vunpack.c.l.b16 %v810
  %v843 = vunpack.c.l.b16 %v811
  %v844 = vunpack.c.l.b16 %v812
  %v845 = vunpack.c.l.b16 %v813
  %v846 = vunpack.c.l.b16 %v814
  %v847 = vunpack.c.l.b16 %v815
  %v848 = vunpack.c.l.b16 %v816
  %v849 = vunpack.c.l.b16 %v817
  %v850 = vunpack.c.l.b16 %v818
  %v851 = vunpack.c.l.b16 %v819
  %v852 = vunpack.c.l.b16 %v820
  %v853 = vunpack.c.l.b16 %v821
  %v854 = vunpack.c.l.b16 %v822
  %v855 = vunpack.c.l.b16 %v823
  %v856 = vunpack.c.l.b16 %v824
  %v857 = vunpack.c.l.b16 %v825
  %v858 = vpack.c.b16 %v843, %v842
  %v859 = vpack.c.b16 %v845, %v844
  %v860 = vpack.c.b16 %v847, %v846
  %v861 = vpack.c.b16 %v849, %v848
  %v862 = vpack.c.b16 %v851, %v850
  %v863 = vpack.c.b16 %v853, %v852
  %v864 = vpack.c.b16 %v855, %v854
  %v865 = vpack.c.b16 %v857, %v856
  %874 = vmatpush.bf16.msra.mxu0 %v865
  %875 = vmatpush.bf16.msra.mxu0 %v864
  %876 = vmatpush.bf16.msra.mxu0 %v863
  %877 = vmatpush.bf16.msra.mxu0 %v862
  %878 = vmatpush.bf16.msra.mxu0 %v861
  %879 = vmatpush.bf16.msra.mxu0 %v860
  %880 = vmatpush.bf16.msra.mxu0 %v859
  %881 = vmatpush.bf16.msra.mxu0 %v858
  %882 = vmatmul.bf16.gmra.mxu0 %v778
  %v883 = vpop.f32.mrf.mxu0
  %v884 = vadd.f32 0.0, %v883
  %v885 = vpop.f32.mrf.mxu0
  %v886 = vadd.f32 0.0, %v885
  %887 = vmatmul.bf16.gmra.mxu0 %v779
  %v888 = vpop.f32.mrf.mxu0
  %v889 = vadd.f32 0.0, %v888
  %v890 = vpop.f32.mrf.mxu0
  %v891 = vadd.f32 0.0, %v890
  %892 = vmatmul.bf16.gmra.mxu0 %v780
  %v893 = vpop.f32.mrf.mxu0
  %v894 = vadd.f32 0.0, %v893
  %v895 = vpop.f32.mrf.mxu0
  %v896 = vadd.f32 0.0, %v895
  %897 = vmatmul.bf16.gmra.mxu0 %v781
  %v898 = vpop.f32.mrf.mxu0
  %v899 = vadd.f32 0.0, %v898
  %v900 = vpop.f32.mrf.mxu0
  %v901 = vadd.f32 0.0, %v900
  %902 = vmatmul.bf16.gmra.mxu0 %v782
  %v903 = vpop.f32.mrf.mxu0
  %v904 = vadd.f32 0.0, %v903
  %v905 = vpop.f32.mrf.mxu0
  %v906 = vadd.f32 0.0, %v905
  %907 = vmatmul.bf16.gmra.mxu0 %v783
  %v908 = vpop.f32.mrf.mxu0
  %v909 = vadd.f32 0.0, %v908
  %v910 = vpop.f32.mrf.mxu0
  %v911 = vadd.f32 0.0, %v910
  %912 = vmatmul.bf16.gmra.mxu0 %v784
  %v913 = vpop.f32.mrf.mxu0
  %v914 = vadd.f32 0.0, %v913
  %v915 = vpop.f32.mrf.mxu0
  %v916 = vadd.f32 0.0, %v915
  %917 = vmatmul.bf16.gmra.mxu0 %v785
  %v918 = vpop.f32.mrf.mxu0
  %v919 = vadd.f32 0.0, %v918
  %v920 = vpop.f32.mrf.mxu0
  %v921 = vadd.f32 0.0, %v920
  %922 = vmatmul.bf16.gmra.mxu0 %v786
  %v923 = vpop.f32.mrf.mxu0
  %v924 = vadd.f32 0.0, %v923
  %v925 = vpop.f32.mrf.mxu0
  %v926 = vadd.f32 0.0, %v925
  %927 = vmatmul.bf16.gmra.mxu0 %v787
  %v928 = vpop.f32.mrf.mxu0
  %v929 = vadd.f32 0.0, %v928
  %v930 = vpop.f32.mrf.mxu0
  %v931 = vadd.f32 0.0, %v930
  %932 = vmatmul.bf16.gmra.mxu0 %v788
  %v933 = vpop.f32.mrf.mxu0
  %v934 = vadd.f32 0.0, %v933
  %v935 = vpop.f32.mrf.mxu0
  %v936 = vadd.f32 0.0, %v935
  %937 = vmatmul.bf16.gmra.mxu0 %v789
  %v938 = vpop.f32.mrf.mxu0
  %v939 = vadd.f32 0.0, %v938
  %v940 = vpop.f32.mrf.mxu0
  %v941 = vadd.f32 0.0, %v940
  %942 = vmatmul.bf16.gmra.mxu0 %v790
  %v943 = vpop.f32.mrf.mxu0
  %v944 = vadd.f32 0.0, %v943
  %v945 = vpop.f32.mrf.mxu0
  %v946 = vadd.f32 0.0, %v945
  %947 = vmatmul.bf16.gmra.mxu0 %v791
  %v948 = vpop.f32.mrf.mxu0
  %v949 = vadd.f32 0.0, %v948
  %v950 = vpop.f32.mrf.mxu0
  %v951 = vadd.f32 0.0, %v950
  %952 = vmatmul.bf16.gmra.mxu0 %v792
  %v953 = vpop.f32.mrf.mxu0
  %v954 = vadd.f32 0.0, %v953
  %v955 = vpop.f32.mrf.mxu0
  %v956 = vadd.f32 0.0, %v955
  %957 = vmatmul.bf16.gmra.mxu0 %v793
  %v958 = vpop.f32.mrf.mxu0
  %v959 = vadd.f32 0.0, %v958
  %v960 = vpop.f32.mrf.mxu0
  %v961 = vadd.f32 0.0, %v960
  %962 = vmatmul.bf16.gmra.mxu0 %v794
  %v963 = vpop.f32.mrf.mxu0
  %v964 = vadd.f32 0.0, %v963
  %v965 = vpop.f32.mrf.mxu0
  %v966 = vadd.f32 0.0, %v965
  %967 = vmatmul.bf16.gmra.mxu0 %v795
  %v968 = vpop.f32.mrf.mxu0
  %v969 = vadd.f32 0.0, %v968
  %v970 = vpop.f32.mrf.mxu0
  %v971 = vadd.f32 0.0, %v970
  %972 = vmatmul.bf16.gmra.mxu0 %v796
  %v973 = vpop.f32.mrf.mxu0
  %v974 = vadd.f32 0.0, %v973
  %v975 = vpop.f32.mrf.mxu0
  %v976 = vadd.f32 0.0, %v975
  %977 = vmatmul.bf16.gmra.mxu0 %v797
  %v978 = vpop.f32.mrf.mxu0
  %v979 = vadd.f32 0.0, %v978
  %v980 = vpop.f32.mrf.mxu0
  %v981 = vadd.f32 0.0, %v980
  %982 = vmatmul.bf16.gmra.mxu0 %v798
  %v983 = vpop.f32.mrf.mxu0
  %v984 = vadd.f32 0.0, %v983
  %v985 = vpop.f32.mrf.mxu0
  %v986 = vadd.f32 0.0, %v985
  %987 = vmatmul.bf16.gmra.mxu0 %v799
  %v988 = vpop.f32.mrf.mxu0
  %v989 = vadd.f32 0.0, %v988
  %v990 = vpop.f32.mrf.mxu0
  %v991 = vadd.f32 0.0, %v990
  %992 = vmatmul.bf16.gmra.mxu0 %v800
  %v993 = vpop.f32.mrf.mxu0
  %v994 = vadd.f32 0.0, %v993
  %v995 = vpop.f32.mrf.mxu0
  %v996 = vadd.f32 0.0, %v995
  %997 = vmatmul.bf16.gmra.mxu0 %v801
  %v998 = vpop.f32.mrf.mxu0
  %v999 = vadd.f32 0.0, %v998
  %v1000 = vpop.f32.mrf.mxu0
  %v1001 = vadd.f32 0.0, %v1000
  %1002 = vmatmul.bf16.gmra.mxu0 %v802
  %v1003 = vpop.f32.mrf.mxu0
  %v1004 = vadd.f32 0.0, %v1003
  %v1005 = vpop.f32.mrf.mxu0
  %v1006 = vadd.f32 0.0, %v1005
  %1007 = vmatmul.bf16.gmra.mxu0 %v803
  %v1008 = vpop.f32.mrf.mxu0
  %v1009 = vadd.f32 0.0, %v1008
  %v1010 = vpop.f32.mrf.mxu0
  %v1011 = vadd.f32 0.0, %v1010
  %1012 = vmatmul.bf16.gmra.mxu0 %v804
  %v1013 = vpop.f32.mrf.mxu0
  %v1014 = vadd.f32 0.0, %v1013
  %v1015 = vpop.f32.mrf.mxu0
  %v1016 = vadd.f32 0.0, %v1015
  %1017 = vmatmul.bf16.gmra.mxu0 %v805
  %v1018 = vpop.f32.mrf.mxu0
  %v1019 = vadd.f32 0.0, %v1018
  %v1020 = vpop.f32.mrf.mxu0
  %v1021 = vadd.f32 0.0, %v1020
  %1022 = vmatmul.bf16.gmra.mxu0 %v806
  %v1023 = vpop.f32.mrf.mxu0
  %v1024 = vadd.f32 0.0, %v1023
  %v1025 = vpop.f32.mrf.mxu0
  %v1026 = vadd.f32 0.0, %v1025
  %1027 = vmatmul.bf16.gmra.mxu0 %v807
  %v1028 = vpop.f32.mrf.mxu0
  %v1029 = vadd.f32 0.0, %v1028
  %v1030 = vpop.f32.mrf.mxu0
  %v1031 = vadd.f32 0.0, %v1030
  %1032 = vmatmul.bf16.gmra.mxu0 %v808
  %v1033 = vpop.f32.mrf.mxu0
  %v1034 = vadd.f32 0.0, %v1033
  %v1035 = vpop.f32.mrf.mxu0
  %v1036 = vadd.f32 0.0, %v1035
  %1037 = vmatmul.bf16.gmra.mxu0 %v809
  %v1038 = vpop.f32.mrf.mxu0
  %v1039 = vadd.f32 0.0, %v1038
  %v1040 = vpop.f32.mrf.mxu0
  %v1041 = vadd.f32 0.0, %v1040
  %1042 = vdwg.mxu0
  %v1043 = vld [vmem:[%s5] sm:$0x1]
  %v1045 = vperm.slane %v1043, 0
  %v1047 = vmul.f32 %v884, %v1045
  %v1048 = vmul.f32 %v886, %v1045
  %v1049 = vmul.f32 %v889, %v1045
  %v1050 = vmul.f32 %v891, %v1045
  %v1051 = vmul.f32 %v894, %v1045
  %v1052 = vmul.f32 %v896, %v1045
  %v1053 = vmul.f32 %v899, %v1045
  %v1054 = vmul.f32 %v901, %v1045
  %v1055 = vmul.f32 %v904, %v1045
  %v1056 = vmul.f32 %v906, %v1045
  %v1057 = vmul.f32 %v909, %v1045
  %v1058 = vmul.f32 %v911, %v1045
  %v1059 = vmul.f32 %v914, %v1045
  %v1060 = vmul.f32 %v916, %v1045
  %v1061 = vmul.f32 %v919, %v1045
  %v1062 = vmul.f32 %v921, %v1045
  %v1063 = vmul.f32 %v924, %v1045
  %v1064 = vmul.f32 %v926, %v1045
  %v1065 = vmul.f32 %v929, %v1045
  %v1066 = vmul.f32 %v931, %v1045
  %v1067 = vmul.f32 %v934, %v1045
  %v1068 = vmul.f32 %v936, %v1045
  %v1069 = vmul.f32 %v939, %v1045
  %v1070 = vmul.f32 %v941, %v1045
  %v1071 = vmul.f32 %v944, %v1045
  %v1072 = vmul.f32 %v946, %v1045
  %v1073 = vmul.f32 %v949, %v1045
  %v1074 = vmul.f32 %v951, %v1045
  %v1075 = vmul.f32 %v954, %v1045
  %v1076 = vmul.f32 %v956, %v1045
  %v1077 = vmul.f32 %v959, %v1045
  %v1078 = vmul.f32 %v961, %v1045
  %v1079 = vmul.f32 %v964, %v1045
  %v1080 = vmul.f32 %v966, %v1045
  %v1081 = vmul.f32 %v969, %v1045
  %v1082 = vmul.f32 %v971, %v1045
  %v1083 = vmul.f32 %v974, %v1045
  %v1084 = vmul.f32 %v976, %v1045
  %v1085 = vmul.f32 %v979, %v1045
  %v1086 = vmul.f32 %v981, %v1045
  %v1087 = vmul.f32 %v984, %v1045
  %v1088 = vmul.f32 %v986, %v1045
  %v1089 = vmul.f32 %v989, %v1045
  %v1090 = vmul.f32 %v991, %v1045
  %v1091 = vmul.f32 %v994, %v1045
  %v1092 = vmul.f32 %v996, %v1045
  %v1093 = vmul.f32 %v999, %v1045
  %v1094 = vmul.f32 %v1001, %v1045
  %v1095 = vmul.f32 %v1004, %v1045
  %v1096 = vmul.f32 %v1006, %v1045
  %v1097 = vmul.f32 %v1009, %v1045
  %v1098 = vmul.f32 %v1011, %v1045
  %v1099 = vmul.f32 %v1014, %v1045
  %v1100 = vmul.f32 %v1016, %v1045
  %v1101 = vmul.f32 %v1019, %v1045
  %v1102 = vmul.f32 %v1021, %v1045
  %v1103 = vmul.f32 %v1024, %v1045
  %v1104 = vmul.f32 %v1026, %v1045
  %v1105 = vmul.f32 %v1029, %v1045
  %v1106 = vmul.f32 %v1031, %v1045
  %v1107 = vmul.f32 %v1034, %v1045
  %v1108 = vmul.f32 %v1036, %v1045
  %v1109 = vmul.f32 %v1039, %v1045
  %v1110 = vmul.f32 %v1041, %v1045
  %v1111 = vld [vmem:[%s7] sm:$0x1]
  %v1113 = vperm.slane %v1111, 0
  %v1115 = vadd.f32 %v1047, %v1113
  %v1116 = vadd.f32 %v1048, %v1113
  %v1117 = vadd.f32 %v1049, %v1113
  %v1118 = vadd.f32 %v1050, %v1113
  %v1119 = vadd.f32 %v1051, %v1113
  %v1120 = vadd.f32 %v1052, %v1113
  %v1121 = vadd.f32 %v1053, %v1113
  %v1122 = vadd.f32 %v1054, %v1113
  %v1123 = vadd.f32 %v1055, %v1113
  %v1124 = vadd.f32 %v1056, %v1113
  %v1125 = vadd.f32 %v1057, %v1113
  %v1126 = vadd.f32 %v1058, %v1113
  %v1127 = vadd.f32 %v1059, %v1113
  %v1128 = vadd.f32 %v1060, %v1113
  %v1129 = vadd.f32 %v1061, %v1113
  %v1130 = vadd.f32 %v1062, %v1113
  %v1131 = vadd.f32 %v1063, %v1113
  %v1132 = vadd.f32 %v1064, %v1113
  %v1133 = vadd.f32 %v1065, %v1113
  %v1134 = vadd.f32 %v1066, %v1113
  %v1135 = vadd.f32 %v1067, %v1113
  %v1136 = vadd.f32 %v1068, %v1113
  %v1137 = vadd.f32 %v1069, %v1113
  %v1138 = vadd.f32 %v1070, %v1113
  %v1139 = vadd.f32 %v1071, %v1113
  %v1140 = vadd.f32 %v1072, %v1113
  %v1141 = vadd.f32 %v1073, %v1113
  %v1142 = vadd.f32 %v1074, %v1113
  %v1143 = vadd.f32 %v1075, %v1113
  %v1144 = vadd.f32 %v1076, %v1113
  %v1145 = vadd.f32 %v1077, %v1113
  %v1146 = vadd.f32 %v1078, %v1113
  %v1147 = vadd.f32 %v1079, %v1113
  %v1148 = vadd.f32 %v1080, %v1113
  %v1149 = vadd.f32 %v1081, %v1113
  %v1150 = vadd.f32 %v1082, %v1113
  %v1151 = vadd.f32 %v1083, %v1113
  %v1152 = vadd.f32 %v1084, %v1113
  %v1153 = vadd.f32 %v1085, %v1113
  %v1154 = vadd.f32 %v1086, %v1113
  %v1155 = vadd.f32 %v1087, %v1113
  %v1156 = vadd.f32 %v1088, %v1113
  %v1157 = vadd.f32 %v1089, %v1113
  %v1158 = vadd.f32 %v1090, %v1113
  %v1159 = vadd.f32 %v1091, %v1113
  %v1160 = vadd.f32 %v1092, %v1113
  %v1161 = vadd.f32 %v1093, %v1113
  %v1162 = vadd.f32 %v1094, %v1113
  %v1163 = vadd.f32 %v1095, %v1113
  %v1164 = vadd.f32 %v1096, %v1113
  %v1165 = vadd.f32 %v1097, %v1113
  %v1166 = vadd.f32 %v1098, %v1113
  %v1167 = vadd.f32 %v1099, %v1113
  %v1168 = vadd.f32 %v1100, %v1113
  %v1169 = vadd.f32 %v1101, %v1113
  %v1170 = vadd.f32 %v1102, %v1113
  %v1171 = vadd.f32 %v1103, %v1113
  %v1172 = vadd.f32 %v1104, %v1113
  %v1173 = vadd.f32 %v1105, %v1113
  %v1174 = vadd.f32 %v1106, %v1113
  %v1175 = vadd.f32 %v1107, %v1113
  %v1176 = vadd.f32 %v1108, %v1113
  %v1177 = vadd.f32 %v1109, %v1113
  %v1178 = vadd.f32 %v1110, %v1113
  %v1179 = vmax.f32 %v1115, 0.0
  %v1180 = vmax.f32 %v1116, 0.0
  %v1181 = vmax.f32 %v1117, 0.0
  %v1182 = vmax.f32 %v1118, 0.0
  %v1183 = vmax.f32 %v1119, 0.0
  %v1184 = vmax.f32 %v1120, 0.0
  %v1185 = vmax.f32 %v1121, 0.0
  %v1186 = vmax.f32 %v1122, 0.0
  %v1187 = vmax.f32 %v1123, 0.0
  %v1188 = vmax.f32 %v1124, 0.0
  %v1189 = vmax.f32 %v1125, 0.0
  %v1190 = vmax.f32 %v1126, 0.0
  %v1191 = vmax.f32 %v1127, 0.0
  %v1192 = vmax.f32 %v1128, 0.0
  %v1193 = vmax.f32 %v1129, 0.0
  %v1194 = vmax.f32 %v1130, 0.0
  %v1195 = vmax.f32 %v1131, 0.0
  %v1196 = vmax.f32 %v1132, 0.0
  %v1197 = vmax.f32 %v1133, 0.0
  %v1198 = vmax.f32 %v1134, 0.0
  %v1199 = vmax.f32 %v1135, 0.0
  %v1200 = vmax.f32 %v1136, 0.0
  %v1201 = vmax.f32 %v1137, 0.0
  %v1202 = vmax.f32 %v1138, 0.0
  %v1203 = vmax.f32 %v1139, 0.0
  %v1204 = vmax.f32 %v1140, 0.0
  %v1205 = vmax.f32 %v1141, 0.0
  %v1206 = vmax.f32 %v1142, 0.0
  %v1207 = vmax.f32 %v1143, 0.0
  %v1208 = vmax.f32 %v1144, 0.0
  %v1209 = vmax.f32 %v1145, 0.0
  %v1210 = vmax.f32 %v1146, 0.0
  %v1211 = vmax.f32 %v1147, 0.0
  %v1212 = vmax.f32 %v1148, 0.0
  %v1213 = vmax.f32 %v1149, 0.0
  %v1214 = vmax.f32 %v1150, 0.0
  %v1215 = vmax.f32 %v1151, 0.0
  %v1216 = vmax.f32 %v1152, 0.0
  %v1217 = vmax.f32 %v1153, 0.0
  %v1218 = vmax.f32 %v1154, 0.0
  %v1219 = vmax.f32 %v1155, 0.0
  %v1220 = vmax.f32 %v1156, 0.0
  %v1221 = vmax.f32 %v1157, 0.0
  %v1222 = vmax.f32 %v1158, 0.0
  %v1223 = vmax.f32 %v1159, 0.0
  %v1224 = vmax.f32 %v1160, 0.0
  %v1225 = vmax.f32 %v1161, 0.0
  %v1226 = vmax.f32 %v1162, 0.0
  %v1227 = vmax.f32 %v1163, 0.0
  %v1228 = vmax.f32 %v1164, 0.0
  %v1229 = vmax.f32 %v1165, 0.0
  %v1230 = vmax.f32 %v1166, 0.0
  %v1231 = vmax.f32 %v1167, 0.0
  %v1232 = vmax.f32 %v1168, 0.0
  %v1233 = vmax.f32 %v1169, 0.0
  %v1234 = vmax.f32 %v1170, 0.0
  %v1235 = vmax.f32 %v1171, 0.0
  %v1236 = vmax.f32 %v1172, 0.0
  %v1237 = vmax.f32 %v1173, 0.0
  %v1238 = vmax.f32 %v1174, 0.0
  %v1239 = vmax.f32 %v1175, 0.0
  %v1240 = vmax.f32 %v1176, 0.0
  %v1241 = vmax.f32 %v1177, 0.0
  %v1242 = vmax.f32 %v1178, 0.0
  %v1243 = vpack.c.bf16 %v1180, %v1179
  %v1244 = vpack.c.bf16 %v1182, %v1181
  %v1245 = vpack.c.bf16 %v1184, %v1183
  %v1246 = vpack.c.bf16 %v1186, %v1185
  %v1247 = vpack.c.bf16 %v1188, %v1187
  %v1248 = vpack.c.bf16 %v1190, %v1189
  %v1249 = vpack.c.bf16 %v1192, %v1191
  %v1250 = vpack.c.bf16 %v1194, %v1193
  %v1251 = vpack.c.bf16 %v1196, %v1195
  %v1252 = vpack.c.bf16 %v1198, %v1197
  %v1253 = vpack.c.bf16 %v1200, %v1199
  %v1254 = vpack.c.bf16 %v1202, %v1201
  %v1255 = vpack.c.bf16 %v1204, %v1203
  %v1256 = vpack.c.bf16 %v1206, %v1205
  %v1257 = vpack.c.bf16 %v1208, %v1207
  %v1258 = vpack.c.bf16 %v1210, %v1209
  %v1259 = vpack.c.bf16 %v1212, %v1211
  %v1260 = vpack.c.bf16 %v1214, %v1213
  %v1261 = vpack.c.bf16 %v1216, %v1215
  %v1262 = vpack.c.bf16 %v1218, %v1217
  %v1263 = vpack.c.bf16 %v1220, %v1219
  %v1264 = vpack.c.bf16 %v1222, %v1221
  %v1265 = vpack.c.bf16 %v1224, %v1223
  %v1266 = vpack.c.bf16 %v1226, %v1225
  %v1267 = vpack.c.bf16 %v1228, %v1227
  %v1268 = vpack.c.bf16 %v1230, %v1229
  %v1269 = vpack.c.bf16 %v1232, %v1231
  %v1270 = vpack.c.bf16 %v1234, %v1233
  %v1271 = vpack.c.bf16 %v1236, %v1235
  %v1272 = vpack.c.bf16 %v1238, %v1237
  %v1273 = vpack.c.bf16 %v1240, %v1239
  %v1274 = vpack.c.bf16 %v1242, %v1241
  %v1275 = vld [vmem:[%s3] sm:$0xf]
  %v1276 = vld [vmem:[%s3 + $0x4] sm:$0xf]
  %v1277 = vld [vmem:[%s3 + $0x8] sm:$0xf]
  %v1278 = vld [vmem:[%s3 + $0xc] sm:$0xf]
  %v1279 = vld [vmem:[%s3 + $0x10] sm:$0xf]
  %v1280 = vld [vmem:[%s3 + $0x14] sm:$0xf]
  %v1281 = vld [vmem:[%s3 + $0x18] sm:$0xf]
  %v1282 = vld [vmem:[%s3 + $0x1c] sm:$0xf]
  %v1283 = vld [vmem:[%s3 + $0x20] sm:$0xf]
  %v1284 = vld [vmem:[%s3 + $0x24] sm:$0xf]
  %v1285 = vld [vmem:[%s3 + $0x28] sm:$0xf]
  %v1286 = vld [vmem:[%s3 + $0x2c] sm:$0xf]
  %v1287 = vld [vmem:[%s3 + $0x30] sm:$0xf]
  %v1288 = vld [vmem:[%s3 + $0x34] sm:$0xf]
  %v1289 = vld [vmem:[%s3 + $0x38] sm:$0xf]
  %v1290 = vld [vmem:[%s3 + $0x3c] sm:$0xf]
  %v1307 = vunpack.c.l.b16 %v1275
  %v1308 = vunpack.c.l.b16 %v1276
  %v1309 = vunpack.c.l.b16 %v1277
  %v1310 = vunpack.c.l.b16 %v1278
  %v1311 = vunpack.c.l.b16 %v1279
  %v1312 = vunpack.c.l.b16 %v1280
  %v1313 = vunpack.c.l.b16 %v1281
  %v1314 = vunpack.c.l.b16 %v1282
  %v1315 = vunpack.c.l.b16 %v1283
  %v1316 = vunpack.c.l.b16 %v1284
  %v1317 = vunpack.c.l.b16 %v1285
  %v1318 = vunpack.c.l.b16 %v1286
  %v1319 = vunpack.c.l.b16 %v1287
  %v1320 = vunpack.c.l.b16 %v1288
  %v1321 = vunpack.c.l.b16 %v1289
  %v1322 = vunpack.c.l.b16 %v1290
  %v1323 = vpack.c.b16 %v1308, %v1307
  %v1324 = vpack.c.b16 %v1310, %v1309
  %v1325 = vpack.c.b16 %v1312, %v1311
  %v1326 = vpack.c.b16 %v1314, %v1313
  %v1327 = vpack.c.b16 %v1316, %v1315
  %v1328 = vpack.c.b16 %v1318, %v1317
  %v1329 = vpack.c.b16 %v1320, %v1319
  %v1330 = vpack.c.b16 %v1322, %v1321
  %1339 = vmatpush.bf16.msra.mxu0 %v1330
  %1340 = vmatpush.bf16.msra.mxu0 %v1329
  %1341 = vmatpush.bf16.msra.mxu0 %v1328
  %1342 = vmatpush.bf16.msra.mxu0 %v1327
  %1343 = vmatpush.bf16.msra.mxu0 %v1326
  %1344 = vmatpush.bf16.msra.mxu0 %v1325
  %1345 = vmatpush.bf16.msra.mxu0 %v1324
  %1346 = vmatpush.bf16.msra.mxu0 %v1323
  %1347 = vmatmul.bf16.gmra.mxu0 %v1243
  %v1348 = vpop.f32.mrf.mxu0
  %v1349 = vadd.f32 0.0, %v1348
  %v1350 = vpop.f32.mrf.mxu0
  %v1351 = vadd.f32 0.0, %v1350
  %1352 = vmatmul.bf16.gmra.mxu0 %v1244
  %v1353 = vpop.f32.mrf.mxu0
  %v1354 = vadd.f32 0.0, %v1353
  %v1355 = vpop.f32.mrf.mxu0
  %v1356 = vadd.f32 0.0, %v1355
  %1357 = vmatmul.bf16.gmra.mxu0 %v1245
  %v1358 = vpop.f32.mrf.mxu0
  %v1359 = vadd.f32 0.0, %v1358
  %v1360 = vpop.f32.mrf.mxu0
  %v1361 = vadd.f32 0.0, %v1360
  %1362 = vmatmul.bf16.gmra.mxu0 %v1246
  %v1363 = vpop.f32.mrf.mxu0
  %v1364 = vadd.f32 0.0, %v1363
  %v1365 = vpop.f32.mrf.mxu0
  %v1366 = vadd.f32 0.0, %v1365
  %1367 = vmatmul.bf16.gmra.mxu0 %v1247
  %v1368 = vpop.f32.mrf.mxu0
  %v1369 = vadd.f32 0.0, %v1368
  %v1370 = vpop.f32.mrf.mxu0
  %v1371 = vadd.f32 0.0, %v1370
  %1372 = vmatmul.bf16.gmra.mxu0 %v1248
  %v1373 = vpop.f32.mrf.mxu0
  %v1374 = vadd.f32 0.0, %v1373
  %v1375 = vpop.f32.mrf.mxu0
  %v1376 = vadd.f32 0.0, %v1375
  %1377 = vmatmul.bf16.gmra.mxu0 %v1249
  %v1378 = vpop.f32.mrf.mxu0
  %v1379 = vadd.f32 0.0, %v1378
  %v1380 = vpop.f32.mrf.mxu0
  %v1381 = vadd.f32 0.0, %v1380
  %1382 = vmatmul.bf16.gmra.mxu0 %v1250
  %v1383 = vpop.f32.mrf.mxu0
  %v1384 = vadd.f32 0.0, %v1383
  %v1385 = vpop.f32.mrf.mxu0
  %v1386 = vadd.f32 0.0, %v1385
  %1387 = vmatmul.bf16.gmra.mxu0 %v1251
  %v1388 = vpop.f32.mrf.mxu0
  %v1389 = vadd.f32 0.0, %v1388
  %v1390 = vpop.f32.mrf.mxu0
  %v1391 = vadd.f32 0.0, %v1390
  %1392 = vmatmul.bf16.gmra.mxu0 %v1252
  %v1393 = vpop.f32.mrf.mxu0
  %v1394 = vadd.f32 0.0, %v1393
  %v1395 = vpop.f32.mrf.mxu0
  %v1396 = vadd.f32 0.0, %v1395
  %1397 = vmatmul.bf16.gmra.mxu0 %v1253
  %v1398 = vpop.f32.mrf.mxu0
  %v1399 = vadd.f32 0.0, %v1398
  %v1400 = vpop.f32.mrf.mxu0
  %v1401 = vadd.f32 0.0, %v1400
  %1402 = vmatmul.bf16.gmra.mxu0 %v1254
  %v1403 = vpop.f32.mrf.mxu0
  %v1404 = vadd.f32 0.0, %v1403
  %v1405 = vpop.f32.mrf.mxu0
  %v1406 = vadd.f32 0.0, %v1405
  %1407 = vmatmul.bf16.gmra.mxu0 %v1255
  %v1408 = vpop.f32.mrf.mxu0
  %v1409 = vadd.f32 0.0, %v1408
  %v1410 = vpop.f32.mrf.mxu0
  %v1411 = vadd.f32 0.0, %v1410
  %1412 = vmatmul.bf16.gmra.mxu0 %v1256
  %v1413 = vpop.f32.mrf.mxu0
  %v1414 = vadd.f32 0.0, %v1413
  %v1415 = vpop.f32.mrf.mxu0
  %v1416 = vadd.f32 0.0, %v1415
  %1417 = vmatmul.bf16.gmra.mxu0 %v1257
  %v1418 = vpop.f32.mrf.mxu0
  %v1419 = vadd.f32 0.0, %v1418
  %v1420 = vpop.f32.mrf.mxu0
  %v1421 = vadd.f32 0.0, %v1420
  %1422 = vmatmul.bf16.gmra.mxu0 %v1258
  %v1423 = vpop.f32.mrf.mxu0
  %v1424 = vadd.f32 0.0, %v1423
  %v1425 = vpop.f32.mrf.mxu0
  %v1426 = vadd.f32 0.0, %v1425
  %1427 = vmatmul.bf16.gmra.mxu0 %v1259
  %v1428 = vpop.f32.mrf.mxu0
  %v1429 = vadd.f32 0.0, %v1428
  %v1430 = vpop.f32.mrf.mxu0
  %v1431 = vadd.f32 0.0, %v1430
  %1432 = vmatmul.bf16.gmra.mxu0 %v1260
  %v1433 = vpop.f32.mrf.mxu0
  %v1434 = vadd.f32 0.0, %v1433
  %v1435 = vpop.f32.mrf.mxu0
  %v1436 = vadd.f32 0.0, %v1435
  %1437 = vmatmul.bf16.gmra.mxu0 %v1261
  %v1438 = vpop.f32.mrf.mxu0
  %v1439 = vadd.f32 0.0, %v1438
  %v1440 = vpop.f32.mrf.mxu0
  %v1441 = vadd.f32 0.0, %v1440
  %1442 = vmatmul.bf16.gmra.mxu0 %v1262
  %v1443 = vpop.f32.mrf.mxu0
  %v1444 = vadd.f32 0.0, %v1443
  %v1445 = vpop.f32.mrf.mxu0
  %v1446 = vadd.f32 0.0, %v1445
  %1447 = vmatmul.bf16.gmra.mxu0 %v1263
  %v1448 = vpop.f32.mrf.mxu0
  %v1449 = vadd.f32 0.0, %v1448
  %v1450 = vpop.f32.mrf.mxu0
  %v1451 = vadd.f32 0.0, %v1450
  %1452 = vmatmul.bf16.gmra.mxu0 %v1264
  %v1453 = vpop.f32.mrf.mxu0
  %v1454 = vadd.f32 0.0, %v1453
  %v1455 = vpop.f32.mrf.mxu0
  %v1456 = vadd.f32 0.0, %v1455
  %1457 = vmatmul.bf16.gmra.mxu0 %v1265
  %v1458 = vpop.f32.mrf.mxu0
  %v1459 = vadd.f32 0.0, %v1458
  %v1460 = vpop.f32.mrf.mxu0
  %v1461 = vadd.f32 0.0, %v1460
  %1462 = vmatmul.bf16.gmra.mxu0 %v1266
  %v1463 = vpop.f32.mrf.mxu0
  %v1464 = vadd.f32 0.0, %v1463
  %v1465 = vpop.f32.mrf.mxu0
  %v1466 = vadd.f32 0.0, %v1465
  %1467 = vmatmul.bf16.gmra.mxu0 %v1267
  %v1468 = vpop.f32.mrf.mxu0
  %v1469 = vadd.f32 0.0, %v1468
  %v1470 = vpop.f32.mrf.mxu0
  %v1471 = vadd.f32 0.0, %v1470
  %1472 = vmatmul.bf16.gmra.mxu0 %v1268
  %v1473 = vpop.f32.mrf.mxu0
  %v1474 = vadd.f32 0.0, %v1473
  %v1475 = vpop.f32.mrf.mxu0
  %v1476 = vadd.f32 0.0, %v1475
  %1477 = vmatmul.bf16.gmra.mxu0 %v1269
  %v1478 = vpop.f32.mrf.mxu0
  %v1479 = vadd.f32 0.0, %v1478
  %v1480 = vpop.f32.mrf.mxu0
  %v1481 = vadd.f32 0.0, %v1480
  %1482 = vmatmul.bf16.gmra.mxu0 %v1270
  %v1483 = vpop.f32.mrf.mxu0
  %v1484 = vadd.f32 0.0, %v1483
  %v1485 = vpop.f32.mrf.mxu0
  %v1486 = vadd.f32 0.0, %v1485
  %1487 = vmatmul.bf16.gmra.mxu0 %v1271
  %v1488 = vpop.f32.mrf.mxu0
  %v1489 = vadd.f32 0.0, %v1488
  %v1490 = vpop.f32.mrf.mxu0
  %v1491 = vadd.f32 0.0, %v1490
  %1492 = vmatmul.bf16.gmra.mxu0 %v1272
  %v1493 = vpop.f32.mrf.mxu0
  %v1494 = vadd.f32 0.0, %v1493
  %v1495 = vpop.f32.mrf.mxu0
  %v1496 = vadd.f32 0.0, %v1495
  %1497 = vmatmul.bf16.gmra.mxu0 %v1273
  %v1498 = vpop.f32.mrf.mxu0
  %v1499 = vadd.f32 0.0, %v1498
  %v1500 = vpop.f32.mrf.mxu0
  %v1501 = vadd.f32 0.0, %v1500
  %1502 = vmatmul.bf16.gmra.mxu0 %v1274
  %v1503 = vpop.f32.mrf.mxu0
  %v1504 = vadd.f32 0.0, %v1503
  %v1505 = vpop.f32.mrf.mxu0
  %v1506 = vadd.f32 0.0, %v1505
  %1507 = vdwg.mxu0
  %v1508 = vadd.f32 %v1349, %v1351
  %v1509 = vadd.f32 %v1508, %v1354
  %v1510 = vadd.f32 %v1509, %v1356
  %v1511 = vadd.f32 %v1510, %v1359
  %v1512 = vadd.f32 %v1511, %v1361
  %v1513 = vadd.f32 %v1512, %v1364
  %v1514 = vadd.f32 %v1513, %v1366
  %v1515 = vadd.f32 %v1514, %v1369
  %v1516 = vadd.f32 %v1515, %v1371
  %v1517 = vadd.f32 %v1516, %v1374
  %v1518 = vadd.f32 %v1517, %v1376
  %v1519 = vadd.f32 %v1518, %v1379
  %v1520 = vadd.f32 %v1519, %v1381
  %v1521 = vadd.f32 %v1520, %v1384
  %v1522 = vadd.f32 %v1521, %v1386
  %v1523 = vadd.f32 %v1522, %v1389
  %v1524 = vadd.f32 %v1523, %v1391
  %v1525 = vadd.f32 %v1524, %v1394
  %v1526 = vadd.f32 %v1525, %v1396
  %v1527 = vadd.f32 %v1526, %v1399
  %v1528 = vadd.f32 %v1527, %v1401
  %v1529 = vadd.f32 %v1528, %v1404
  %v1530 = vadd.f32 %v1529, %v1406
  %v1531 = vadd.f32 %v1530, %v1409
  %v1532 = vadd.f32 %v1531, %v1411
  %v1533 = vadd.f32 %v1532, %v1414
  %v1534 = vadd.f32 %v1533, %v1416
  %v1535 = vadd.f32 %v1534, %v1419
  %v1536 = vadd.f32 %v1535, %v1421
  %v1537 = vadd.f32 %v1536, %v1424
  %v1538 = vadd.f32 %v1537, %v1426
  %v1539 = vadd.f32 %v1538, %v1429
  %v1540 = vadd.f32 %v1539, %v1431
  %v1541 = vadd.f32 %v1540, %v1434
  %v1542 = vadd.f32 %v1541, %v1436
  %v1543 = vadd.f32 %v1542, %v1439
  %v1544 = vadd.f32 %v1543, %v1441
  %v1545 = vadd.f32 %v1544, %v1444
  %v1546 = vadd.f32 %v1545, %v1446
  %v1547 = vadd.f32 %v1546, %v1449
  %v1548 = vadd.f32 %v1547, %v1451
  %v1549 = vadd.f32 %v1548, %v1454
  %v1550 = vadd.f32 %v1549, %v1456
  %v1551 = vadd.f32 %v1550, %v1459
  %v1552 = vadd.f32 %v1551, %v1461
  %v1553 = vadd.f32 %v1552, %v1464
  %v1554 = vadd.f32 %v1553, %v1466
  %v1555 = vadd.f32 %v1554, %v1469
  %v1556 = vadd.f32 %v1555, %v1471
  %v1557 = vadd.f32 %v1556, %v1474
  %v1558 = vadd.f32 %v1557, %v1476
  %v1559 = vadd.f32 %v1558, %v1479
  %v1560 = vadd.f32 %v1559, %v1481
  %v1561 = vadd.f32 %v1560, %v1484
  %v1562 = vadd.f32 %v1561, %v1486
  %v1563 = vadd.f32 %v1562, %v1489
  %v1564 = vadd.f32 %v1563, %v1491
  %v1565 = vadd.f32 %v1564, %v1494
  %v1566 = vadd.f32 %v1565, %v1496
  %v1567 = vadd.f32 %v1566, %v1499
  %v1568 = vadd.f32 %v1567, %v1501
  %v1569 = vadd.f32 %v1568, %v1504
  %v1570 = vadd.f32 %v1569, %v1506
  %v1571 = vrot.slane %v1570, 4
  %v1572 = vadd.f32 %v1570, %v1571
  %v1573 = vrot.slane %v1572, 2
  %v1574 = vadd.f32 %v1572, %v1573
  %v1575 = vrot.slane %v1574, 1
  %v1576 = vadd.f32 %v1574, %v1575
  %v1577 = vmul.f32 %v1349, %v1349
  %v1578 = vmul.f32 %v1351, %v1351
  %v1579 = vmul.f32 %v1354, %v1354
  %v1580 = vmul.f32 %v1356, %v1356
  %v1581 = vmul.f32 %v1359, %v1359
  %v1582 = vmul.f32 %v1361, %v1361
  %v1583 = vmul.f32 %v1364, %v1364
  %v1584 = vmul.f32 %v1366, %v1366
  %v1585 = vmul.f32 %v1369, %v1369
  %v1586 = vmul.f32 %v1371, %v1371
  %v1587 = vmul.f32 %v1374, %v1374
  %v1588 = vmul.f32 %v1376, %v1376
  %v1589 = vmul.f32 %v1379, %v1379
  %v1590 = vmul.f32 %v1381, %v1381
  %v1591 = vmul.f32 %v1384, %v1384
  %v1592 = vmul.f32 %v1386, %v1386
  %v1593 = vmul.f32 %v1389, %v1389
  %v1594 = vmul.f32 %v1391, %v1391
  %v1595 = vmul.f32 %v1394, %v1394
  %v1596 = vmul.f32 %v1396, %v1396
  %v1597 = vmul.f32 %v1399, %v1399
  %v1598 = vmul.f32 %v1401, %v1401
  %v1599 = vmul.f32 %v1404, %v1404
  %v1600 = vmul.f32 %v1406, %v1406
  %v1601 = vmul.f32 %v1409, %v1409
  %v1602 = vmul.f32 %v1411, %v1411
  %v1603 = vmul.f32 %v1414, %v1414
  %v1604 = vmul.f32 %v1416, %v1416
  %v1605 = vmul.f32 %v1419, %v1419
  %v1606 = vmul.f32 %v1421, %v1421
  %v1607 = vmul.f32 %v1424, %v1424
  %v1608 = vmul.f32 %v1426, %v1426
  %v1609 = vmul.f32 %v1429, %v1429
  %v1610 = vmul.f32 %v1431, %v1431
  %v1611 = vmul.f32 %v1434, %v1434
  %v1612 = vmul.f32 %v1436, %v1436
  %v1613 = vmul.f32 %v1439, %v1439
  %v1614 = vmul.f32 %v1441, %v1441
  %v1615 = vmul.f32 %v1444, %v1444
  %v1616 = vmul.f32 %v1446, %v1446
  %v1617 = vmul.f32 %v1449, %v1449
  %v1618 = vmul.f32 %v1451, %v1451
  %v1619 = vmul.f32 %v1454, %v1454
  %v1620 = vmul.f32 %v1456, %v1456
  %v1621 = vmul.f32 %v1459, %v1459
  %v1622 = vmul.f32 %v1461, %v1461
  %v1623 = vmul.f32 %v1464, %v1464
  %v1624 = vmul.f32 %v1466, %v1466
  %v1625 = vmul.f32 %v1469, %v1469
  %v1626 = vmul.f32 %v1471, %v1471
  %v1627 = vmul.f32 %v1474, %v1474
  %v1628 = vmul.f32 %v1476, %v1476
  %v1629 = vmul.f32 %v1479, %v1479
  %v1630 = vmul.f32 %v1481, %v1481
  %v1631 = vmul.f32 %v1484, %v1484
  %v1632 = vmul.f32 %v1486, %v1486
  %v1633 = vmul.f32 %v1489, %v1489
  %v1634 = vmul.f32 %v1491, %v1491
  %v1635 = vmul.f32 %v1494, %v1494
  %v1636 = vmul.f32 %v1496, %v1496
  %v1637 = vmul.f32 %v1499, %v1499
  %v1638 = vmul.f32 %v1501, %v1501
  %v1639 = vmul.f32 %v1504, %v1504
  %v1640 = vmul.f32 %v1506, %v1506
  %v1641 = vadd.f32 %v1577, %v1578
  %v1642 = vadd.f32 %v1641, %v1579
  %v1643 = vadd.f32 %v1642, %v1580
  %v1644 = vadd.f32 %v1643, %v1581
  %v1645 = vadd.f32 %v1644, %v1582
  %v1646 = vadd.f32 %v1645, %v1583
  %v1647 = vadd.f32 %v1646, %v1584
  %v1648 = vadd.f32 %v1647, %v1585
  %v1649 = vadd.f32 %v1648, %v1586
  %v1650 = vadd.f32 %v1649, %v1587
  %v1651 = vadd.f32 %v1650, %v1588
  %v1652 = vadd.f32 %v1651, %v1589
  %v1653 = vadd.f32 %v1652, %v1590
  %v1654 = vadd.f32 %v1653, %v1591
  %v1655 = vadd.f32 %v1654, %v1592
  %v1656 = vadd.f32 %v1655, %v1593
  %v1657 = vadd.f32 %v1656, %v1594
  %v1658 = vadd.f32 %v1657, %v1595
  %v1659 = vadd.f32 %v1658, %v1596
  %v1660 = vadd.f32 %v1659, %v1597
  %v1661 = vadd.f32 %v1660, %v1598
  %v1662 = vadd.f32 %v1661, %v1599
  %v1663 = vadd.f32 %v1662, %v1600
  %v1664 = vadd.f32 %v1663, %v1601
  %v1665 = vadd.f32 %v1664, %v1602
  %v1666 = vadd.f32 %v1665, %v1603
  %v1667 = vadd.f32 %v1666, %v1604
  %v1668 = vadd.f32 %v1667, %v1605
  %v1669 = vadd.f32 %v1668, %v1606
  %v1670 = vadd.f32 %v1669, %v1607
  %v1671 = vadd.f32 %v1670, %v1608
  %v1672 = vadd.f32 %v1671, %v1609
  %v1673 = vadd.f32 %v1672, %v1610
  %v1674 = vadd.f32 %v1673, %v1611
  %v1675 = vadd.f32 %v1674, %v1612
  %v1676 = vadd.f32 %v1675, %v1613
  %v1677 = vadd.f32 %v1676, %v1614
  %v1678 = vadd.f32 %v1677, %v1615
  %v1679 = vadd.f32 %v1678, %v1616
  %v1680 = vadd.f32 %v1679, %v1617
  %v1681 = vadd.f32 %v1680, %v1618
  %v1682 = vadd.f32 %v1681, %v1619
  %v1683 = vadd.f32 %v1682, %v1620
  %v1684 = vadd.f32 %v1683, %v1621
  %v1685 = vadd.f32 %v1684, %v1622
  %v1686 = vadd.f32 %v1685, %v1623
  %v1687 = vadd.f32 %v1686, %v1624
  %v1688 = vadd.f32 %v1687, %v1625
  %v1689 = vadd.f32 %v1688, %v1626
  %v1690 = vadd.f32 %v1689, %v1627
  %v1691 = vadd.f32 %v1690, %v1628
  %v1692 = vadd.f32 %v1691, %v1629
  %v1693 = vadd.f32 %v1692, %v1630
  %v1694 = vadd.f32 %v1693, %v1631
  %v1695 = vadd.f32 %v1694, %v1632
  %v1696 = vadd.f32 %v1695, %v1633
  %v1697 = vadd.f32 %v1696, %v1634
  %v1698 = vadd.f32 %v1697, %v1635
  %v1699 = vadd.f32 %v1698, %v1636
  %v1700 = vadd.f32 %v1699, %v1637
  %v1701 = vadd.f32 %v1700, %v1638
  %v1702 = vadd.f32 %v1701, %v1639
  %v1703 = vadd.f32 %v1702, %v1640
  %v1704 = vrot.slane %v1703, 4
  %v1705 = vadd.f32 %v1703, %v1704
  %v1706 = vrot.slane %v1705, 2
  %v1707 = vadd.f32 %v1705, %v1706
  %v1708 = vrot.slane %v1707, 1
  %v1709 = vadd.f32 %v1707, %v1708
  %p1710 = scmp.eq.s32.totalorder 0, 0
  // Predicated region
  $region34: #{set_abstraction_msg2.11} parent=0 // pred_check
    %p1711 = pneg %p1710
  $region35: #{set_abstraction_msg2.11} parent=0 // pred_check_branch
    %1713 = sbr.rel (%p1711) target = $region37
  $region36: #{set_abstraction_msg2.11} parent=0 // pred_region
    %v1714 = vlaneseq
    %vm1715 = vcmp.ge.s32.totalorder %v1714, 0
    %vm1716 = vcmp.lt.s32.totalorder %v1714, 256
    %vm1717 = vmand %vm1715, %vm1716
    %1718 = vst.msk [vmem:[%s8] sm:$0x3] %vm1717, 0.0
  $region37: #{set_abstraction_msg2.11} parent=0 // pred_fallthru
    _
  %v1719 = vld [vmem:[%s8] sm:$0x1]
  %v1720 = vadd.f32 %v1719, %v1576
  %v1721 = vlaneseq
  %vm1722 = vcmp.ge.s32.totalorder %v1721, 0
  %vm1723 = vcmp.lt.s32.totalorder %v1721, 128
  %vm1724 = vmand %vm1722, %vm1723
  %1725 = vst.msk [vmem:[%s8] sm:$0x1] %vm1724, %v1720
  %v1726 = vld [vmem:[%s8 + $0x1] sm:$0x1]
  %v1727 = vadd.f32 %v1726, %v1709
  %1728 = vst.msk [vmem:[%s8 + $0x1] sm:$0x1] %vm1724, %v1727
  %v1729 = vmax.f32 %v1349, %v1351
  %v1730 = vrot.slane %v1729, 4
  %v1731 = vmax.f32 %v1729, %v1730
  %v1732 = vrot.slane %v1731, 2
  %v1733 = vmax.f32 %v1731, %v1732
  %v1734 = vrot.slane %v1733, 1
  %v1735 = vmax.f32 %v1733, %v1734
  %v1736 = vmax.f32 %v1354, %v1356
  %v1737 = vrot.slane %v1736, 4
  %v1738 = vmax.f32 %v1736, %v1737
  %v1739 = vrot.slane %v1738, 2
  %v1740 = vmax.f32 %v1738, %v1739
  %v1741 = vrot.slane %v1740, 1
  %v1742 = vmax.f32 %v1740, %v1741
  %v1743 = vmax.f32 %v1359, %v1361
  %v1744 = vrot.slane %v1743, 4
  %v1745 = vmax.f32 %v1743, %v1744
  %v1746 = vrot.slane %v1745, 2
  %v1747 = vmax.f32 %v1745, %v1746
  %v1748 = vrot.slane %v1747, 1
  %v1749 = vmax.f32 %v1747, %v1748
  %v1750 = vmax.f32 %v1364, %v1366
  %v1751 = vrot.slane %v1750, 4
  %v1752 = vmax.f32 %v1750, %v1751
  %v1753 = vrot.slane %v1752, 2
  %v1754 = vmax.f32 %v1752, %v1753
  %v1755 = vrot.slane %v1754, 1
  %v1756 = vmax.f32 %v1754, %v1755
  %v1757 = vmax.f32 %v1369, %v1371
  %v1758 = vrot.slane %v1757, 4
  %v1759 = vmax.f32 %v1757, %v1758
  %v1760 = vrot.slane %v1759, 2
  %v1761 = vmax.f32 %v1759, %v1760
  %v1762 = vrot.slane %v1761, 1
  %v1763 = vmax.f32 %v1761, %v1762
  %v1764 = vmax.f32 %v1374, %v1376
  %v1765 = vrot.slane %v1764, 4
  %v1766 = vmax.f32 %v1764, %v1765
  %v1767 = vrot.slane %v1766, 2
  %v1768 = vmax.f32 %v1766, %v1767
  %v1769 = vrot.slane %v1768, 1
  %v1770 = vmax.f32 %v1768, %v1769
  %v1771 = vmax.f32 %v1379, %v1381
  %v1772 = vrot.slane %v1771, 4
  %v1773 = vmax.f32 %v1771, %v1772
  %v1774 = vrot.slane %v1773, 2
  %v1775 = vmax.f32 %v1773, %v1774
  %v1776 = vrot.slane %v1775, 1
  %v1777 = vmax.f32 %v1775, %v1776
  %v1778 = vmax.f32 %v1384, %v1386
  %v1779 = vrot.slane %v1778, 4
  %v1780 = vmax.f32 %v1778, %v1779
  %v1781 = vrot.slane %v1780, 2
  %v1782 = vmax.f32 %v1780, %v1781
  %v1783 = vrot.slane %v1782, 1
  %v1784 = vmax.f32 %v1782, %v1783
  %v1785 = vmax.f32 %v1389, %v1391
  %v1786 = vrot.slane %v1785, 4
  %v1787 = vmax.f32 %v1785, %v1786
  %v1788 = vrot.slane %v1787, 2
  %v1789 = vmax.f32 %v1787, %v1788
  %v1790 = vrot.slane %v1789, 1
  %v1791 = vmax.f32 %v1789, %v1790
  %v1792 = vmax.f32 %v1394, %v1396
  %v1793 = vrot.slane %v1792, 4
  %v1794 = vmax.f32 %v1792, %v1793
  %v1795 = vrot.slane %v1794, 2
  %v1796 = vmax.f32 %v1794, %v1795
  %v1797 = vrot.slane %v1796, 1
  %v1798 = vmax.f32 %v1796, %v1797
  %v1799 = vmax.f32 %v1399, %v1401
  %v1800 = vrot.slane %v1799, 4
  %v1801 = vmax.f32 %v1799, %v1800
  %v1802 = vrot.slane %v1801, 2
  %v1803 = vmax.f32 %v1801, %v1802
  %v1804 = vrot.slane %v1803, 1
  %v1805 = vmax.f32 %v1803, %v1804
  %v1806 = vmax.f32 %v1404, %v1406
  %v1807 = vrot.slane %v1806, 4
  %v1808 = vmax.f32 %v1806, %v1807
  %v1809 = vrot.slane %v1808, 2
  %v1810 = vmax.f32 %v1808, %v1809
  %v1811 = vrot.slane %v1810, 1
  %v1812 = vmax.f32 %v1810, %v1811
  %v1813 = vmax.f32 %v1409, %v1411
  %v1814 = vrot.slane %v1813, 4
  %v1815 = vmax.f32 %v1813, %v1814
  %v1816 = vrot.slane %v1815, 2
  %v1817 = vmax.f32 %v1815, %v1816
  %v1818 = vrot.slane %v1817, 1
  %v1819 = vmax.f32 %v1817, %v1818
  %v1820 = vmax.f32 %v1414, %v1416
  %v1821 = vrot.slane %v1820, 4
  %v1822 = vmax.f32 %v1820, %v1821
  %v1823 = vrot.slane %v1822, 2
  %v1824 = vmax.f32 %v1822, %v1823
  %v1825 = vrot.slane %v1824, 1
  %v1826 = vmax.f32 %v1824, %v1825
  %v1827 = vmax.f32 %v1419, %v1421
  %v1828 = vrot.slane %v1827, 4
  %v1829 = vmax.f32 %v1827, %v1828
  %v1830 = vrot.slane %v1829, 2
  %v1831 = vmax.f32 %v1829, %v1830
  %v1832 = vrot.slane %v1831, 1
  %v1833 = vmax.f32 %v1831, %v1832
  %v1834 = vmax.f32 %v1424, %v1426
  %v1835 = vrot.slane %v1834, 4
  %v1836 = vmax.f32 %v1834, %v1835
  %v1837 = vrot.slane %v1836, 2
  %v1838 = vmax.f32 %v1836, %v1837
  %v1839 = vrot.slane %v1838, 1
  %v1840 = vmax.f32 %v1838, %v1839
  %v1841 = vmax.f32 %v1429, %v1431
  %v1842 = vrot.slane %v1841, 4
  %v1843 = vmax.f32 %v1841, %v1842
  %v1844 = vrot.slane %v1843, 2
  %v1845 = vmax.f32 %v1843, %v1844
  %v1846 = vrot.slane %v1845, 1
  %v1847 = vmax.f32 %v1845, %v1846
  %v1848 = vmax.f32 %v1434, %v1436
  %v1849 = vrot.slane %v1848, 4
  %v1850 = vmax.f32 %v1848, %v1849
  %v1851 = vrot.slane %v1850, 2
  %v1852 = vmax.f32 %v1850, %v1851
  %v1853 = vrot.slane %v1852, 1
  %v1854 = vmax.f32 %v1852, %v1853
  %v1855 = vmax.f32 %v1439, %v1441
  %v1856 = vrot.slane %v1855, 4
  %v1857 = vmax.f32 %v1855, %v1856
  %v1858 = vrot.slane %v1857, 2
  %v1859 = vmax.f32 %v1857, %v1858
  %v1860 = vrot.slane %v1859, 1
  %v1861 = vmax.f32 %v1859, %v1860
  %v1862 = vmax.f32 %v1444, %v1446
  %v1863 = vrot.slane %v1862, 4
  %v1864 = vmax.f32 %v1862, %v1863
  %v1865 = vrot.slane %v1864, 2
  %v1866 = vmax.f32 %v1864, %v1865
  %v1867 = vrot.slane %v1866, 1
  %v1868 = vmax.f32 %v1866, %v1867
  %v1869 = vmax.f32 %v1449, %v1451
  %v1870 = vrot.slane %v1869, 4
  %v1871 = vmax.f32 %v1869, %v1870
  %v1872 = vrot.slane %v1871, 2
  %v1873 = vmax.f32 %v1871, %v1872
  %v1874 = vrot.slane %v1873, 1
  %v1875 = vmax.f32 %v1873, %v1874
  %v1876 = vmax.f32 %v1454, %v1456
  %v1877 = vrot.slane %v1876, 4
  %v1878 = vmax.f32 %v1876, %v1877
  %v1879 = vrot.slane %v1878, 2
  %v1880 = vmax.f32 %v1878, %v1879
  %v1881 = vrot.slane %v1880, 1
  %v1882 = vmax.f32 %v1880, %v1881
  %v1883 = vmax.f32 %v1459, %v1461
  %v1884 = vrot.slane %v1883, 4
  %v1885 = vmax.f32 %v1883, %v1884
  %v1886 = vrot.slane %v1885, 2
  %v1887 = vmax.f32 %v1885, %v1886
  %v1888 = vrot.slane %v1887, 1
  %v1889 = vmax.f32 %v1887, %v1888
  %v1890 = vmax.f32 %v1464, %v1466
  %v1891 = vrot.slane %v1890, 4
  %v1892 = vmax.f32 %v1890, %v1891
  %v1893 = vrot.slane %v1892, 2
  %v1894 = vmax.f32 %v1892, %v1893
  %v1895 = vrot.slane %v1894, 1
  %v1896 = vmax.f32 %v1894, %v1895
  %v1897 = vmax.f32 %v1469, %v1471
  %v1898 = vrot.slane %v1897, 4
  %v1899 = vmax.f32 %v1897, %v1898
  %v1900 = vrot.slane %v1899, 2
  %v1901 = vmax.f32 %v1899, %v1900
  %v1902 = vrot.slane %v1901, 1
  %v1903 = vmax.f32 %v1901, %v1902
  %v1904 = vmax.f32 %v1474, %v1476
  %v1905 = vrot.slane %v1904, 4
  %v1906 = vmax.f32 %v1904, %v1905
  %v1907 = vrot.slane %v1906, 2
  %v1908 = vmax.f32 %v1906, %v1907
  %v1909 = vrot.slane %v1908, 1
  %v1910 = vmax.f32 %v1908, %v1909
  %v1911 = vmax.f32 %v1479, %v1481
  %v1912 = vrot.slane %v1911, 4
  %v1913 = vmax.f32 %v1911, %v1912
  %v1914 = vrot.slane %v1913, 2
  %v1915 = vmax.f32 %v1913, %v1914
  %v1916 = vrot.slane %v1915, 1
  %v1917 = vmax.f32 %v1915, %v1916
  %v1918 = vmax.f32 %v1484, %v1486
  %v1919 = vrot.slane %v1918, 4
  %v1920 = vmax.f32 %v1918, %v1919
  %v1921 = vrot.slane %v1920, 2
  %v1922 = vmax.f32 %v1920, %v1921
  %v1923 = vrot.slane %v1922, 1
  %v1924 = vmax.f32 %v1922, %v1923
  %v1925 = vmax.f32 %v1489, %v1491
  %v1926 = vrot.slane %v1925, 4
  %v1927 = vmax.f32 %v1925, %v1926
  %v1928 = vrot.slane %v1927, 2
  %v1929 = vmax.f32 %v1927, %v1928
  %v1930 = vrot.slane %v1929, 1
  %v1931 = vmax.f32 %v1929, %v1930
  %v1932 = vmax.f32 %v1494, %v1496
  %v1933 = vrot.slane %v1932, 4
  %v1934 = vmax.f32 %v1932, %v1933
  %v1935 = vrot.slane %v1934, 2
  %v1936 = vmax.f32 %v1934, %v1935
  %v1937 = vrot.slane %v1936, 1
  %v1938 = vmax.f32 %v1936, %v1937
  %v1939 = vmax.f32 %v1499, %v1501
  %v1940 = vrot.slane %v1939, 4
  %v1941 = vmax.f32 %v1939, %v1940
  %v1942 = vrot.slane %v1941, 2
  %v1943 = vmax.f32 %v1941, %v1942
  %v1944 = vrot.slane %v1943, 1
  %v1945 = vmax.f32 %v1943, %v1944
  %v1946 = vmax.f32 %v1504, %v1506
  %v1947 = vrot.slane %v1946, 4
  %v1948 = vmax.f32 %v1946, %v1947
  %v1949 = vrot.slane %v1948, 2
  %v1950 = vmax.f32 %v1948, %v1949
  %v1951 = vrot.slane %v1950, 1
  %v1952 = vmax.f32 %v1950, %v1951
  %vm1985 = vcmask 1041409
  %v1986 = vsel %vm1985, %v1742, %v1735
  %vm1987 = vcmask 1042434
  %v1988 = vsel %vm1987, %v1749, %v1986
  %vm1989 = vcmask 1043459
  %v1990 = vsel %vm1989, %v1756, %v1988
  %vm1991 = vcmask 1044484
  %v1992 = vsel %vm1991, %v1763, %v1990
  %vm1993 = vcmask 1045509
  %v1994 = vsel %vm1993, %v1770, %v1992
  %vm1995 = vcmask 1046534
  %v1996 = vsel %vm1995, %v1777, %v1994
  %vm1997 = vcmask 1047559
  %v1998 = vsel %vm1997, %v1784, %v1996
  %v1999 = vsel %vm1985, %v1798, %v1791
  %v2000 = vsel %vm1987, %v1805, %v1999
  %v2001 = vsel %vm1989, %v1812, %v2000
  %v2002 = vsel %vm1991, %v1819, %v2001
  %v2003 = vsel %vm1993, %v1826, %v2002
  %v2004 = vsel %vm1995, %v1833, %v2003
  %v2005 = vsel %vm1997, %v1840, %v2004
  %v2006 = vsel %vm1985, %v1854, %v1847
  %v2007 = vsel %vm1987, %v1861, %v2006
  %v2008 = vsel %vm1989, %v1868, %v2007
  %v2009 = vsel %vm1991, %v1875, %v2008
  %v2010 = vsel %vm1993, %v1882, %v2009
  %v2011 = vsel %vm1995, %v1889, %v2010
  %v2012 = vsel %vm1997, %v1896, %v2011
  %v2013 = vsel %vm1985, %v1910, %v1903
  %v2014 = vsel %vm1987, %v1917, %v2013
  %v2015 = vsel %vm1989, %v1924, %v2014
  %v2016 = vsel %vm1991, %v1931, %v2015
  %v2017 = vsel %vm1993, %v1938, %v2016
  %v2018 = vsel %vm1995, %v1945, %v2017
  %v2019 = vsel %vm1997, %v1952, %v2018
  %2024 = vst [vmem:[%s71] sm:$0xff] %v1998
  %2025 = vst [vmem:[%s71 + $0x8] sm:$0xff] %v2005
  %2026 = vst [vmem:[%s71 + $0x10] sm:$0xff] %v2012
  %2027 = vst [vmem:[%s71 + $0x18] sm:$0xff] %v2019
  %v2028 = vmin.f32 %v1349, %v1351
  %v2029 = vrot.slane %v2028, 4
  %v2030 = vmin.f32 %v2028, %v2029
  %v2031 = vrot.slane %v2030, 2
  %v2032 = vmin.f32 %v2030, %v2031
  %v2033 = vrot.slane %v2032, 1
  %v2034 = vmin.f32 %v2032, %v2033
  %v2035 = vmin.f32 %v1354, %v1356
  %v2036 = vrot.slane %v2035, 4
  %v2037 = vmin.f32 %v2035, %v2036
  %v2038 = vrot.slane %v2037, 2
  %v2039 = vmin.f32 %v2037, %v2038
  %v2040 = vrot.slane %v2039, 1
  %v2041 = vmin.f32 %v2039, %v2040
  %v2042 = vmin.f32 %v1359, %v1361
  %v2043 = vrot.slane %v2042, 4
  %v2044 = vmin.f32 %v2042, %v2043
  %v2045 = vrot.slane %v2044, 2
  %v2046 = vmin.f32 %v2044, %v2045
  %v2047 = vrot.slane %v2046, 1
  %v2048 = vmin.f32 %v2046, %v2047
  %v2049 = vmin.f32 %v1364, %v1366
  %v2050 = vrot.slane %v2049, 4
  %v2051 = vmin.f32 %v2049, %v2050
  %v2052 = vrot.slane %v2051, 2
  %v2053 = vmin.f32 %v2051, %v2052
  %v2054 = vrot.slane %v2053, 1
  %v2055 = vmin.f32 %v2053, %v2054
  %v2056 = vmin.f32 %v1369, %v1371
  %v2057 = vrot.slane %v2056, 4
  %v2058 = vmin.f32 %v2056, %v2057
  %v2059 = vrot.slane %v2058, 2
  %v2060 = vmin.f32 %v2058, %v2059
  %v2061 = vrot.slane %v2060, 1
  %v2062 = vmin.f32 %v2060, %v2061
  %v2063 = vmin.f32 %v1374, %v1376
  %v2064 = vrot.slane %v2063, 4
  %v2065 = vmin.f32 %v2063, %v2064
  %v2066 = vrot.slane %v2065, 2
  %v2067 = vmin.f32 %v2065, %v2066
  %v2068 = vrot.slane %v2067, 1
  %v2069 = vmin.f32 %v2067, %v2068
  %v2070 = vmin.f32 %v1379, %v1381
  %v2071 = vrot.slane %v2070, 4
  %v2072 = vmin.f32 %v2070, %v2071
  %v2073 = vrot.slane %v2072, 2
  %v2074 = vmin.f32 %v2072, %v2073
  %v2075 = vrot.slane %v2074, 1
  %v2076 = vmin.f32 %v2074, %v2075
  %v2077 = vmin.f32 %v1384, %v1386
  %v2078 = vrot.slane %v2077, 4
  %v2079 = vmin.f32 %v2077, %v2078
  %v2080 = vrot.slane %v2079, 2
  %v2081 = vmin.f32 %v2079, %v2080
  %v2082 = vrot.slane %v2081, 1
  %v2083 = vmin.f32 %v2081, %v2082
  %v2084 = vmin.f32 %v1389, %v1391
  %v2085 = vrot.slane %v2084, 4
  %v2086 = vmin.f32 %v2084, %v2085
  %v2087 = vrot.slane %v2086, 2
  %v2088 = vmin.f32 %v2086, %v2087
  %v2089 = vrot.slane %v2088, 1
  %v2090 = vmin.f32 %v2088, %v2089
  %v2091 = vmin.f32 %v1394, %v1396
  %v2092 = vrot.slane %v2091, 4
  %v2093 = vmin.f32 %v2091, %v2092
  %v2094 = vrot.slane %v2093, 2
  %v2095 = vmin.f32 %v2093, %v2094
  %v2096 = vrot.slane %v2095, 1
  %v2097 = vmin.f32 %v2095, %v2096
  %v2098 = vmin.f32 %v1399, %v1401
  %v2099 = vrot.slane %v2098, 4
  %v2100 = vmin.f32 %v2098, %v2099
  %v2101 = vrot.slane %v2100, 2
  %v2102 = vmin.f32 %v2100, %v2101
  %v2103 = vrot.slane %v2102, 1
  %v2104 = vmin.f32 %v2102, %v2103
  %v2105 = vmin.f32 %v1404, %v1406
  %v2106 = vrot.slane %v2105, 4
  %v2107 = vmin.f32 %v2105, %v2106
  %v2108 = vrot.slane %v2107, 2
  %v2109 = vmin.f32 %v2107, %v2108
  %v2110 = vrot.slane %v2109, 1
  %v2111 = vmin.f32 %v2109, %v2110
  %v2112 = vmin.f32 %v1409, %v1411
  %v2113 = vrot.slane %v2112, 4
  %v2114 = vmin.f32 %v2112, %v2113
  %v2115 = vrot.slane %v2114, 2
  %v2116 = vmin.f32 %v2114, %v2115
  %v2117 = vrot.slane %v2116, 1
  %v2118 = vmin.f32 %v2116, %v2117
  %v2119 = vmin.f32 %v1414, %v1416
  %v2120 = vrot.slane %v2119, 4
  %v2121 = vmin.f32 %v2119, %v2120
  %v2122 = vrot.slane %v2121, 2
  %v2123 = vmin.f32 %v2121, %v2122
  %v2124 = vrot.slane %v2123, 1
  %v2125 = vmin.f32 %v2123, %v2124
  %v2126 = vmin.f32 %v1419, %v1421
  %v2127 = vrot.slane %v2126, 4
  %v2128 = vmin.f32 %v2126, %v2127
  %v2129 = vrot.slane %v2128, 2
  %v2130 = vmin.f32 %v2128, %v2129
  %v2131 = vrot.slane %v2130, 1
  %v2132 = vmin.f32 %v2130, %v2131
  %v2133 = vmin.f32 %v1424, %v1426
  %v2134 = vrot.slane %v2133, 4
  %v2135 = vmin.f32 %v2133, %v2134
  %v2136 = vrot.slane %v2135, 2
  %v2137 = vmin.f32 %v2135, %v2136
  %v2138 = vrot.slane %v2137, 1
  %v2139 = vmin.f32 %v2137, %v2138
  %v2140 = vmin.f32 %v1429, %v1431
  %v2141 = vrot.slane %v2140, 4
  %v2142 = vmin.f32 %v2140, %v2141
  %v2143 = vrot.slane %v2142, 2
  %v2144 = vmin.f32 %v2142, %v2143
  %v2145 = vrot.slane %v2144, 1
  %v2146 = vmin.f32 %v2144, %v2145
  %v2147 = vmin.f32 %v1434, %v1436
  %v2148 = vrot.slane %v2147, 4
  %v2149 = vmin.f32 %v2147, %v2148
  %v2150 = vrot.slane %v2149, 2
  %v2151 = vmin.f32 %v2149, %v2150
  %v2152 = vrot.slane %v2151, 1
  %v2153 = vmin.f32 %v2151, %v2152
  %v2154 = vmin.f32 %v1439, %v1441
  %v2155 = vrot.slane %v2154, 4
  %v2156 = vmin.f32 %v2154, %v2155
  %v2157 = vrot.slane %v2156, 2
  %v2158 = vmin.f32 %v2156, %v2157
  %v2159 = vrot.slane %v2158, 1
  %v2160 = vmin.f32 %v2158, %v2159
  %v2161 = vmin.f32 %v1444, %v1446
  %v2162 = vrot.slane %v2161, 4
  %v2163 = vmin.f32 %v2161, %v2162
  %v2164 = vrot.slane %v2163, 2
  %v2165 = vmin.f32 %v2163, %v2164
  %v2166 = vrot.slane %v2165, 1
  %v2167 = vmin.f32 %v2165, %v2166
  %v2168 = vmin.f32 %v1449, %v1451
  %v2169 = vrot.slane %v2168, 4
  %v2170 = vmin.f32 %v2168, %v2169
  %v2171 = vrot.slane %v2170, 2
  %v2172 = vmin.f32 %v2170, %v2171
  %v2173 = vrot.slane %v2172, 1
  %v2174 = vmin.f32 %v2172, %v2173
  %v2175 = vmin.f32 %v1454, %v1456
  %v2176 = vrot.slane %v2175, 4
  %v2177 = vmin.f32 %v2175, %v2176
  %v2178 = vrot.slane %v2177, 2
  %v2179 = vmin.f32 %v2177, %v2178
  %v2180 = vrot.slane %v2179, 1
  %v2181 = vmin.f32 %v2179, %v2180
  %v2182 = vmin.f32 %v1459, %v1461
  %v2183 = vrot.slane %v2182, 4
  %v2184 = vmin.f32 %v2182, %v2183
  %v2185 = vrot.slane %v2184, 2
  %v2186 = vmin.f32 %v2184, %v2185
  %v2187 = vrot.slane %v2186, 1
  %v2188 = vmin.f32 %v2186, %v2187
  %v2189 = vmin.f32 %v1464, %v1466
  %v2190 = vrot.slane %v2189, 4
  %v2191 = vmin.f32 %v2189, %v2190
  %v2192 = vrot.slane %v2191, 2
  %v2193 = vmin.f32 %v2191, %v2192
  %v2194 = vrot.slane %v2193, 1
  %v2195 = vmin.f32 %v2193, %v2194
  %v2196 = vmin.f32 %v1469, %v1471
  %v2197 = vrot.slane %v2196, 4
  %v2198 = vmin.f32 %v2196, %v2197
  %v2199 = vrot.slane %v2198, 2
  %v2200 = vmin.f32 %v2198, %v2199
  %v2201 = vrot.slane %v2200, 1
  %v2202 = vmin.f32 %v2200, %v2201
  %v2203 = vmin.f32 %v1474, %v1476
  %v2204 = vrot.slane %v2203, 4
  %v2205 = vmin.f32 %v2203, %v2204
  %v2206 = vrot.slane %v2205, 2
  %v2207 = vmin.f32 %v2205, %v2206
  %v2208 = vrot.slane %v2207, 1
  %v2209 = vmin.f32 %v2207, %v2208
  %v2210 = vmin.f32 %v1479, %v1481
  %v2211 = vrot.slane %v2210, 4
  %v2212 = vmin.f32 %v2210, %v2211
  %v2213 = vrot.slane %v2212, 2
  %v2214 = vmin.f32 %v2212, %v2213
  %v2215 = vrot.slane %v2214, 1
  %v2216 = vmin.f32 %v2214, %v2215
  %v2217 = vmin.f32 %v1484, %v1486
  %v2218 = vrot.slane %v2217, 4
  %v2219 = vmin.f32 %v2217, %v2218
  %v2220 = vrot.slane %v2219, 2
  %v2221 = vmin.f32 %v2219, %v2220
  %v2222 = vrot.slane %v2221, 1
  %v2223 = vmin.f32 %v2221, %v2222
  %v2224 = vmin.f32 %v1489, %v1491
  %v2225 = vrot.slane %v2224, 4
  %v2226 = vmin.f32 %v2224, %v2225
  %v2227 = vrot.slane %v2226, 2
  %v2228 = vmin.f32 %v2226, %v2227
  %v2229 = vrot.slane %v2228, 1
  %v2230 = vmin.f32 %v2228, %v2229
  %v2231 = vmin.f32 %v1494, %v1496
  %v2232 = vrot.slane %v2231, 4
  %v2233 = vmin.f32 %v2231, %v2232
  %v2234 = vrot.slane %v2233, 2
  %v2235 = vmin.f32 %v2233, %v2234
  %v2236 = vrot.slane %v2235, 1
  %v2237 = vmin.f32 %v2235, %v2236
  %v2238 = vmin.f32 %v1499, %v1501
  %v2239 = vrot.slane %v2238, 4
  %v2240 = vmin.f32 %v2238, %v2239
  %v2241 = vrot.slane %v2240, 2
  %v2242 = vmin.f32 %v2240, %v2241
  %v2243 = vrot.slane %v2242, 1
  %v2244 = vmin.f32 %v2242, %v2243
  %v2245 = vmin.f32 %v1504, %v1506
  %v2246 = vrot.slane %v2245, 4
  %v2247 = vmin.f32 %v2245, %v2246
  %v2248 = vrot.slane %v2247, 2
  %v2249 = vmin.f32 %v2247, %v2248
  %v2250 = vrot.slane %v2249, 1
  %v2251 = vmin.f32 %v2249, %v2250
  %v2284 = vsel %vm1985, %v2041, %v2034
  %v2285 = vsel %vm1987, %v2048, %v2284
  %v2286 = vsel %vm1989, %v2055, %v2285
  %v2287 = vsel %vm1991, %v2062, %v2286
  %v2288 = vsel %vm1993, %v2069, %v2287
  %v2289 = vsel %vm1995, %v2076, %v2288
  %v2290 = vsel %vm1997, %v2083, %v2289
  %v2291 = vsel %vm1985, %v2097, %v2090
  %v2292 = vsel %vm1987, %v2104, %v2291
  %v2293 = vsel %vm1989, %v2111, %v2292
  %v2294 = vsel %vm1991, %v2118, %v2293
  %v2295 = vsel %vm1993, %v2125, %v2294
  %v2296 = vsel %vm1995, %v2132, %v2295
  %v2297 = vsel %vm1997, %v2139, %v2296
  %v2298 = vsel %vm1985, %v2153, %v2146
  %v2299 = vsel %vm1987, %v2160, %v2298
  %v2300 = vsel %vm1989, %v2167, %v2299
  %v2301 = vsel %vm1991, %v2174, %v2300
  %v2302 = vsel %vm1993, %v2181, %v2301
  %v2303 = vsel %vm1995, %v2188, %v2302
  %v2304 = vsel %vm1997, %v2195, %v2303
  %v2305 = vsel %vm1985, %v2209, %v2202
  %v2306 = vsel %vm1987, %v2216, %v2305
  %v2307 = vsel %vm1989, %v2223, %v2306
  %v2308 = vsel %vm1991, %v2230, %v2307
  %v2309 = vsel %vm1993, %v2237, %v2308
  %v2310 = vsel %vm1995, %v2244, %v2309
  %v2311 = vsel %vm1997, %v2251, %v2310
  %2316 = vst [vmem:[%s79] sm:$0xff] %v2290
  %2317 = vst [vmem:[%s79 + $0x8] sm:$0xff] %v2297
  %2318 = vst [vmem:[%s79 + $0x10] sm:$0xff] %v2304
  %2319 = vst [vmem:[%s79 + $0x18] sm:$0xff] %v2311
  %s2320 = sadd.s32 0, 0
  %s2321 = smul.u32 4, %s2320
  %p2322 = scmp.lt.s32.totalorder %s2321, 3
  %s2323 = scalar_select %p2322, %s2321, 3
  %s2324 = smul.addr %s2323, 8
  %s2325 = scalar_lea.vmem %s9, %s2324
  %s2326 = sadd.s32 0, 0
  %s2327 = smul.u32 4, %s2326
  %p2328 = scmp.lt.s32.totalorder %s2327, 3
  %s2329 = scalar_select %p2328, %s2327, 3
  %s2330 = smul.addr %s2329, 8
  %s2331 = scalar_lea.vmem %s10, %s2330
  // Predicated region
  $region38: #{set_abstraction_msg2.11} parent=0 // pred_check
    _
  $region39: #{set_abstraction_msg2.11} parent=0 // pred_check_branch
    %2333 = sbr.rel (0) target = $region41
  $region40: #{set_abstraction_msg2.11} parent=0 // pred_region
    _
  $region41: #{set_abstraction_msg2.11} parent=0 // pred_fallthru
    _
  // Predicated region
  $region42: #{set_abstraction_msg2.11} parent=0 // pred_check
    _
  $region43: #{set_abstraction_msg2.11} parent=0 // pred_check_branch
    %2335 = sbr.rel (0) target = $region45
  $region44: #{set_abstraction_msg2.11} parent=0 // pred_region
    %s2336 = sadd.s32 0, 0
    %s2337 = smul.u32 4, %s2336
  $region45: #{set_abstraction_msg2.11} parent=0 // pred_fallthru
    _
  // Predicated region
  $region46: #{set_abstraction_msg2.11} parent=0 // pred_check
    _
  $region47: #{set_abstraction_msg2.11} parent=0 // pred_check_branch
    %2339 = sbr.rel (0) target = $region49
  $region48: #{set_abstraction_msg2.11} parent=0 // pred_region
    %s2340 = sadd.s32 0, 0
    %s2341 = smul.u32 4, %s2340
  $region49: #{set_abstraction_msg2.11} parent=0 // pred_fallthru
    _
  // Predicated region
  $region50: #{set_abstraction_msg2.11} parent=0 // pred_check
    _
  $region51: #{set_abstraction_msg2.11} parent=0 // pred_check_branch
    %2343 = sbr.rel (0) target = $region53
  $region52: #{set_abstraction_msg2.11} parent=0 // pred_region
    _
  $region53: #{set_abstraction_msg2.11} parent=0 // pred_fallthru
    _
  // Predicated region
  $region54: #{set_abstraction_msg2.11} parent=0 // pred_check
    _
  $region55: #{set_abstraction_msg2.11} parent=0 // pred_check_branch
    %2345 = sbr.rel (0) target = $region57
  $region56: #{set_abstraction_msg2.11} parent=0 // pred_region
    %s2346 = sadd.s32 0, 0
    %s2347 = smul.u32 4, %s2346
    %p2348 = scmp.lt.s32.totalorder %s2347, 3
    %s2349 = scalar_select %p2348, %s2347, 3
    %s2350 = smul.addr %s2349, 8
    %s2351 = scalar_lea.vmem %s9, %s2350
  $region57: #{set_abstraction_msg2.11} parent=0 // pred_fallthru
    _
  // Predicated region
  $region58: #{set_abstraction_msg2.11} parent=0 // pred_check
    _
  $region59: #{set_abstraction_msg2.11} parent=0 // pred_check_branch
    %2353 = sbr.rel (0) target = $region61
  $region60: #{set_abstraction_msg2.11} parent=0 // pred_region
    %s2354 = sadd.s32 0, 0
    %s2355 = smul.u32 4, %s2354
    %p2356 = scmp.lt.s32.totalorder %s2355, 3
    %s2357 = scalar_select %p2356, %s2355, 3
    %s2358 = smul.addr %s2357, 8
    %s2359 = scalar_lea.vmem %s10, %s2358
  $region61: #{set_abstraction_msg2.11} parent=0 // pred_fallthru
    _

</llo_original>
